<compile_context>
chip_gen: v6e
topology: v6e:2x2x1
jax: 0.10.0
libtpu: 0.0.40
codegen_flags: <defaults>
</compile_context>

<pallas_src>
import functools

import jax
import jax.numpy as jnp
from jax.experimental import pallas as pl
from jax.experimental.pallas import tpu as pltpu


# ----------------------------------------------------------------------------
# Pallas kernel: tiled matmul + folded-BN bias + (optional residual) + act
# ----------------------------------------------------------------------------
def _mm_kernel(a_ref, b_ref, bias_ref, *rest, act, has_res):
    """grid = (Mi, Nj, Kk), K innermost.  acc scratch is (tm, tn) f32."""
    if has_res:
        r_ref, o_ref, acc_ref = rest
    else:
        r_ref = None
        o_ref, acc_ref = rest
    k = pl.program_id(2)

    @pl.when(k == 0)
    def _():
        acc_ref[...] = jnp.zeros_like(acc_ref)

    acc_ref[...] += jnp.dot(a_ref[...], b_ref[...],
                            preferred_element_type=jnp.float32)

    @pl.when(k == pl.num_programs(2) - 1)
    def _():
        y = acc_ref[...] + bias_ref[...]              # (1, tn) broadcasts over rows
        if has_res:
            y = y + r_ref[...].astype(jnp.float32)
        if act == "relu":
            y = jnp.maximum(y, 0.0)
        elif act == "sigmoid":
            y = jax.nn.sigmoid(y)                     # EUP path, free slot
        o_ref[...] = y.astype(o_ref.dtype)


# ----------------------------------------------------------------------------
# Tiling helpers
# ----------------------------------------------------------------------------
def _round_up(x, m):
    return (x + m - 1) // m * m


def _pick_tile(dim, unit, max_t):
    """Pick a tile size (multiple of `unit`).  If the unit-rounded dim fits below
    max_t, use it whole (single block, no refetch).  Otherwise prefer the largest
    tile that divides the rounded dim exactly (no HBM zero-padding of the operand);
    fall back to the tile that minimizes padding."""
    dp = _round_up(dim, unit)
    if dp <= max_t:
        return dp
    best_t, best_waste = unit, None
    t = max_t
    while t >= unit:
        waste = _round_up(dp, t) - dp
        if waste == 0:
            return t
        if best_waste is None or waste < best_waste:
            best_t, best_waste = t, waste
        t -= unit
    return best_t


def _pad2(x, rows, cols):
    r, c = x.shape
    if r == rows and c == cols:
        return x
    return jnp.pad(x, ((0, rows - r), (0, cols - c)))


# ----------------------------------------------------------------------------
# Fused GEMM wrapper
# ----------------------------------------------------------------------------
def matmul_bias(a, b, bias, act="none", residual=None, out_dtype=jnp.bfloat16):
    """(M,K) @ (K,N) + bias[N] (+ residual[M,N]) -> activation, via one Pallas call.

    A/B are bf16 for the MXU; accumulation and the epilogue are f32.
    """
    M, K = a.shape
    K2, N = b.shape
    assert K == K2

    tm = _pick_tile(M, 8, 256)
    tn = _pick_tile(N, 128, 256)
    tk = _pick_tile(K, 128, 1024)
    Mp, Np, Kp = _round_up(M, tm), _round_up(N, tn), _round_up(K, tk)

    a_p = _pad2(a.astype(jnp.bfloat16), Mp, Kp)
    b_p = _pad2(b.astype(jnp.bfloat16), Kp, Np)
    c_p = _pad2(bias.reshape(1, -1).astype(jnp.float32), 1, Np)

    in_arrays = [a_p, b_p, c_p]
    in_specs = [
        pl.BlockSpec((tm, tk), lambda i, j, k: (i, k)),
        pl.BlockSpec((tk, tn), lambda i, j, k: (k, j)),
        pl.BlockSpec((1, tn), lambda i, j, k: (0, j)),
    ]
    has_res = residual is not None
    if has_res:
        in_arrays.append(_pad2(residual.astype(jnp.bfloat16), Mp, Np))
        # block index independent of k -> fetched once per (i, j), stays resident
        in_specs.append(pl.BlockSpec((tm, tn), lambda i, j, k: (i, j)))

    grid = (Mp // tm, Np // tn, Kp // tk)

    out = pl.pallas_call(
        functools.partial(_mm_kernel, act=act, has_res=has_res),
        out_shape=jax.ShapeDtypeStruct((Mp, Np), out_dtype),
        grid_spec=pltpu.PrefetchScalarGridSpec(
            num_scalar_prefetch=0,
            grid=grid,
            in_specs=in_specs,
            out_specs=pl.BlockSpec((tm, tn), lambda i, j, k: (i, j)),
            scratch_shapes=[pltpu.VMEM((tm, tn), jnp.float32)],
        ),
        compiler_params=pltpu.CompilerParams(
            dimension_semantics=("parallel", "parallel", "arbitrary"),
            vmem_limit_bytes=32 * 1024 * 1024),
    )(*in_arrays)
    return out[:M, :N]


# ----------------------------------------------------------------------------
# Conv / pool glue (reshapes, im2col for spatial kernels) — GEMM runs in Pallas.
# ----------------------------------------------------------------------------
def im2col(x, kh, kw, stride, pad):
    # x: NHWC (bf16).  Only used for the 7x7 stem and the 3x3 bottleneck convs.
    # TODO(synk): replace with direct shifted-window DMA inside the kernel to avoid
    #             the kh*kw-times activation copy in HBM.
    if pad > 0:
        x = jnp.pad(x, ((0, 0), (pad, pad), (pad, pad), (0, 0)))
    N, H, W, C = x.shape
    Ho = (H - kh) // stride + 1
    Wo = (W - kw) // stride + 1
    patches = []
    for i in range(kh):
        for j in range(kw):
            patches.append(
                x[:, i:i + stride * Ho:stride, j:j + stride * Wo:stride, :])
    cols = jnp.concatenate(patches, axis=-1)          # (N, Ho, Wo, kh*kw*C)
    return cols.reshape(N * Ho * Wo, kh * kw * C), (N, Ho, Wo)


def conv_bn(x, p, stride=1, pad=0, act="relu", residual=None):
    """Conv (no bias) + folded BatchNorm + optional fused residual + activation."""
    kh, kw, cin, cout = p["w"].shape
    if kh == 1 and kw == 1 and pad == 0:
        # 1x1 conv: pure GEMM over the (possibly strided) activations — no im2col.
        if stride > 1:
            x = x[:, ::stride, ::stride, :]
        n, ho, wo, _ = x.shape
        cols = x.reshape(n * ho * wo, cin)
    else:
        cols, (n, ho, wo) = im2col(x, kh, kw, stride, pad)
    w2 = p["w"].reshape(kh * kw * cin, cout)
    y = matmul_bias(cols, w2, p["bias"], act=act, residual=residual)
    return y.reshape(n, ho, wo, cout)


def maxpool2d(x, k=3, stride=2, pad=1):
    # TODO(synk): maxpool kept in plain JAX (negligible compute vs the conv GEMMs).
    neg = jnp.asarray(-1e30, x.dtype)
    x = jnp.pad(x, ((0, 0), (pad, pad), (pad, pad), (0, 0)), constant_values=neg)
    N, H, W, C = x.shape
    Ho = (H - k) // stride + 1
    Wo = (W - k) // stride + 1
    out = jnp.full((N, Ho, Wo, C), neg, x.dtype)
    for i in range(k):
        for j in range(k):
            out = jnp.maximum(
                out, x[:, i:i + stride * Ho:stride, j:j + stride * Wo:stride, :])
    return out


# ----------------------------------------------------------------------------
# ResNet-50 backbone (torchvision-style bottlenecks)
# ----------------------------------------------------------------------------
STAGE_SPECS = [  # (planes, num_blocks, stride) — resnet50 = [3, 4, 6, 3]
    (64, 3, 1), (128, 4, 2), (256, 6, 2), (512, 3, 2),
]
EXPANSION = 4


def make_conv_bn_params(key, kh, kw, cin, cout):
    k1, k2, k3 = jax.random.split(key, 3)
    fan_in = kh * kw * cin
    w = jax.random.normal(k1, (kh, kw, cin, cout), jnp.float32) / jnp.sqrt(fan_in)
    scale = 1.0 + 0.1 * jax.random.normal(k2, (cout,), jnp.float32)  # BN gamma/sigma
    bias = 0.1 * jax.random.normal(k3, (cout,), jnp.float32)         # BN beta-term
    # Fold the inference-mode BN scale directly into the conv weight; only the bias
    # survives into the GEMM epilogue.
    w = (w * scale[None, None, None, :]).astype(jnp.bfloat16)
    return dict(w=w, bias=bias)


def init_backbone_params(key, nblock):
    keys = list(jax.random.split(key, 256))
    ki = iter(keys)
    params = {"conv1": make_conv_bn_params(next(ki), 7, 7, 3, 64)}
    in_ch = 64
    layers = []
    for planes, nb, stride in STAGE_SPECS[:nblock]:
        blocks = []
        for bi in range(nb):
            s = stride if bi == 0 else 1
            blk = {
                "conv1": make_conv_bn_params(next(ki), 1, 1, in_ch, planes),
                "conv2": make_conv_bn_params(next(ki), 3, 3, planes, planes),
                "conv3": make_conv_bn_params(next(ki), 1, 1, planes,
                                             planes * EXPANSION),
                "stride": s,
            }
            if s != 1 or in_ch != planes * EXPANSION:
                blk["down"] = make_conv_bn_params(next(ki), 1, 1, in_ch,
                                                  planes * EXPANSION)
            blocks.append(blk)
            in_ch = planes * EXPANSION
        layers.append(blocks)
    params["layers"] = layers
    return params, in_ch


def bottleneck(x, blk):
    out = conv_bn(x, blk["conv1"], stride=1, pad=0, act="relu")
    out = conv_bn(out, blk["conv2"], stride=blk["stride"], pad=1, act="relu")
    if "down" in blk:
        ident = conv_bn(x, blk["down"], stride=blk["stride"], pad=0, act="none")
    else:
        ident = x
    n, h, w, c = ident.shape
    # residual add + relu fused into the conv3 GEMM epilogue
    out = conv_bn(out, blk["conv3"], stride=1, pad=0, act="relu",
                  residual=ident.reshape(-1, c))
    return out


def backbone_forward(params, x_nchw):
    x = jnp.transpose(x_nchw, (0, 2, 3, 1)).astype(jnp.bfloat16)  # NCHW -> NHWC
    x = conv_bn(x, params["conv1"], stride=2, pad=3, act="relu")
    x = maxpool2d(x, k=3, stride=2, pad=1)
    for blocks in params["layers"]:
        for blk in blocks:
            x = bottleneck(x, blk)
    # TODO(synk): global average pool kept in plain JAX (tiny vs the GEMMs).
    return jnp.mean(x.astype(jnp.float32), axis=(1, 2))  # (N, fvdim)


# ----------------------------------------------------------------------------
# Full module: Resnet50(nblock, k) -> sigmoid(Linear(fv))
# ----------------------------------------------------------------------------
class Resnet50Pallas:
    def __init__(self, nblock=4, k=10, key=None):
        if key is None:
            key = jax.random.PRNGKey(0)
        kb, kp = jax.random.split(key)
        self.backbone, fvdim = init_backbone_params(kb, nblock)
        assert fvdim == 2048 // 2 ** (4 - nblock)
        k1, k2 = jax.random.split(kp)
        self.proj_w = jax.random.normal(k1, (fvdim, k), jnp.float32) / jnp.sqrt(fvdim)
        self.proj_b = 0.1 * jax.random.normal(k2, (k,), jnp.float32)
        self.k = k

    def __call__(self, x_nchw):
        fv = backbone_forward(self.backbone, x_nchw)           # (N, fvdim)
        # sigmoid(fv @ W + b) fused into the Pallas GEMM epilogue
        return matmul_bias(fv, self.proj_w, self.proj_b,
                           act="sigmoid", out_dtype=jnp.float32)


if __name__ == "__main__":
    # Small demo: nblock=2 (module's nblock is a constructor arg; full default is 4),
    # batch=2, 3 input channels, 32x32 spatial  ->  fvdim = 2048 // 2**(4-2) = 512.
    key = jax.random.PRNGKey(0)
    model = Resnet50Pallas(nblock=2, k=10, key=key)
    x = jax.random.normal(jax.random.PRNGKey(1), (2, 3, 32, 32), jnp.float32)
    fwd = jax.jit(model.__call__)
    y = fwd(x)
    y = jax.block_until_ready(y)
    assert y.shape == (2, 10)
    assert bool(jnp.all((y >= 0.0) & (y <= 1.0)))
    print("KERNEL_OK")
</pallas_src>

<mosaic_0001>
module attributes {stable_mosaic.version = 11 : i64} {
  func.func @_mm_kernel(%arg0: i32, %arg1: i32, %arg2: i32, %arg3: memref<256x256xbf16, #tpu.memory_space<vmem>>, %arg4: memref<256x128xbf16, #tpu.memory_space<vmem>>, %arg5: memref<1x128xf32, #tpu.memory_space<vmem>>, %arg6: memref<256x128xbf16, #tpu.memory_space<vmem>>, %arg7: memref<256x128xf32, #tpu.memory_space<vmem>>) attributes {dimension_semantics = [#tpu.dimension_semantics<parallel>, #tpu.dimension_semantics<parallel>, #tpu.dimension_semantics<arbitrary>], iteration_bounds = array<i64: 2, 1, 1>, scalar_prefetch = 0 : i64, scratch_operands = 1 : i64, tpu.core_type = #tpu.core_type<tc>, window_params = [{transform_indices = @transform_0, window_bounds = array<i64: 256, 256>}, {transform_indices = @transform_1, window_bounds = array<i64: 256, 128>}, {transform_indices = @transform_2, window_bounds = array<i64: 1, 128>}, {transform_indices = @transform_3, window_bounds = array<i64: 256, 128>}]} {
    %c0_i32 = arith.constant 0 : i32
    %0 = arith.cmpi eq, %arg2, %c0_i32 : i32
    %1 = arith.extui %0 : i1 to i32
    %c0_i32_0 = arith.constant 0 : i32
    %2 = arith.cmpi ne, %1, %c0_i32_0 : i32
    scf.if %2 {
      %cst_10 = arith.constant 0.000000e+00 : f32
      %12 = vector.broadcast %cst_10 : f32 to vector<256x128xf32>
      %c0_11 = arith.constant 0 : index
      %c0_12 = arith.constant 0 : index
      %13 = vector.load %arg7[%c0_11, %c0_12] : memref<256x128xf32, #tpu.memory_space<vmem>>, vector<256x128xf32>
      tpu.vector_store %arg7[%c0_11, %c0_12], %12 {strides = array<i32>} : memref<256x128xf32, #tpu.memory_space<vmem>>, vector<256x128xf32>,
    } else {
    }
    %c0 = arith.constant 0 : index
    %c0_1 = arith.constant 0 : index
    %3 = vector.load %arg7[%c0, %c0_1] : memref<256x128xf32, #tpu.memory_space<vmem>>, vector<256x128xf32>
    %c0_2 = arith.constant 0 : index
    %c0_3 = arith.constant 0 : index
    %4 = vector.load %arg3[%c0_2, %c0_3] : memref<256x256xbf16, #tpu.memory_space<vmem>>, vector<256x256xbf16>
    %c0_4 = arith.constant 0 : index
    %c0_5 = arith.constant 0 : index
    %5 = vector.load %arg4[%c0_4, %c0_5] : memref<256x128xbf16, #tpu.memory_space<vmem>>, vector<256x128xbf16>
    %cst = arith.constant dense<0.000000e+00> : vector<256x128xf32>
    %6 = tpu.matmul %4, %5, %cst {dimension_numbers = #tpu.dot_dimension_numbers<[1], [0], [0], [1], [0, 0, 1, 1], [], []>} : vector<256x256xbf16>, vector<256x128xbf16>, vector<256x128xf32> -> vector<256x128xf32>
    %7 = arith.addf %3, %6 : vector<256x128xf32>
    %c0_6 = arith.constant 0 : index
    %c0_7 = arith.constant 0 : index
    %8 = vector.load %arg7[%c0_6, %c0_7] : memref<256x128xf32, #tpu.memory_space<vmem>>, vector<256x128xf32>
    tpu.vector_store %arg7[%c0_6, %c0_7], %7 {strides = array<i32>} : memref<256x128xf32, #tpu.memory_space<vmem>>, vector<256x128xf32>,
    %c0_i32_8 = arith.constant 0 : i32
    %9 = arith.cmpi eq, %arg2, %c0_i32_8 : i32
    %10 = arith.extui %9 : i1 to i32
    %c0_i32_9 = arith.constant 0 : i32
    %11 = arith.cmpi ne, %10, %c0_i32_9 : i32
    scf.if %11 {
      %c0_10 = arith.constant 0 : index
      %c0_11 = arith.constant 0 : index
      %12 = vector.load %arg7[%c0_10, %c0_11] : memref<256x128xf32, #tpu.memory_space<vmem>>, vector<256x128xf32>
      %c0_12 = arith.constant 0 : index
      %c0_13 = arith.constant 0 : index
      %13 = vector.load %arg5[%c0_12, %c0_13] : memref<1x128xf32, #tpu.memory_space<vmem>>, vector<1x128xf32>
      %14 = vector.broadcast %13 : vector<1x128xf32> to vector<256x128xf32>
      %15 = arith.addf %12, %14 : vector<256x128xf32>
      %cst_14 = arith.constant 0.000000e+00 : f32
      %16 = vector.broadcast %cst_14 : f32 to vector<256x128xf32>
      %17 = arith.maximumf %15, %16 : vector<256x128xf32>
      %18 = arith.truncf %17 : vector<256x128xf32> to vector<256x128xbf16>
      %c0_15 = arith.constant 0 : index
      %c0_16 = arith.constant 0 : index
      %19 = vector.load %arg6[%c0_15, %c0_16] : memref<256x128xbf16, #tpu.memory_space<vmem>>, vector<256x128xbf16>
      tpu.vector_store %arg6[%c0_15, %c0_16], %18 {strides = array<i32>} : memref<256x128xbf16, #tpu.memory_space<vmem>>, vector<256x128xbf16>,
    } else {
    }
    return
  }
  func.func @transform_0(%arg0: i32, %arg1: i32, %arg2: i32) -> (i32, i32) {
    %c0_i32 = arith.constant 0 : i32
    return %arg0, %arg2 : i32, i32
  }
  func.func @transform_1(%arg0: i32, %arg1: i32, %arg2: i32) -> (i32, i32) {
    %c0_i32 = arith.constant 0 : i32
    return %arg2, %arg1 : i32, i32
  }
  func.func @transform_2(%arg0: i32, %arg1: i32, %arg2: i32) -> (i32, i32) {
    %c0_i32 = arith.constant 0 : i32
    %c0_i32_0 = arith.constant 0 : i32
    return %c0_i32, %arg1 : i32, i32
  }
  func.func @transform_3(%arg0: i32, %arg1: i32, %arg2: i32) -> (i32, i32) {
    %c0_i32 = arith.constant 0 : i32
    return %arg0, %arg1 : i32, i32
  }
}

module attributes {stable_mosaic.version = 11 : i64} {
  func.func @_mm_kernel(%arg0: i32, %arg1: i32, %arg2: i32, %arg3: memref<128x128xbf16, #tpu.memory_space<vmem>>, %arg4: memref<128x128xbf16, #tpu.memory_space<vmem>>, %arg5: memref<1x128xf32, #tpu.memory_space<vmem>>, %arg6: memref<128x128xbf16, #tpu.memory_space<vmem>>, %arg7: memref<128x128xf32, #tpu.memory_space<vmem>>) attributes {dimension_semantics = [#tpu.dimension_semantics<parallel>, #tpu.dimension_semantics<parallel>, #tpu.dimension_semantics<arbitrary>], iteration_bounds = array<i64: 1, 1, 1>, scalar_prefetch = 0 : i64, scratch_operands = 1 : i64, tpu.core_type = #tpu.core_type<tc>, window_params = [{transform_indices = @transform_0, window_bounds = array<i64: 128, 128>}, {transform_indices = @transform_1, window_bounds = array<i64: 128, 128>}, {transform_indices = @transform_2, window_bounds = array<i64: 1, 128>}, {transform_indices = @transform_3, window_bounds = array<i64: 128, 128>}]} {
    %c0_i32 = arith.constant 0 : i32
    %0 = arith.cmpi eq, %arg2, %c0_i32 : i32
    %1 = arith.extui %0 : i1 to i32
    %c0_i32_0 = arith.constant 0 : i32
    %2 = arith.cmpi ne, %1, %c0_i32_0 : i32
    scf.if %2 {
      %cst_10 = arith.constant 0.000000e+00 : f32
      %12 = vector.broadcast %cst_10 : f32 to vector<128x128xf32>
      %c0_11 = arith.constant 0 : index
      %c0_12 = arith.constant 0 : index
      %13 = vector.load %arg7[%c0_11, %c0_12] : memref<128x128xf32, #tpu.memory_space<vmem>>, vector<128x128xf32>
      tpu.vector_store %arg7[%c0_11, %c0_12], %12 {strides = array<i32>} : memref<128x128xf32, #tpu.memory_space<vmem>>, vector<128x128xf32>,
    } else {
    }
    %c0 = arith.constant 0 : index
    %c0_1 = arith.constant 0 : index
    %3 = vector.load %arg7[%c0, %c0_1] : memref<128x128xf32, #tpu.memory_space<vmem>>, vector<128x128xf32>
    %c0_2 = arith.constant 0 : index
    %c0_3 = arith.constant 0 : index
    %4 = vector.load %arg3[%c0_2, %c0_3] : memref<128x128xbf16, #tpu.memory_space<vmem>>, vector<128x128xbf16>
    %c0_4 = arith.constant 0 : index
    %c0_5 = arith.constant 0 : index
    %5 = vector.load %arg4[%c0_4, %c0_5] : memref<128x128xbf16, #tpu.memory_space<vmem>>, vector<128x128xbf16>
    %cst = arith.constant dense<0.000000e+00> : vector<128x128xf32>
    %6 = tpu.matmul %4, %5, %cst {dimension_numbers = #tpu.dot_dimension_numbers<[1], [0], [0], [1], [0, 0, 1, 1], [], []>} : vector<128x128xbf16>, vector<128x128xbf16>, vector<128x128xf32> -> vector<128x128xf32>
    %7 = arith.addf %3, %6 : vector<128x128xf32>
    %c0_6 = arith.constant 0 : index
    %c0_7 = arith.constant 0 : index
    %8 = vector.load %arg7[%c0_6, %c0_7] : memref<128x128xf32, #tpu.memory_space<vmem>>, vector<128x128xf32>
    tpu.vector_store %arg7[%c0_6, %c0_7], %7 {strides = array<i32>} : memref<128x128xf32, #tpu.memory_space<vmem>>, vector<128x128xf32>,
    %c0_i32_8 = arith.constant 0 : i32
    %9 = arith.cmpi eq, %arg2, %c0_i32_8 : i32
    %10 = arith.extui %9 : i1 to i32
    %c0_i32_9 = arith.constant 0 : i32
    %11 = arith.cmpi ne, %10, %c0_i32_9 : i32
    scf.if %11 {
      %c0_10 = arith.constant 0 : index
      %c0_11 = arith.constant 0 : index
      %12 = vector.load %arg7[%c0_10, %c0_11] : memref<128x128xf32, #tpu.memory_space<vmem>>, vector<128x128xf32>
      %c0_12 = arith.constant 0 : index
      %c0_13 = arith.constant 0 : index
      %13 = vector.load %arg5[%c0_12, %c0_13] : memref<1x128xf32, #tpu.memory_space<vmem>>, vector<1x128xf32>
      %14 = vector.broadcast %13 : vector<1x128xf32> to vector<128x128xf32>
      %15 = arith.addf %12, %14 : vector<128x128xf32>
      %cst_14 = arith.constant 0.000000e+00 : f32
      %16 = vector.broadcast %cst_14 : f32 to vector<128x128xf32>
      %17 = arith.maximumf %15, %16 : vector<128x128xf32>
      %18 = arith.truncf %17 : vector<128x128xf32> to vector<128x128xbf16>
      %c0_15 = arith.constant 0 : index
      %c0_16 = arith.constant 0 : index
      %19 = vector.load %arg6[%c0_15, %c0_16] : memref<128x128xbf16, #tpu.memory_space<vmem>>, vector<128x128xbf16>
      tpu.vector_store %arg6[%c0_15, %c0_16], %18 {strides = array<i32>} : memref<128x128xbf16, #tpu.memory_space<vmem>>, vector<128x128xbf16>,
    } else {
    }
    return
  }
  func.func @transform_0(%arg0: i32, %arg1: i32, %arg2: i32) -> (i32, i32) {
    %c0_i32 = arith.constant 0 : i32
    return %arg0, %arg2 : i32, i32
  }
  func.func @transform_1(%arg0: i32, %arg1: i32, %arg2: i32) -> (i32, i32) {
    %c0_i32 = arith.constant 0 : i32
    return %arg2, %arg1 : i32, i32
  }
  func.func @transform_2(%arg0: i32, %arg1: i32, %arg2: i32) -> (i32, i32) {
    %c0_i32 = arith.constant 0 : i32
    %c0_i32_0 = arith.constant 0 : i32
    return %c0_i32, %arg1 : i32, i32
  }
  func.func @transform_3(%arg0: i32, %arg1: i32, %arg2: i32) -> (i32, i32) {
    %c0_i32 = arith.constant 0 : i32
    return %arg0, %arg1 : i32, i32
  }
}

module attributes {stable_mosaic.version = 11 : i64} {
  func.func @_mm_kernel(%arg0: i32, %arg1: i32, %arg2: i32, %arg3: memref<128x128xbf16, #tpu.memory_space<vmem>>, %arg4: memref<128x256xbf16, #tpu.memory_space<vmem>>, %arg5: memref<1x256xf32, #tpu.memory_space<vmem>>, %arg6: memref<128x256xbf16, #tpu.memory_space<vmem>>, %arg7: memref<128x256xf32, #tpu.memory_space<vmem>>) attributes {dimension_semantics = [#tpu.dimension_semantics<parallel>, #tpu.dimension_semantics<parallel>, #tpu.dimension_semantics<arbitrary>], iteration_bounds = array<i64: 1, 1, 1>, scalar_prefetch = 0 : i64, scratch_operands = 1 : i64, tpu.core_type = #tpu.core_type<tc>, window_params = [{transform_indices = @transform_0, window_bounds = array<i64: 128, 128>}, {transform_indices = @transform_1, window_bounds = array<i64: 128, 256>}, {transform_indices = @transform_2, window_bounds = array<i64: 1, 256>}, {transform_indices = @transform_3, window_bounds = array<i64: 128, 256>}]} {
    %c0_i32 = arith.constant 0 : i32
    %0 = arith.cmpi eq, %arg2, %c0_i32 : i32
    %1 = arith.extui %0 : i1 to i32
    %c0_i32_0 = arith.constant 0 : i32
    %2 = arith.cmpi ne, %1, %c0_i32_0 : i32
    scf.if %2 {
      %cst_10 = arith.constant 0.000000e+00 : f32
      %12 = vector.broadcast %cst_10 : f32 to vector<128x256xf32>
      %c0_11 = arith.constant 0 : index
      %c0_12 = arith.constant 0 : index
      %13 = vector.load %arg7[%c0_11, %c0_12] : memref<128x256xf32, #tpu.memory_space<vmem>>, vector<128x256xf32>
      tpu.vector_store %arg7[%c0_11, %c0_12], %12 {strides = array<i32>} : memref<128x256xf32, #tpu.memory_space<vmem>>, vector<128x256xf32>,
    } else {
    }
    %c0 = arith.constant 0 : index
    %c0_1 = arith.constant 0 : index
    %3 = vector.load %arg7[%c0, %c0_1] : memref<128x256xf32, #tpu.memory_space<vmem>>, vector<128x256xf32>
    %c0_2 = arith.constant 0 : index
    %c0_3 = arith.constant 0 : index
    %4 = vector.load %arg3[%c0_2, %c0_3] : memref<128x128xbf16, #tpu.memory_space<vmem>>, vector<128x128xbf16>
    %c0_4 = arith.constant 0 : index
    %c0_5 = arith.constant 0 : index
    %5 = vector.load %arg4[%c0_4, %c0_5] : memref<128x256xbf16, #tpu.memory_space<vmem>>, vector<128x256xbf16>
    %cst = arith.constant dense<0.000000e+00> : vector<128x256xf32>
    %6 = tpu.matmul %4, %5, %cst {dimension_numbers = #tpu.dot_dimension_numbers<[1], [0], [0], [1], [0, 0, 1, 1], [], []>} : vector<128x128xbf16>, vector<128x256xbf16>, vector<128x256xf32> -> vector<128x256xf32>
    %7 = arith.addf %3, %6 : vector<128x256xf32>
    %c0_6 = arith.constant 0 : index
    %c0_7 = arith.constant 0 : index
    %8 = vector.load %arg7[%c0_6, %c0_7] : memref<128x256xf32, #tpu.memory_space<vmem>>, vector<128x256xf32>
    tpu.vector_store %arg7[%c0_6, %c0_7], %7 {strides = array<i32>} : memref<128x256xf32, #tpu.memory_space<vmem>>, vector<128x256xf32>,
    %c0_i32_8 = arith.constant 0 : i32
    %9 = arith.cmpi eq, %arg2, %c0_i32_8 : i32
    %10 = arith.extui %9 : i1 to i32
    %c0_i32_9 = arith.constant 0 : i32
    %11 = arith.cmpi ne, %10, %c0_i32_9 : i32
    scf.if %11 {
      %c0_10 = arith.constant 0 : index
      %c0_11 = arith.constant 0 : index
      %12 = vector.load %arg7[%c0_10, %c0_11] : memref<128x256xf32, #tpu.memory_space<vmem>>, vector<128x256xf32>
      %c0_12 = arith.constant 0 : index
      %c0_13 = arith.constant 0 : index
      %13 = vector.load %arg5[%c0_12, %c0_13] : memref<1x256xf32, #tpu.memory_space<vmem>>, vector<1x256xf32>
      %14 = vector.broadcast %13 : vector<1x256xf32> to vector<128x256xf32>
      %15 = arith.addf %12, %14 : vector<128x256xf32>
      %16 = arith.truncf %15 : vector<128x256xf32> to vector<128x256xbf16>
      %c0_14 = arith.constant 0 : index
      %c0_15 = arith.constant 0 : index
      %17 = vector.load %arg6[%c0_14, %c0_15] : memref<128x256xbf16, #tpu.memory_space<vmem>>, vector<128x256xbf16>
      tpu.vector_store %arg6[%c0_14, %c0_15], %16 {strides = array<i32>} : memref<128x256xbf16, #tpu.memory_space<vmem>>, vector<128x256xbf16>,
    } else {
    }
    return
  }
  func.func @transform_0(%arg0: i32, %arg1: i32, %arg2: i32) -> (i32, i32) {
    %c0_i32 = arith.constant 0 : i32
    return %arg0, %arg2 : i32, i32
  }
  func.func @transform_1(%arg0: i32, %arg1: i32, %arg2: i32) -> (i32, i32) {
    %c0_i32 = arith.constant 0 : i32
    return %arg2, %arg1 : i32, i32
  }
  func.func @transform_2(%arg0: i32, %arg1: i32, %arg2: i32) -> (i32, i32) {
    %c0_i32 = arith.constant 0 : i32
    %c0_i32_0 = arith.constant 0 : i32
    return %c0_i32, %arg1 : i32, i32
  }
  func.func @transform_3(%arg0: i32, %arg1: i32, %arg2: i32) -> (i32, i32) {
    %c0_i32 = arith.constant 0 : i32
    return %arg0, %arg1 : i32, i32
  }
}

module attributes {stable_mosaic.version = 11 : i64} {
  func.func @_mm_kernel(%arg0: i32, %arg1: i32, %arg2: i32, %arg3: memref<128x640xbf16, #tpu.memory_space<vmem>>, %arg4: memref<640x128xbf16, #tpu.memory_space<vmem>>, %arg5: memref<1x128xf32, #tpu.memory_space<vmem>>, %arg6: memref<128x128xbf16, #tpu.memory_space<vmem>>, %arg7: memref<128x128xf32, #tpu.memory_space<vmem>>) attributes {dimension_semantics = [#tpu.dimension_semantics<parallel>, #tpu.dimension_semantics<parallel>, #tpu.dimension_semantics<arbitrary>], iteration_bounds = array<i64: 1, 1, 1>, scalar_prefetch = 0 : i64, scratch_operands = 1 : i64, tpu.core_type = #tpu.core_type<tc>, window_params = [{transform_indices = @transform_0, window_bounds = array<i64: 128, 640>}, {transform_indices = @transform_1, window_bounds = array<i64: 640, 128>}, {transform_indices = @transform_2, window_bounds = array<i64: 1, 128>}, {transform_indices = @transform_3, window_bounds = array<i64: 128, 128>}]} {
    %c0_i32 = arith.constant 0 : i32
    %0 = arith.cmpi eq, %arg2, %c0_i32 : i32
    %1 = arith.extui %0 : i1 to i32
    %c0_i32_0 = arith.constant 0 : i32
    %2 = arith.cmpi ne, %1, %c0_i32_0 : i32
    scf.if %2 {
      %cst_10 = arith.constant 0.000000e+00 : f32
      %12 = vector.broadcast %cst_10 : f32 to vector<128x128xf32>
      %c0_11 = arith.constant 0 : index
      %c0_12 = arith.constant 0 : index
      %13 = vector.load %arg7[%c0_11, %c0_12] : memref<128x128xf32, #tpu.memory_space<vmem>>, vector<128x128xf32>
      tpu.vector_store %arg7[%c0_11, %c0_12], %12 {strides = array<i32>} : memref<128x128xf32, #tpu.memory_space<vmem>>, vector<128x128xf32>,
    } else {
    }
    %c0 = arith.constant 0 : index
    %c0_1 = arith.constant 0 : index
    %3 = vector.load %arg7[%c0, %c0_1] : memref<128x128xf32, #tpu.memory_space<vmem>>, vector<128x128xf32>
    %c0_2 = arith.constant 0 : index
    %c0_3 = arith.constant 0 : index
    %4 = vector.load %arg3[%c0_2, %c0_3] : memref<128x640xbf16, #tpu.memory_space<vmem>>, vector<128x640xbf16>
    %c0_4 = arith.constant 0 : index
    %c0_5 = arith.constant 0 : index
    %5 = vector.load %arg4[%c0_4, %c0_5] : memref<640x128xbf16, #tpu.memory_space<vmem>>, vector<640x128xbf16>
    %cst = arith.constant dense<0.000000e+00> : vector<128x128xf32>
    %6 = tpu.matmul %4, %5, %cst {dimension_numbers = #tpu.dot_dimension_numbers<[1], [0], [0], [1], [0, 0, 1, 1], [], []>} : vector<128x640xbf16>, vector<640x128xbf16>, vector<128x128xf32> -> vector<128x128xf32>
    %7 = arith.addf %3, %6 : vector<128x128xf32>
    %c0_6 = arith.constant 0 : index
    %c0_7 = arith.constant 0 : index
    %8 = vector.load %arg7[%c0_6, %c0_7] : memref<128x128xf32, #tpu.memory_space<vmem>>, vector<128x128xf32>
    tpu.vector_store %arg7[%c0_6, %c0_7], %7 {strides = array<i32>} : memref<128x128xf32, #tpu.memory_space<vmem>>, vector<128x128xf32>,
    %c0_i32_8 = arith.constant 0 : i32
    %9 = arith.cmpi eq, %arg2, %c0_i32_8 : i32
    %10 = arith.extui %9 : i1 to i32
    %c0_i32_9 = arith.constant 0 : i32
    %11 = arith.cmpi ne, %10, %c0_i32_9 : i32
    scf.if %11 {
      %c0_10 = arith.constant 0 : index
      %c0_11 = arith.constant 0 : index
      %12 = vector.load %arg7[%c0_10, %c0_11] : memref<128x128xf32, #tpu.memory_space<vmem>>, vector<128x128xf32>
      %c0_12 = arith.constant 0 : index
      %c0_13 = arith.constant 0 : index
      %13 = vector.load %arg5[%c0_12, %c0_13] : memref<1x128xf32, #tpu.memory_space<vmem>>, vector<1x128xf32>
      %14 = vector.broadcast %13 : vector<1x128xf32> to vector<128x128xf32>
      %15 = arith.addf %12, %14 : vector<128x128xf32>
      %cst_14 = arith.constant 0.000000e+00 : f32
      %16 = vector.broadcast %cst_14 : f32 to vector<128x128xf32>
      %17 = arith.maximumf %15, %16 : vector<128x128xf32>
      %18 = arith.truncf %17 : vector<128x128xf32> to vector<128x128xbf16>
      %c0_15 = arith.constant 0 : index
      %c0_16 = arith.constant 0 : index
      %19 = vector.load %arg6[%c0_15, %c0_16] : memref<128x128xbf16, #tpu.memory_space<vmem>>, vector<128x128xbf16>
      tpu.vector_store %arg6[%c0_15, %c0_16], %18 {strides = array<i32>} : memref<128x128xbf16, #tpu.memory_space<vmem>>, vector<128x128xbf16>,
    } else {
    }
    return
  }
  func.func @transform_0(%arg0: i32, %arg1: i32, %arg2: i32) -> (i32, i32) {
    %c0_i32 = arith.constant 0 : i32
    return %arg0, %arg2 : i32, i32
  }
  func.func @transform_1(%arg0: i32, %arg1: i32, %arg2: i32) -> (i32, i32) {
    %c0_i32 = arith.constant 0 : i32
    return %arg2, %arg1 : i32, i32
  }
  func.func @transform_2(%arg0: i32, %arg1: i32, %arg2: i32) -> (i32, i32) {
    %c0_i32 = arith.constant 0 : i32
    %c0_i32_0 = arith.constant 0 : i32
    return %c0_i32, %arg1 : i32, i32
  }
  func.func @transform_3(%arg0: i32, %arg1: i32, %arg2: i32) -> (i32, i32) {
    %c0_i32 = arith.constant 0 : i32
    return %arg0, %arg1 : i32, i32
  }
}

module attributes {stable_mosaic.version = 11 : i64} {
  func.func @_mm_kernel(%arg0: i32, %arg1: i32, %arg2: i32, %arg3: memref<128x128xbf16, #tpu.memory_space<vmem>>, %arg4: memref<128x256xbf16, #tpu.memory_space<vmem>>, %arg5: memref<1x256xf32, #tpu.memory_space<vmem>>, %arg6: memref<128x256xbf16, #tpu.memory_space<vmem>>, %arg7: memref<128x256xbf16, #tpu.memory_space<vmem>>, %arg8: memref<128x256xf32, #tpu.memory_space<vmem>>) attributes {dimension_semantics = [#tpu.dimension_semantics<parallel>, #tpu.dimension_semantics<parallel>, #tpu.dimension_semantics<arbitrary>], iteration_bounds = array<i64: 1, 1, 1>, scalar_prefetch = 0 : i64, scratch_operands = 1 : i64, tpu.core_type = #tpu.core_type<tc>, window_params = [{transform_indices = @transform_0, window_bounds = array<i64: 128, 128>}, {transform_indices = @transform_1, window_bounds = array<i64: 128, 256>}, {transform_indices = @transform_2, window_bounds = array<i64: 1, 256>}, {transform_indices = @transform_3, window_bounds = array<i64: 128, 256>}, {transform_indices = @transform_4, window_bounds = array<i64: 128, 256>}]} {
    %c0_i32 = arith.constant 0 : i32
    %0 = arith.cmpi eq, %arg2, %c0_i32 : i32
    %1 = arith.extui %0 : i1 to i32
    %c0_i32_0 = arith.constant 0 : i32
    %2 = arith.cmpi ne, %1, %c0_i32_0 : i32
    scf.if %2 {
      %cst_10 = arith.constant 0.000000e+00 : f32
      %12 = vector.broadcast %cst_10 : f32 to vector<128x256xf32>
      %c0_11 = arith.constant 0 : index
      %c0_12 = arith.constant 0 : index
      %13 = vector.load %arg8[%c0_11, %c0_12] : memref<128x256xf32, #tpu.memory_space<vmem>>, vector<128x256xf32>
      tpu.vector_store %arg8[%c0_11, %c0_12], %12 {strides = array<i32>} : memref<128x256xf32, #tpu.memory_space<vmem>>, vector<128x256xf32>,
    } else {
    }
    %c0 = arith.constant 0 : index
    %c0_1 = arith.constant 0 : index
    %3 = vector.load %arg8[%c0, %c0_1] : memref<128x256xf32, #tpu.memory_space<vmem>>, vector<128x256xf32>
    %c0_2 = arith.constant 0 : index
    %c0_3 = arith.constant 0 : index
    %4 = vector.load %arg3[%c0_2, %c0_3] : memref<128x128xbf16, #tpu.memory_space<vmem>>, vector<128x128xbf16>
    %c0_4 = arith.constant 0 : index
    %c0_5 = arith.constant 0 : index
    %5 = vector.load %arg4[%c0_4, %c0_5] : memref<128x256xbf16, #tpu.memory_space<vmem>>, vector<128x256xbf16>
    %cst = arith.constant dense<0.000000e+00> : vector<128x256xf32>
    %6 = tpu.matmul %4, %5, %cst {dimension_numbers = #tpu.dot_dimension_numbers<[1], [0], [0], [1], [0, 0, 1, 1], [], []>} : vector<128x128xbf16>, vector<128x256xbf16>, vector<128x256xf32> -> vector<128x256xf32>
    %7 = arith.addf %3, %6 : vector<128x256xf32>
    %c0_6 = arith.constant 0 : index
    %c0_7 = arith.constant 0 : index
    %8 = vector.load %arg8[%c0_6, %c0_7] : memref<128x256xf32, #tpu.memory_space<vmem>>, vector<128x256xf32>
    tpu.vector_store %arg8[%c0_6, %c0_7], %7 {strides = array<i32>} : memref<128x256xf32, #tpu.memory_space<vmem>>, vector<128x256xf32>,
    %c0_i32_8 = arith.constant 0 : i32
    %9 = arith.cmpi eq, %arg2, %c0_i32_8 : i32
    %10 = arith.extui %9 : i1 to i32
    %c0_i32_9 = arith.constant 0 : i32
    %11 = arith.cmpi ne, %10, %c0_i32_9 : i32
    scf.if %11 {
      %c0_10 = arith.constant 0 : index
      %c0_11 = arith.constant 0 : index
      %12 = vector.load %arg8[%c0_10, %c0_11] : memref<128x256xf32, #tpu.memory_space<vmem>>, vector<128x256xf32>
      %c0_12 = arith.constant 0 : index
      %c0_13 = arith.constant 0 : index
      %13 = vector.load %arg5[%c0_12, %c0_13] : memref<1x256xf32, #tpu.memory_space<vmem>>, vector<1x256xf32>
      %14 = vector.broadcast %13 : vector<1x256xf32> to vector<128x256xf32>
      %15 = arith.addf %12, %14 : vector<128x256xf32>
      %c0_14 = arith.constant 0 : index
      %c0_15 = arith.constant 0 : index
      %16 = vector.load %arg6[%c0_14, %c0_15] : memref<128x256xbf16, #tpu.memory_space<vmem>>, vector<128x256xbf16>
      %17 = arith.extf %16 : vector<128x256xbf16> to vector<128x256xf32>
      %18 = arith.addf %15, %17 : vector<128x256xf32>
      %cst_16 = arith.constant 0.000000e+00 : f32
      %19 = vector.broadcast %cst_16 : f32 to vector<128x256xf32>
      %20 = arith.maximumf %18, %19 : vector<128x256xf32>
      %21 = arith.truncf %20 : vector<128x256xf32> to vector<128x256xbf16>
      %c0_17 = arith.constant 0 : index
      %c0_18 = arith.constant 0 : index
      %22 = vector.load %arg7[%c0_17, %c0_18] : memref<128x256xbf16, #tpu.memory_space<vmem>>, vector<128x256xbf16>
      tpu.vector_store %arg7[%c0_17, %c0_18], %21 {strides = array<i32>} : memref<128x256xbf16, #tpu.memory_space<vmem>>, vector<128x256xbf16>,
    } else {
    }
    return
  }
  func.func @transform_0(%arg0: i32, %arg1: i32, %arg2: i32) -> (i32, i32) {
    %c0_i32 = arith.constant 0 : i32
    return %arg0, %arg2 : i32, i32
  }
  func.func @transform_1(%arg0: i32, %arg1: i32, %arg2: i32) -> (i32, i32) {
    %c0_i32 = arith.constant 0 : i32
    return %arg2, %arg1 : i32, i32
  }
  func.func @transform_2(%arg0: i32, %arg1: i32, %arg2: i32) -> (i32, i32) {
    %c0_i32 = arith.constant 0 : i32
    %c0_i32_0 = arith.constant 0 : i32
    return %c0_i32, %arg1 : i32, i32
  }
  func.func @transform_3(%arg0: i32, %arg1: i32, %arg2: i32) -> (i32, i32) {
    %c0_i32 = arith.constant 0 : i32
    return %arg0, %arg1 : i32, i32
  }
  func.func @transform_4(%arg0: i32, %arg1: i32, %arg2: i32) -> (i32, i32) {
    %c0_i32 = arith.constant 0 : i32
    return %arg0, %arg1 : i32, i32
  }
}

module attributes {stable_mosaic.version = 11 : i64} {
  func.func @_mm_kernel(%arg0: i32, %arg1: i32, %arg2: i32, %arg3: memref<128x256xbf16, #tpu.memory_space<vmem>>, %arg4: memref<256x128xbf16, #tpu.memory_space<vmem>>, %arg5: memref<1x128xf32, #tpu.memory_space<vmem>>, %arg6: memref<128x128xbf16, #tpu.memory_space<vmem>>, %arg7: memref<128x128xf32, #tpu.memory_space<vmem>>) attributes {dimension_semantics = [#tpu.dimension_semantics<parallel>, #tpu.dimension_semantics<parallel>, #tpu.dimension_semantics<arbitrary>], iteration_bounds = array<i64: 1, 1, 1>, scalar_prefetch = 0 : i64, scratch_operands = 1 : i64, tpu.core_type = #tpu.core_type<tc>, window_params = [{transform_indices = @transform_0, window_bounds = array<i64: 128, 256>}, {transform_indices = @transform_1, window_bounds = array<i64: 256, 128>}, {transform_indices = @transform_2, window_bounds = array<i64: 1, 128>}, {transform_indices = @transform_3, window_bounds = array<i64: 128, 128>}]} {
    %c0_i32 = arith.constant 0 : i32
    %0 = arith.cmpi eq, %arg2, %c0_i32 : i32
    %1 = arith.extui %0 : i1 to i32
    %c0_i32_0 = arith.constant 0 : i32
    %2 = arith.cmpi ne, %1, %c0_i32_0 : i32
    scf.if %2 {
      %cst_10 = arith.constant 0.000000e+00 : f32
      %12 = vector.broadcast %cst_10 : f32 to vector<128x128xf32>
      %c0_11 = arith.constant 0 : index
      %c0_12 = arith.constant 0 : index
      %13 = vector.load %arg7[%c0_11, %c0_12] : memref<128x128xf32, #tpu.memory_space<vmem>>, vector<128x128xf32>
      tpu.vector_store %arg7[%c0_11, %c0_12], %12 {strides = array<i32>} : memref<128x128xf32, #tpu.memory_space<vmem>>, vector<128x128xf32>,
    } else {
    }
    %c0 = arith.constant 0 : index
    %c0_1 = arith.constant 0 : index
    %3 = vector.load %arg7[%c0, %c0_1] : memref<128x128xf32, #tpu.memory_space<vmem>>, vector<128x128xf32>
    %c0_2 = arith.constant 0 : index
    %c0_3 = arith.constant 0 : index
    %4 = vector.load %arg3[%c0_2, %c0_3] : memref<128x256xbf16, #tpu.memory_space<vmem>>, vector<128x256xbf16>
    %c0_4 = arith.constant 0 : index
    %c0_5 = arith.constant 0 : index
    %5 = vector.load %arg4[%c0_4, %c0_5] : memref<256x128xbf16, #tpu.memory_space<vmem>>, vector<256x128xbf16>
    %cst = arith.constant dense<0.000000e+00> : vector<128x128xf32>
    %6 = tpu.matmul %4, %5, %cst {dimension_numbers = #tpu.dot_dimension_numbers<[1], [0], [0], [1], [0, 0, 1, 1], [], []>} : vector<128x256xbf16>, vector<256x128xbf16>, vector<128x128xf32> -> vector<128x128xf32>
    %7 = arith.addf %3, %6 : vector<128x128xf32>
    %c0_6 = arith.constant 0 : index
    %c0_7 = arith.constant 0 : index
    %8 = vector.load %arg7[%c0_6, %c0_7] : memref<128x128xf32, #tpu.memory_space<vmem>>, vector<128x128xf32>
    tpu.vector_store %arg7[%c0_6, %c0_7], %7 {strides = array<i32>} : memref<128x128xf32, #tpu.memory_space<vmem>>, vector<128x128xf32>,
    %c0_i32_8 = arith.constant 0 : i32
    %9 = arith.cmpi eq, %arg2, %c0_i32_8 : i32
    %10 = arith.extui %9 : i1 to i32
    %c0_i32_9 = arith.constant 0 : i32
    %11 = arith.cmpi ne, %10, %c0_i32_9 : i32
    scf.if %11 {
      %c0_10 = arith.constant 0 : index
      %c0_11 = arith.constant 0 : index
      %12 = vector.load %arg7[%c0_10, %c0_11] : memref<128x128xf32, #tpu.memory_space<vmem>>, vector<128x128xf32>
      %c0_12 = arith.constant 0 : index
      %c0_13 = arith.constant 0 : index
      %13 = vector.load %arg5[%c0_12, %c0_13] : memref<1x128xf32, #tpu.memory_space<vmem>>, vector<1x128xf32>
      %14 = vector.broadcast %13 : vector<1x128xf32> to vector<128x128xf32>
      %15 = arith.addf %12, %14 : vector<128x128xf32>
      %cst_14 = arith.constant 0.000000e+00 : f32
      %16 = vector.broadcast %cst_14 : f32 to vector<128x128xf32>
      %17 = arith.maximumf %15, %16 : vector<128x128xf32>
      %18 = arith.truncf %17 : vector<128x128xf32> to vector<128x128xbf16>
      %c0_15 = arith.constant 0 : index
      %c0_16 = arith.constant 0 : index
      %19 = vector.load %arg6[%c0_15, %c0_16] : memref<128x128xbf16, #tpu.memory_space<vmem>>, vector<128x128xbf16>
      tpu.vector_store %arg6[%c0_15, %c0_16], %18 {strides = array<i32>} : memref<128x128xbf16, #tpu.memory_space<vmem>>, vector<128x128xbf16>,
    } else {
    }
    return
  }
  func.func @transform_0(%arg0: i32, %arg1: i32, %arg2: i32) -> (i32, i32) {
    %c0_i32 = arith.constant 0 : i32
    return %arg0, %arg2 : i32, i32
  }
  func.func @transform_1(%arg0: i32, %arg1: i32, %arg2: i32) -> (i32, i32) {
    %c0_i32 = arith.constant 0 : i32
    return %arg2, %arg1 : i32, i32
  }
  func.func @transform_2(%arg0: i32, %arg1: i32, %arg2: i32) -> (i32, i32) {
    %c0_i32 = arith.constant 0 : i32
    %c0_i32_0 = arith.constant 0 : i32
    return %c0_i32, %arg1 : i32, i32
  }
  func.func @transform_3(%arg0: i32, %arg1: i32, %arg2: i32) -> (i32, i32) {
    %c0_i32 = arith.constant 0 : i32
    return %arg0, %arg1 : i32, i32
  }
}

module attributes {stable_mosaic.version = 11 : i64} {
  func.func @_mm_kernel(%arg0: i32, %arg1: i32, %arg2: i32, %arg3: memref<32x256xbf16, #tpu.memory_space<vmem>>, %arg4: memref<256x256xbf16, #tpu.memory_space<vmem>>, %arg5: memref<1x256xf32, #tpu.memory_space<vmem>>, %arg6: memref<32x256xbf16, #tpu.memory_space<vmem>>, %arg7: memref<32x256xf32, #tpu.memory_space<vmem>>) attributes {dimension_semantics = [#tpu.dimension_semantics<parallel>, #tpu.dimension_semantics<parallel>, #tpu.dimension_semantics<arbitrary>], iteration_bounds = array<i64: 1, 2, 1>, scalar_prefetch = 0 : i64, scratch_operands = 1 : i64, tpu.core_type = #tpu.core_type<tc>, window_params = [{transform_indices = @transform_0, window_bounds = array<i64: 32, 256>}, {transform_indices = @transform_1, window_bounds = array<i64: 256, 256>}, {transform_indices = @transform_2, window_bounds = array<i64: 1, 256>}, {transform_indices = @transform_3, window_bounds = array<i64: 32, 256>}]} {
    %c0_i32 = arith.constant 0 : i32
    %0 = arith.cmpi eq, %arg2, %c0_i32 : i32
    %1 = arith.extui %0 : i1 to i32
    %c0_i32_0 = arith.constant 0 : i32
    %2 = arith.cmpi ne, %1, %c0_i32_0 : i32
    scf.if %2 {
      %cst_10 = arith.constant 0.000000e+00 : f32
      %12 = vector.broadcast %cst_10 : f32 to vector<32x256xf32>
      %c0_11 = arith.constant 0 : index
      %c0_12 = arith.constant 0 : index
      %13 = vector.load %arg7[%c0_11, %c0_12] : memref<32x256xf32, #tpu.memory_space<vmem>>, vector<32x256xf32>
      tpu.vector_store %arg7[%c0_11, %c0_12], %12 {strides = array<i32>} : memref<32x256xf32, #tpu.memory_space<vmem>>, vector<32x256xf32>,
    } else {
    }
    %c0 = arith.constant 0 : index
    %c0_1 = arith.constant 0 : index
    %3 = vector.load %arg7[%c0, %c0_1] : memref<32x256xf32, #tpu.memory_space<vmem>>, vector<32x256xf32>
    %c0_2 = arith.constant 0 : index
    %c0_3 = arith.constant 0 : index
    %4 = vector.load %arg3[%c0_2, %c0_3] : memref<32x256xbf16, #tpu.memory_space<vmem>>, vector<32x256xbf16>
    %c0_4 = arith.constant 0 : index
    %c0_5 = arith.constant 0 : index
    %5 = vector.load %arg4[%c0_4, %c0_5] : memref<256x256xbf16, #tpu.memory_space<vmem>>, vector<256x256xbf16>
    %cst = arith.constant dense<0.000000e+00> : vector<32x256xf32>
    %6 = tpu.matmul %4, %5, %cst {dimension_numbers = #tpu.dot_dimension_numbers<[1], [0], [0], [1], [0, 0, 1, 1], [], []>} : vector<32x256xbf16>, vector<256x256xbf16>, vector<32x256xf32> -> vector<32x256xf32>
    %7 = arith.addf %3, %6 : vector<32x256xf32>
    %c0_6 = arith.constant 0 : index
    %c0_7 = arith.constant 0 : index
    %8 = vector.load %arg7[%c0_6, %c0_7] : memref<32x256xf32, #tpu.memory_space<vmem>>, vector<32x256xf32>
    tpu.vector_store %arg7[%c0_6, %c0_7], %7 {strides = array<i32>} : memref<32x256xf32, #tpu.memory_space<vmem>>, vector<32x256xf32>,
    %c0_i32_8 = arith.constant 0 : i32
    %9 = arith.cmpi eq, %arg2, %c0_i32_8 : i32
    %10 = arith.extui %9 : i1 to i32
    %c0_i32_9 = arith.constant 0 : i32
    %11 = arith.cmpi ne, %10, %c0_i32_9 : i32
    scf.if %11 {
      %c0_10 = arith.constant 0 : index
      %c0_11 = arith.constant 0 : index
      %12 = vector.load %arg7[%c0_10, %c0_11] : memref<32x256xf32, #tpu.memory_space<vmem>>, vector<32x256xf32>
      %c0_12 = arith.constant 0 : index
      %c0_13 = arith.constant 0 : index
      %13 = vector.load %arg5[%c0_12, %c0_13] : memref<1x256xf32, #tpu.memory_space<vmem>>, vector<1x256xf32>
      %14 = vector.broadcast %13 : vector<1x256xf32> to vector<32x256xf32>
      %15 = arith.addf %12, %14 : vector<32x256xf32>
      %16 = arith.truncf %15 : vector<32x256xf32> to vector<32x256xbf16>
      %c0_14 = arith.constant 0 : index
      %c0_15 = arith.constant 0 : index
      %17 = vector.load %arg6[%c0_14, %c0_15] : memref<32x256xbf16, #tpu.memory_space<vmem>>, vector<32x256xbf16>
      tpu.vector_store %arg6[%c0_14, %c0_15], %16 {strides = array<i32>} : memref<32x256xbf16, #tpu.memory_space<vmem>>, vector<32x256xbf16>,
    } else {
    }
    return
  }
  func.func @transform_0(%arg0: i32, %arg1: i32, %arg2: i32) -> (i32, i32) {
    %c0_i32 = arith.constant 0 : i32
    return %arg0, %arg2 : i32, i32
  }
  func.func @transform_1(%arg0: i32, %arg1: i32, %arg2: i32) -> (i32, i32) {
    %c0_i32 = arith.constant 0 : i32
    return %arg2, %arg1 : i32, i32
  }
  func.func @transform_2(%arg0: i32, %arg1: i32, %arg2: i32) -> (i32, i32) {
    %c0_i32 = arith.constant 0 : i32
    %c0_i32_0 = arith.constant 0 : i32
    return %c0_i32, %arg1 : i32, i32
  }
  func.func @transform_3(%arg0: i32, %arg1: i32, %arg2: i32) -> (i32, i32) {
    %c0_i32 = arith.constant 0 : i32
    return %arg0, %arg1 : i32, i32
  }
}

module attributes {stable_mosaic.version = 11 : i64} {
  func.func @_mm_kernel(%arg0: i32, %arg1: i32, %arg2: i32, %arg3: memref<32x384xbf16, #tpu.memory_space<vmem>>, %arg4: memref<384x128xbf16, #tpu.memory_space<vmem>>, %arg5: memref<1x128xf32, #tpu.memory_space<vmem>>, %arg6: memref<32x128xbf16, #tpu.memory_space<vmem>>, %arg7: memref<32x128xf32, #tpu.memory_space<vmem>>) attributes {dimension_semantics = [#tpu.dimension_semantics<parallel>, #tpu.dimension_semantics<parallel>, #tpu.dimension_semantics<arbitrary>], iteration_bounds = array<i64: 1, 1, 3>, scalar_prefetch = 0 : i64, scratch_operands = 1 : i64, tpu.core_type = #tpu.core_type<tc>, window_params = [{transform_indices = @transform_0, window_bounds = array<i64: 32, 384>}, {transform_indices = @transform_1, window_bounds = array<i64: 384, 128>}, {transform_indices = @transform_2, window_bounds = array<i64: 1, 128>}, {transform_indices = @transform_3, window_bounds = array<i64: 32, 128>}]} {
    %c0_i32 = arith.constant 0 : i32
    %0 = arith.cmpi eq, %arg2, %c0_i32 : i32
    %1 = arith.extui %0 : i1 to i32
    %c0_i32_0 = arith.constant 0 : i32
    %2 = arith.cmpi ne, %1, %c0_i32_0 : i32
    scf.if %2 {
      %cst_9 = arith.constant 0.000000e+00 : f32
      %12 = vector.broadcast %cst_9 : f32 to vector<32x128xf32>
      %c0_10 = arith.constant 0 : index
      %c0_11 = arith.constant 0 : index
      %13 = vector.load %arg7[%c0_10, %c0_11] : memref<32x128xf32, #tpu.memory_space<vmem>>, vector<32x128xf32>
      tpu.vector_store %arg7[%c0_10, %c0_11], %12 {strides = array<i32>} : memref<32x128xf32, #tpu.memory_space<vmem>>, vector<32x128xf32>,
    } else {
    }
    %c0 = arith.constant 0 : index
    %c0_1 = arith.constant 0 : index
    %3 = vector.load %arg7[%c0, %c0_1] : memref<32x128xf32, #tpu.memory_space<vmem>>, vector<32x128xf32>
    %c0_2 = arith.constant 0 : index
    %c0_3 = arith.constant 0 : index
    %4 = vector.load %arg3[%c0_2, %c0_3] : memref<32x384xbf16, #tpu.memory_space<vmem>>, vector<32x384xbf16>
    %c0_4 = arith.constant 0 : index
    %c0_5 = arith.constant 0 : index
    %5 = vector.load %arg4[%c0_4, %c0_5] : memref<384x128xbf16, #tpu.memory_space<vmem>>, vector<384x128xbf16>
    %cst = arith.constant dense<0.000000e+00> : vector<32x128xf32>
    %6 = tpu.matmul %4, %5, %cst {dimension_numbers = #tpu.dot_dimension_numbers<[1], [0], [0], [1], [0, 0, 1, 1], [], []>} : vector<32x384xbf16>, vector<384x128xbf16>, vector<32x128xf32> -> vector<32x128xf32>
    %7 = arith.addf %3, %6 : vector<32x128xf32>
    %c0_6 = arith.constant 0 : index
    %c0_7 = arith.constant 0 : index
    %8 = vector.load %arg7[%c0_6, %c0_7] : memref<32x128xf32, #tpu.memory_space<vmem>>, vector<32x128xf32>
    tpu.vector_store %arg7[%c0_6, %c0_7], %7 {strides = array<i32>} : memref<32x128xf32, #tpu.memory_space<vmem>>, vector<32x128xf32>,
    %c2_i32 = arith.constant 2 : i32
    %9 = arith.cmpi eq, %arg2, %c2_i32 : i32
    %10 = arith.extui %9 : i1 to i32
    %c0_i32_8 = arith.constant 0 : i32
    %11 = arith.cmpi ne, %10, %c0_i32_8 : i32
    scf.if %11 {
      %c0_9 = arith.constant 0 : index
      %c0_10 = arith.constant 0 : index
      %12 = vector.load %arg7[%c0_9, %c0_10] : memref<32x128xf32, #tpu.memory_space<vmem>>, vector<32x128xf32>
      %c0_11 = arith.constant 0 : index
      %c0_12 = arith.constant 0 : index
      %13 = vector.load %arg5[%c0_11, %c0_12] : memref<1x128xf32, #tpu.memory_space<vmem>>, vector<1x128xf32>
      %14 = vector.broadcast %13 : vector<1x128xf32> to vector<32x128xf32>
      %15 = arith.addf %12, %14 : vector<32x128xf32>
      %cst_13 = arith.constant 0.000000e+00 : f32
      %16 = vector.broadcast %cst_13 : f32 to vector<32x128xf32>
      %17 = arith.maximumf %15, %16 : vector<32x128xf32>
      %18 = arith.truncf %17 : vector<32x128xf32> to vector<32x128xbf16>
      %c0_14 = arith.constant 0 : index
      %c0_15 = arith.constant 0 : index
      %19 = vector.load %arg6[%c0_14, %c0_15] : memref<32x128xbf16, #tpu.memory_space<vmem>>, vector<32x128xbf16>
      tpu.vector_store %arg6[%c0_14, %c0_15], %18 {strides = array<i32>} : memref<32x128xbf16, #tpu.memory_space<vmem>>, vector<32x128xbf16>,
    } else {
    }
    return
  }
  func.func @transform_0(%arg0: i32, %arg1: i32, %arg2: i32) -> (i32, i32) {
    %c0_i32 = arith.constant 0 : i32
    return %arg0, %arg2 : i32, i32
  }
  func.func @transform_1(%arg0: i32, %arg1: i32, %arg2: i32) -> (i32, i32) {
    %c0_i32 = arith.constant 0 : i32
    return %arg2, %arg1 : i32, i32
  }
  func.func @transform_2(%arg0: i32, %arg1: i32, %arg2: i32) -> (i32, i32) {
    %c0_i32 = arith.constant 0 : i32
    %c0_i32_0 = arith.constant 0 : i32
    return %c0_i32, %arg1 : i32, i32
  }
  func.func @transform_3(%arg0: i32, %arg1: i32, %arg2: i32) -> (i32, i32) {
    %c0_i32 = arith.constant 0 : i32
    return %arg0, %arg1 : i32, i32
  }
}

module attributes {stable_mosaic.version = 11 : i64} {
  func.func @_mm_kernel(%arg0: i32, %arg1: i32, %arg2: i32, %arg3: memref<32x512xbf16, #tpu.memory_space<vmem>>, %arg4: memref<512x128xbf16, #tpu.memory_space<vmem>>, %arg5: memref<1x128xf32, #tpu.memory_space<vmem>>, %arg6: memref<32x128xbf16, #tpu.memory_space<vmem>>, %arg7: memref<32x128xf32, #tpu.memory_space<vmem>>) attributes {dimension_semantics = [#tpu.dimension_semantics<parallel>, #tpu.dimension_semantics<parallel>, #tpu.dimension_semantics<arbitrary>], iteration_bounds = array<i64: 1, 1, 1>, scalar_prefetch = 0 : i64, scratch_operands = 1 : i64, tpu.core_type = #tpu.core_type<tc>, window_params = [{transform_indices = @transform_0, window_bounds = array<i64: 32, 512>}, {transform_indices = @transform_1, window_bounds = array<i64: 512, 128>}, {transform_indices = @transform_2, window_bounds = array<i64: 1, 128>}, {transform_indices = @transform_3, window_bounds = array<i64: 32, 128>}]} {
    %c0_i32 = arith.constant 0 : i32
    %0 = arith.cmpi eq, %arg2, %c0_i32 : i32
    %1 = arith.extui %0 : i1 to i32
    %c0_i32_0 = arith.constant 0 : i32
    %2 = arith.cmpi ne, %1, %c0_i32_0 : i32
    scf.if %2 {
      %cst_10 = arith.constant 0.000000e+00 : f32
      %12 = vector.broadcast %cst_10 : f32 to vector<32x128xf32>
      %c0_11 = arith.constant 0 : index
      %c0_12 = arith.constant 0 : index
      %13 = vector.load %arg7[%c0_11, %c0_12] : memref<32x128xf32, #tpu.memory_space<vmem>>, vector<32x128xf32>
      tpu.vector_store %arg7[%c0_11, %c0_12], %12 {strides = array<i32>} : memref<32x128xf32, #tpu.memory_space<vmem>>, vector<32x128xf32>,
    } else {
    }
    %c0 = arith.constant 0 : index
    %c0_1 = arith.constant 0 : index
    %3 = vector.load %arg7[%c0, %c0_1] : memref<32x128xf32, #tpu.memory_space<vmem>>, vector<32x128xf32>
    %c0_2 = arith.constant 0 : index
    %c0_3 = arith.constant 0 : index
    %4 = vector.load %arg3[%c0_2, %c0_3] : memref<32x512xbf16, #tpu.memory_space<vmem>>, vector<32x512xbf16>
    %c0_4 = arith.constant 0 : index
    %c0_5 = arith.constant 0 : index
    %5 = vector.load %arg4[%c0_4, %c0_5] : memref<512x128xbf16, #tpu.memory_space<vmem>>, vector<512x128xbf16>
    %cst = arith.constant dense<0.000000e+00> : vector<32x128xf32>
    %6 = tpu.matmul %4, %5, %cst {dimension_numbers = #tpu.dot_dimension_numbers<[1], [0], [0], [1], [0, 0, 1, 1], [], []>} : vector<32x512xbf16>, vector<512x128xbf16>, vector<32x128xf32> -> vector<32x128xf32>
    %7 = arith.addf %3, %6 : vector<32x128xf32>
    %c0_6 = arith.constant 0 : index
    %c0_7 = arith.constant 0 : index
    %8 = vector.load %arg7[%c0_6, %c0_7] : memref<32x128xf32, #tpu.memory_space<vmem>>, vector<32x128xf32>
    tpu.vector_store %arg7[%c0_6, %c0_7], %7 {strides = array<i32>} : memref<32x128xf32, #tpu.memory_space<vmem>>, vector<32x128xf32>,
    %c0_i32_8 = arith.constant 0 : i32
    %9 = arith.cmpi eq, %arg2, %c0_i32_8 : i32
    %10 = arith.extui %9 : i1 to i32
    %c0_i32_9 = arith.constant 0 : i32
    %11 = arith.cmpi ne, %10, %c0_i32_9 : i32
    scf.if %11 {
      %c0_10 = arith.constant 0 : index
      %c0_11 = arith.constant 0 : index
      %12 = vector.load %arg7[%c0_10, %c0_11] : memref<32x128xf32, #tpu.memory_space<vmem>>, vector<32x128xf32>
      %c0_12 = arith.constant 0 : index
      %c0_13 = arith.constant 0 : index
      %13 = vector.load %arg5[%c0_12, %c0_13] : memref<1x128xf32, #tpu.memory_space<vmem>>, vector<1x128xf32>
      %14 = vector.broadcast %13 : vector<1x128xf32> to vector<32x128xf32>
      %15 = arith.addf %12, %14 : vector<32x128xf32>
      %cst_14 = arith.constant 0.000000e+00 : f32
      %16 = vector.broadcast %cst_14 : f32 to vector<32x128xf32>
      %17 = arith.maximumf %15, %16 : vector<32x128xf32>
      %18 = arith.truncf %17 : vector<32x128xf32> to vector<32x128xbf16>
      %c0_15 = arith.constant 0 : index
      %c0_16 = arith.constant 0 : index
      %19 = vector.load %arg6[%c0_15, %c0_16] : memref<32x128xbf16, #tpu.memory_space<vmem>>, vector<32x128xbf16>
      tpu.vector_store %arg6[%c0_15, %c0_16], %18 {strides = array<i32>} : memref<32x128xbf16, #tpu.memory_space<vmem>>, vector<32x128xbf16>,
    } else {
    }
    return
  }
  func.func @transform_0(%arg0: i32, %arg1: i32, %arg2: i32) -> (i32, i32) {
    %c0_i32 = arith.constant 0 : i32
    return %arg0, %arg2 : i32, i32
  }
  func.func @transform_1(%arg0: i32, %arg1: i32, %arg2: i32) -> (i32, i32) {
    %c0_i32 = arith.constant 0 : i32
    return %arg2, %arg1 : i32, i32
  }
  func.func @transform_2(%arg0: i32, %arg1: i32, %arg2: i32) -> (i32, i32) {
    %c0_i32 = arith.constant 0 : i32
    %c0_i32_0 = arith.constant 0 : i32
    return %c0_i32, %arg1 : i32, i32
  }
  func.func @transform_3(%arg0: i32, %arg1: i32, %arg2: i32) -> (i32, i32) {
    %c0_i32 = arith.constant 0 : i32
    return %arg0, %arg1 : i32, i32
  }
}

module attributes {stable_mosaic.version = 11 : i64} {
  func.func @_mm_kernel(%arg0: i32, %arg1: i32, %arg2: i32, %arg3: memref<32x128xbf16, #tpu.memory_space<vmem>>, %arg4: memref<128x256xbf16, #tpu.memory_space<vmem>>, %arg5: memref<1x256xf32, #tpu.memory_space<vmem>>, %arg6: memref<32x256xbf16, #tpu.memory_space<vmem>>, %arg7: memref<32x256xbf16, #tpu.memory_space<vmem>>, %arg8: memref<32x256xf32, #tpu.memory_space<vmem>>) attributes {dimension_semantics = [#tpu.dimension_semantics<parallel>, #tpu.dimension_semantics<parallel>, #tpu.dimension_semantics<arbitrary>], iteration_bounds = array<i64: 1, 2, 1>, scalar_prefetch = 0 : i64, scratch_operands = 1 : i64, tpu.core_type = #tpu.core_type<tc>, window_params = [{transform_indices = @transform_0, window_bounds = array<i64: 32, 128>}, {transform_indices = @transform_1, window_bounds = array<i64: 128, 256>}, {transform_indices = @transform_2, window_bounds = array<i64: 1, 256>}, {transform_indices = @transform_3, window_bounds = array<i64: 32, 256>}, {transform_indices = @transform_4, window_bounds = array<i64: 32, 256>}]} {
    %c0_i32 = arith.constant 0 : i32
    %0 = arith.cmpi eq, %arg2, %c0_i32 : i32
    %1 = arith.extui %0 : i1 to i32
    %c0_i32_0 = arith.constant 0 : i32
    %2 = arith.cmpi ne, %1, %c0_i32_0 : i32
    scf.if %2 {
      %cst_10 = arith.constant 0.000000e+00 : f32
      %12 = vector.broadcast %cst_10 : f32 to vector<32x256xf32>
      %c0_11 = arith.constant 0 : index
      %c0_12 = arith.constant 0 : index
      %13 = vector.load %arg8[%c0_11, %c0_12] : memref<32x256xf32, #tpu.memory_space<vmem>>, vector<32x256xf32>
      tpu.vector_store %arg8[%c0_11, %c0_12], %12 {strides = array<i32>} : memref<32x256xf32, #tpu.memory_space<vmem>>, vector<32x256xf32>,
    } else {
    }
    %c0 = arith.constant 0 : index
    %c0_1 = arith.constant 0 : index
    %3 = vector.load %arg8[%c0, %c0_1] : memref<32x256xf32, #tpu.memory_space<vmem>>, vector<32x256xf32>
    %c0_2 = arith.constant 0 : index
    %c0_3 = arith.constant 0 : index
    %4 = vector.load %arg3[%c0_2, %c0_3] : memref<32x128xbf16, #tpu.memory_space<vmem>>, vector<32x128xbf16>
    %c0_4 = arith.constant 0 : index
    %c0_5 = arith.constant 0 : index
    %5 = vector.load %arg4[%c0_4, %c0_5] : memref<128x256xbf16, #tpu.memory_space<vmem>>, vector<128x256xbf16>
    %cst = arith.constant dense<0.000000e+00> : vector<32x256xf32>
    %6 = tpu.matmul %4, %5, %cst {dimension_numbers = #tpu.dot_dimension_numbers<[1], [0], [0], [1], [0, 0, 1, 1], [], []>} : vector<32x128xbf16>, vector<128x256xbf16>, vector<32x256xf32> -> vector<32x256xf32>
    %7 = arith.addf %3, %6 : vector<32x256xf32>
    %c0_6 = arith.constant 0 : index
    %c0_7 = arith.constant 0 : index
    %8 = vector.load %arg8[%c0_6, %c0_7] : memref<32x256xf32, #tpu.memory_space<vmem>>, vector<32x256xf32>
    tpu.vector_store %arg8[%c0_6, %c0_7], %7 {strides = array<i32>} : memref<32x256xf32, #tpu.memory_space<vmem>>, vector<32x256xf32>,
    %c0_i32_8 = arith.constant 0 : i32
    %9 = arith.cmpi eq, %arg2, %c0_i32_8 : i32
    %10 = arith.extui %9 : i1 to i32
    %c0_i32_9 = arith.constant 0 : i32
    %11 = arith.cmpi ne, %10, %c0_i32_9 : i32
    scf.if %11 {
      %c0_10 = arith.constant 0 : index
      %c0_11 = arith.constant 0 : index
      %12 = vector.load %arg8[%c0_10, %c0_11] : memref<32x256xf32, #tpu.memory_space<vmem>>, vector<32x256xf32>
      %c0_12 = arith.constant 0 : index
      %c0_13 = arith.constant 0 : index
      %13 = vector.load %arg5[%c0_12, %c0_13] : memref<1x256xf32, #tpu.memory_space<vmem>>, vector<1x256xf32>
      %14 = vector.broadcast %13 : vector<1x256xf32> to vector<32x256xf32>
      %15 = arith.addf %12, %14 : vector<32x256xf32>
      %c0_14 = arith.constant 0 : index
      %c0_15 = arith.constant 0 : index
      %16 = vector.load %arg6[%c0_14, %c0_15] : memref<32x256xbf16, #tpu.memory_space<vmem>>, vector<32x256xbf16>
      %17 = arith.extf %16 : vector<32x256xbf16> to vector<32x256xf32>
      %18 = arith.addf %15, %17 : vector<32x256xf32>
      %cst_16 = arith.constant 0.000000e+00 : f32
      %19 = vector.broadcast %cst_16 : f32 to vector<32x256xf32>
      %20 = arith.maximumf %18, %19 : vector<32x256xf32>
      %21 = arith.truncf %20 : vector<32x256xf32> to vector<32x256xbf16>
      %c0_17 = arith.constant 0 : index
      %c0_18 = arith.constant 0 : index
      %22 = vector.load %arg7[%c0_17, %c0_18] : memref<32x256xbf16, #tpu.memory_space<vmem>>, vector<32x256xbf16>
      tpu.vector_store %arg7[%c0_17, %c0_18], %21 {strides = array<i32>} : memref<32x256xbf16, #tpu.memory_space<vmem>>, vector<32x256xbf16>,
    } else {
    }
    return
  }
  func.func @transform_0(%arg0: i32, %arg1: i32, %arg2: i32) -> (i32, i32) {
    %c0_i32 = arith.constant 0 : i32
    return %arg0, %arg2 : i32, i32
  }
  func.func @transform_1(%arg0: i32, %arg1: i32, %arg2: i32) -> (i32, i32) {
    %c0_i32 = arith.constant 0 : i32
    return %arg2, %arg1 : i32, i32
  }
  func.func @transform_2(%arg0: i32, %arg1: i32, %arg2: i32) -> (i32, i32) {
    %c0_i32 = arith.constant 0 : i32
    %c0_i32_0 = arith.constant 0 : i32
    return %c0_i32, %arg1 : i32, i32
  }
  func.func @transform_3(%arg0: i32, %arg1: i32, %arg2: i32) -> (i32, i32) {
    %c0_i32 = arith.constant 0 : i32
    return %arg0, %arg1 : i32, i32
  }
  func.func @transform_4(%arg0: i32, %arg1: i32, %arg2: i32) -> (i32, i32) {
    %c0_i32 = arith.constant 0 : i32
    return %arg0, %arg1 : i32, i32
  }
}

module attributes {stable_mosaic.version = 11 : i64} {
  func.func @_mm_kernel(%arg0: i32, %arg1: i32, %arg2: i32, %arg3: memref<8x512xbf16, #tpu.memory_space<vmem>>, %arg4: memref<512x128xbf16, #tpu.memory_space<vmem>>, %arg5: memref<1x128xf32, #tpu.memory_space<vmem>>, %arg6: memref<8x128xf32, #tpu.memory_space<vmem>>, %arg7: memref<8x128xf32, #tpu.memory_space<vmem>>) attributes {dimension_semantics = [#tpu.dimension_semantics<parallel>, #tpu.dimension_semantics<parallel>, #tpu.dimension_semantics<arbitrary>], iteration_bounds = array<i64: 1, 1, 1>, scalar_prefetch = 0 : i64, scratch_operands = 1 : i64, tpu.core_type = #tpu.core_type<tc>, window_params = [{transform_indices = @transform_0, window_bounds = array<i64: 8, 512>}, {transform_indices = @transform_1, window_bounds = array<i64: 512, 128>}, {transform_indices = @transform_2, window_bounds = array<i64: 1, 128>}, {transform_indices = @transform_3, window_bounds = array<i64: 8, 128>}]} {
    %c0_i32 = arith.constant 0 : i32
    %0 = arith.cmpi eq, %arg2, %c0_i32 : i32
    %1 = arith.extui %0 : i1 to i32
    %c0_i32_0 = arith.constant 0 : i32
    %2 = arith.cmpi ne, %1, %c0_i32_0 : i32
    scf.if %2 {
      %cst_10 = arith.constant 0.000000e+00 : f32
      %12 = vector.broadcast %cst_10 : f32 to vector<8x128xf32>
      %c0_11 = arith.constant 0 : index
      %c0_12 = arith.constant 0 : index
      %13 = vector.load %arg7[%c0_11, %c0_12] : memref<8x128xf32, #tpu.memory_space<vmem>>, vector<8x128xf32>
      tpu.vector_store %arg7[%c0_11, %c0_12], %12 {strides = array<i32>} : memref<8x128xf32, #tpu.memory_space<vmem>>, vector<8x128xf32>,
    } else {
    }
    %c0 = arith.constant 0 : index
    %c0_1 = arith.constant 0 : index
    %3 = vector.load %arg7[%c0, %c0_1] : memref<8x128xf32, #tpu.memory_space<vmem>>, vector<8x128xf32>
    %c0_2 = arith.constant 0 : index
    %c0_3 = arith.constant 0 : index
    %4 = vector.load %arg3[%c0_2, %c0_3] : memref<8x512xbf16, #tpu.memory_space<vmem>>, vector<8x512xbf16>
    %c0_4 = arith.constant 0 : index
    %c0_5 = arith.constant 0 : index
    %5 = vector.load %arg4[%c0_4, %c0_5] : memref<512x128xbf16, #tpu.memory_space<vmem>>, vector<512x128xbf16>
    %cst = arith.constant dense<0.000000e+00> : vector<8x128xf32>
    %6 = tpu.matmul %4, %5, %cst {dimension_numbers = #tpu.dot_dimension_numbers<[1], [0], [0], [1], [0, 0, 1, 1], [], []>} : vector<8x512xbf16>, vector<512x128xbf16>, vector<8x128xf32> -> vector<8x128xf32>
    %7 = arith.addf %3, %6 : vector<8x128xf32>
    %c0_6 = arith.constant 0 : index
    %c0_7 = arith.constant 0 : index
    %8 = vector.load %arg7[%c0_6, %c0_7] : memref<8x128xf32, #tpu.memory_space<vmem>>, vector<8x128xf32>
    tpu.vector_store %arg7[%c0_6, %c0_7], %7 {strides = array<i32>} : memref<8x128xf32, #tpu.memory_space<vmem>>, vector<8x128xf32>,
    %c0_i32_8 = arith.constant 0 : i32
    %9 = arith.cmpi eq, %arg2, %c0_i32_8 : i32
    %10 = arith.extui %9 : i1 to i32
    %c0_i32_9 = arith.constant 0 : i32
    %11 = arith.cmpi ne, %10, %c0_i32_9 : i32
    scf.if %11 {
      %c0_10 = arith.constant 0 : index
      %c0_11 = arith.constant 0 : index
      %12 = vector.load %arg7[%c0_10, %c0_11] : memref<8x128xf32, #tpu.memory_space<vmem>>, vector<8x128xf32>
      %c0_12 = arith.constant 0 : index
      %c0_13 = arith.constant 0 : index
      %13 = vector.load %arg5[%c0_12, %c0_13] : memref<1x128xf32, #tpu.memory_space<vmem>>, vector<1x128xf32>
      %14 = vector.broadcast %13 : vector<1x128xf32> to vector<8x128xf32>
      %15 = arith.addf %12, %14 : vector<8x128xf32>
      %16 = arith.negf %15 : vector<8x128xf32>
      %17 = math.exp %16 : vector<8x128xf32>
      %cst_14 = arith.constant 1.000000e+00 : f32
      %18 = vector.broadcast %cst_14 : f32 to vector<8x128xf32>
      %19 = arith.addf %18, %17 : vector<8x128xf32>
      %20 = arith.divf %18, %19 : vector<8x128xf32>
      %c0_15 = arith.constant 0 : index
      %c0_16 = arith.constant 0 : index
      %21 = vector.load %arg6[%c0_15, %c0_16] : memref<8x128xf32, #tpu.memory_space<vmem>>, vector<8x128xf32>
      tpu.vector_store %arg6[%c0_15, %c0_16], %20 {strides = array<i32>} : memref<8x128xf32, #tpu.memory_space<vmem>>, vector<8x128xf32>,
    } else {
    }
    return
  }
  func.func @transform_0(%arg0: i32, %arg1: i32, %arg2: i32) -> (i32, i32) {
    %c0_i32 = arith.constant 0 : i32
    return %arg0, %arg2 : i32, i32
  }
  func.func @transform_1(%arg0: i32, %arg1: i32, %arg2: i32) -> (i32, i32) {
    %c0_i32 = arith.constant 0 : i32
    return %arg2, %arg1 : i32, i32
  }
  func.func @transform_2(%arg0: i32, %arg1: i32, %arg2: i32) -> (i32, i32) {
    %c0_i32 = arith.constant 0 : i32
    %c0_i32_0 = arith.constant 0 : i32
    return %c0_i32, %arg1 : i32, i32
  }
  func.func @transform_3(%arg0: i32, %arg1: i32, %arg2: i32) -> (i32, i32) {
    %c0_i32 = arith.constant 0 : i32
    return %arg0, %arg1 : i32, i32
  }
}

</mosaic_0001>

<llo_original>
// kernel: a_call__.25
$region0: #{a_call__.25}
  #allocation0 [shape = 'u32[]', space=smem, size = 0x4, offset = 0x4, fixed_abs, tag = 'smem constant byte address 0x4 - core index']
  #allocation1 [shape = 'u32[144,128]{1,0:T(1,128)}', space=vmem, size = 0x12000, scoped, tag = 'internal scratch']
  #allocation2 [shape = 'f32[256,128]{1,0:T(8,128)}', space=vmem, size = 0x20000, scoped, tag = 'scratch operand']
  %s0 = inlined_call_operand.vmem [shape: bf16[512,256], index: 0, kind: input, shape index: {}]
  %s1 = inlined_call_operand.vmem [shape: bf16[256,128], index: 1, kind: input, shape index: {}]
  %s2 = inlined_call_operand.vmem [shape: f32[1,128], index: 2, kind: input, shape index: {}]
  %s3 = inlined_call_operand.vmem [shape: bf16[512,128], index: 3, kind: output, shape index: {}]
  %s4 = sld [smem:[#allocation0]]
  $region53: #{a_call__.25} parent=0
    _
  %s6 = ssub.s32 1, %s4
  %s7 = scalar_select 0, %s6, %s4
  loop: start=0, step=1, limit=4
  $region2: #{a_call__.25} parent=0 // loop_pre_header
    _
  $region3: #{a_call__.25} parent=0 // loop_header
    %s9 = sphi 0, %s13
    %p10 = scmp.ge.s32.totalorder %s9, 4
    %s16 = sphi 0, %s35
    %s17 = sphi 0, %s31
    %s18 = sphi 0, %s27
    %s19 = sphi 0, %s16
    %s20 = sphi 0, %s17
    %s21 = sphi 0, %s18
    %s22 = sphi 0, %s19
    %s23 = sphi 0, %s20
    %s24 = sphi 0, %s21
    %s40 = sphi 0, %s42
    %s43 = sphi 0, %s40
    %s44 = sphi 0, %s43
    %s60 = sphi 0, %s44
    %s68 = sphi 0, %s70
    %s71 = sphi 0, %s68
    %s72 = sphi 0, %s71
    %s88 = sphi 0, %s72
    %s94 = sphi 0, %s96
    %s97 = sphi 0, %s94
    %s98 = sphi 0, %s97
    %s114 = sphi 0, %s98
    %s122 = sphi 0, %s124
    %s125 = sphi 0, %s122
    %s126 = sphi 0, %s125
    %s142 = sphi 0, %s126
  $region4: #{a_call__.25} parent=0 // loop_header_branch
    %12 = sbr.rel (%p10) target = $region8
  $region5: #{a_call__.25} parent=0 // loop_body
    %s14 = ssub.s32 %s9, 1
    %s15 = ssub.s32 %s9, 2
    %s25 = sadd.s32 1, %s18
    %p26 = scmp.ge.s32.totalorder %s25, 1
    %s27 = scalar_select %p26, 0, %s25
    %s28 = sadd.s32 1, %s17
    %s29 = scalar_select %p26, %s28, %s17
    %p30 = scmp.ge.s32.totalorder %s29, 1
    %s31 = scalar_select %p30, 0, %s29
    %s32 = sadd.s32 1, %s16
    %s33 = scalar_select %p30, %s32, %s16
    %p34 = scmp.ge.s32.totalorder %s33, 2
    %s35 = scalar_select %p34, 0, %s33
    %s36 = ssub.s32 %s16, %s35
    %s37 = ssub.s32 %s18, %s27
    %s38 = sor.u32 %s36, %s37
    %p39 = scmp.eq.s32.totalorder %s38, 0
    %s41 = sadd.s32 %s40, 1
    %s42 = scalar_select %p39, %s40, %s41
    %p45 = pneg %p39
    %p46 = scmp.eq.s32.totalorder %s9, 1
    %p47 = por %p45, %p46
    %p48 = scmp.ne.s32.totalorder %s40, %s43
    %p49 = scmp.eq.s32.totalorder %s9, 0
    %p50 = por %p48, %p49
    %p51 = scmp.ne.s32.totalorder %s40, %s43
    %p52 = scmp.eq.s32.totalorder %s14, 1
    %p53 = por %p51, %p52
    %p54 = scmp.ne.s32.totalorder %s43, %s44
    %p55 = scmp.eq.s32.totalorder %s14, 0
    %p56 = por %p54, %p55
    %p57 = scmp.ne.s32.totalorder %s43, %s44
    %p58 = scmp.eq.s32.totalorder %s15, 1
    %p59 = por %p57, %p58
    %p61 = scmp.ne.s32.totalorder %s44, %s60
    %p62 = scmp.eq.s32.totalorder %s15, 0
    %p63 = por %p61, %p62
    %s64 = ssub.s32 %s18, %s27
    %s65 = ssub.s32 %s17, %s31
    %s66 = sor.u32 %s64, %s65
    %p67 = scmp.eq.s32.totalorder %s66, 0
    %s69 = sadd.s32 %s68, 1
    %s70 = scalar_select %p67, %s68, %s69
    %p73 = pneg %p67
    %p74 = scmp.eq.s32.totalorder %s9, 1
    %p75 = por %p73, %p74
    %p76 = scmp.ne.s32.totalorder %s68, %s71
    %p77 = scmp.eq.s32.totalorder %s9, 0
    %p78 = por %p76, %p77
    %p79 = scmp.ne.s32.totalorder %s68, %s71
    %p80 = scmp.eq.s32.totalorder %s14, 1
    %p81 = por %p79, %p80
    %p82 = scmp.ne.s32.totalorder %s71, %s72
    %p83 = scmp.eq.s32.totalorder %s14, 0
    %p84 = por %p82, %p83
    %p85 = scmp.ne.s32.totalorder %s71, %s72
    %p86 = scmp.eq.s32.totalorder %s15, 1
    %p87 = por %p85, %p86
    %p89 = scmp.ne.s32.totalorder %s72, %s88
    %p90 = scmp.eq.s32.totalorder %s15, 0
    %p91 = por %p89, %p90
    %s92 = ssub.s32 %s17, %s31
    %p93 = scmp.eq.s32.totalorder %s92, 0
    %s95 = sadd.s32 %s94, 1
    %s96 = scalar_select %p93, %s94, %s95
    %p99 = pneg %p93
    %p100 = scmp.eq.s32.totalorder %s9, 1
    %p101 = por %p99, %p100
    %p102 = scmp.ne.s32.totalorder %s94, %s97
    %p103 = scmp.eq.s32.totalorder %s9, 0
    %p104 = por %p102, %p103
    %p105 = scmp.ne.s32.totalorder %s94, %s97
    %p106 = scmp.eq.s32.totalorder %s14, 1
    %p107 = por %p105, %p106
    %p108 = scmp.ne.s32.totalorder %s97, %s98
    %p109 = scmp.eq.s32.totalorder %s14, 0
    %p110 = por %p108, %p109
    %p111 = scmp.ne.s32.totalorder %s97, %s98
    %p112 = scmp.eq.s32.totalorder %s15, 1
    %p113 = por %p111, %p112
    %p115 = scmp.ne.s32.totalorder %s98, %s114
    %p116 = scmp.eq.s32.totalorder %s15, 0
    %p117 = por %p115, %p116
    %s118 = ssub.s32 %s16, %s35
    %s119 = ssub.s32 %s17, %s31
    %s120 = sor.u32 %s118, %s119
    %p121 = scmp.eq.s32.totalorder %s120, 0
    %s123 = sadd.s32 %s122, 1
    %s124 = scalar_select %p121, %s122, %s123
    %p127 = pneg %p121
    %p128 = scmp.eq.s32.totalorder %s9, 1
    %p129 = por %p127, %p128
    %p130 = scmp.ne.s32.totalorder %s122, %s125
    %p131 = scmp.eq.s32.totalorder %s9, 0
    %p132 = por %p130, %p131
    %p133 = scmp.ne.s32.totalorder %s122, %s125
    %p134 = scmp.eq.s32.totalorder %s14, 1
    %p135 = por %p133, %p134
    %p136 = scmp.ne.s32.totalorder %s125, %s126
    %p137 = scmp.eq.s32.totalorder %s14, 0
    %p138 = por %p136, %p137
    %p139 = scmp.ne.s32.totalorder %s125, %s126
    %p140 = scmp.eq.s32.totalorder %s15, 1
    %p141 = por %p139, %p140
    %p143 = scmp.ne.s32.totalorder %s126, %s142
    %p144 = scmp.eq.s32.totalorder %s15, 0
    %p145 = por %p143, %p144
    %p146 = scmp.le.s32.totalorder 1, %s9
    %p147 = scmp.lt.s32.totalorder %s9, 3
    %p148 = pnand %p146, %p147
    %p149 = pneg %p148
    // Predicated region
    $region9: #{a_call__.25} parent=5 // pred_check
      _
    $region10: #{a_call__.25} parent=5 // pred_check_branch
      %151 = sbr.rel (%p148) target = $region12
    $region11: #{a_call__.25} parent=5 // pred_region
      %s152 = ssub.s32 %s9, 1
      // Predicated region
      $region13: #{a_call__.25} parent=11 // pred_check
        %p153 = pneg %p84
      $region14: #{a_call__.25} parent=11 // pred_check_branch
        %155 = sbr.rel (%p153) target = $region16
      $region15: #{a_call__.25} parent=11 // pred_region
        %s156 = smul.u32 32, %s21
        %p157 = scmp.lt.s32.totalorder %s156, 31
        %s158 = scalar_select %p157, %s156, 31
        %p159 = scmp.lt.s32.totalorder %s20, 0
        %s160 = scalar_select %p159, %s20, 0
        %s161 = sadd.s32 %s160, %s158
        %s162 = smul.addr %s161, 4
        %s163 = scalar_lea.vmem %s1, %s162
        %s164 = smul.u32 32, %s21
      $region16: #{a_call__.25} parent=11 // pred_fallthru
        _
      // Predicated region
      $region17: #{a_call__.25} parent=11 // pred_check
        %p165 = pneg %p110
      $region18: #{a_call__.25} parent=11 // pred_check_branch
        %167 = sbr.rel (%p165) target = $region20
      $region19: #{a_call__.25} parent=11 // pred_region
        %p168 = scmp.lt.s32.totalorder %s20, 0
        %s169 = scalar_select %p168, %s20, 0
        %s170 = scalar_lea.vmem %s2, %s169
      $region20: #{a_call__.25} parent=11 // pred_fallthru
        _
    $region12: #{a_call__.25} parent=5 // pred_fallthru
      _
    %p171 = scmp.lt.s32.totalorder %s9, 2
    // Predicated region
    $region21: #{a_call__.25} parent=5 // pred_check
      %p172 = pneg %p171
    $region22: #{a_call__.25} parent=5 // pred_check_branch
      %174 = sbr.rel (%p172) target = $region24
    $region23: #{a_call__.25} parent=5 // pred_region
      // Predicated region
      $region25: #{a_call__.25} parent=23 // pred_check
        %p175 = pneg %p50
      $region26: #{a_call__.25} parent=23 // pred_check_branch
        %177 = sbr.rel (%p175) target = $region28
      $region27: #{a_call__.25} parent=23 // pred_region
        %s178 = smul.u32 32, %s16
        %s179 = smul.u32 2, %s18
        %p180 = scmp.lt.s32.totalorder %s178, 63
        %s181 = scalar_select %p180, %s178, 63
        %p182 = scmp.lt.s32.totalorder %s179, 1
        %s183 = scalar_select %p182, %s179, 1
        %s184 = smul.addr %s181, 2
        %s185 = sadd.s32 %s183, %s184
        %s186 = smul.addr %s185, 4
        %s187 = scalar_lea.vmem %s0, %s186
        %s188 = smul.u32 32, %s16
        %s189 = smul.u32 2, %s18
      $region28: #{a_call__.25} parent=23 // pred_fallthru
        _
    $region24: #{a_call__.25} parent=5 // pred_fallthru
      _
    %p190 = scmp.le.s32.totalorder 1, %s9
    %p191 = scmp.lt.s32.totalorder %s9, 3
    %p192 = pnand %p190, %p191
    %p193 = pneg %p192
    // Predicated region
    $region29: #{a_call__.25} parent=5 // pred_check
      _
    $region30: #{a_call__.25} parent=5 // pred_check_branch
      %195 = sbr.rel (%p192) target = $region32
    $region31: #{a_call__.25} parent=5 // pred_region
      %s196 = ssub.s32 %s9, 1
      %s197 = smul.u32 32, %s19
      %s198 = smul.u32 2, %s21
      %p199 = scmp.lt.s32.totalorder %s197, 63
      %s200 = scalar_select %p199, %s197, 63
      %p201 = scmp.lt.s32.totalorder %s198, 1
      %s202 = scalar_select %p201, %s198, 1
      %s203 = smul.addr %s200, 2
      %s204 = sadd.s32 %s202, %s203
      %s205 = smul.addr %s204, 4
      %s206 = scalar_lea.vmem %s0, %s205
      %p207 = pneg %p56
      %p208 = pneg %p53
      %s209 = smul.u32 32, %s21
      %p210 = scmp.lt.s32.totalorder %s209, 31
      %s211 = scalar_select %p210, %s209, 31
      %p212 = scmp.lt.s32.totalorder %s20, 0
      %s213 = scalar_select %p212, %s20, 0
      %s214 = sadd.s32 %s213, %s211
      %s215 = smul.addr %s214, 4
      %s216 = scalar_lea.vmem %s1, %s215
      %p217 = pneg %p84
      %p218 = pneg %p81
      %p219 = scmp.lt.s32.totalorder %s20, 0
      %s220 = scalar_select %p219, %s20, 0
      %s221 = scalar_lea.vmem %s2, %s220
      %p222 = pneg %p110
      %p223 = pneg %p107
      %p224 = pneg %p138
      %p225 = pneg %p135
      %s226 = smul.u32 32, %s19
      %p227 = scmp.lt.s32.totalorder %s226, 63
      %s228 = scalar_select %p227, %s226, 63
      %p229 = scmp.lt.s32.totalorder %s20, 0
      %s230 = scalar_select %p229, %s20, 0
      %s231 = sadd.s32 %s230, %s228
      %s232 = smul.addr %s231, 4
      %s233 = scalar_lea.vmem %s3, %s232
      %s234 = smul.u32 32, %s19
      %s235 = smul.u32 2, %s21
      %p236 = scmp.lt.s32.totalorder %s234, 63
      %s237 = scalar_select %p236, %s234, 63
      %p238 = scmp.lt.s32.totalorder %s235, 1
      %s239 = scalar_select %p238, %s235, 1
      %s240 = smul.addr %s237, 2
      %s241 = sadd.s32 %s239, %s240
      %s242 = smul.addr %s241, 4
      %s243 = scalar_lea.vmem %s0, %s242
      %s244 = smul.u32 32, %s19
      %s245 = smul.u32 2, %s21
      %s246 = smul.u32 32, %s21
      %p247 = scmp.lt.s32.totalorder %s246, 31
      %s248 = scalar_select %p247, %s246, 31
      %p249 = scmp.lt.s32.totalorder %s20, 0
      %s250 = scalar_select %p249, %s20, 0
      %s251 = sadd.s32 %s250, %s248
      %s252 = smul.addr %s251, 4
      %s253 = scalar_lea.vmem %s1, %s252
      %s254 = smul.u32 32, %s21
      %p255 = scmp.lt.s32.totalorder %s20, 0
      %s256 = scalar_select %p255, %s20, 0
      %s257 = scalar_lea.vmem %s2, %s256
      %s258 = smul.u32 32, %s19
      %p259 = scmp.lt.s32.totalorder %s258, 63
      %s260 = scalar_select %p259, %s258, 63
      %p261 = scmp.lt.s32.totalorder %s20, 0
      %s262 = scalar_select %p261, %s20, 0
      %s263 = sadd.s32 %s262, %s260
      %s264 = smul.addr %s263, 4
      %s265 = scalar_lea.vmem %s3, %s264
      %s266 = smul.u32 32, %s19
      %p268 = scmp.eq.s32.totalorder %s21, 0
      // Predicated region
      $region33: #{a_call__.25} parent=31 // pred_check
        %p269 = pneg %p268
      $region34: #{a_call__.25} parent=31 // pred_check_branch
        %271 = sbr.rel (%p269) target = $region36
      $region35: #{a_call__.25} parent=31 // pred_region
        %272 = vst [vmem:[#allocation2] sm:$0xff] 0.0
        %273 = vst [vmem:[#allocation2 + $0x8] sm:$0xff] 0.0
        %274 = vst [vmem:[#allocation2 + $0x10] sm:$0xff] 0.0
        %275 = vst [vmem:[#allocation2 + $0x18] sm:$0xff] 0.0
        %276 = vst [vmem:[#allocation2 + $0x20] sm:$0xff] 0.0
        %277 = vst [vmem:[#allocation2 + $0x28] sm:$0xff] 0.0
        %278 = vst [vmem:[#allocation2 + $0x30] sm:$0xff] 0.0
        %279 = vst [vmem:[#allocation2 + $0x38] sm:$0xff] 0.0
        %280 = vst [vmem:[#allocation2 + $0x40] sm:$0xff] 0.0
        %281 = vst [vmem:[#allocation2 + $0x48] sm:$0xff] 0.0
        %282 = vst [vmem:[#allocation2 + $0x50] sm:$0xff] 0.0
        %283 = vst [vmem:[#allocation2 + $0x58] sm:$0xff] 0.0
        %284 = vst [vmem:[#allocation2 + $0x60] sm:$0xff] 0.0
        %285 = vst [vmem:[#allocation2 + $0x68] sm:$0xff] 0.0
        %286 = vst [vmem:[#allocation2 + $0x70] sm:$0xff] 0.0
        %287 = vst [vmem:[#allocation2 + $0x78] sm:$0xff] 0.0
        %288 = vst [vmem:[#allocation2 + $0x80] sm:$0xff] 0.0
        %289 = vst [vmem:[#allocation2 + $0x88] sm:$0xff] 0.0
        %290 = vst [vmem:[#allocation2 + $0x90] sm:$0xff] 0.0
        %291 = vst [vmem:[#allocation2 + $0x98] sm:$0xff] 0.0
        %292 = vst [vmem:[#allocation2 + $0xa0] sm:$0xff] 0.0
        %293 = vst [vmem:[#allocation2 + $0xa8] sm:$0xff] 0.0
        %294 = vst [vmem:[#allocation2 + $0xb0] sm:$0xff] 0.0
        %295 = vst [vmem:[#allocation2 + $0xb8] sm:$0xff] 0.0
        %296 = vst [vmem:[#allocation2 + $0xc0] sm:$0xff] 0.0
        %297 = vst [vmem:[#allocation2 + $0xc8] sm:$0xff] 0.0
        %298 = vst [vmem:[#allocation2 + $0xd0] sm:$0xff] 0.0
        %299 = vst [vmem:[#allocation2 + $0xd8] sm:$0xff] 0.0
        %300 = vst [vmem:[#allocation2 + $0xe0] sm:$0xff] 0.0
        %301 = vst [vmem:[#allocation2 + $0xe8] sm:$0xff] 0.0
        %302 = vst [vmem:[#allocation2 + $0xf0] sm:$0xff] 0.0
        %303 = vst [vmem:[#allocation2 + $0xf8] sm:$0xff] 0.0
      $region36: #{a_call__.25} parent=31 // pred_fallthru
        _
      %v304 = vld [vmem:[#allocation2] sm:$0xff]
      %v305 = vld [vmem:[#allocation2 + $0x8] sm:$0xff]
      %v306 = vld [vmem:[#allocation2 + $0x10] sm:$0xff]
      %v307 = vld [vmem:[#allocation2 + $0x18] sm:$0xff]
      %v308 = vld [vmem:[#allocation2 + $0x20] sm:$0xff]
      %v309 = vld [vmem:[#allocation2 + $0x28] sm:$0xff]
      %v310 = vld [vmem:[#allocation2 + $0x30] sm:$0xff]
      %v311 = vld [vmem:[#allocation2 + $0x38] sm:$0xff]
      %v312 = vld [vmem:[#allocation2 + $0x40] sm:$0xff]
      %v313 = vld [vmem:[#allocation2 + $0x48] sm:$0xff]
      %v314 = vld [vmem:[#allocation2 + $0x50] sm:$0xff]
      %v315 = vld [vmem:[#allocation2 + $0x58] sm:$0xff]
      %v316 = vld [vmem:[#allocation2 + $0x60] sm:$0xff]
      %v317 = vld [vmem:[#allocation2 + $0x68] sm:$0xff]
      %v318 = vld [vmem:[#allocation2 + $0x70] sm:$0xff]
      %v319 = vld [vmem:[#allocation2 + $0x78] sm:$0xff]
      %v320 = vld [vmem:[#allocation2 + $0x80] sm:$0xff]
      %v321 = vld [vmem:[#allocation2 + $0x88] sm:$0xff]
      %v322 = vld [vmem:[#allocation2 + $0x90] sm:$0xff]
      %v323 = vld [vmem:[#allocation2 + $0x98] sm:$0xff]
      %v324 = vld [vmem:[#allocation2 + $0xa0] sm:$0xff]
      %v325 = vld [vmem:[#allocation2 + $0xa8] sm:$0xff]
      %v326 = vld [vmem:[#allocation2 + $0xb0] sm:$0xff]
      %v327 = vld [vmem:[#allocation2 + $0xb8] sm:$0xff]
      %v328 = vld [vmem:[#allocation2 + $0xc0] sm:$0xff]
      %v329 = vld [vmem:[#allocation2 + $0xc8] sm:$0xff]
      %v330 = vld [vmem:[#allocation2 + $0xd0] sm:$0xff]
      %v331 = vld [vmem:[#allocation2 + $0xd8] sm:$0xff]
      %v332 = vld [vmem:[#allocation2 + $0xe0] sm:$0xff]
      %v333 = vld [vmem:[#allocation2 + $0xe8] sm:$0xff]
      %v334 = vld [vmem:[#allocation2 + $0xf0] sm:$0xff]
      %v335 = vld [vmem:[#allocation2 + $0xf8] sm:$0xff]
      %v336 = vld [vmem:[%s243] sm:$0xff]
      %v337 = vld [vmem:[%s243 + $0x8] sm:$0xff]
      %v338 = vld [vmem:[%s243 + $0x10] sm:$0xff]
      %v339 = vld [vmem:[%s243 + $0x18] sm:$0xff]
      %v340 = vld [vmem:[%s243 + $0x20] sm:$0xff]
      %v341 = vld [vmem:[%s243 + $0x28] sm:$0xff]
      %v342 = vld [vmem:[%s243 + $0x30] sm:$0xff]
      %v343 = vld [vmem:[%s243 + $0x38] sm:$0xff]
      %v344 = vld [vmem:[%s243 + $0x40] sm:$0xff]
      %v345 = vld [vmem:[%s243 + $0x48] sm:$0xff]
      %v346 = vld [vmem:[%s243 + $0x50] sm:$0xff]
      %v347 = vld [vmem:[%s243 + $0x58] sm:$0xff]
      %v348 = vld [vmem:[%s243 + $0x60] sm:$0xff]
      %v349 = vld [vmem:[%s243 + $0x68] sm:$0xff]
      %v350 = vld [vmem:[%s243 + $0x70] sm:$0xff]
      %v351 = vld [vmem:[%s243 + $0x78] sm:$0xff]
      %v352 = vld [vmem:[%s243 + $0x80] sm:$0xff]
      %v353 = vld [vmem:[%s243 + $0x88] sm:$0xff]
      %v354 = vld [vmem:[%s243 + $0x90] sm:$0xff]
      %v355 = vld [vmem:[%s243 + $0x98] sm:$0xff]
      %v356 = vld [vmem:[%s243 + $0xa0] sm:$0xff]
      %v357 = vld [vmem:[%s243 + $0xa8] sm:$0xff]
      %v358 = vld [vmem:[%s243 + $0xb0] sm:$0xff]
      %v359 = vld [vmem:[%s243 + $0xb8] sm:$0xff]
      %v360 = vld [vmem:[%s243 + $0xc0] sm:$0xff]
      %v361 = vld [vmem:[%s243 + $0xc8] sm:$0xff]
      %v362 = vld [vmem:[%s243 + $0xd0] sm:$0xff]
      %v363 = vld [vmem:[%s243 + $0xd8] sm:$0xff]
      %v364 = vld [vmem:[%s243 + $0xe0] sm:$0xff]
      %v365 = vld [vmem:[%s243 + $0xe8] sm:$0xff]
      %v366 = vld [vmem:[%s243 + $0xf0] sm:$0xff]
      %v367 = vld [vmem:[%s243 + $0xf8] sm:$0xff]
      %v368 = vld [vmem:[%s253] sm:$0xf]
      %v369 = vld [vmem:[%s253 + $0x4] sm:$0xf]
      %v370 = vld [vmem:[%s253 + $0x8] sm:$0xf]
      %v371 = vld [vmem:[%s253 + $0xc] sm:$0xf]
      %v372 = vld [vmem:[%s253 + $0x10] sm:$0xf]
      %v373 = vld [vmem:[%s253 + $0x14] sm:$0xf]
      %v374 = vld [vmem:[%s253 + $0x18] sm:$0xf]
      %v375 = vld [vmem:[%s253 + $0x1c] sm:$0xf]
      %v376 = vld [vmem:[%s253 + $0x20] sm:$0xf]
      %v377 = vld [vmem:[%s253 + $0x24] sm:$0xf]
      %v378 = vld [vmem:[%s253 + $0x28] sm:$0xf]
      %v379 = vld [vmem:[%s253 + $0x2c] sm:$0xf]
      %v380 = vld [vmem:[%s253 + $0x30] sm:$0xf]
      %v381 = vld [vmem:[%s253 + $0x34] sm:$0xf]
      %v382 = vld [vmem:[%s253 + $0x38] sm:$0xf]
      %v383 = vld [vmem:[%s253 + $0x3c] sm:$0xf]
      %v384 = vld [vmem:[%s253 + $0x40] sm:$0xf]
      %v385 = vld [vmem:[%s253 + $0x44] sm:$0xf]
      %v386 = vld [vmem:[%s253 + $0x48] sm:$0xf]
      %v387 = vld [vmem:[%s253 + $0x4c] sm:$0xf]
      %v388 = vld [vmem:[%s253 + $0x50] sm:$0xf]
      %v389 = vld [vmem:[%s253 + $0x54] sm:$0xf]
      %v390 = vld [vmem:[%s253 + $0x58] sm:$0xf]
      %v391 = vld [vmem:[%s253 + $0x5c] sm:$0xf]
      %v392 = vld [vmem:[%s253 + $0x60] sm:$0xf]
      %v393 = vld [vmem:[%s253 + $0x64] sm:$0xf]
      %v394 = vld [vmem:[%s253 + $0x68] sm:$0xf]
      %v395 = vld [vmem:[%s253 + $0x6c] sm:$0xf]
      %v396 = vld [vmem:[%s253 + $0x70] sm:$0xf]
      %v397 = vld [vmem:[%s253 + $0x74] sm:$0xf]
      %v398 = vld [vmem:[%s253 + $0x78] sm:$0xf]
      %v399 = vld [vmem:[%s253 + $0x7c] sm:$0xf]
      %v432 = vunpack.c.l.b16 %v336
      %v433 = vunpack.c.h.b16 %v336
      %v434 = vunpack.c.l.b16 %v337
      %v435 = vunpack.c.h.b16 %v337
      %v436 = vunpack.c.l.b16 %v338
      %v437 = vunpack.c.h.b16 %v338
      %v438 = vunpack.c.l.b16 %v339
      %v439 = vunpack.c.h.b16 %v339
      %v440 = vunpack.c.l.b16 %v340
      %v441 = vunpack.c.h.b16 %v340
      %v442 = vunpack.c.l.b16 %v341
      %v443 = vunpack.c.h.b16 %v341
      %v444 = vunpack.c.l.b16 %v342
      %v445 = vunpack.c.h.b16 %v342
      %v446 = vunpack.c.l.b16 %v343
      %v447 = vunpack.c.h.b16 %v343
      %v448 = vunpack.c.l.b16 %v344
      %v449 = vunpack.c.h.b16 %v344
      %v450 = vunpack.c.l.b16 %v345
      %v451 = vunpack.c.h.b16 %v345
      %v452 = vunpack.c.l.b16 %v346
      %v453 = vunpack.c.h.b16 %v346
      %v454 = vunpack.c.l.b16 %v347
      %v455 = vunpack.c.h.b16 %v347
      %v456 = vunpack.c.l.b16 %v348
      %v457 = vunpack.c.h.b16 %v348
      %v458 = vunpack.c.l.b16 %v349
      %v459 = vunpack.c.h.b16 %v349
      %v460 = vunpack.c.l.b16 %v350
      %v461 = vunpack.c.h.b16 %v350
      %v462 = vunpack.c.l.b16 %v351
      %v463 = vunpack.c.h.b16 %v351
      %v464 = vunpack.c.l.b16 %v352
      %v465 = vunpack.c.h.b16 %v352
      %v466 = vunpack.c.l.b16 %v353
      %v467 = vunpack.c.h.b16 %v353
      %v468 = vunpack.c.l.b16 %v354
      %v469 = vunpack.c.h.b16 %v354
      %v470 = vunpack.c.l.b16 %v355
      %v471 = vunpack.c.h.b16 %v355
      %v472 = vunpack.c.l.b16 %v356
      %v473 = vunpack.c.h.b16 %v356
      %v474 = vunpack.c.l.b16 %v357
      %v475 = vunpack.c.h.b16 %v357
      %v476 = vunpack.c.l.b16 %v358
      %v477 = vunpack.c.h.b16 %v358
      %v478 = vunpack.c.l.b16 %v359
      %v479 = vunpack.c.h.b16 %v359
      %v480 = vunpack.c.l.b16 %v360
      %v481 = vunpack.c.h.b16 %v360
      %v482 = vunpack.c.l.b16 %v361
      %v483 = vunpack.c.h.b16 %v361
      %v484 = vunpack.c.l.b16 %v362
      %v485 = vunpack.c.h.b16 %v362
      %v486 = vunpack.c.l.b16 %v363
      %v487 = vunpack.c.h.b16 %v363
      %v488 = vunpack.c.l.b16 %v364
      %v489 = vunpack.c.h.b16 %v364
      %v490 = vunpack.c.l.b16 %v365
      %v491 = vunpack.c.h.b16 %v365
      %v492 = vunpack.c.l.b16 %v366
      %v493 = vunpack.c.h.b16 %v366
      %v494 = vunpack.c.l.b16 %v367
      %v495 = vunpack.c.h.b16 %v367
      %v496 = vpack.c.b16 %v434, %v432
      %v497 = vpack.c.b16 %v435, %v433
      %v498 = vpack.c.b16 %v438, %v436
      %v499 = vpack.c.b16 %v439, %v437
      %v500 = vpack.c.b16 %v442, %v440
      %v501 = vpack.c.b16 %v443, %v441
      %v502 = vpack.c.b16 %v446, %v444
      %v503 = vpack.c.b16 %v447, %v445
      %v504 = vpack.c.b16 %v450, %v448
      %v505 = vpack.c.b16 %v451, %v449
      %v506 = vpack.c.b16 %v454, %v452
      %v507 = vpack.c.b16 %v455, %v453
      %v508 = vpack.c.b16 %v458, %v456
      %v509 = vpack.c.b16 %v459, %v457
      %v510 = vpack.c.b16 %v462, %v460
      %v511 = vpack.c.b16 %v463, %v461
      %v512 = vpack.c.b16 %v466, %v464
      %v513 = vpack.c.b16 %v467, %v465
      %v514 = vpack.c.b16 %v470, %v468
      %v515 = vpack.c.b16 %v471, %v469
      %v516 = vpack.c.b16 %v474, %v472
      %v517 = vpack.c.b16 %v475, %v473
      %v518 = vpack.c.b16 %v478, %v476
      %v519 = vpack.c.b16 %v479, %v477
      %v520 = vpack.c.b16 %v482, %v480
      %v521 = vpack.c.b16 %v483, %v481
      %v522 = vpack.c.b16 %v486, %v484
      %v523 = vpack.c.b16 %v487, %v485
      %v524 = vpack.c.b16 %v490, %v488
      %v525 = vpack.c.b16 %v491, %v489
      %v526 = vpack.c.b16 %v494, %v492
      %v527 = vpack.c.b16 %v495, %v493
      %v592 = vunpack.c.l.b16 %v368
      %v593 = vunpack.c.l.b16 %v369
      %v594 = vunpack.c.l.b16 %v370
      %v595 = vunpack.c.l.b16 %v371
      %v596 = vunpack.c.l.b16 %v372
      %v597 = vunpack.c.l.b16 %v373
      %v598 = vunpack.c.l.b16 %v374
      %v599 = vunpack.c.l.b16 %v375
      %v600 = vunpack.c.l.b16 %v376
      %v601 = vunpack.c.l.b16 %v377
      %v602 = vunpack.c.l.b16 %v378
      %v603 = vunpack.c.l.b16 %v379
      %v604 = vunpack.c.l.b16 %v380
      %v605 = vunpack.c.l.b16 %v381
      %v606 = vunpack.c.l.b16 %v382
      %v607 = vunpack.c.l.b16 %v383
      %v608 = vunpack.c.l.b16 %v384
      %v609 = vunpack.c.l.b16 %v385
      %v610 = vunpack.c.l.b16 %v386
      %v611 = vunpack.c.l.b16 %v387
      %v612 = vunpack.c.l.b16 %v388
      %v613 = vunpack.c.l.b16 %v389
      %v614 = vunpack.c.l.b16 %v390
      %v615 = vunpack.c.l.b16 %v391
      %v616 = vunpack.c.l.b16 %v392
      %v617 = vunpack.c.l.b16 %v393
      %v618 = vunpack.c.l.b16 %v394
      %v619 = vunpack.c.l.b16 %v395
      %v620 = vunpack.c.l.b16 %v396
      %v621 = vunpack.c.l.b16 %v397
      %v622 = vunpack.c.l.b16 %v398
      %v623 = vunpack.c.l.b16 %v399
      %v624 = vpack.c.b16 %v593, %v592
      %v625 = vpack.c.b16 %v595, %v594
      %v626 = vpack.c.b16 %v597, %v596
      %v627 = vpack.c.b16 %v599, %v598
      %v628 = vpack.c.b16 %v601, %v600
      %v629 = vpack.c.b16 %v603, %v602
      %v630 = vpack.c.b16 %v605, %v604
      %v631 = vpack.c.b16 %v607, %v606
      %v632 = vpack.c.b16 %v609, %v608
      %v633 = vpack.c.b16 %v611, %v610
      %v634 = vpack.c.b16 %v613, %v612
      %v635 = vpack.c.b16 %v615, %v614
      %v636 = vpack.c.b16 %v617, %v616
      %v637 = vpack.c.b16 %v619, %v618
      %v638 = vpack.c.b16 %v621, %v620
      %v639 = vpack.c.b16 %v623, %v622
      %656 = vmatprep.subr.bf16.mxu0 0
      %657 = vmatpush1.bf16.msra.mxu0 %v631
      %658 = vmatprep.subr.bf16.mxu0 0
      %659 = vmatpush1.bf16.msra.mxu0 %v630
      %660 = vmatprep.subr.bf16.mxu0 0
      %661 = vmatpush1.bf16.msra.mxu0 %v629
      %662 = vmatprep.subr.bf16.mxu0 0
      %663 = vmatpush1.bf16.msra.mxu0 %v628
      %664 = vmatprep.subr.bf16.mxu0 0
      %665 = vmatpush1.bf16.msra.mxu0 %v627
      %666 = vmatprep.subr.bf16.mxu0 0
      %667 = vmatpush1.bf16.msra.mxu0 %v626
      %668 = vmatprep.subr.bf16.mxu0 0
      %669 = vmatpush1.bf16.msra.mxu0 %v625
      %670 = vmatprep.subr.bf16.mxu0 0
      %671 = vmatpush1.bf16.msra.mxu0 %v624
      %672 = vmatprep.subr.bf16.mxu0 0
      %673 = vmatpush2.bf16.msra.mxu0 %v639
      %674 = vmatprep.subr.bf16.mxu0 0
      %675 = vmatpush2.bf16.msra.mxu0 %v638
      %676 = vmatprep.subr.bf16.mxu0 0
      %677 = vmatpush2.bf16.msra.mxu0 %v637
      %678 = vmatprep.subr.bf16.mxu0 0
      %679 = vmatpush2.bf16.msra.mxu0 %v636
      %680 = vmatprep.subr.bf16.mxu0 0
      %681 = vmatpush2.bf16.msra.mxu0 %v635
      %682 = vmatprep.subr.bf16.mxu0 0
      %683 = vmatpush2.bf16.msra.mxu0 %v634
      %684 = vmatprep.subr.bf16.mxu0 0
      %685 = vmatpush2.bf16.msra.mxu0 %v633
      %686 = vmatprep.subr.bf16.mxu0 0
      %687 = vmatpush2.bf16.msra.mxu0 %v632
      %688 = vmatprep.mubr.bf16.mxu0 %v497
      %689 = vmatmul.mubr.bf16.gmra.mxu0 %v496
      %v690 = vpop.f32.mrf.mxu0
      %v691 = vadd.f32 0.0, %v690
      %v692 = vpop.f32.mrf.mxu0
      %v693 = vpop.f32.mrf.mxu0
      %v694 = vadd.f32 0.0, %v693
      %v695 = vpop.f32.mrf.mxu0
      %696 = vmatprep.mubr.bf16.mxu0 %v499
      %697 = vmatmul.mubr.bf16.gmra.mxu0 %v498
      %v698 = vpop.f32.mrf.mxu0
      %v699 = vadd.f32 0.0, %v698
      %v700 = vpop.f32.mrf.mxu0
      %v701 = vpop.f32.mrf.mxu0
      %v702 = vadd.f32 0.0, %v701
      %v703 = vpop.f32.mrf.mxu0
      %704 = vmatprep.mubr.bf16.mxu0 %v501
      %705 = vmatmul.mubr.bf16.gmra.mxu0 %v500
      %v706 = vpop.f32.mrf.mxu0
      %v707 = vadd.f32 0.0, %v706
      %v708 = vpop.f32.mrf.mxu0
      %v709 = vpop.f32.mrf.mxu0
      %v710 = vadd.f32 0.0, %v709
      %v711 = vpop.f32.mrf.mxu0
      %712 = vmatprep.mubr.bf16.mxu0 %v503
      %713 = vmatmul.mubr.bf16.gmra.mxu0 %v502
      %v714 = vpop.f32.mrf.mxu0
      %v715 = vadd.f32 0.0, %v714
      %v716 = vpop.f32.mrf.mxu0
      %v717 = vpop.f32.mrf.mxu0
      %v718 = vadd.f32 0.0, %v717
      %v719 = vpop.f32.mrf.mxu0
      %720 = vmatprep.mubr.bf16.mxu0 %v505
      %721 = vmatmul.mubr.bf16.gmra.mxu0 %v504
      %v722 = vpop.f32.mrf.mxu0
      %v723 = vadd.f32 0.0, %v722
      %v724 = vpop.f32.mrf.mxu0
      %v725 = vpop.f32.mrf.mxu0
      %v726 = vadd.f32 0.0, %v725
      %v727 = vpop.f32.mrf.mxu0
      %728 = vmatprep.mubr.bf16.mxu0 %v507
      %729 = vmatmul.mubr.bf16.gmra.mxu0 %v506
      %v730 = vpop.f32.mrf.mxu0
      %v731 = vadd.f32 0.0, %v730
      %v732 = vpop.f32.mrf.mxu0
      %v733 = vpop.f32.mrf.mxu0
      %v734 = vadd.f32 0.0, %v733
      %v735 = vpop.f32.mrf.mxu0
      %736 = vmatprep.mubr.bf16.mxu0 %v509
      %737 = vmatmul.mubr.bf16.gmra.mxu0 %v508
      %v738 = vpop.f32.mrf.mxu0
      %v739 = vadd.f32 0.0, %v738
      %v740 = vpop.f32.mrf.mxu0
      %v741 = vpop.f32.mrf.mxu0
      %v742 = vadd.f32 0.0, %v741
      %v743 = vpop.f32.mrf.mxu0
      %744 = vmatprep.mubr.bf16.mxu0 %v511
      %745 = vmatmul.mubr.bf16.gmra.mxu0 %v510
      %v746 = vpop.f32.mrf.mxu0
      %v747 = vadd.f32 0.0, %v746
      %v748 = vpop.f32.mrf.mxu0
      %v749 = vpop.f32.mrf.mxu0
      %v750 = vadd.f32 0.0, %v749
      %v751 = vpop.f32.mrf.mxu0
      %752 = vmatprep.mubr.bf16.mxu0 %v513
      %753 = vmatmul.mubr.bf16.gmra.mxu0 %v512
      %v754 = vpop.f32.mrf.mxu0
      %v755 = vadd.f32 0.0, %v754
      %v756 = vpop.f32.mrf.mxu0
      %v757 = vpop.f32.mrf.mxu0
      %v758 = vadd.f32 0.0, %v757
      %v759 = vpop.f32.mrf.mxu0
      %760 = vmatprep.mubr.bf16.mxu0 %v515
      %761 = vmatmul.mubr.bf16.gmra.mxu0 %v514
      %v762 = vpop.f32.mrf.mxu0
      %v763 = vadd.f32 0.0, %v762
      %v764 = vpop.f32.mrf.mxu0
      %v765 = vpop.f32.mrf.mxu0
      %v766 = vadd.f32 0.0, %v765
      %v767 = vpop.f32.mrf.mxu0
      %768 = vmatprep.mubr.bf16.mxu0 %v517
      %769 = vmatmul.mubr.bf16.gmra.mxu0 %v516
      %v770 = vpop.f32.mrf.mxu0
      %v771 = vadd.f32 0.0, %v770
      %v772 = vpop.f32.mrf.mxu0
      %v773 = vpop.f32.mrf.mxu0
      %v774 = vadd.f32 0.0, %v773
      %v775 = vpop.f32.mrf.mxu0
      %776 = vmatprep.mubr.bf16.mxu0 %v519
      %777 = vmatmul.mubr.bf16.gmra.mxu0 %v518
      %v778 = vpop.f32.mrf.mxu0
      %v779 = vadd.f32 0.0, %v778
      %v780 = vpop.f32.mrf.mxu0
      %v781 = vpop.f32.mrf.mxu0
      %v782 = vadd.f32 0.0, %v781
      %v783 = vpop.f32.mrf.mxu0
      %784 = vmatprep.mubr.bf16.mxu0 %v521
      %785 = vmatmul.mubr.bf16.gmra.mxu0 %v520
      %v786 = vpop.f32.mrf.mxu0
      %v787 = vadd.f32 0.0, %v786
      %v788 = vpop.f32.mrf.mxu0
      %v789 = vpop.f32.mrf.mxu0
      %v790 = vadd.f32 0.0, %v789
      %v791 = vpop.f32.mrf.mxu0
      %792 = vmatprep.mubr.bf16.mxu0 %v523
      %793 = vmatmul.mubr.bf16.gmra.mxu0 %v522
      %v794 = vpop.f32.mrf.mxu0
      %v795 = vadd.f32 0.0, %v794
      %v796 = vpop.f32.mrf.mxu0
      %v797 = vpop.f32.mrf.mxu0
      %v798 = vadd.f32 0.0, %v797
      %v799 = vpop.f32.mrf.mxu0
      %800 = vmatprep.mubr.bf16.mxu0 %v525
      %801 = vmatmul.mubr.bf16.gmra.mxu0 %v524
      %v802 = vpop.f32.mrf.mxu0
      %v803 = vadd.f32 0.0, %v802
      %v804 = vpop.f32.mrf.mxu0
      %v805 = vpop.f32.mrf.mxu0
      %v806 = vadd.f32 0.0, %v805
      %v807 = vpop.f32.mrf.mxu0
      %808 = vmatprep.mubr.bf16.mxu0 %v527
      %809 = vmatmul.mubr.bf16.gmra.mxu0 %v526
      %v810 = vpop.f32.mrf.mxu0
      %v811 = vadd.f32 0.0, %v810
      %v812 = vpop.f32.mrf.mxu0
      %v813 = vpop.f32.mrf.mxu0
      %v814 = vadd.f32 0.0, %v813
      %v815 = vpop.f32.mrf.mxu0
      %816 = vdwg.mxu0
      %v817 = vadd.f32 %v304, %v691
      %v818 = vadd.f32 %v305, %v694
      %v819 = vadd.f32 %v306, %v699
      %v820 = vadd.f32 %v307, %v702
      %v821 = vadd.f32 %v308, %v707
      %v822 = vadd.f32 %v309, %v710
      %v823 = vadd.f32 %v310, %v715
      %v824 = vadd.f32 %v311, %v718
      %v825 = vadd.f32 %v312, %v723
      %v826 = vadd.f32 %v313, %v726
      %v827 = vadd.f32 %v314, %v731
      %v828 = vadd.f32 %v315, %v734
      %v829 = vadd.f32 %v316, %v739
      %v830 = vadd.f32 %v317, %v742
      %v831 = vadd.f32 %v318, %v747
      %v832 = vadd.f32 %v319, %v750
      %v833 = vadd.f32 %v320, %v755
      %v834 = vadd.f32 %v321, %v758
      %v835 = vadd.f32 %v322, %v763
      %v836 = vadd.f32 %v323, %v766
      %v837 = vadd.f32 %v324, %v771
      %v838 = vadd.f32 %v325, %v774
      %v839 = vadd.f32 %v326, %v779
      %v840 = vadd.f32 %v327, %v782
      %v841 = vadd.f32 %v328, %v787
      %v842 = vadd.f32 %v329, %v790
      %v843 = vadd.f32 %v330, %v795
      %v844 = vadd.f32 %v331, %v798
      %v845 = vadd.f32 %v332, %v803
      %v846 = vadd.f32 %v333, %v806
      %v847 = vadd.f32 %v334, %v811
      %v848 = vadd.f32 %v335, %v814
      %849 = vst [vmem:[#allocation2] sm:$0xff] %v817
      %850 = vst [vmem:[#allocation2 + $0x8] sm:$0xff] %v818
      %851 = vst [vmem:[#allocation2 + $0x10] sm:$0xff] %v819
      %852 = vst [vmem:[#allocation2 + $0x18] sm:$0xff] %v820
      %853 = vst [vmem:[#allocation2 + $0x20] sm:$0xff] %v821
      %854 = vst [vmem:[#allocation2 + $0x28] sm:$0xff] %v822
      %855 = vst [vmem:[#allocation2 + $0x30] sm:$0xff] %v823
      %856 = vst [vmem:[#allocation2 + $0x38] sm:$0xff] %v824
      %857 = vst [vmem:[#allocation2 + $0x40] sm:$0xff] %v825
      %858 = vst [vmem:[#allocation2 + $0x48] sm:$0xff] %v826
      %859 = vst [vmem:[#allocation2 + $0x50] sm:$0xff] %v827
      %860 = vst [vmem:[#allocation2 + $0x58] sm:$0xff] %v828
      %861 = vst [vmem:[#allocation2 + $0x60] sm:$0xff] %v829
      %862 = vst [vmem:[#allocation2 + $0x68] sm:$0xff] %v830
      %863 = vst [vmem:[#allocation2 + $0x70] sm:$0xff] %v831
      %864 = vst [vmem:[#allocation2 + $0x78] sm:$0xff] %v832
      %865 = vst [vmem:[#allocation2 + $0x80] sm:$0xff] %v833
      %866 = vst [vmem:[#allocation2 + $0x88] sm:$0xff] %v834
      %867 = vst [vmem:[#allocation2 + $0x90] sm:$0xff] %v835
      %868 = vst [vmem:[#allocation2 + $0x98] sm:$0xff] %v836
      %869 = vst [vmem:[#allocation2 + $0xa0] sm:$0xff] %v837
      %870 = vst [vmem:[#allocation2 + $0xa8] sm:$0xff] %v838
      %871 = vst [vmem:[#allocation2 + $0xb0] sm:$0xff] %v839
      %872 = vst [vmem:[#allocation2 + $0xb8] sm:$0xff] %v840
      %873 = vst [vmem:[#allocation2 + $0xc0] sm:$0xff] %v841
      %874 = vst [vmem:[#allocation2 + $0xc8] sm:$0xff] %v842
      %875 = vst [vmem:[#allocation2 + $0xd0] sm:$0xff] %v843
      %876 = vst [vmem:[#allocation2 + $0xd8] sm:$0xff] %v844
      %877 = vst [vmem:[#allocation2 + $0xe0] sm:$0xff] %v845
      %878 = vst [vmem:[#allocation2 + $0xe8] sm:$0xff] %v846
      %879 = vst [vmem:[#allocation2 + $0xf0] sm:$0xff] %v847
      %880 = vst [vmem:[#allocation2 + $0xf8] sm:$0xff] %v848
      // Predicated region
      $region37: #{a_call__.25} parent=31 // pred_check
        %p881 = pneg %p268
      $region38: #{a_call__.25} parent=31 // pred_check_branch
        %883 = sbr.rel (%p881) target = $region40
      $region39: #{a_call__.25} parent=31 // pred_region
        %v884 = vld [vmem:[#allocation2] sm:$0xff]
        %v885 = vld [vmem:[#allocation2 + $0x8] sm:$0xff]
        %v886 = vld [vmem:[#allocation2 + $0x10] sm:$0xff]
        %v887 = vld [vmem:[#allocation2 + $0x18] sm:$0xff]
        %v888 = vld [vmem:[#allocation2 + $0x20] sm:$0xff]
        %v889 = vld [vmem:[#allocation2 + $0x28] sm:$0xff]
        %v890 = vld [vmem:[#allocation2 + $0x30] sm:$0xff]
        %v891 = vld [vmem:[#allocation2 + $0x38] sm:$0xff]
        %v892 = vld [vmem:[#allocation2 + $0x40] sm:$0xff]
        %v893 = vld [vmem:[#allocation2 + $0x48] sm:$0xff]
        %v894 = vld [vmem:[#allocation2 + $0x50] sm:$0xff]
        %v895 = vld [vmem:[#allocation2 + $0x58] sm:$0xff]
        %v896 = vld [vmem:[#allocation2 + $0x60] sm:$0xff]
        %v897 = vld [vmem:[#allocation2 + $0x68] sm:$0xff]
        %v898 = vld [vmem:[#allocation2 + $0x70] sm:$0xff]
        %v899 = vld [vmem:[#allocation2 + $0x78] sm:$0xff]
        %v900 = vld [vmem:[#allocation2 + $0x80] sm:$0xff]
        %v901 = vld [vmem:[#allocation2 + $0x88] sm:$0xff]
        %v902 = vld [vmem:[#allocation2 + $0x90] sm:$0xff]
        %v903 = vld [vmem:[#allocation2 + $0x98] sm:$0xff]
        %v904 = vld [vmem:[#allocation2 + $0xa0] sm:$0xff]
        %v905 = vld [vmem:[#allocation2 + $0xa8] sm:$0xff]
        %v906 = vld [vmem:[#allocation2 + $0xb0] sm:$0xff]
        %v907 = vld [vmem:[#allocation2 + $0xb8] sm:$0xff]
        %v908 = vld [vmem:[#allocation2 + $0xc0] sm:$0xff]
        %v909 = vld [vmem:[#allocation2 + $0xc8] sm:$0xff]
        %v910 = vld [vmem:[#allocation2 + $0xd0] sm:$0xff]
        %v911 = vld [vmem:[#allocation2 + $0xd8] sm:$0xff]
        %v912 = vld [vmem:[#allocation2 + $0xe0] sm:$0xff]
        %v913 = vld [vmem:[#allocation2 + $0xe8] sm:$0xff]
        %v914 = vld [vmem:[#allocation2 + $0xf0] sm:$0xff]
        %v915 = vld [vmem:[#allocation2 + $0xf8] sm:$0xff]
        %v916 = vld [vmem:[%s257] sm:$0x1]
        %v918 = vlaneseq
        %v919 = vshrl.u32 %v918, 7
        %v920 = vsub.s32 0, %v919
        %v921 = vrot.slane %v916, %v920
        %v923 = vadd.f32 %v884, %v921
        %v924 = vadd.f32 %v885, %v921
        %v925 = vadd.f32 %v886, %v921
        %v926 = vadd.f32 %v887, %v921
        %v927 = vadd.f32 %v888, %v921
        %v928 = vadd.f32 %v889, %v921
        %v929 = vadd.f32 %v890, %v921
        %v930 = vadd.f32 %v891, %v921
        %v931 = vadd.f32 %v892, %v921
        %v932 = vadd.f32 %v893, %v921
        %v933 = vadd.f32 %v894, %v921
        %v934 = vadd.f32 %v895, %v921
        %v935 = vadd.f32 %v896, %v921
        %v936 = vadd.f32 %v897, %v921
        %v937 = vadd.f32 %v898, %v921
        %v938 = vadd.f32 %v899, %v921
        %v939 = vadd.f32 %v900, %v921
        %v940 = vadd.f32 %v901, %v921
        %v941 = vadd.f32 %v902, %v921
        %v942 = vadd.f32 %v903, %v921
        %v943 = vadd.f32 %v904, %v921
        %v944 = vadd.f32 %v905, %v921
        %v945 = vadd.f32 %v906, %v921
        %v946 = vadd.f32 %v907, %v921
        %v947 = vadd.f32 %v908, %v921
        %v948 = vadd.f32 %v909, %v921
        %v949 = vadd.f32 %v910, %v921
        %v950 = vadd.f32 %v911, %v921
        %v951 = vadd.f32 %v912, %v921
        %v952 = vadd.f32 %v913, %v921
        %v953 = vadd.f32 %v914, %v921
        %v954 = vadd.f32 %v915, %v921
        %v955 = vmax.f32 %v923, 0.0
        %v956 = vmax.f32 %v924, 0.0
        %v957 = vmax.f32 %v925, 0.0
        %v958 = vmax.f32 %v926, 0.0
        %v959 = vmax.f32 %v927, 0.0
        %v960 = vmax.f32 %v928, 0.0
        %v961 = vmax.f32 %v929, 0.0
        %v962 = vmax.f32 %v930, 0.0
        %v963 = vmax.f32 %v931, 0.0
        %v964 = vmax.f32 %v932, 0.0
        %v965 = vmax.f32 %v933, 0.0
        %v966 = vmax.f32 %v934, 0.0
        %v967 = vmax.f32 %v935, 0.0
        %v968 = vmax.f32 %v936, 0.0
        %v969 = vmax.f32 %v937, 0.0
        %v970 = vmax.f32 %v938, 0.0
        %v971 = vmax.f32 %v939, 0.0
        %v972 = vmax.f32 %v940, 0.0
        %v973 = vmax.f32 %v941, 0.0
        %v974 = vmax.f32 %v942, 0.0
        %v975 = vmax.f32 %v943, 0.0
        %v976 = vmax.f32 %v944, 0.0
        %v977 = vmax.f32 %v945, 0.0
        %v978 = vmax.f32 %v946, 0.0
        %v979 = vmax.f32 %v947, 0.0
        %v980 = vmax.f32 %v948, 0.0
        %v981 = vmax.f32 %v949, 0.0
        %v982 = vmax.f32 %v950, 0.0
        %v983 = vmax.f32 %v951, 0.0
        %v984 = vmax.f32 %v952, 0.0
        %v985 = vmax.f32 %v953, 0.0
        %v986 = vmax.f32 %v954, 0.0
        %v987 = vpack.c.bf16 %v956, %v955
        %v988 = vpack.c.bf16 %v958, %v957
        %v989 = vpack.c.bf16 %v960, %v959
        %v990 = vpack.c.bf16 %v962, %v961
        %v991 = vpack.c.bf16 %v964, %v963
        %v992 = vpack.c.bf16 %v966, %v965
        %v993 = vpack.c.bf16 %v968, %v967
        %v994 = vpack.c.bf16 %v970, %v969
        %v995 = vpack.c.bf16 %v972, %v971
        %v996 = vpack.c.bf16 %v974, %v973
        %v997 = vpack.c.bf16 %v976, %v975
        %v998 = vpack.c.bf16 %v978, %v977
        %v999 = vpack.c.bf16 %v980, %v979
        %v1000 = vpack.c.bf16 %v982, %v981
        %v1001 = vpack.c.bf16 %v984, %v983
        %v1002 = vpack.c.bf16 %v986, %v985
        %v1019 = vunpack.c.l.b16 %v987
        %v1020 = vunpack.c.h.b16 %v987
        %v1021 = vunpack.c.l.b16 %v988
        %v1022 = vunpack.c.h.b16 %v988
        %v1023 = vunpack.c.l.b16 %v989
        %v1024 = vunpack.c.h.b16 %v989
        %v1025 = vunpack.c.l.b16 %v990
        %v1026 = vunpack.c.h.b16 %v990
        %v1027 = vunpack.c.l.b16 %v991
        %v1028 = vunpack.c.h.b16 %v991
        %v1029 = vunpack.c.l.b16 %v992
        %v1030 = vunpack.c.h.b16 %v992
        %v1031 = vunpack.c.l.b16 %v993
        %v1032 = vunpack.c.h.b16 %v993
        %v1033 = vunpack.c.l.b16 %v994
        %v1034 = vunpack.c.h.b16 %v994
        %v1035 = vunpack.c.l.b16 %v995
        %v1036 = vunpack.c.h.b16 %v995
        %v1037 = vunpack.c.l.b16 %v996
        %v1038 = vunpack.c.h.b16 %v996
        %v1039 = vunpack.c.l.b16 %v997
        %v1040 = vunpack.c.h.b16 %v997
        %v1041 = vunpack.c.l.b16 %v998
        %v1042 = vunpack.c.h.b16 %v998
        %v1043 = vunpack.c.l.b16 %v999
        %v1044 = vunpack.c.h.b16 %v999
        %v1045 = vunpack.c.l.b16 %v1000
        %v1046 = vunpack.c.h.b16 %v1000
        %v1047 = vunpack.c.l.b16 %v1001
        %v1048 = vunpack.c.h.b16 %v1001
        %v1049 = vunpack.c.l.b16 %v1002
        %v1050 = vunpack.c.h.b16 %v1002
        %v1051 = vpack.c.b16 %v1019, %v1019
        %v1052 = vpack.c.b16 %v1020, %v1020
        %v1053 = vpack.c.b16 %v1021, %v1021
        %v1054 = vpack.c.b16 %v1022, %v1022
        %v1055 = vpack.c.b16 %v1023, %v1023
        %v1056 = vpack.c.b16 %v1024, %v1024
        %v1057 = vpack.c.b16 %v1025, %v1025
        %v1058 = vpack.c.b16 %v1026, %v1026
        %v1059 = vpack.c.b16 %v1027, %v1027
        %v1060 = vpack.c.b16 %v1028, %v1028
        %v1061 = vpack.c.b16 %v1029, %v1029
        %v1062 = vpack.c.b16 %v1030, %v1030
        %v1063 = vpack.c.b16 %v1031, %v1031
        %v1064 = vpack.c.b16 %v1032, %v1032
        %v1065 = vpack.c.b16 %v1033, %v1033
        %v1066 = vpack.c.b16 %v1034, %v1034
        %v1067 = vpack.c.b16 %v1035, %v1035
        %v1068 = vpack.c.b16 %v1036, %v1036
        %v1069 = vpack.c.b16 %v1037, %v1037
        %v1070 = vpack.c.b16 %v1038, %v1038
        %v1071 = vpack.c.b16 %v1039, %v1039
        %v1072 = vpack.c.b16 %v1040, %v1040
        %v1073 = vpack.c.b16 %v1041, %v1041
        %v1074 = vpack.c.b16 %v1042, %v1042
        %v1075 = vpack.c.b16 %v1043, %v1043
        %v1076 = vpack.c.b16 %v1044, %v1044
        %v1077 = vpack.c.b16 %v1045, %v1045
        %v1078 = vpack.c.b16 %v1046, %v1046
        %v1079 = vpack.c.b16 %v1047, %v1047
        %v1080 = vpack.c.b16 %v1048, %v1048
        %v1081 = vpack.c.b16 %v1049, %v1049
        %v1082 = vpack.c.b16 %v1050, %v1050
        %1115 = vst [vmem:[%s265] sm:$0xf] %v1051
        %1116 = vst [vmem:[%s265 + $0x4] sm:$0xf] %v1052
        %1117 = vst [vmem:[%s265 + $0x8] sm:$0xf] %v1053
        %1118 = vst [vmem:[%s265 + $0xc] sm:$0xf] %v1054
        %1119 = vst [vmem:[%s265 + $0x10] sm:$0xf] %v1055
        %1120 = vst [vmem:[%s265 + $0x14] sm:$0xf] %v1056
        %1121 = vst [vmem:[%s265 + $0x18] sm:$0xf] %v1057
        %1122 = vst [vmem:[%s265 + $0x1c] sm:$0xf] %v1058
        %1123 = vst [vmem:[%s265 + $0x20] sm:$0xf] %v1059
        %1124 = vst [vmem:[%s265 + $0x24] sm:$0xf] %v1060
        %1125 = vst [vmem:[%s265 + $0x28] sm:$0xf] %v1061
        %1126 = vst [vmem:[%s265 + $0x2c] sm:$0xf] %v1062
        %1127 = vst [vmem:[%s265 + $0x30] sm:$0xf] %v1063
        %1128 = vst [vmem:[%s265 + $0x34] sm:$0xf] %v1064
        %1129 = vst [vmem:[%s265 + $0x38] sm:$0xf] %v1065
        %1130 = vst [vmem:[%s265 + $0x3c] sm:$0xf] %v1066
        %1131 = vst [vmem:[%s265 + $0x40] sm:$0xf] %v1067
        %1132 = vst [vmem:[%s265 + $0x44] sm:$0xf] %v1068
        %1133 = vst [vmem:[%s265 + $0x48] sm:$0xf] %v1069
        %1134 = vst [vmem:[%s265 + $0x4c] sm:$0xf] %v1070
        %1135 = vst [vmem:[%s265 + $0x50] sm:$0xf] %v1071
        %1136 = vst [vmem:[%s265 + $0x54] sm:$0xf] %v1072
        %1137 = vst [vmem:[%s265 + $0x58] sm:$0xf] %v1073
        %1138 = vst [vmem:[%s265 + $0x5c] sm:$0xf] %v1074
        %1139 = vst [vmem:[%s265 + $0x60] sm:$0xf] %v1075
        %1140 = vst [vmem:[%s265 + $0x64] sm:$0xf] %v1076
        %1141 = vst [vmem:[%s265 + $0x68] sm:$0xf] %v1077
        %1142 = vst [vmem:[%s265 + $0x6c] sm:$0xf] %v1078
        %1143 = vst [vmem:[%s265 + $0x70] sm:$0xf] %v1079
        %1144 = vst [vmem:[%s265 + $0x74] sm:$0xf] %v1080
        %1145 = vst [vmem:[%s265 + $0x78] sm:$0xf] %v1081
        %1146 = vst [vmem:[%s265 + $0x7c] sm:$0xf] %v1082
      $region40: #{a_call__.25} parent=31 // pred_fallthru
        _
      %s1147 = smul.u32 32, %s19
      %p1148 = scmp.lt.s32.totalorder %s1147, 63
      %s1149 = scalar_select %p1148, %s1147, 63
      %p1150 = scmp.lt.s32.totalorder %s20, 0
      %s1151 = scalar_select %p1150, %s20, 0
      %s1152 = sadd.s32 %s1151, %s1149
      %s1153 = smul.addr %s1152, 4
      %s1154 = scalar_lea.vmem %s3, %s1153
      // Predicated region
      $region41: #{a_call__.25} parent=31 // pred_check
        %p1155 = pneg %p135
      $region42: #{a_call__.25} parent=31 // pred_check_branch
        %1157 = sbr.rel (%p1155) target = $region44
      $region43: #{a_call__.25} parent=31 // pred_region
        %s1158 = smul.u32 32, %s19
      $region44: #{a_call__.25} parent=31 // pred_fallthru
        _
    $region32: #{a_call__.25} parent=5 // pred_fallthru
      _
    %p1159 = scmp.le.s32.totalorder 2, %s9
    // Predicated region
    $region45: #{a_call__.25} parent=5 // pred_check
      %p1160 = pneg %p1159
    $region46: #{a_call__.25} parent=5 // pred_check_branch
      %1162 = sbr.rel (%p1160) target = $region48
    $region47: #{a_call__.25} parent=5 // pred_region
      %s1163 = ssub.s32 %s9, 2
      // Predicated region
      $region49: #{a_call__.25} parent=47 // pred_check
        %p1164 = pneg %p141
      $region50: #{a_call__.25} parent=47 // pred_check_branch
        %1166 = sbr.rel (%p1164) target = $region52
      $region51: #{a_call__.25} parent=47 // pred_region
        %s1167 = smul.u32 32, %s22
        %p1168 = scmp.lt.s32.totalorder %s1167, 63
        %s1169 = scalar_select %p1168, %s1167, 63
        %p1170 = scmp.lt.s32.totalorder %s23, 0
        %s1171 = scalar_select %p1170, %s23, 0
        %s1172 = sadd.s32 %s1171, %s1169
        %s1173 = smul.addr %s1172, 4
        %s1174 = scalar_lea.vmem %s3, %s1173
      $region52: #{a_call__.25} parent=47 // pred_fallthru
        _
    $region48: #{a_call__.25} parent=5 // pred_fallthru
      _
  $region6: #{a_call__.25} parent=0 // loop_footer
    %s13 = sadd.s32 1, %s9
  $region7: #{a_call__.25} parent=0 // loop_footer_branch
    %8 = sbr.rel target = $region3
  $region8: #{a_call__.25} parent=0 // loop_exit
    _

// kernel: a_call__.26
$region0: #{a_call__.26}
  #allocation0 [shape = 'u32[]', space=smem, size = 0x4, offset = 0x4, fixed_abs, tag = 'smem constant byte address 0x4 - core index']
  #allocation1 [shape = 'u32[144,128]{1,0:T(1,128)}', space=vmem, size = 0x12000, scoped, tag = 'internal scratch']
  #allocation2 [shape = 'f32[128,128]{1,0:T(8,128)}', space=vmem, size = 0x10000, scoped, tag = 'scratch operand']
  %s0 = inlined_call_operand.vmem [shape: bf16[128,128], index: 0, kind: input, shape index: {}]
  %s1 = inlined_call_operand.vmem [shape: bf16[128,128], index: 1, kind: input, shape index: {}]
  %s2 = inlined_call_operand.vmem [shape: f32[1,128], index: 2, kind: input, shape index: {}]
  %s3 = inlined_call_operand.vmem [shape: bf16[128,128], index: 3, kind: output, shape index: {}]
  %s4 = sld [smem:[#allocation0]]
  $region30: #{a_call__.26} parent=0
    _
  %s6 = ssub.s32 1, %s4
  %s7 = scalar_select 0, %s6, %s4
  // Predicated region
  $region2: #{a_call__.26} parent=0 // pred_check
    _
  $region3: #{a_call__.26} parent=0 // pred_check_branch
    %9 = sbr.rel (0) target = $region5
  $region4: #{a_call__.26} parent=0 // pred_region
    _
  $region5: #{a_call__.26} parent=0 // pred_fallthru
    _
  // Predicated region
  $region6: #{a_call__.26} parent=0 // pred_check
    _
  $region7: #{a_call__.26} parent=0 // pred_check_branch
    %11 = sbr.rel (0) target = $region9
  $region8: #{a_call__.26} parent=0 // pred_region
    _
  $region9: #{a_call__.26} parent=0 // pred_fallthru
    _
  // Predicated region
  $region10: #{a_call__.26} parent=0 // pred_check
    _
  $region11: #{a_call__.26} parent=0 // pred_check_branch
    %13 = sbr.rel (0) target = $region13
  $region12: #{a_call__.26} parent=0 // pred_region
    _
  $region13: #{a_call__.26} parent=0 // pred_fallthru
    _
  %p15 = scmp.eq.s32.totalorder 0, 0
  // Predicated region
  $region14: #{a_call__.26} parent=0 // pred_check
    %p16 = pneg %p15
  $region15: #{a_call__.26} parent=0 // pred_check_branch
    %18 = sbr.rel (%p16) target = $region17
  $region16: #{a_call__.26} parent=0 // pred_region
    %19 = vst [vmem:[#allocation2] sm:$0xff] 0.0
    %20 = vst [vmem:[#allocation2 + $0x8] sm:$0xff] 0.0
    %21 = vst [vmem:[#allocation2 + $0x10] sm:$0xff] 0.0
    %22 = vst [vmem:[#allocation2 + $0x18] sm:$0xff] 0.0
    %23 = vst [vmem:[#allocation2 + $0x20] sm:$0xff] 0.0
    %24 = vst [vmem:[#allocation2 + $0x28] sm:$0xff] 0.0
    %25 = vst [vmem:[#allocation2 + $0x30] sm:$0xff] 0.0
    %26 = vst [vmem:[#allocation2 + $0x38] sm:$0xff] 0.0
    %27 = vst [vmem:[#allocation2 + $0x40] sm:$0xff] 0.0
    %28 = vst [vmem:[#allocation2 + $0x48] sm:$0xff] 0.0
    %29 = vst [vmem:[#allocation2 + $0x50] sm:$0xff] 0.0
    %30 = vst [vmem:[#allocation2 + $0x58] sm:$0xff] 0.0
    %31 = vst [vmem:[#allocation2 + $0x60] sm:$0xff] 0.0
    %32 = vst [vmem:[#allocation2 + $0x68] sm:$0xff] 0.0
    %33 = vst [vmem:[#allocation2 + $0x70] sm:$0xff] 0.0
    %34 = vst [vmem:[#allocation2 + $0x78] sm:$0xff] 0.0
  $region17: #{a_call__.26} parent=0 // pred_fallthru
    _
  %v35 = vld [vmem:[#allocation2] sm:$0xff]
  %v36 = vld [vmem:[#allocation2 + $0x8] sm:$0xff]
  %v37 = vld [vmem:[#allocation2 + $0x10] sm:$0xff]
  %v38 = vld [vmem:[#allocation2 + $0x18] sm:$0xff]
  %v39 = vld [vmem:[#allocation2 + $0x20] sm:$0xff]
  %v40 = vld [vmem:[#allocation2 + $0x28] sm:$0xff]
  %v41 = vld [vmem:[#allocation2 + $0x30] sm:$0xff]
  %v42 = vld [vmem:[#allocation2 + $0x38] sm:$0xff]
  %v43 = vld [vmem:[#allocation2 + $0x40] sm:$0xff]
  %v44 = vld [vmem:[#allocation2 + $0x48] sm:$0xff]
  %v45 = vld [vmem:[#allocation2 + $0x50] sm:$0xff]
  %v46 = vld [vmem:[#allocation2 + $0x58] sm:$0xff]
  %v47 = vld [vmem:[#allocation2 + $0x60] sm:$0xff]
  %v48 = vld [vmem:[#allocation2 + $0x68] sm:$0xff]
  %v49 = vld [vmem:[#allocation2 + $0x70] sm:$0xff]
  %v50 = vld [vmem:[#allocation2 + $0x78] sm:$0xff]
  %v51 = vld [vmem:[%s0] sm:$0xf]
  %v52 = vld [vmem:[%s0 + $0x4] sm:$0xf]
  %v53 = vld [vmem:[%s0 + $0x8] sm:$0xf]
  %v54 = vld [vmem:[%s0 + $0xc] sm:$0xf]
  %v55 = vld [vmem:[%s0 + $0x10] sm:$0xf]
  %v56 = vld [vmem:[%s0 + $0x14] sm:$0xf]
  %v57 = vld [vmem:[%s0 + $0x18] sm:$0xf]
  %v58 = vld [vmem:[%s0 + $0x1c] sm:$0xf]
  %v59 = vld [vmem:[%s0 + $0x20] sm:$0xf]
  %v60 = vld [vmem:[%s0 + $0x24] sm:$0xf]
  %v61 = vld [vmem:[%s0 + $0x28] sm:$0xf]
  %v62 = vld [vmem:[%s0 + $0x2c] sm:$0xf]
  %v63 = vld [vmem:[%s0 + $0x30] sm:$0xf]
  %v64 = vld [vmem:[%s0 + $0x34] sm:$0xf]
  %v65 = vld [vmem:[%s0 + $0x38] sm:$0xf]
  %v66 = vld [vmem:[%s0 + $0x3c] sm:$0xf]
  %v67 = vld [vmem:[%s1] sm:$0xf]
  %v68 = vld [vmem:[%s1 + $0x4] sm:$0xf]
  %v69 = vld [vmem:[%s1 + $0x8] sm:$0xf]
  %v70 = vld [vmem:[%s1 + $0xc] sm:$0xf]
  %v71 = vld [vmem:[%s1 + $0x10] sm:$0xf]
  %v72 = vld [vmem:[%s1 + $0x14] sm:$0xf]
  %v73 = vld [vmem:[%s1 + $0x18] sm:$0xf]
  %v74 = vld [vmem:[%s1 + $0x1c] sm:$0xf]
  %v75 = vld [vmem:[%s1 + $0x20] sm:$0xf]
  %v76 = vld [vmem:[%s1 + $0x24] sm:$0xf]
  %v77 = vld [vmem:[%s1 + $0x28] sm:$0xf]
  %v78 = vld [vmem:[%s1 + $0x2c] sm:$0xf]
  %v79 = vld [vmem:[%s1 + $0x30] sm:$0xf]
  %v80 = vld [vmem:[%s1 + $0x34] sm:$0xf]
  %v81 = vld [vmem:[%s1 + $0x38] sm:$0xf]
  %v82 = vld [vmem:[%s1 + $0x3c] sm:$0xf]
  %v99 = vunpack.c.l.b16 %v51
  %v100 = vunpack.c.l.b16 %v52
  %v101 = vunpack.c.l.b16 %v53
  %v102 = vunpack.c.l.b16 %v54
  %v103 = vunpack.c.l.b16 %v55
  %v104 = vunpack.c.l.b16 %v56
  %v105 = vunpack.c.l.b16 %v57
  %v106 = vunpack.c.l.b16 %v58
  %v107 = vunpack.c.l.b16 %v59
  %v108 = vunpack.c.l.b16 %v60
  %v109 = vunpack.c.l.b16 %v61
  %v110 = vunpack.c.l.b16 %v62
  %v111 = vunpack.c.l.b16 %v63
  %v112 = vunpack.c.l.b16 %v64
  %v113 = vunpack.c.l.b16 %v65
  %v114 = vunpack.c.l.b16 %v66
  %v115 = vpack.c.b16 %v100, %v99
  %v116 = vpack.c.b16 %v102, %v101
  %v117 = vpack.c.b16 %v104, %v103
  %v118 = vpack.c.b16 %v106, %v105
  %v119 = vpack.c.b16 %v108, %v107
  %v120 = vpack.c.b16 %v110, %v109
  %v121 = vpack.c.b16 %v112, %v111
  %v122 = vpack.c.b16 %v114, %v113
  %v147 = vunpack.c.l.b16 %v67
  %v148 = vunpack.c.l.b16 %v68
  %v149 = vunpack.c.l.b16 %v69
  %v150 = vunpack.c.l.b16 %v70
  %v151 = vunpack.c.l.b16 %v71
  %v152 = vunpack.c.l.b16 %v72
  %v153 = vunpack.c.l.b16 %v73
  %v154 = vunpack.c.l.b16 %v74
  %v155 = vunpack.c.l.b16 %v75
  %v156 = vunpack.c.l.b16 %v76
  %v157 = vunpack.c.l.b16 %v77
  %v158 = vunpack.c.l.b16 %v78
  %v159 = vunpack.c.l.b16 %v79
  %v160 = vunpack.c.l.b16 %v80
  %v161 = vunpack.c.l.b16 %v81
  %v162 = vunpack.c.l.b16 %v82
  %v163 = vpack.c.b16 %v148, %v147
  %v164 = vpack.c.b16 %v150, %v149
  %v165 = vpack.c.b16 %v152, %v151
  %v166 = vpack.c.b16 %v154, %v153
  %v167 = vpack.c.b16 %v156, %v155
  %v168 = vpack.c.b16 %v158, %v157
  %v169 = vpack.c.b16 %v160, %v159
  %v170 = vpack.c.b16 %v162, %v161
  %179 = vmatprep.subr.bf16.mxu0 0
  %180 = vmatpush1.bf16.msra.mxu0 %v170
  %181 = vmatprep.subr.bf16.mxu0 0
  %182 = vmatpush1.bf16.msra.mxu0 %v169
  %183 = vmatprep.subr.bf16.mxu0 0
  %184 = vmatpush1.bf16.msra.mxu0 %v168
  %185 = vmatprep.subr.bf16.mxu0 0
  %186 = vmatpush1.bf16.msra.mxu0 %v167
  %187 = vmatprep.subr.bf16.mxu0 0
  %188 = vmatpush1.bf16.msra.mxu0 %v166
  %189 = vmatprep.subr.bf16.mxu0 0
  %190 = vmatpush1.bf16.msra.mxu0 %v165
  %191 = vmatprep.subr.bf16.mxu0 0
  %192 = vmatpush1.bf16.msra.mxu0 %v164
  %193 = vmatprep.subr.bf16.mxu0 0
  %194 = vmatpush1.bf16.msra.mxu0 %v163
  %195 = vmatprep.subr.bf16.mxu0 0
  %196 = vmatpush2.bf16.msra.mxu0 0
  %197 = vmatprep.subr.bf16.mxu0 0
  %198 = vmatpush2.bf16.msra.mxu0 0
  %199 = vmatprep.subr.bf16.mxu0 0
  %200 = vmatpush2.bf16.msra.mxu0 0
  %201 = vmatprep.subr.bf16.mxu0 0
  %202 = vmatpush2.bf16.msra.mxu0 0
  %203 = vmatprep.subr.bf16.mxu0 0
  %204 = vmatpush2.bf16.msra.mxu0 0
  %205 = vmatprep.subr.bf16.mxu0 0
  %206 = vmatpush2.bf16.msra.mxu0 0
  %207 = vmatprep.subr.bf16.mxu0 0
  %208 = vmatpush2.bf16.msra.mxu0 0
  %209 = vmatprep.subr.bf16.mxu0 0
  %210 = vmatpush2.bf16.msra.mxu0 0
  %211 = vmatprep.mubr.bf16.mxu0 0
  %212 = vmatmul.mubr.bf16.gmra.mxu0 %v115
  %v213 = vpop.f32.mrf.mxu0
  %v214 = vadd.f32 0.0, %v213
  %v215 = vpop.f32.mrf.mxu0
  %v216 = vpop.f32.mrf.mxu0
  %v217 = vadd.f32 0.0, %v216
  %v218 = vpop.f32.mrf.mxu0
  %219 = vmatprep.mubr.bf16.mxu0 0
  %220 = vmatmul.mubr.bf16.gmra.mxu0 %v116
  %v221 = vpop.f32.mrf.mxu0
  %v222 = vadd.f32 0.0, %v221
  %v223 = vpop.f32.mrf.mxu0
  %v224 = vpop.f32.mrf.mxu0
  %v225 = vadd.f32 0.0, %v224
  %v226 = vpop.f32.mrf.mxu0
  %227 = vmatprep.mubr.bf16.mxu0 0
  %228 = vmatmul.mubr.bf16.gmra.mxu0 %v117
  %v229 = vpop.f32.mrf.mxu0
  %v230 = vadd.f32 0.0, %v229
  %v231 = vpop.f32.mrf.mxu0
  %v232 = vpop.f32.mrf.mxu0
  %v233 = vadd.f32 0.0, %v232
  %v234 = vpop.f32.mrf.mxu0
  %235 = vmatprep.mubr.bf16.mxu0 0
  %236 = vmatmul.mubr.bf16.gmra.mxu0 %v118
  %v237 = vpop.f32.mrf.mxu0
  %v238 = vadd.f32 0.0, %v237
  %v239 = vpop.f32.mrf.mxu0
  %v240 = vpop.f32.mrf.mxu0
  %v241 = vadd.f32 0.0, %v240
  %v242 = vpop.f32.mrf.mxu0
  %243 = vmatprep.mubr.bf16.mxu0 0
  %244 = vmatmul.mubr.bf16.gmra.mxu0 %v119
  %v245 = vpop.f32.mrf.mxu0
  %v246 = vadd.f32 0.0, %v245
  %v247 = vpop.f32.mrf.mxu0
  %v248 = vpop.f32.mrf.mxu0
  %v249 = vadd.f32 0.0, %v248
  %v250 = vpop.f32.mrf.mxu0
  %251 = vmatprep.mubr.bf16.mxu0 0
  %252 = vmatmul.mubr.bf16.gmra.mxu0 %v120
  %v253 = vpop.f32.mrf.mxu0
  %v254 = vadd.f32 0.0, %v253
  %v255 = vpop.f32.mrf.mxu0
  %v256 = vpop.f32.mrf.mxu0
  %v257 = vadd.f32 0.0, %v256
  %v258 = vpop.f32.mrf.mxu0
  %259 = vmatprep.mubr.bf16.mxu0 0
  %260 = vmatmul.mubr.bf16.gmra.mxu0 %v121
  %v261 = vpop.f32.mrf.mxu0
  %v262 = vadd.f32 0.0, %v261
  %v263 = vpop.f32.mrf.mxu0
  %v264 = vpop.f32.mrf.mxu0
  %v265 = vadd.f32 0.0, %v264
  %v266 = vpop.f32.mrf.mxu0
  %267 = vmatprep.mubr.bf16.mxu0 0
  %268 = vmatmul.mubr.bf16.gmra.mxu0 %v122
  %v269 = vpop.f32.mrf.mxu0
  %v270 = vadd.f32 0.0, %v269
  %v271 = vpop.f32.mrf.mxu0
  %v272 = vpop.f32.mrf.mxu0
  %v273 = vadd.f32 0.0, %v272
  %v274 = vpop.f32.mrf.mxu0
  %275 = vdwg.mxu0
  %v276 = vadd.f32 %v35, %v214
  %v277 = vadd.f32 %v36, %v217
  %v278 = vadd.f32 %v37, %v222
  %v279 = vadd.f32 %v38, %v225
  %v280 = vadd.f32 %v39, %v230
  %v281 = vadd.f32 %v40, %v233
  %v282 = vadd.f32 %v41, %v238
  %v283 = vadd.f32 %v42, %v241
  %v284 = vadd.f32 %v43, %v246
  %v285 = vadd.f32 %v44, %v249
  %v286 = vadd.f32 %v45, %v254
  %v287 = vadd.f32 %v46, %v257
  %v288 = vadd.f32 %v47, %v262
  %v289 = vadd.f32 %v48, %v265
  %v290 = vadd.f32 %v49, %v270
  %v291 = vadd.f32 %v50, %v273
  %292 = vst [vmem:[#allocation2] sm:$0xff] %v276
  %293 = vst [vmem:[#allocation2 + $0x8] sm:$0xff] %v277
  %294 = vst [vmem:[#allocation2 + $0x10] sm:$0xff] %v278
  %295 = vst [vmem:[#allocation2 + $0x18] sm:$0xff] %v279
  %296 = vst [vmem:[#allocation2 + $0x20] sm:$0xff] %v280
  %297 = vst [vmem:[#allocation2 + $0x28] sm:$0xff] %v281
  %298 = vst [vmem:[#allocation2 + $0x30] sm:$0xff] %v282
  %299 = vst [vmem:[#allocation2 + $0x38] sm:$0xff] %v283
  %300 = vst [vmem:[#allocation2 + $0x40] sm:$0xff] %v284
  %301 = vst [vmem:[#allocation2 + $0x48] sm:$0xff] %v285
  %302 = vst [vmem:[#allocation2 + $0x50] sm:$0xff] %v286
  %303 = vst [vmem:[#allocation2 + $0x58] sm:$0xff] %v287
  %304 = vst [vmem:[#allocation2 + $0x60] sm:$0xff] %v288
  %305 = vst [vmem:[#allocation2 + $0x68] sm:$0xff] %v289
  %306 = vst [vmem:[#allocation2 + $0x70] sm:$0xff] %v290
  %307 = vst [vmem:[#allocation2 + $0x78] sm:$0xff] %v291
  // Predicated region
  $region18: #{a_call__.26} parent=0 // pred_check
    %p308 = pneg %p15
  $region19: #{a_call__.26} parent=0 // pred_check_branch
    %310 = sbr.rel (%p308) target = $region21
  $region20: #{a_call__.26} parent=0 // pred_region
    %v311 = vld [vmem:[#allocation2] sm:$0xff]
    %v312 = vld [vmem:[#allocation2 + $0x8] sm:$0xff]
    %v313 = vld [vmem:[#allocation2 + $0x10] sm:$0xff]
    %v314 = vld [vmem:[#allocation2 + $0x18] sm:$0xff]
    %v315 = vld [vmem:[#allocation2 + $0x20] sm:$0xff]
    %v316 = vld [vmem:[#allocation2 + $0x28] sm:$0xff]
    %v317 = vld [vmem:[#allocation2 + $0x30] sm:$0xff]
    %v318 = vld [vmem:[#allocation2 + $0x38] sm:$0xff]
    %v319 = vld [vmem:[#allocation2 + $0x40] sm:$0xff]
    %v320 = vld [vmem:[#allocation2 + $0x48] sm:$0xff]
    %v321 = vld [vmem:[#allocation2 + $0x50] sm:$0xff]
    %v322 = vld [vmem:[#allocation2 + $0x58] sm:$0xff]
    %v323 = vld [vmem:[#allocation2 + $0x60] sm:$0xff]
    %v324 = vld [vmem:[#allocation2 + $0x68] sm:$0xff]
    %v325 = vld [vmem:[#allocation2 + $0x70] sm:$0xff]
    %v326 = vld [vmem:[#allocation2 + $0x78] sm:$0xff]
    %v327 = vld [vmem:[%s2] sm:$0x1]
    %v329 = vlaneseq
    %v330 = vshrl.u32 %v329, 7
    %v331 = vsub.s32 0, %v330
    %v332 = vrot.slane %v327, %v331
    %v334 = vadd.f32 %v311, %v332
    %v335 = vadd.f32 %v312, %v332
    %v336 = vadd.f32 %v313, %v332
    %v337 = vadd.f32 %v314, %v332
    %v338 = vadd.f32 %v315, %v332
    %v339 = vadd.f32 %v316, %v332
    %v340 = vadd.f32 %v317, %v332
    %v341 = vadd.f32 %v318, %v332
    %v342 = vadd.f32 %v319, %v332
    %v343 = vadd.f32 %v320, %v332
    %v344 = vadd.f32 %v321, %v332
    %v345 = vadd.f32 %v322, %v332
    %v346 = vadd.f32 %v323, %v332
    %v347 = vadd.f32 %v324, %v332
    %v348 = vadd.f32 %v325, %v332
    %v349 = vadd.f32 %v326, %v332
    %v350 = vmax.f32 %v334, 0.0
    %v351 = vmax.f32 %v335, 0.0
    %v352 = vmax.f32 %v336, 0.0
    %v353 = vmax.f32 %v337, 0.0
    %v354 = vmax.f32 %v338, 0.0
    %v355 = vmax.f32 %v339, 0.0
    %v356 = vmax.f32 %v340, 0.0
    %v357 = vmax.f32 %v341, 0.0
    %v358 = vmax.f32 %v342, 0.0
    %v359 = vmax.f32 %v343, 0.0
    %v360 = vmax.f32 %v344, 0.0
    %v361 = vmax.f32 %v345, 0.0
    %v362 = vmax.f32 %v346, 0.0
    %v363 = vmax.f32 %v347, 0.0
    %v364 = vmax.f32 %v348, 0.0
    %v365 = vmax.f32 %v349, 0.0
    %v366 = vpack.c.bf16 %v351, %v350
    %v367 = vpack.c.bf16 %v353, %v352
    %v368 = vpack.c.bf16 %v355, %v354
    %v369 = vpack.c.bf16 %v357, %v356
    %v370 = vpack.c.bf16 %v359, %v358
    %v371 = vpack.c.bf16 %v361, %v360
    %v372 = vpack.c.bf16 %v363, %v362
    %v373 = vpack.c.bf16 %v365, %v364
    %v382 = vunpack.c.l.b16 %v366
    %v383 = vunpack.c.h.b16 %v366
    %v384 = vunpack.c.l.b16 %v367
    %v385 = vunpack.c.h.b16 %v367
    %v386 = vunpack.c.l.b16 %v368
    %v387 = vunpack.c.h.b16 %v368
    %v388 = vunpack.c.l.b16 %v369
    %v389 = vunpack.c.h.b16 %v369
    %v390 = vunpack.c.l.b16 %v370
    %v391 = vunpack.c.h.b16 %v370
    %v392 = vunpack.c.l.b16 %v371
    %v393 = vunpack.c.h.b16 %v371
    %v394 = vunpack.c.l.b16 %v372
    %v395 = vunpack.c.h.b16 %v372
    %v396 = vunpack.c.l.b16 %v373
    %v397 = vunpack.c.h.b16 %v373
    %v398 = vpack.c.b16 %v382, %v382
    %v399 = vpack.c.b16 %v383, %v383
    %v400 = vpack.c.b16 %v384, %v384
    %v401 = vpack.c.b16 %v385, %v385
    %v402 = vpack.c.b16 %v386, %v386
    %v403 = vpack.c.b16 %v387, %v387
    %v404 = vpack.c.b16 %v388, %v388
    %v405 = vpack.c.b16 %v389, %v389
    %v406 = vpack.c.b16 %v390, %v390
    %v407 = vpack.c.b16 %v391, %v391
    %v408 = vpack.c.b16 %v392, %v392
    %v409 = vpack.c.b16 %v393, %v393
    %v410 = vpack.c.b16 %v394, %v394
    %v411 = vpack.c.b16 %v395, %v395
    %v412 = vpack.c.b16 %v396, %v396
    %v413 = vpack.c.b16 %v397, %v397
    %430 = vst [vmem:[%s3] sm:$0xf] %v398
    %431 = vst [vmem:[%s3 + $0x4] sm:$0xf] %v399
    %432 = vst [vmem:[%s3 + $0x8] sm:$0xf] %v400
    %433 = vst [vmem:[%s3 + $0xc] sm:$0xf] %v401
    %434 = vst [vmem:[%s3 + $0x10] sm:$0xf] %v402
    %435 = vst [vmem:[%s3 + $0x14] sm:$0xf] %v403
    %436 = vst [vmem:[%s3 + $0x18] sm:$0xf] %v404
    %437 = vst [vmem:[%s3 + $0x1c] sm:$0xf] %v405
    %438 = vst [vmem:[%s3 + $0x20] sm:$0xf] %v406
    %439 = vst [vmem:[%s3 + $0x24] sm:$0xf] %v407
    %440 = vst [vmem:[%s3 + $0x28] sm:$0xf] %v408
    %441 = vst [vmem:[%s3 + $0x2c] sm:$0xf] %v409
    %442 = vst [vmem:[%s3 + $0x30] sm:$0xf] %v410
    %443 = vst [vmem:[%s3 + $0x34] sm:$0xf] %v411
    %444 = vst [vmem:[%s3 + $0x38] sm:$0xf] %v412
    %445 = vst [vmem:[%s3 + $0x3c] sm:$0xf] %v413
  $region21: #{a_call__.26} parent=0 // pred_fallthru
    _
  // Predicated region
  $region22: #{a_call__.26} parent=0 // pred_check
    _
  $region23: #{a_call__.26} parent=0 // pred_check_branch
    %447 = sbr.rel (0) target = $region25
  $region24: #{a_call__.26} parent=0 // pred_region
    _
  $region25: #{a_call__.26} parent=0 // pred_fallthru
    _
  // Predicated region
  $region26: #{a_call__.26} parent=0 // pred_check
    _
  $region27: #{a_call__.26} parent=0 // pred_check_branch
    %449 = sbr.rel (0) target = $region29
  $region28: #{a_call__.26} parent=0 // pred_region
    _
  $region29: #{a_call__.26} parent=0 // pred_fallthru
    _

// kernel: a_call__.28
$region0: #{a_call__.28}
  #allocation0 [shape = 'u32[]', space=smem, size = 0x4, offset = 0x4, fixed_abs, tag = 'smem constant byte address 0x4 - core index']
  #allocation1 [shape = 'u32[144,128]{1,0:T(1,128)}', space=vmem, size = 0x12000, scoped, tag = 'internal scratch']
  #allocation2 [shape = 'f32[128,256]{1,0:T(8,128)}', space=vmem, size = 0x20000, scoped, tag = 'scratch operand']
  %s0 = inlined_call_operand.vmem [shape: bf16[128,128], index: 0, kind: input, shape index: {}]
  %s1 = inlined_call_operand.vmem [shape: bf16[128,256], index: 1, kind: input, shape index: {}]
  %s2 = inlined_call_operand.vmem [shape: f32[1,256], index: 2, kind: input, shape index: {}]
  %s3 = inlined_call_operand.vmem [shape: bf16[128,256], index: 3, kind: output, shape index: {}]
  %s4 = sld [smem:[#allocation0]]
  $region30: #{a_call__.28} parent=0
    _
  %s6 = ssub.s32 1, %s4
  %s7 = scalar_select 0, %s6, %s4
  // Predicated region
  $region2: #{a_call__.28} parent=0 // pred_check
    _
  $region3: #{a_call__.28} parent=0 // pred_check_branch
    %9 = sbr.rel (0) target = $region5
  $region4: #{a_call__.28} parent=0 // pred_region
    _
  $region5: #{a_call__.28} parent=0 // pred_fallthru
    _
  // Predicated region
  $region6: #{a_call__.28} parent=0 // pred_check
    _
  $region7: #{a_call__.28} parent=0 // pred_check_branch
    %11 = sbr.rel (0) target = $region9
  $region8: #{a_call__.28} parent=0 // pred_region
    _
  $region9: #{a_call__.28} parent=0 // pred_fallthru
    _
  // Predicated region
  $region10: #{a_call__.28} parent=0 // pred_check
    _
  $region11: #{a_call__.28} parent=0 // pred_check_branch
    %13 = sbr.rel (0) target = $region13
  $region12: #{a_call__.28} parent=0 // pred_region
    _
  $region13: #{a_call__.28} parent=0 // pred_fallthru
    _
  %p15 = scmp.eq.s32.totalorder 0, 0
  // Predicated region
  $region14: #{a_call__.28} parent=0 // pred_check
    %p16 = pneg %p15
  $region15: #{a_call__.28} parent=0 // pred_check_branch
    %18 = sbr.rel (%p16) target = $region17
  $region16: #{a_call__.28} parent=0 // pred_region
    %19 = vst [vmem:[#allocation2] sm:$0xff] 0.0
    %20 = vst [vmem:[#allocation2 + $0x8] sm:$0xff] 0.0
    %21 = vst [vmem:[#allocation2 + $0x10] sm:$0xff] 0.0
    %22 = vst [vmem:[#allocation2 + $0x18] sm:$0xff] 0.0
    %23 = vst [vmem:[#allocation2 + $0x20] sm:$0xff] 0.0
    %24 = vst [vmem:[#allocation2 + $0x28] sm:$0xff] 0.0
    %25 = vst [vmem:[#allocation2 + $0x30] sm:$0xff] 0.0
    %26 = vst [vmem:[#allocation2 + $0x38] sm:$0xff] 0.0
    %27 = vst [vmem:[#allocation2 + $0x40] sm:$0xff] 0.0
    %28 = vst [vmem:[#allocation2 + $0x48] sm:$0xff] 0.0
    %29 = vst [vmem:[#allocation2 + $0x50] sm:$0xff] 0.0
    %30 = vst [vmem:[#allocation2 + $0x58] sm:$0xff] 0.0
    %31 = vst [vmem:[#allocation2 + $0x60] sm:$0xff] 0.0
    %32 = vst [vmem:[#allocation2 + $0x68] sm:$0xff] 0.0
    %33 = vst [vmem:[#allocation2 + $0x70] sm:$0xff] 0.0
    %34 = vst [vmem:[#allocation2 + $0x78] sm:$0xff] 0.0
    %35 = vst [vmem:[#allocation2 + $0x80] sm:$0xff] 0.0
    %36 = vst [vmem:[#allocation2 + $0x88] sm:$0xff] 0.0
    %37 = vst [vmem:[#allocation2 + $0x90] sm:$0xff] 0.0
    %38 = vst [vmem:[#allocation2 + $0x98] sm:$0xff] 0.0
    %39 = vst [vmem:[#allocation2 + $0xa0] sm:$0xff] 0.0
    %40 = vst [vmem:[#allocation2 + $0xa8] sm:$0xff] 0.0
    %41 = vst [vmem:[#allocation2 + $0xb0] sm:$0xff] 0.0
    %42 = vst [vmem:[#allocation2 + $0xb8] sm:$0xff] 0.0
    %43 = vst [vmem:[#allocation2 + $0xc0] sm:$0xff] 0.0
    %44 = vst [vmem:[#allocation2 + $0xc8] sm:$0xff] 0.0
    %45 = vst [vmem:[#allocation2 + $0xd0] sm:$0xff] 0.0
    %46 = vst [vmem:[#allocation2 + $0xd8] sm:$0xff] 0.0
    %47 = vst [vmem:[#allocation2 + $0xe0] sm:$0xff] 0.0
    %48 = vst [vmem:[#allocation2 + $0xe8] sm:$0xff] 0.0
    %49 = vst [vmem:[#allocation2 + $0xf0] sm:$0xff] 0.0
    %50 = vst [vmem:[#allocation2 + $0xf8] sm:$0xff] 0.0
  $region17: #{a_call__.28} parent=0 // pred_fallthru
    _
  %v51 = vld [vmem:[#allocation2] sm:$0xff]
  %v52 = vld [vmem:[#allocation2 + $0x8] sm:$0xff]
  %v53 = vld [vmem:[#allocation2 + $0x10] sm:$0xff]
  %v54 = vld [vmem:[#allocation2 + $0x18] sm:$0xff]
  %v55 = vld [vmem:[#allocation2 + $0x20] sm:$0xff]
  %v56 = vld [vmem:[#allocation2 + $0x28] sm:$0xff]
  %v57 = vld [vmem:[#allocation2 + $0x30] sm:$0xff]
  %v58 = vld [vmem:[#allocation2 + $0x38] sm:$0xff]
  %v59 = vld [vmem:[#allocation2 + $0x40] sm:$0xff]
  %v60 = vld [vmem:[#allocation2 + $0x48] sm:$0xff]
  %v61 = vld [vmem:[#allocation2 + $0x50] sm:$0xff]
  %v62 = vld [vmem:[#allocation2 + $0x58] sm:$0xff]
  %v63 = vld [vmem:[#allocation2 + $0x60] sm:$0xff]
  %v64 = vld [vmem:[#allocation2 + $0x68] sm:$0xff]
  %v65 = vld [vmem:[#allocation2 + $0x70] sm:$0xff]
  %v66 = vld [vmem:[#allocation2 + $0x78] sm:$0xff]
  %v67 = vld [vmem:[#allocation2 + $0x80] sm:$0xff]
  %v68 = vld [vmem:[#allocation2 + $0x88] sm:$0xff]
  %v69 = vld [vmem:[#allocation2 + $0x90] sm:$0xff]
  %v70 = vld [vmem:[#allocation2 + $0x98] sm:$0xff]
  %v71 = vld [vmem:[#allocation2 + $0xa0] sm:$0xff]
  %v72 = vld [vmem:[#allocation2 + $0xa8] sm:$0xff]
  %v73 = vld [vmem:[#allocation2 + $0xb0] sm:$0xff]
  %v74 = vld [vmem:[#allocation2 + $0xb8] sm:$0xff]
  %v75 = vld [vmem:[#allocation2 + $0xc0] sm:$0xff]
  %v76 = vld [vmem:[#allocation2 + $0xc8] sm:$0xff]
  %v77 = vld [vmem:[#allocation2 + $0xd0] sm:$0xff]
  %v78 = vld [vmem:[#allocation2 + $0xd8] sm:$0xff]
  %v79 = vld [vmem:[#allocation2 + $0xe0] sm:$0xff]
  %v80 = vld [vmem:[#allocation2 + $0xe8] sm:$0xff]
  %v81 = vld [vmem:[#allocation2 + $0xf0] sm:$0xff]
  %v82 = vld [vmem:[#allocation2 + $0xf8] sm:$0xff]
  %v83 = vld [vmem:[%s0] sm:$0xf]
  %v84 = vld [vmem:[%s0 + $0x4] sm:$0xf]
  %v85 = vld [vmem:[%s0 + $0x8] sm:$0xf]
  %v86 = vld [vmem:[%s0 + $0xc] sm:$0xf]
  %v87 = vld [vmem:[%s0 + $0x10] sm:$0xf]
  %v88 = vld [vmem:[%s0 + $0x14] sm:$0xf]
  %v89 = vld [vmem:[%s0 + $0x18] sm:$0xf]
  %v90 = vld [vmem:[%s0 + $0x1c] sm:$0xf]
  %v91 = vld [vmem:[%s0 + $0x20] sm:$0xf]
  %v92 = vld [vmem:[%s0 + $0x24] sm:$0xf]
  %v93 = vld [vmem:[%s0 + $0x28] sm:$0xf]
  %v94 = vld [vmem:[%s0 + $0x2c] sm:$0xf]
  %v95 = vld [vmem:[%s0 + $0x30] sm:$0xf]
  %v96 = vld [vmem:[%s0 + $0x34] sm:$0xf]
  %v97 = vld [vmem:[%s0 + $0x38] sm:$0xf]
  %v98 = vld [vmem:[%s0 + $0x3c] sm:$0xf]
  %v99 = vld [vmem:[%s1] sm:$0xff]
  %v100 = vld [vmem:[%s1 + $0x8] sm:$0xff]
  %v101 = vld [vmem:[%s1 + $0x10] sm:$0xff]
  %v102 = vld [vmem:[%s1 + $0x18] sm:$0xff]
  %v103 = vld [vmem:[%s1 + $0x20] sm:$0xff]
  %v104 = vld [vmem:[%s1 + $0x28] sm:$0xff]
  %v105 = vld [vmem:[%s1 + $0x30] sm:$0xff]
  %v106 = vld [vmem:[%s1 + $0x38] sm:$0xff]
  %v107 = vld [vmem:[%s1 + $0x40] sm:$0xff]
  %v108 = vld [vmem:[%s1 + $0x48] sm:$0xff]
  %v109 = vld [vmem:[%s1 + $0x50] sm:$0xff]
  %v110 = vld [vmem:[%s1 + $0x58] sm:$0xff]
  %v111 = vld [vmem:[%s1 + $0x60] sm:$0xff]
  %v112 = vld [vmem:[%s1 + $0x68] sm:$0xff]
  %v113 = vld [vmem:[%s1 + $0x70] sm:$0xff]
  %v114 = vld [vmem:[%s1 + $0x78] sm:$0xff]
  %v131 = vunpack.c.l.b16 %v83
  %v132 = vunpack.c.l.b16 %v84
  %v133 = vunpack.c.l.b16 %v85
  %v134 = vunpack.c.l.b16 %v86
  %v135 = vunpack.c.l.b16 %v87
  %v136 = vunpack.c.l.b16 %v88
  %v137 = vunpack.c.l.b16 %v89
  %v138 = vunpack.c.l.b16 %v90
  %v139 = vunpack.c.l.b16 %v91
  %v140 = vunpack.c.l.b16 %v92
  %v141 = vunpack.c.l.b16 %v93
  %v142 = vunpack.c.l.b16 %v94
  %v143 = vunpack.c.l.b16 %v95
  %v144 = vunpack.c.l.b16 %v96
  %v145 = vunpack.c.l.b16 %v97
  %v146 = vunpack.c.l.b16 %v98
  %v147 = vpack.c.b16 %v132, %v131
  %v148 = vpack.c.b16 %v134, %v133
  %v149 = vpack.c.b16 %v136, %v135
  %v150 = vpack.c.b16 %v138, %v137
  %v151 = vpack.c.b16 %v140, %v139
  %v152 = vpack.c.b16 %v142, %v141
  %v153 = vpack.c.b16 %v144, %v143
  %v154 = vpack.c.b16 %v146, %v145
  %v179 = vunpack.c.l.b16 %v99
  %v180 = vunpack.c.h.b16 %v99
  %v181 = vunpack.c.l.b16 %v100
  %v182 = vunpack.c.h.b16 %v100
  %v183 = vunpack.c.l.b16 %v101
  %v184 = vunpack.c.h.b16 %v101
  %v185 = vunpack.c.l.b16 %v102
  %v186 = vunpack.c.h.b16 %v102
  %v187 = vunpack.c.l.b16 %v103
  %v188 = vunpack.c.h.b16 %v103
  %v189 = vunpack.c.l.b16 %v104
  %v190 = vunpack.c.h.b16 %v104
  %v191 = vunpack.c.l.b16 %v105
  %v192 = vunpack.c.h.b16 %v105
  %v193 = vunpack.c.l.b16 %v106
  %v194 = vunpack.c.h.b16 %v106
  %v195 = vunpack.c.l.b16 %v107
  %v196 = vunpack.c.h.b16 %v107
  %v197 = vunpack.c.l.b16 %v108
  %v198 = vunpack.c.h.b16 %v108
  %v199 = vunpack.c.l.b16 %v109
  %v200 = vunpack.c.h.b16 %v109
  %v201 = vunpack.c.l.b16 %v110
  %v202 = vunpack.c.h.b16 %v110
  %v203 = vunpack.c.l.b16 %v111
  %v204 = vunpack.c.h.b16 %v111
  %v205 = vunpack.c.l.b16 %v112
  %v206 = vunpack.c.h.b16 %v112
  %v207 = vunpack.c.l.b16 %v113
  %v208 = vunpack.c.h.b16 %v113
  %v209 = vunpack.c.l.b16 %v114
  %v210 = vunpack.c.h.b16 %v114
  %v211 = vpack.c.b16 %v181, %v179
  %v212 = vpack.c.b16 %v182, %v180
  %v213 = vpack.c.b16 %v185, %v183
  %v214 = vpack.c.b16 %v186, %v184
  %v215 = vpack.c.b16 %v189, %v187
  %v216 = vpack.c.b16 %v190, %v188
  %v217 = vpack.c.b16 %v193, %v191
  %v218 = vpack.c.b16 %v194, %v192
  %v219 = vpack.c.b16 %v197, %v195
  %v220 = vpack.c.b16 %v198, %v196
  %v221 = vpack.c.b16 %v201, %v199
  %v222 = vpack.c.b16 %v202, %v200
  %v223 = vpack.c.b16 %v205, %v203
  %v224 = vpack.c.b16 %v206, %v204
  %v225 = vpack.c.b16 %v209, %v207
  %v226 = vpack.c.b16 %v210, %v208
  %243 = vmatprep.subr.bf16.mxu0 %v226
  %244 = vmatpush1.bf16.msra.mxu0 %v225
  %245 = vmatprep.subr.bf16.mxu0 %v224
  %246 = vmatpush1.bf16.msra.mxu0 %v223
  %247 = vmatprep.subr.bf16.mxu0 %v222
  %248 = vmatpush1.bf16.msra.mxu0 %v221
  %249 = vmatprep.subr.bf16.mxu0 %v220
  %250 = vmatpush1.bf16.msra.mxu0 %v219
  %251 = vmatprep.subr.bf16.mxu0 %v218
  %252 = vmatpush1.bf16.msra.mxu0 %v217
  %253 = vmatprep.subr.bf16.mxu0 %v216
  %254 = vmatpush1.bf16.msra.mxu0 %v215
  %255 = vmatprep.subr.bf16.mxu0 %v214
  %256 = vmatpush1.bf16.msra.mxu0 %v213
  %257 = vmatprep.subr.bf16.mxu0 %v212
  %258 = vmatpush1.bf16.msra.mxu0 %v211
  %259 = vmatprep.subr.bf16.mxu0 0
  %260 = vmatpush2.bf16.msra.mxu0 0
  %261 = vmatprep.subr.bf16.mxu0 0
  %262 = vmatpush2.bf16.msra.mxu0 0
  %263 = vmatprep.subr.bf16.mxu0 0
  %264 = vmatpush2.bf16.msra.mxu0 0
  %265 = vmatprep.subr.bf16.mxu0 0
  %266 = vmatpush2.bf16.msra.mxu0 0
  %267 = vmatprep.subr.bf16.mxu0 0
  %268 = vmatpush2.bf16.msra.mxu0 0
  %269 = vmatprep.subr.bf16.mxu0 0
  %270 = vmatpush2.bf16.msra.mxu0 0
  %271 = vmatprep.subr.bf16.mxu0 0
  %272 = vmatpush2.bf16.msra.mxu0 0
  %273 = vmatprep.subr.bf16.mxu0 0
  %274 = vmatpush2.bf16.msra.mxu0 0
  %275 = vmatprep.mubr.bf16.mxu0 0
  %276 = vmatmul.mubr.bf16.gmra.mxu0 %v147
  %v277 = vpop.f32.mrf.mxu0
  %v278 = vadd.f32 0.0, %v277
  %v279 = vpop.f32.mrf.mxu0
  %v280 = vadd.f32 0.0, %v279
  %v281 = vpop.f32.mrf.mxu0
  %v282 = vadd.f32 0.0, %v281
  %v283 = vpop.f32.mrf.mxu0
  %v284 = vadd.f32 0.0, %v283
  %285 = vmatprep.mubr.bf16.mxu0 0
  %286 = vmatmul.mubr.bf16.gmra.mxu0 %v148
  %v287 = vpop.f32.mrf.mxu0
  %v288 = vadd.f32 0.0, %v287
  %v289 = vpop.f32.mrf.mxu0
  %v290 = vadd.f32 0.0, %v289
  %v291 = vpop.f32.mrf.mxu0
  %v292 = vadd.f32 0.0, %v291
  %v293 = vpop.f32.mrf.mxu0
  %v294 = vadd.f32 0.0, %v293
  %295 = vmatprep.mubr.bf16.mxu0 0
  %296 = vmatmul.mubr.bf16.gmra.mxu0 %v149
  %v297 = vpop.f32.mrf.mxu0
  %v298 = vadd.f32 0.0, %v297
  %v299 = vpop.f32.mrf.mxu0
  %v300 = vadd.f32 0.0, %v299
  %v301 = vpop.f32.mrf.mxu0
  %v302 = vadd.f32 0.0, %v301
  %v303 = vpop.f32.mrf.mxu0
  %v304 = vadd.f32 0.0, %v303
  %305 = vmatprep.mubr.bf16.mxu0 0
  %306 = vmatmul.mubr.bf16.gmra.mxu0 %v150
  %v307 = vpop.f32.mrf.mxu0
  %v308 = vadd.f32 0.0, %v307
  %v309 = vpop.f32.mrf.mxu0
  %v310 = vadd.f32 0.0, %v309
  %v311 = vpop.f32.mrf.mxu0
  %v312 = vadd.f32 0.0, %v311
  %v313 = vpop.f32.mrf.mxu0
  %v314 = vadd.f32 0.0, %v313
  %315 = vmatprep.mubr.bf16.mxu0 0
  %316 = vmatmul.mubr.bf16.gmra.mxu0 %v151
  %v317 = vpop.f32.mrf.mxu0
  %v318 = vadd.f32 0.0, %v317
  %v319 = vpop.f32.mrf.mxu0
  %v320 = vadd.f32 0.0, %v319
  %v321 = vpop.f32.mrf.mxu0
  %v322 = vadd.f32 0.0, %v321
  %v323 = vpop.f32.mrf.mxu0
  %v324 = vadd.f32 0.0, %v323
  %325 = vmatprep.mubr.bf16.mxu0 0
  %326 = vmatmul.mubr.bf16.gmra.mxu0 %v152
  %v327 = vpop.f32.mrf.mxu0
  %v328 = vadd.f32 0.0, %v327
  %v329 = vpop.f32.mrf.mxu0
  %v330 = vadd.f32 0.0, %v329
  %v331 = vpop.f32.mrf.mxu0
  %v332 = vadd.f32 0.0, %v331
  %v333 = vpop.f32.mrf.mxu0
  %v334 = vadd.f32 0.0, %v333
  %335 = vmatprep.mubr.bf16.mxu0 0
  %336 = vmatmul.mubr.bf16.gmra.mxu0 %v153
  %v337 = vpop.f32.mrf.mxu0
  %v338 = vadd.f32 0.0, %v337
  %v339 = vpop.f32.mrf.mxu0
  %v340 = vadd.f32 0.0, %v339
  %v341 = vpop.f32.mrf.mxu0
  %v342 = vadd.f32 0.0, %v341
  %v343 = vpop.f32.mrf.mxu0
  %v344 = vadd.f32 0.0, %v343
  %345 = vmatprep.mubr.bf16.mxu0 0
  %346 = vmatmul.mubr.bf16.gmra.mxu0 %v154
  %v347 = vpop.f32.mrf.mxu0
  %v348 = vadd.f32 0.0, %v347
  %v349 = vpop.f32.mrf.mxu0
  %v350 = vadd.f32 0.0, %v349
  %v351 = vpop.f32.mrf.mxu0
  %v352 = vadd.f32 0.0, %v351
  %v353 = vpop.f32.mrf.mxu0
  %v354 = vadd.f32 0.0, %v353
  %355 = vdwg.mxu0
  %v356 = vadd.f32 %v51, %v278
  %v357 = vadd.f32 %v52, %v280
  %v358 = vadd.f32 %v53, %v282
  %v359 = vadd.f32 %v54, %v284
  %v360 = vadd.f32 %v55, %v288
  %v361 = vadd.f32 %v56, %v290
  %v362 = vadd.f32 %v57, %v292
  %v363 = vadd.f32 %v58, %v294
  %v364 = vadd.f32 %v59, %v298
  %v365 = vadd.f32 %v60, %v300
  %v366 = vadd.f32 %v61, %v302
  %v367 = vadd.f32 %v62, %v304
  %v368 = vadd.f32 %v63, %v308
  %v369 = vadd.f32 %v64, %v310
  %v370 = vadd.f32 %v65, %v312
  %v371 = vadd.f32 %v66, %v314
  %v372 = vadd.f32 %v67, %v318
  %v373 = vadd.f32 %v68, %v320
  %v374 = vadd.f32 %v69, %v322
  %v375 = vadd.f32 %v70, %v324
  %v376 = vadd.f32 %v71, %v328
  %v377 = vadd.f32 %v72, %v330
  %v378 = vadd.f32 %v73, %v332
  %v379 = vadd.f32 %v74, %v334
  %v380 = vadd.f32 %v75, %v338
  %v381 = vadd.f32 %v76, %v340
  %v382 = vadd.f32 %v77, %v342
  %v383 = vadd.f32 %v78, %v344
  %v384 = vadd.f32 %v79, %v348
  %v385 = vadd.f32 %v80, %v350
  %v386 = vadd.f32 %v81, %v352
  %v387 = vadd.f32 %v82, %v354
  %388 = vst [vmem:[#allocation2] sm:$0xff] %v356
  %389 = vst [vmem:[#allocation2 + $0x8] sm:$0xff] %v357
  %390 = vst [vmem:[#allocation2 + $0x10] sm:$0xff] %v358
  %391 = vst [vmem:[#allocation2 + $0x18] sm:$0xff] %v359
  %392 = vst [vmem:[#allocation2 + $0x20] sm:$0xff] %v360
  %393 = vst [vmem:[#allocation2 + $0x28] sm:$0xff] %v361
  %394 = vst [vmem:[#allocation2 + $0x30] sm:$0xff] %v362
  %395 = vst [vmem:[#allocation2 + $0x38] sm:$0xff] %v363
  %396 = vst [vmem:[#allocation2 + $0x40] sm:$0xff] %v364
  %397 = vst [vmem:[#allocation2 + $0x48] sm:$0xff] %v365
  %398 = vst [vmem:[#allocation2 + $0x50] sm:$0xff] %v366
  %399 = vst [vmem:[#allocation2 + $0x58] sm:$0xff] %v367
  %400 = vst [vmem:[#allocation2 + $0x60] sm:$0xff] %v368
  %401 = vst [vmem:[#allocation2 + $0x68] sm:$0xff] %v369
  %402 = vst [vmem:[#allocation2 + $0x70] sm:$0xff] %v370
  %403 = vst [vmem:[#allocation2 + $0x78] sm:$0xff] %v371
  %404 = vst [vmem:[#allocation2 + $0x80] sm:$0xff] %v372
  %405 = vst [vmem:[#allocation2 + $0x88] sm:$0xff] %v373
  %406 = vst [vmem:[#allocation2 + $0x90] sm:$0xff] %v374
  %407 = vst [vmem:[#allocation2 + $0x98] sm:$0xff] %v375
  %408 = vst [vmem:[#allocation2 + $0xa0] sm:$0xff] %v376
  %409 = vst [vmem:[#allocation2 + $0xa8] sm:$0xff] %v377
  %410 = vst [vmem:[#allocation2 + $0xb0] sm:$0xff] %v378
  %411 = vst [vmem:[#allocation2 + $0xb8] sm:$0xff] %v379
  %412 = vst [vmem:[#allocation2 + $0xc0] sm:$0xff] %v380
  %413 = vst [vmem:[#allocation2 + $0xc8] sm:$0xff] %v381
  %414 = vst [vmem:[#allocation2 + $0xd0] sm:$0xff] %v382
  %415 = vst [vmem:[#allocation2 + $0xd8] sm:$0xff] %v383
  %416 = vst [vmem:[#allocation2 + $0xe0] sm:$0xff] %v384
  %417 = vst [vmem:[#allocation2 + $0xe8] sm:$0xff] %v385
  %418 = vst [vmem:[#allocation2 + $0xf0] sm:$0xff] %v386
  %419 = vst [vmem:[#allocation2 + $0xf8] sm:$0xff] %v387
  // Predicated region
  $region18: #{a_call__.28} parent=0 // pred_check
    %p420 = pneg %p15
  $region19: #{a_call__.28} parent=0 // pred_check_branch
    %422 = sbr.rel (%p420) target = $region21
  $region20: #{a_call__.28} parent=0 // pred_region
    %v423 = vld [vmem:[#allocation2] sm:$0xff]
    %v424 = vld [vmem:[#allocation2 + $0x8] sm:$0xff]
    %v425 = vld [vmem:[#allocation2 + $0x10] sm:$0xff]
    %v426 = vld [vmem:[#allocation2 + $0x18] sm:$0xff]
    %v427 = vld [vmem:[#allocation2 + $0x20] sm:$0xff]
    %v428 = vld [vmem:[#allocation2 + $0x28] sm:$0xff]
    %v429 = vld [vmem:[#allocation2 + $0x30] sm:$0xff]
    %v430 = vld [vmem:[#allocation2 + $0x38] sm:$0xff]
    %v431 = vld [vmem:[#allocation2 + $0x40] sm:$0xff]
    %v432 = vld [vmem:[#allocation2 + $0x48] sm:$0xff]
    %v433 = vld [vmem:[#allocation2 + $0x50] sm:$0xff]
    %v434 = vld [vmem:[#allocation2 + $0x58] sm:$0xff]
    %v435 = vld [vmem:[#allocation2 + $0x60] sm:$0xff]
    %v436 = vld [vmem:[#allocation2 + $0x68] sm:$0xff]
    %v437 = vld [vmem:[#allocation2 + $0x70] sm:$0xff]
    %v438 = vld [vmem:[#allocation2 + $0x78] sm:$0xff]
    %v439 = vld [vmem:[#allocation2 + $0x80] sm:$0xff]
    %v440 = vld [vmem:[#allocation2 + $0x88] sm:$0xff]
    %v441 = vld [vmem:[#allocation2 + $0x90] sm:$0xff]
    %v442 = vld [vmem:[#allocation2 + $0x98] sm:$0xff]
    %v443 = vld [vmem:[#allocation2 + $0xa0] sm:$0xff]
    %v444 = vld [vmem:[#allocation2 + $0xa8] sm:$0xff]
    %v445 = vld [vmem:[#allocation2 + $0xb0] sm:$0xff]
    %v446 = vld [vmem:[#allocation2 + $0xb8] sm:$0xff]
    %v447 = vld [vmem:[#allocation2 + $0xc0] sm:$0xff]
    %v448 = vld [vmem:[#allocation2 + $0xc8] sm:$0xff]
    %v449 = vld [vmem:[#allocation2 + $0xd0] sm:$0xff]
    %v450 = vld [vmem:[#allocation2 + $0xd8] sm:$0xff]
    %v451 = vld [vmem:[#allocation2 + $0xe0] sm:$0xff]
    %v452 = vld [vmem:[#allocation2 + $0xe8] sm:$0xff]
    %v453 = vld [vmem:[#allocation2 + $0xf0] sm:$0xff]
    %v454 = vld [vmem:[#allocation2 + $0xf8] sm:$0xff]
    %v455 = vld [vmem:[%s2] sm:$0x3]
    %v457 = vlaneseq
    %v458 = vshrl.u32 %v457, 7
    %v459 = vsub.s32 0, %v458
    %v460 = vrot.slane %v455, %v459
    %v461 = vlaneseq
    %v462 = vshrl.u32 %v461, 7
    %v463 = vsub.s32 1, %v462
    %v464 = vrot.slane %v455, %v463
    %v467 = vadd.f32 %v423, %v460
    %v468 = vadd.f32 %v424, %v464
    %v469 = vadd.f32 %v425, %v460
    %v470 = vadd.f32 %v426, %v464
    %v471 = vadd.f32 %v427, %v460
    %v472 = vadd.f32 %v428, %v464
    %v473 = vadd.f32 %v429, %v460
    %v474 = vadd.f32 %v430, %v464
    %v475 = vadd.f32 %v431, %v460
    %v476 = vadd.f32 %v432, %v464
    %v477 = vadd.f32 %v433, %v460
    %v478 = vadd.f32 %v434, %v464
    %v479 = vadd.f32 %v435, %v460
    %v480 = vadd.f32 %v436, %v464
    %v481 = vadd.f32 %v437, %v460
    %v482 = vadd.f32 %v438, %v464
    %v483 = vadd.f32 %v439, %v460
    %v484 = vadd.f32 %v440, %v464
    %v485 = vadd.f32 %v441, %v460
    %v486 = vadd.f32 %v442, %v464
    %v487 = vadd.f32 %v443, %v460
    %v488 = vadd.f32 %v444, %v464
    %v489 = vadd.f32 %v445, %v460
    %v490 = vadd.f32 %v446, %v464
    %v491 = vadd.f32 %v447, %v460
    %v492 = vadd.f32 %v448, %v464
    %v493 = vadd.f32 %v449, %v460
    %v494 = vadd.f32 %v450, %v464
    %v495 = vadd.f32 %v451, %v460
    %v496 = vadd.f32 %v452, %v464
    %v497 = vadd.f32 %v453, %v460
    %v498 = vadd.f32 %v454, %v464
    %v499 = vpack.c.bf16 %v469, %v467
    %v500 = vpack.c.bf16 %v470, %v468
    %v501 = vpack.c.bf16 %v473, %v471
    %v502 = vpack.c.bf16 %v474, %v472
    %v503 = vpack.c.bf16 %v477, %v475
    %v504 = vpack.c.bf16 %v478, %v476
    %v505 = vpack.c.bf16 %v481, %v479
    %v506 = vpack.c.bf16 %v482, %v480
    %v507 = vpack.c.bf16 %v485, %v483
    %v508 = vpack.c.bf16 %v486, %v484
    %v509 = vpack.c.bf16 %v489, %v487
    %v510 = vpack.c.bf16 %v490, %v488
    %v511 = vpack.c.bf16 %v493, %v491
    %v512 = vpack.c.bf16 %v494, %v492
    %v513 = vpack.c.bf16 %v497, %v495
    %v514 = vpack.c.bf16 %v498, %v496
    %v531 = vunpack.c.l.b16 %v499
    %v532 = vunpack.c.l.b16 %v500
    %v533 = vunpack.c.h.b16 %v499
    %v534 = vunpack.c.h.b16 %v500
    %v535 = vunpack.c.l.b16 %v501
    %v536 = vunpack.c.l.b16 %v502
    %v537 = vunpack.c.h.b16 %v501
    %v538 = vunpack.c.h.b16 %v502
    %v539 = vunpack.c.l.b16 %v503
    %v540 = vunpack.c.l.b16 %v504
    %v541 = vunpack.c.h.b16 %v503
    %v542 = vunpack.c.h.b16 %v504
    %v543 = vunpack.c.l.b16 %v505
    %v544 = vunpack.c.l.b16 %v506
    %v545 = vunpack.c.h.b16 %v505
    %v546 = vunpack.c.h.b16 %v506
    %v547 = vunpack.c.l.b16 %v507
    %v548 = vunpack.c.l.b16 %v508
    %v549 = vunpack.c.h.b16 %v507
    %v550 = vunpack.c.h.b16 %v508
    %v551 = vunpack.c.l.b16 %v509
    %v552 = vunpack.c.l.b16 %v510
    %v553 = vunpack.c.h.b16 %v509
    %v554 = vunpack.c.h.b16 %v510
    %v555 = vunpack.c.l.b16 %v511
    %v556 = vunpack.c.l.b16 %v512
    %v557 = vunpack.c.h.b16 %v511
    %v558 = vunpack.c.h.b16 %v512
    %v559 = vunpack.c.l.b16 %v513
    %v560 = vunpack.c.l.b16 %v514
    %v561 = vunpack.c.h.b16 %v513
    %v562 = vunpack.c.h.b16 %v514
    %v563 = vpack.c.b16 %v532, %v531
    %v564 = vpack.c.b16 %v534, %v533
    %v565 = vpack.c.b16 %v536, %v535
    %v566 = vpack.c.b16 %v538, %v537
    %v567 = vpack.c.b16 %v540, %v539
    %v568 = vpack.c.b16 %v542, %v541
    %v569 = vpack.c.b16 %v544, %v543
    %v570 = vpack.c.b16 %v546, %v545
    %v571 = vpack.c.b16 %v548, %v547
    %v572 = vpack.c.b16 %v550, %v549
    %v573 = vpack.c.b16 %v552, %v551
    %v574 = vpack.c.b16 %v554, %v553
    %v575 = vpack.c.b16 %v556, %v555
    %v576 = vpack.c.b16 %v558, %v557
    %v577 = vpack.c.b16 %v560, %v559
    %v578 = vpack.c.b16 %v562, %v561
    %595 = vst [vmem:[%s3] sm:$0xff] %v563
    %596 = vst [vmem:[%s3 + $0x8] sm:$0xff] %v564
    %597 = vst [vmem:[%s3 + $0x10] sm:$0xff] %v565
    %598 = vst [vmem:[%s3 + $0x18] sm:$0xff] %v566
    %599 = vst [vmem:[%s3 + $0x20] sm:$0xff] %v567
    %600 = vst [vmem:[%s3 + $0x28] sm:$0xff] %v568
    %601 = vst [vmem:[%s3 + $0x30] sm:$0xff] %v569
    %602 = vst [vmem:[%s3 + $0x38] sm:$0xff] %v570
    %603 = vst [vmem:[%s3 + $0x40] sm:$0xff] %v571
    %604 = vst [vmem:[%s3 + $0x48] sm:$0xff] %v572
    %605 = vst [vmem:[%s3 + $0x50] sm:$0xff] %v573
    %606 = vst [vmem:[%s3 + $0x58] sm:$0xff] %v574
    %607 = vst [vmem:[%s3 + $0x60] sm:$0xff] %v575
    %608 = vst [vmem:[%s3 + $0x68] sm:$0xff] %v576
    %609 = vst [vmem:[%s3 + $0x70] sm:$0xff] %v577
    %610 = vst [vmem:[%s3 + $0x78] sm:$0xff] %v578
  $region21: #{a_call__.28} parent=0 // pred_fallthru
    _
  // Predicated region
  $region22: #{a_call__.28} parent=0 // pred_check
    _
  $region23: #{a_call__.28} parent=0 // pred_check_branch
    %612 = sbr.rel (0) target = $region25
  $region24: #{a_call__.28} parent=0 // pred_region
    _
  $region25: #{a_call__.28} parent=0 // pred_fallthru
    _
  // Predicated region
  $region26: #{a_call__.28} parent=0 // pred_check
    _
  $region27: #{a_call__.28} parent=0 // pred_check_branch
    %614 = sbr.rel (0) target = $region29
  $region28: #{a_call__.28} parent=0 // pred_region
    _
  $region29: #{a_call__.28} parent=0 // pred_fallthru
    _

// kernel: a_call__.30
$region0: #{a_call__.30}
  #allocation0 [shape = 'u32[]', space=smem, size = 0x4, offset = 0x4, fixed_abs, tag = 'smem constant byte address 0x4 - core index']
  #allocation1 [shape = 'u32[144,128]{1,0:T(1,128)}', space=vmem, size = 0x12000, scoped, tag = 'internal scratch']
  #allocation2 [shape = 'f32[128,128]{1,0:T(8,128)}', space=vmem, size = 0x10000, scoped, tag = 'scratch operand']
  %s0 = inlined_call_operand.vmem [shape: bf16[128,256], index: 0, kind: input, shape index: {}]
  %s1 = inlined_call_operand.vmem [shape: bf16[256,128], index: 1, kind: input, shape index: {}]
  %s2 = inlined_call_operand.vmem [shape: f32[1,128], index: 2, kind: input, shape index: {}]
  %s3 = inlined_call_operand.vmem [shape: bf16[128,128], index: 3, kind: output, shape index: {}]
  %s4 = sld [smem:[#allocation0]]
  $region30: #{a_call__.30} parent=0
    _
  %s6 = ssub.s32 1, %s4
  %s7 = scalar_select 0, %s6, %s4
  // Predicated region
  $region2: #{a_call__.30} parent=0 // pred_check
    _
  $region3: #{a_call__.30} parent=0 // pred_check_branch
    %9 = sbr.rel (0) target = $region5
  $region4: #{a_call__.30} parent=0 // pred_region
    _
  $region5: #{a_call__.30} parent=0 // pred_fallthru
    _
  // Predicated region
  $region6: #{a_call__.30} parent=0 // pred_check
    _
  $region7: #{a_call__.30} parent=0 // pred_check_branch
    %11 = sbr.rel (0) target = $region9
  $region8: #{a_call__.30} parent=0 // pred_region
    _
  $region9: #{a_call__.30} parent=0 // pred_fallthru
    _
  // Predicated region
  $region10: #{a_call__.30} parent=0 // pred_check
    _
  $region11: #{a_call__.30} parent=0 // pred_check_branch
    %13 = sbr.rel (0) target = $region13
  $region12: #{a_call__.30} parent=0 // pred_region
    _
  $region13: #{a_call__.30} parent=0 // pred_fallthru
    _
  %p15 = scmp.eq.s32.totalorder 0, 0
  // Predicated region
  $region14: #{a_call__.30} parent=0 // pred_check
    %p16 = pneg %p15
  $region15: #{a_call__.30} parent=0 // pred_check_branch
    %18 = sbr.rel (%p16) target = $region17
  $region16: #{a_call__.30} parent=0 // pred_region
    %19 = vst [vmem:[#allocation2] sm:$0xff] 0.0
    %20 = vst [vmem:[#allocation2 + $0x8] sm:$0xff] 0.0
    %21 = vst [vmem:[#allocation2 + $0x10] sm:$0xff] 0.0
    %22 = vst [vmem:[#allocation2 + $0x18] sm:$0xff] 0.0
    %23 = vst [vmem:[#allocation2 + $0x20] sm:$0xff] 0.0
    %24 = vst [vmem:[#allocation2 + $0x28] sm:$0xff] 0.0
    %25 = vst [vmem:[#allocation2 + $0x30] sm:$0xff] 0.0
    %26 = vst [vmem:[#allocation2 + $0x38] sm:$0xff] 0.0
    %27 = vst [vmem:[#allocation2 + $0x40] sm:$0xff] 0.0
    %28 = vst [vmem:[#allocation2 + $0x48] sm:$0xff] 0.0
    %29 = vst [vmem:[#allocation2 + $0x50] sm:$0xff] 0.0
    %30 = vst [vmem:[#allocation2 + $0x58] sm:$0xff] 0.0
    %31 = vst [vmem:[#allocation2 + $0x60] sm:$0xff] 0.0
    %32 = vst [vmem:[#allocation2 + $0x68] sm:$0xff] 0.0
    %33 = vst [vmem:[#allocation2 + $0x70] sm:$0xff] 0.0
    %34 = vst [vmem:[#allocation2 + $0x78] sm:$0xff] 0.0
  $region17: #{a_call__.30} parent=0 // pred_fallthru
    _
  %v35 = vld [vmem:[#allocation2] sm:$0xff]
  %v36 = vld [vmem:[#allocation2 + $0x8] sm:$0xff]
  %v37 = vld [vmem:[#allocation2 + $0x10] sm:$0xff]
  %v38 = vld [vmem:[#allocation2 + $0x18] sm:$0xff]
  %v39 = vld [vmem:[#allocation2 + $0x20] sm:$0xff]
  %v40 = vld [vmem:[#allocation2 + $0x28] sm:$0xff]
  %v41 = vld [vmem:[#allocation2 + $0x30] sm:$0xff]
  %v42 = vld [vmem:[#allocation2 + $0x38] sm:$0xff]
  %v43 = vld [vmem:[#allocation2 + $0x40] sm:$0xff]
  %v44 = vld [vmem:[#allocation2 + $0x48] sm:$0xff]
  %v45 = vld [vmem:[#allocation2 + $0x50] sm:$0xff]
  %v46 = vld [vmem:[#allocation2 + $0x58] sm:$0xff]
  %v47 = vld [vmem:[#allocation2 + $0x60] sm:$0xff]
  %v48 = vld [vmem:[#allocation2 + $0x68] sm:$0xff]
  %v49 = vld [vmem:[#allocation2 + $0x70] sm:$0xff]
  %v50 = vld [vmem:[#allocation2 + $0x78] sm:$0xff]
  %v51 = vld [vmem:[%s0] sm:$0xff]
  %v52 = vld [vmem:[%s0 + $0x8] sm:$0xff]
  %v53 = vld [vmem:[%s0 + $0x10] sm:$0xff]
  %v54 = vld [vmem:[%s0 + $0x18] sm:$0xff]
  %v55 = vld [vmem:[%s0 + $0x20] sm:$0xff]
  %v56 = vld [vmem:[%s0 + $0x28] sm:$0xff]
  %v57 = vld [vmem:[%s0 + $0x30] sm:$0xff]
  %v58 = vld [vmem:[%s0 + $0x38] sm:$0xff]
  %v59 = vld [vmem:[%s0 + $0x40] sm:$0xff]
  %v60 = vld [vmem:[%s0 + $0x48] sm:$0xff]
  %v61 = vld [vmem:[%s0 + $0x50] sm:$0xff]
  %v62 = vld [vmem:[%s0 + $0x58] sm:$0xff]
  %v63 = vld [vmem:[%s0 + $0x60] sm:$0xff]
  %v64 = vld [vmem:[%s0 + $0x68] sm:$0xff]
  %v65 = vld [vmem:[%s0 + $0x70] sm:$0xff]
  %v66 = vld [vmem:[%s0 + $0x78] sm:$0xff]
  %v67 = vld [vmem:[%s1] sm:$0xf]
  %v68 = vld [vmem:[%s1 + $0x4] sm:$0xf]
  %v69 = vld [vmem:[%s1 + $0x8] sm:$0xf]
  %v70 = vld [vmem:[%s1 + $0xc] sm:$0xf]
  %v71 = vld [vmem:[%s1 + $0x10] sm:$0xf]
  %v72 = vld [vmem:[%s1 + $0x14] sm:$0xf]
  %v73 = vld [vmem:[%s1 + $0x18] sm:$0xf]
  %v74 = vld [vmem:[%s1 + $0x1c] sm:$0xf]
  %v75 = vld [vmem:[%s1 + $0x20] sm:$0xf]
  %v76 = vld [vmem:[%s1 + $0x24] sm:$0xf]
  %v77 = vld [vmem:[%s1 + $0x28] sm:$0xf]
  %v78 = vld [vmem:[%s1 + $0x2c] sm:$0xf]
  %v79 = vld [vmem:[%s1 + $0x30] sm:$0xf]
  %v80 = vld [vmem:[%s1 + $0x34] sm:$0xf]
  %v81 = vld [vmem:[%s1 + $0x38] sm:$0xf]
  %v82 = vld [vmem:[%s1 + $0x3c] sm:$0xf]
  %v83 = vld [vmem:[%s1 + $0x40] sm:$0xf]
  %v84 = vld [vmem:[%s1 + $0x44] sm:$0xf]
  %v85 = vld [vmem:[%s1 + $0x48] sm:$0xf]
  %v86 = vld [vmem:[%s1 + $0x4c] sm:$0xf]
  %v87 = vld [vmem:[%s1 + $0x50] sm:$0xf]
  %v88 = vld [vmem:[%s1 + $0x54] sm:$0xf]
  %v89 = vld [vmem:[%s1 + $0x58] sm:$0xf]
  %v90 = vld [vmem:[%s1 + $0x5c] sm:$0xf]
  %v91 = vld [vmem:[%s1 + $0x60] sm:$0xf]
  %v92 = vld [vmem:[%s1 + $0x64] sm:$0xf]
  %v93 = vld [vmem:[%s1 + $0x68] sm:$0xf]
  %v94 = vld [vmem:[%s1 + $0x6c] sm:$0xf]
  %v95 = vld [vmem:[%s1 + $0x70] sm:$0xf]
  %v96 = vld [vmem:[%s1 + $0x74] sm:$0xf]
  %v97 = vld [vmem:[%s1 + $0x78] sm:$0xf]
  %v98 = vld [vmem:[%s1 + $0x7c] sm:$0xf]
  %v115 = vunpack.c.l.b16 %v51
  %v116 = vunpack.c.h.b16 %v51
  %v117 = vunpack.c.l.b16 %v52
  %v118 = vunpack.c.h.b16 %v52
  %v119 = vunpack.c.l.b16 %v53
  %v120 = vunpack.c.h.b16 %v53
  %v121 = vunpack.c.l.b16 %v54
  %v122 = vunpack.c.h.b16 %v54
  %v123 = vunpack.c.l.b16 %v55
  %v124 = vunpack.c.h.b16 %v55
  %v125 = vunpack.c.l.b16 %v56
  %v126 = vunpack.c.h.b16 %v56
  %v127 = vunpack.c.l.b16 %v57
  %v128 = vunpack.c.h.b16 %v57
  %v129 = vunpack.c.l.b16 %v58
  %v130 = vunpack.c.h.b16 %v58
  %v131 = vunpack.c.l.b16 %v59
  %v132 = vunpack.c.h.b16 %v59
  %v133 = vunpack.c.l.b16 %v60
  %v134 = vunpack.c.h.b16 %v60
  %v135 = vunpack.c.l.b16 %v61
  %v136 = vunpack.c.h.b16 %v61
  %v137 = vunpack.c.l.b16 %v62
  %v138 = vunpack.c.h.b16 %v62
  %v139 = vunpack.c.l.b16 %v63
  %v140 = vunpack.c.h.b16 %v63
  %v141 = vunpack.c.l.b16 %v64
  %v142 = vunpack.c.h.b16 %v64
  %v143 = vunpack.c.l.b16 %v65
  %v144 = vunpack.c.h.b16 %v65
  %v145 = vunpack.c.l.b16 %v66
  %v146 = vunpack.c.h.b16 %v66
  %v147 = vpack.c.b16 %v117, %v115
  %v148 = vpack.c.b16 %v118, %v116
  %v149 = vpack.c.b16 %v121, %v119
  %v150 = vpack.c.b16 %v122, %v120
  %v151 = vpack.c.b16 %v125, %v123
  %v152 = vpack.c.b16 %v126, %v124
  %v153 = vpack.c.b16 %v129, %v127
  %v154 = vpack.c.b16 %v130, %v128
  %v155 = vpack.c.b16 %v133, %v131
  %v156 = vpack.c.b16 %v134, %v132
  %v157 = vpack.c.b16 %v137, %v135
  %v158 = vpack.c.b16 %v138, %v136
  %v159 = vpack.c.b16 %v141, %v139
  %v160 = vpack.c.b16 %v142, %v140
  %v161 = vpack.c.b16 %v145, %v143
  %v162 = vpack.c.b16 %v146, %v144
  %v211 = vunpack.c.l.b16 %v67
  %v212 = vunpack.c.l.b16 %v68
  %v213 = vunpack.c.l.b16 %v69
  %v214 = vunpack.c.l.b16 %v70
  %v215 = vunpack.c.l.b16 %v71
  %v216 = vunpack.c.l.b16 %v72
  %v217 = vunpack.c.l.b16 %v73
  %v218 = vunpack.c.l.b16 %v74
  %v219 = vunpack.c.l.b16 %v75
  %v220 = vunpack.c.l.b16 %v76
  %v221 = vunpack.c.l.b16 %v77
  %v222 = vunpack.c.l.b16 %v78
  %v223 = vunpack.c.l.b16 %v79
  %v224 = vunpack.c.l.b16 %v80
  %v225 = vunpack.c.l.b16 %v81
  %v226 = vunpack.c.l.b16 %v82
  %v227 = vunpack.c.l.b16 %v83
  %v228 = vunpack.c.l.b16 %v84
  %v229 = vunpack.c.l.b16 %v85
  %v230 = vunpack.c.l.b16 %v86
  %v231 = vunpack.c.l.b16 %v87
  %v232 = vunpack.c.l.b16 %v88
  %v233 = vunpack.c.l.b16 %v89
  %v234 = vunpack.c.l.b16 %v90
  %v235 = vunpack.c.l.b16 %v91
  %v236 = vunpack.c.l.b16 %v92
  %v237 = vunpack.c.l.b16 %v93
  %v238 = vunpack.c.l.b16 %v94
  %v239 = vunpack.c.l.b16 %v95
  %v240 = vunpack.c.l.b16 %v96
  %v241 = vunpack.c.l.b16 %v97
  %v242 = vunpack.c.l.b16 %v98
  %v243 = vpack.c.b16 %v212, %v211
  %v244 = vpack.c.b16 %v214, %v213
  %v245 = vpack.c.b16 %v216, %v215
  %v246 = vpack.c.b16 %v218, %v217
  %v247 = vpack.c.b16 %v220, %v219
  %v248 = vpack.c.b16 %v222, %v221
  %v249 = vpack.c.b16 %v224, %v223
  %v250 = vpack.c.b16 %v226, %v225
  %v251 = vpack.c.b16 %v228, %v227
  %v252 = vpack.c.b16 %v230, %v229
  %v253 = vpack.c.b16 %v232, %v231
  %v254 = vpack.c.b16 %v234, %v233
  %v255 = vpack.c.b16 %v236, %v235
  %v256 = vpack.c.b16 %v238, %v237
  %v257 = vpack.c.b16 %v240, %v239
  %v258 = vpack.c.b16 %v242, %v241
  %275 = vmatprep.subr.bf16.mxu0 0
  %276 = vmatpush1.bf16.msra.mxu0 %v250
  %277 = vmatprep.subr.bf16.mxu0 0
  %278 = vmatpush1.bf16.msra.mxu0 %v249
  %279 = vmatprep.subr.bf16.mxu0 0
  %280 = vmatpush1.bf16.msra.mxu0 %v248
  %281 = vmatprep.subr.bf16.mxu0 0
  %282 = vmatpush1.bf16.msra.mxu0 %v247
  %283 = vmatprep.subr.bf16.mxu0 0
  %284 = vmatpush1.bf16.msra.mxu0 %v246
  %285 = vmatprep.subr.bf16.mxu0 0
  %286 = vmatpush1.bf16.msra.mxu0 %v245
  %287 = vmatprep.subr.bf16.mxu0 0
  %288 = vmatpush1.bf16.msra.mxu0 %v244
  %289 = vmatprep.subr.bf16.mxu0 0
  %290 = vmatpush1.bf16.msra.mxu0 %v243
  %291 = vmatprep.subr.bf16.mxu0 0
  %292 = vmatpush2.bf16.msra.mxu0 %v258
  %293 = vmatprep.subr.bf16.mxu0 0
  %294 = vmatpush2.bf16.msra.mxu0 %v257
  %295 = vmatprep.subr.bf16.mxu0 0
  %296 = vmatpush2.bf16.msra.mxu0 %v256
  %297 = vmatprep.subr.bf16.mxu0 0
  %298 = vmatpush2.bf16.msra.mxu0 %v255
  %299 = vmatprep.subr.bf16.mxu0 0
  %300 = vmatpush2.bf16.msra.mxu0 %v254
  %301 = vmatprep.subr.bf16.mxu0 0
  %302 = vmatpush2.bf16.msra.mxu0 %v253
  %303 = vmatprep.subr.bf16.mxu0 0
  %304 = vmatpush2.bf16.msra.mxu0 %v252
  %305 = vmatprep.subr.bf16.mxu0 0
  %306 = vmatpush2.bf16.msra.mxu0 %v251
  %307 = vmatprep.mubr.bf16.mxu0 %v148
  %308 = vmatmul.mubr.bf16.gmra.mxu0 %v147
  %v309 = vpop.f32.mrf.mxu0
  %v310 = vadd.f32 0.0, %v309
  %v311 = vpop.f32.mrf.mxu0
  %v312 = vpop.f32.mrf.mxu0
  %v313 = vadd.f32 0.0, %v312
  %v314 = vpop.f32.mrf.mxu0
  %315 = vmatprep.mubr.bf16.mxu0 %v150
  %316 = vmatmul.mubr.bf16.gmra.mxu0 %v149
  %v317 = vpop.f32.mrf.mxu0
  %v318 = vadd.f32 0.0, %v317
  %v319 = vpop.f32.mrf.mxu0
  %v320 = vpop.f32.mrf.mxu0
  %v321 = vadd.f32 0.0, %v320
  %v322 = vpop.f32.mrf.mxu0
  %323 = vmatprep.mubr.bf16.mxu0 %v152
  %324 = vmatmul.mubr.bf16.gmra.mxu0 %v151
  %v325 = vpop.f32.mrf.mxu0
  %v326 = vadd.f32 0.0, %v325
  %v327 = vpop.f32.mrf.mxu0
  %v328 = vpop.f32.mrf.mxu0
  %v329 = vadd.f32 0.0, %v328
  %v330 = vpop.f32.mrf.mxu0
  %331 = vmatprep.mubr.bf16.mxu0 %v154
  %332 = vmatmul.mubr.bf16.gmra.mxu0 %v153
  %v333 = vpop.f32.mrf.mxu0
  %v334 = vadd.f32 0.0, %v333
  %v335 = vpop.f32.mrf.mxu0
  %v336 = vpop.f32.mrf.mxu0
  %v337 = vadd.f32 0.0, %v336
  %v338 = vpop.f32.mrf.mxu0
  %339 = vmatprep.mubr.bf16.mxu0 %v156
  %340 = vmatmul.mubr.bf16.gmra.mxu0 %v155
  %v341 = vpop.f32.mrf.mxu0
  %v342 = vadd.f32 0.0, %v341
  %v343 = vpop.f32.mrf.mxu0
  %v344 = vpop.f32.mrf.mxu0
  %v345 = vadd.f32 0.0, %v344
  %v346 = vpop.f32.mrf.mxu0
  %347 = vmatprep.mubr.bf16.mxu0 %v158
  %348 = vmatmul.mubr.bf16.gmra.mxu0 %v157
  %v349 = vpop.f32.mrf.mxu0
  %v350 = vadd.f32 0.0, %v349
  %v351 = vpop.f32.mrf.mxu0
  %v352 = vpop.f32.mrf.mxu0
  %v353 = vadd.f32 0.0, %v352
  %v354 = vpop.f32.mrf.mxu0
  %355 = vmatprep.mubr.bf16.mxu0 %v160
  %356 = vmatmul.mubr.bf16.gmra.mxu0 %v159
  %v357 = vpop.f32.mrf.mxu0
  %v358 = vadd.f32 0.0, %v357
  %v359 = vpop.f32.mrf.mxu0
  %v360 = vpop.f32.mrf.mxu0
  %v361 = vadd.f32 0.0, %v360
  %v362 = vpop.f32.mrf.mxu0
  %363 = vmatprep.mubr.bf16.mxu0 %v162
  %364 = vmatmul.mubr.bf16.gmra.mxu0 %v161
  %v365 = vpop.f32.mrf.mxu0
  %v366 = vadd.f32 0.0, %v365
  %v367 = vpop.f32.mrf.mxu0
  %v368 = vpop.f32.mrf.mxu0
  %v369 = vadd.f32 0.0, %v368
  %v370 = vpop.f32.mrf.mxu0
  %371 = vdwg.mxu0
  %v372 = vadd.f32 %v35, %v310
  %v373 = vadd.f32 %v36, %v313
  %v374 = vadd.f32 %v37, %v318
  %v375 = vadd.f32 %v38, %v321
  %v376 = vadd.f32 %v39, %v326
  %v377 = vadd.f32 %v40, %v329
  %v378 = vadd.f32 %v41, %v334
  %v379 = vadd.f32 %v42, %v337
  %v380 = vadd.f32 %v43, %v342
  %v381 = vadd.f32 %v44, %v345
  %v382 = vadd.f32 %v45, %v350
  %v383 = vadd.f32 %v46, %v353
  %v384 = vadd.f32 %v47, %v358
  %v385 = vadd.f32 %v48, %v361
  %v386 = vadd.f32 %v49, %v366
  %v387 = vadd.f32 %v50, %v369
  %388 = vst [vmem:[#allocation2] sm:$0xff] %v372
  %389 = vst [vmem:[#allocation2 + $0x8] sm:$0xff] %v373
  %390 = vst [vmem:[#allocation2 + $0x10] sm:$0xff] %v374
  %391 = vst [vmem:[#allocation2 + $0x18] sm:$0xff] %v375
  %392 = vst [vmem:[#allocation2 + $0x20] sm:$0xff] %v376
  %393 = vst [vmem:[#allocation2 + $0x28] sm:$0xff] %v377
  %394 = vst [vmem:[#allocation2 + $0x30] sm:$0xff] %v378
  %395 = vst [vmem:[#allocation2 + $0x38] sm:$0xff] %v379
  %396 = vst [vmem:[#allocation2 + $0x40] sm:$0xff] %v380
  %397 = vst [vmem:[#allocation2 + $0x48] sm:$0xff] %v381
  %398 = vst [vmem:[#allocation2 + $0x50] sm:$0xff] %v382
  %399 = vst [vmem:[#allocation2 + $0x58] sm:$0xff] %v383
  %400 = vst [vmem:[#allocation2 + $0x60] sm:$0xff] %v384
  %401 = vst [vmem:[#allocation2 + $0x68] sm:$0xff] %v385
  %402 = vst [vmem:[#allocation2 + $0x70] sm:$0xff] %v386
  %403 = vst [vmem:[#allocation2 + $0x78] sm:$0xff] %v387
  // Predicated region
  $region18: #{a_call__.30} parent=0 // pred_check
    %p404 = pneg %p15
  $region19: #{a_call__.30} parent=0 // pred_check_branch
    %406 = sbr.rel (%p404) target = $region21
  $region20: #{a_call__.30} parent=0 // pred_region
    %v407 = vld [vmem:[#allocation2] sm:$0xff]
    %v408 = vld [vmem:[#allocation2 + $0x8] sm:$0xff]
    %v409 = vld [vmem:[#allocation2 + $0x10] sm:$0xff]
    %v410 = vld [vmem:[#allocation2 + $0x18] sm:$0xff]
    %v411 = vld [vmem:[#allocation2 + $0x20] sm:$0xff]
    %v412 = vld [vmem:[#allocation2 + $0x28] sm:$0xff]
    %v413 = vld [vmem:[#allocation2 + $0x30] sm:$0xff]
    %v414 = vld [vmem:[#allocation2 + $0x38] sm:$0xff]
    %v415 = vld [vmem:[#allocation2 + $0x40] sm:$0xff]
    %v416 = vld [vmem:[#allocation2 + $0x48] sm:$0xff]
    %v417 = vld [vmem:[#allocation2 + $0x50] sm:$0xff]
    %v418 = vld [vmem:[#allocation2 + $0x58] sm:$0xff]
    %v419 = vld [vmem:[#allocation2 + $0x60] sm:$0xff]
    %v420 = vld [vmem:[#allocation2 + $0x68] sm:$0xff]
    %v421 = vld [vmem:[#allocation2 + $0x70] sm:$0xff]
    %v422 = vld [vmem:[#allocation2 + $0x78] sm:$0xff]
    %v423 = vld [vmem:[%s2] sm:$0x1]
    %v425 = vlaneseq
    %v426 = vshrl.u32 %v425, 7
    %v427 = vsub.s32 0, %v426
    %v428 = vrot.slane %v423, %v427
    %v430 = vadd.f32 %v407, %v428
    %v431 = vadd.f32 %v408, %v428
    %v432 = vadd.f32 %v409, %v428
    %v433 = vadd.f32 %v410, %v428
    %v434 = vadd.f32 %v411, %v428
    %v435 = vadd.f32 %v412, %v428
    %v436 = vadd.f32 %v413, %v428
    %v437 = vadd.f32 %v414, %v428
    %v438 = vadd.f32 %v415, %v428
    %v439 = vadd.f32 %v416, %v428
    %v440 = vadd.f32 %v417, %v428
    %v441 = vadd.f32 %v418, %v428
    %v442 = vadd.f32 %v419, %v428
    %v443 = vadd.f32 %v420, %v428
    %v444 = vadd.f32 %v421, %v428
    %v445 = vadd.f32 %v422, %v428
    %v446 = vmax.f32 %v430, 0.0
    %v447 = vmax.f32 %v431, 0.0
    %v448 = vmax.f32 %v432, 0.0
    %v449 = vmax.f32 %v433, 0.0
    %v450 = vmax.f32 %v434, 0.0
    %v451 = vmax.f32 %v435, 0.0
    %v452 = vmax.f32 %v436, 0.0
    %v453 = vmax.f32 %v437, 0.0
    %v454 = vmax.f32 %v438, 0.0
    %v455 = vmax.f32 %v439, 0.0
    %v456 = vmax.f32 %v440, 0.0
    %v457 = vmax.f32 %v441, 0.0
    %v458 = vmax.f32 %v442, 0.0
    %v459 = vmax.f32 %v443, 0.0
    %v460 = vmax.f32 %v444, 0.0
    %v461 = vmax.f32 %v445, 0.0
    %v462 = vpack.c.bf16 %v447, %v446
    %v463 = vpack.c.bf16 %v449, %v448
    %v464 = vpack.c.bf16 %v451, %v450
    %v465 = vpack.c.bf16 %v453, %v452
    %v466 = vpack.c.bf16 %v455, %v454
    %v467 = vpack.c.bf16 %v457, %v456
    %v468 = vpack.c.bf16 %v459, %v458
    %v469 = vpack.c.bf16 %v461, %v460
    %v478 = vunpack.c.l.b16 %v462
    %v479 = vunpack.c.h.b16 %v462
    %v480 = vunpack.c.l.b16 %v463
    %v481 = vunpack.c.h.b16 %v463
    %v482 = vunpack.c.l.b16 %v464
    %v483 = vunpack.c.h.b16 %v464
    %v484 = vunpack.c.l.b16 %v465
    %v485 = vunpack.c.h.b16 %v465
    %v486 = vunpack.c.l.b16 %v466
    %v487 = vunpack.c.h.b16 %v466
    %v488 = vunpack.c.l.b16 %v467
    %v489 = vunpack.c.h.b16 %v467
    %v490 = vunpack.c.l.b16 %v468
    %v491 = vunpack.c.h.b16 %v468
    %v492 = vunpack.c.l.b16 %v469
    %v493 = vunpack.c.h.b16 %v469
    %v494 = vpack.c.b16 %v478, %v478
    %v495 = vpack.c.b16 %v479, %v479
    %v496 = vpack.c.b16 %v480, %v480
    %v497 = vpack.c.b16 %v481, %v481
    %v498 = vpack.c.b16 %v482, %v482
    %v499 = vpack.c.b16 %v483, %v483
    %v500 = vpack.c.b16 %v484, %v484
    %v501 = vpack.c.b16 %v485, %v485
    %v502 = vpack.c.b16 %v486, %v486
    %v503 = vpack.c.b16 %v487, %v487
    %v504 = vpack.c.b16 %v488, %v488
    %v505 = vpack.c.b16 %v489, %v489
    %v506 = vpack.c.b16 %v490, %v490
    %v507 = vpack.c.b16 %v491, %v491
    %v508 = vpack.c.b16 %v492, %v492
    %v509 = vpack.c.b16 %v493, %v493
    %526 = vst [vmem:[%s3] sm:$0xf] %v494
    %527 = vst [vmem:[%s3 + $0x4] sm:$0xf] %v495
    %528 = vst [vmem:[%s3 + $0x8] sm:$0xf] %v496
    %529 = vst [vmem:[%s3 + $0xc] sm:$0xf] %v497
    %530 = vst [vmem:[%s3 + $0x10] sm:$0xf] %v498
    %531 = vst [vmem:[%s3 + $0x14] sm:$0xf] %v499
    %532 = vst [vmem:[%s3 + $0x18] sm:$0xf] %v500
    %533 = vst [vmem:[%s3 + $0x1c] sm:$0xf] %v501
    %534 = vst [vmem:[%s3 + $0x20] sm:$0xf] %v502
    %535 = vst [vmem:[%s3 + $0x24] sm:$0xf] %v503
    %536 = vst [vmem:[%s3 + $0x28] sm:$0xf] %v504
    %537 = vst [vmem:[%s3 + $0x2c] sm:$0xf] %v505
    %538 = vst [vmem:[%s3 + $0x30] sm:$0xf] %v506
    %539 = vst [vmem:[%s3 + $0x34] sm:$0xf] %v507
    %540 = vst [vmem:[%s3 + $0x38] sm:$0xf] %v508
    %541 = vst [vmem:[%s3 + $0x3c] sm:$0xf] %v509
  $region21: #{a_call__.30} parent=0 // pred_fallthru
    _
  // Predicated region
  $region22: #{a_call__.30} parent=0 // pred_check
    _
  $region23: #{a_call__.30} parent=0 // pred_check_branch
    %543 = sbr.rel (0) target = $region25
  $region24: #{a_call__.30} parent=0 // pred_region
    _
  $region25: #{a_call__.30} parent=0 // pred_fallthru
    _
  // Predicated region
  $region26: #{a_call__.30} parent=0 // pred_check
    _
  $region27: #{a_call__.30} parent=0 // pred_check_branch
    %545 = sbr.rel (0) target = $region29
  $region28: #{a_call__.30} parent=0 // pred_region
    _
  $region29: #{a_call__.30} parent=0 // pred_fallthru
    _

// kernel: a_call__.29
$region0: #{a_call__.29}
  #allocation0 [shape = 'u32[]', space=smem, size = 0x4, offset = 0x4, fixed_abs, tag = 'smem constant byte address 0x4 - core index']
  #allocation1 [shape = 'u32[144,128]{1,0:T(1,128)}', space=vmem, size = 0x12000, scoped, tag = 'internal scratch']
  #allocation2 [shape = 'f32[128,256]{1,0:T(8,128)}', space=vmem, size = 0x20000, scoped, tag = 'scratch operand']
  %s0 = inlined_call_operand.vmem [shape: bf16[128,128], index: 0, kind: input, shape index: {}]
  %s1 = inlined_call_operand.vmem [shape: bf16[128,256], index: 1, kind: input, shape index: {}]
  %s2 = inlined_call_operand.vmem [shape: f32[1,256], index: 2, kind: input, shape index: {}]
  %s3 = inlined_call_operand.vmem [shape: bf16[128,256], index: 3, kind: input, shape index: {}]
  %s4 = inlined_call_operand.vmem [shape: bf16[128,256], index: 4, kind: output, shape index: {}]
  %s5 = sld [smem:[#allocation0]]
  $region34: #{a_call__.29} parent=0
    _
  %s7 = ssub.s32 1, %s5
  %s8 = scalar_select 0, %s7, %s5
  // Predicated region
  $region2: #{a_call__.29} parent=0 // pred_check
    _
  $region3: #{a_call__.29} parent=0 // pred_check_branch
    %10 = sbr.rel (0) target = $region5
  $region4: #{a_call__.29} parent=0 // pred_region
    _
  $region5: #{a_call__.29} parent=0 // pred_fallthru
    _
  // Predicated region
  $region6: #{a_call__.29} parent=0 // pred_check
    _
  $region7: #{a_call__.29} parent=0 // pred_check_branch
    %12 = sbr.rel (0) target = $region9
  $region8: #{a_call__.29} parent=0 // pred_region
    _
  $region9: #{a_call__.29} parent=0 // pred_fallthru
    _
  // Predicated region
  $region10: #{a_call__.29} parent=0 // pred_check
    _
  $region11: #{a_call__.29} parent=0 // pred_check_branch
    %14 = sbr.rel (0) target = $region13
  $region12: #{a_call__.29} parent=0 // pred_region
    _
  $region13: #{a_call__.29} parent=0 // pred_fallthru
    _
  // Predicated region
  $region14: #{a_call__.29} parent=0 // pred_check
    _
  $region15: #{a_call__.29} parent=0 // pred_check_branch
    %16 = sbr.rel (0) target = $region17
  $region16: #{a_call__.29} parent=0 // pred_region
    _
  $region17: #{a_call__.29} parent=0 // pred_fallthru
    _
  %p18 = scmp.eq.s32.totalorder 0, 0
  // Predicated region
  $region18: #{a_call__.29} parent=0 // pred_check
    %p19 = pneg %p18
  $region19: #{a_call__.29} parent=0 // pred_check_branch
    %21 = sbr.rel (%p19) target = $region21
  $region20: #{a_call__.29} parent=0 // pred_region
    %22 = vst [vmem:[#allocation2] sm:$0xff] 0.0
    %23 = vst [vmem:[#allocation2 + $0x8] sm:$0xff] 0.0
    %24 = vst [vmem:[#allocation2 + $0x10] sm:$0xff] 0.0
    %25 = vst [vmem:[#allocation2 + $0x18] sm:$0xff] 0.0
    %26 = vst [vmem:[#allocation2 + $0x20] sm:$0xff] 0.0
    %27 = vst [vmem:[#allocation2 + $0x28] sm:$0xff] 0.0
    %28 = vst [vmem:[#allocation2 + $0x30] sm:$0xff] 0.0
    %29 = vst [vmem:[#allocation2 + $0x38] sm:$0xff] 0.0
    %30 = vst [vmem:[#allocation2 + $0x40] sm:$0xff] 0.0
    %31 = vst [vmem:[#allocation2 + $0x48] sm:$0xff] 0.0
    %32 = vst [vmem:[#allocation2 + $0x50] sm:$0xff] 0.0
    %33 = vst [vmem:[#allocation2 + $0x58] sm:$0xff] 0.0
    %34 = vst [vmem:[#allocation2 + $0x60] sm:$0xff] 0.0
    %35 = vst [vmem:[#allocation2 + $0x68] sm:$0xff] 0.0
    %36 = vst [vmem:[#allocation2 + $0x70] sm:$0xff] 0.0
    %37 = vst [vmem:[#allocation2 + $0x78] sm:$0xff] 0.0
    %38 = vst [vmem:[#allocation2 + $0x80] sm:$0xff] 0.0
    %39 = vst [vmem:[#allocation2 + $0x88] sm:$0xff] 0.0
    %40 = vst [vmem:[#allocation2 + $0x90] sm:$0xff] 0.0
    %41 = vst [vmem:[#allocation2 + $0x98] sm:$0xff] 0.0
    %42 = vst [vmem:[#allocation2 + $0xa0] sm:$0xff] 0.0
    %43 = vst [vmem:[#allocation2 + $0xa8] sm:$0xff] 0.0
    %44 = vst [vmem:[#allocation2 + $0xb0] sm:$0xff] 0.0
    %45 = vst [vmem:[#allocation2 + $0xb8] sm:$0xff] 0.0
    %46 = vst [vmem:[#allocation2 + $0xc0] sm:$0xff] 0.0
    %47 = vst [vmem:[#allocation2 + $0xc8] sm:$0xff] 0.0
    %48 = vst [vmem:[#allocation2 + $0xd0] sm:$0xff] 0.0
    %49 = vst [vmem:[#allocation2 + $0xd8] sm:$0xff] 0.0
    %50 = vst [vmem:[#allocation2 + $0xe0] sm:$0xff] 0.0
    %51 = vst [vmem:[#allocation2 + $0xe8] sm:$0xff] 0.0
    %52 = vst [vmem:[#allocation2 + $0xf0] sm:$0xff] 0.0
    %53 = vst [vmem:[#allocation2 + $0xf8] sm:$0xff] 0.0
  $region21: #{a_call__.29} parent=0 // pred_fallthru
    _
  %v54 = vld [vmem:[#allocation2] sm:$0xff]
  %v55 = vld [vmem:[#allocation2 + $0x8] sm:$0xff]
  %v56 = vld [vmem:[#allocation2 + $0x10] sm:$0xff]
  %v57 = vld [vmem:[#allocation2 + $0x18] sm:$0xff]
  %v58 = vld [vmem:[#allocation2 + $0x20] sm:$0xff]
  %v59 = vld [vmem:[#allocation2 + $0x28] sm:$0xff]
  %v60 = vld [vmem:[#allocation2 + $0x30] sm:$0xff]
  %v61 = vld [vmem:[#allocation2 + $0x38] sm:$0xff]
  %v62 = vld [vmem:[#allocation2 + $0x40] sm:$0xff]
  %v63 = vld [vmem:[#allocation2 + $0x48] sm:$0xff]
  %v64 = vld [vmem:[#allocation2 + $0x50] sm:$0xff]
  %v65 = vld [vmem:[#allocation2 + $0x58] sm:$0xff]
  %v66 = vld [vmem:[#allocation2 + $0x60] sm:$0xff]
  %v67 = vld [vmem:[#allocation2 + $0x68] sm:$0xff]
  %v68 = vld [vmem:[#allocation2 + $0x70] sm:$0xff]
  %v69 = vld [vmem:[#allocation2 + $0x78] sm:$0xff]
  %v70 = vld [vmem:[#allocation2 + $0x80] sm:$0xff]
  %v71 = vld [vmem:[#allocation2 + $0x88] sm:$0xff]
  %v72 = vld [vmem:[#allocation2 + $0x90] sm:$0xff]
  %v73 = vld [vmem:[#allocation2 + $0x98] sm:$0xff]
  %v74 = vld [vmem:[#allocation2 + $0xa0] sm:$0xff]
  %v75 = vld [vmem:[#allocation2 + $0xa8] sm:$0xff]
  %v76 = vld [vmem:[#allocation2 + $0xb0] sm:$0xff]
  %v77 = vld [vmem:[#allocation2 + $0xb8] sm:$0xff]
  %v78 = vld [vmem:[#allocation2 + $0xc0] sm:$0xff]
  %v79 = vld [vmem:[#allocation2 + $0xc8] sm:$0xff]
  %v80 = vld [vmem:[#allocation2 + $0xd0] sm:$0xff]
  %v81 = vld [vmem:[#allocation2 + $0xd8] sm:$0xff]
  %v82 = vld [vmem:[#allocation2 + $0xe0] sm:$0xff]
  %v83 = vld [vmem:[#allocation2 + $0xe8] sm:$0xff]
  %v84 = vld [vmem:[#allocation2 + $0xf0] sm:$0xff]
  %v85 = vld [vmem:[#allocation2 + $0xf8] sm:$0xff]
  %v86 = vld [vmem:[%s0] sm:$0xf]
  %v87 = vld [vmem:[%s0 + $0x4] sm:$0xf]
  %v88 = vld [vmem:[%s0 + $0x8] sm:$0xf]
  %v89 = vld [vmem:[%s0 + $0xc] sm:$0xf]
  %v90 = vld [vmem:[%s0 + $0x10] sm:$0xf]
  %v91 = vld [vmem:[%s0 + $0x14] sm:$0xf]
  %v92 = vld [vmem:[%s0 + $0x18] sm:$0xf]
  %v93 = vld [vmem:[%s0 + $0x1c] sm:$0xf]
  %v94 = vld [vmem:[%s0 + $0x20] sm:$0xf]
  %v95 = vld [vmem:[%s0 + $0x24] sm:$0xf]
  %v96 = vld [vmem:[%s0 + $0x28] sm:$0xf]
  %v97 = vld [vmem:[%s0 + $0x2c] sm:$0xf]
  %v98 = vld [vmem:[%s0 + $0x30] sm:$0xf]
  %v99 = vld [vmem:[%s0 + $0x34] sm:$0xf]
  %v100 = vld [vmem:[%s0 + $0x38] sm:$0xf]
  %v101 = vld [vmem:[%s0 + $0x3c] sm:$0xf]
  %v102 = vld [vmem:[%s1] sm:$0xff]
  %v103 = vld [vmem:[%s1 + $0x8] sm:$0xff]
  %v104 = vld [vmem:[%s1 + $0x10] sm:$0xff]
  %v105 = vld [vmem:[%s1 + $0x18] sm:$0xff]
  %v106 = vld [vmem:[%s1 + $0x20] sm:$0xff]
  %v107 = vld [vmem:[%s1 + $0x28] sm:$0xff]
  %v108 = vld [vmem:[%s1 + $0x30] sm:$0xff]
  %v109 = vld [vmem:[%s1 + $0x38] sm:$0xff]
  %v110 = vld [vmem:[%s1 + $0x40] sm:$0xff]
  %v111 = vld [vmem:[%s1 + $0x48] sm:$0xff]
  %v112 = vld [vmem:[%s1 + $0x50] sm:$0xff]
  %v113 = vld [vmem:[%s1 + $0x58] sm:$0xff]
  %v114 = vld [vmem:[%s1 + $0x60] sm:$0xff]
  %v115 = vld [vmem:[%s1 + $0x68] sm:$0xff]
  %v116 = vld [vmem:[%s1 + $0x70] sm:$0xff]
  %v117 = vld [vmem:[%s1 + $0x78] sm:$0xff]
  %v134 = vunpack.c.l.b16 %v86
  %v135 = vunpack.c.l.b16 %v87
  %v136 = vunpack.c.l.b16 %v88
  %v137 = vunpack.c.l.b16 %v89
  %v138 = vunpack.c.l.b16 %v90
  %v139 = vunpack.c.l.b16 %v91
  %v140 = vunpack.c.l.b16 %v92
  %v141 = vunpack.c.l.b16 %v93
  %v142 = vunpack.c.l.b16 %v94
  %v143 = vunpack.c.l.b16 %v95
  %v144 = vunpack.c.l.b16 %v96
  %v145 = vunpack.c.l.b16 %v97
  %v146 = vunpack.c.l.b16 %v98
  %v147 = vunpack.c.l.b16 %v99
  %v148 = vunpack.c.l.b16 %v100
  %v149 = vunpack.c.l.b16 %v101
  %v150 = vpack.c.b16 %v135, %v134
  %v151 = vpack.c.b16 %v137, %v136
  %v152 = vpack.c.b16 %v139, %v138
  %v153 = vpack.c.b16 %v141, %v140
  %v154 = vpack.c.b16 %v143, %v142
  %v155 = vpack.c.b16 %v145, %v144
  %v156 = vpack.c.b16 %v147, %v146
  %v157 = vpack.c.b16 %v149, %v148
  %v182 = vunpack.c.l.b16 %v102
  %v183 = vunpack.c.h.b16 %v102
  %v184 = vunpack.c.l.b16 %v103
  %v185 = vunpack.c.h.b16 %v103
  %v186 = vunpack.c.l.b16 %v104
  %v187 = vunpack.c.h.b16 %v104
  %v188 = vunpack.c.l.b16 %v105
  %v189 = vunpack.c.h.b16 %v105
  %v190 = vunpack.c.l.b16 %v106
  %v191 = vunpack.c.h.b16 %v106
  %v192 = vunpack.c.l.b16 %v107
  %v193 = vunpack.c.h.b16 %v107
  %v194 = vunpack.c.l.b16 %v108
  %v195 = vunpack.c.h.b16 %v108
  %v196 = vunpack.c.l.b16 %v109
  %v197 = vunpack.c.h.b16 %v109
  %v198 = vunpack.c.l.b16 %v110
  %v199 = vunpack.c.h.b16 %v110
  %v200 = vunpack.c.l.b16 %v111
  %v201 = vunpack.c.h.b16 %v111
  %v202 = vunpack.c.l.b16 %v112
  %v203 = vunpack.c.h.b16 %v112
  %v204 = vunpack.c.l.b16 %v113
  %v205 = vunpack.c.h.b16 %v113
  %v206 = vunpack.c.l.b16 %v114
  %v207 = vunpack.c.h.b16 %v114
  %v208 = vunpack.c.l.b16 %v115
  %v209 = vunpack.c.h.b16 %v115
  %v210 = vunpack.c.l.b16 %v116
  %v211 = vunpack.c.h.b16 %v116
  %v212 = vunpack.c.l.b16 %v117
  %v213 = vunpack.c.h.b16 %v117
  %v214 = vpack.c.b16 %v184, %v182
  %v215 = vpack.c.b16 %v185, %v183
  %v216 = vpack.c.b16 %v188, %v186
  %v217 = vpack.c.b16 %v189, %v187
  %v218 = vpack.c.b16 %v192, %v190
  %v219 = vpack.c.b16 %v193, %v191
  %v220 = vpack.c.b16 %v196, %v194
  %v221 = vpack.c.b16 %v197, %v195
  %v222 = vpack.c.b16 %v200, %v198
  %v223 = vpack.c.b16 %v201, %v199
  %v224 = vpack.c.b16 %v204, %v202
  %v225 = vpack.c.b16 %v205, %v203
  %v226 = vpack.c.b16 %v208, %v206
  %v227 = vpack.c.b16 %v209, %v207
  %v228 = vpack.c.b16 %v212, %v210
  %v229 = vpack.c.b16 %v213, %v211
  %246 = vmatprep.subr.bf16.mxu0 %v229
  %247 = vmatpush1.bf16.msra.mxu0 %v228
  %248 = vmatprep.subr.bf16.mxu0 %v227
  %249 = vmatpush1.bf16.msra.mxu0 %v226
  %250 = vmatprep.subr.bf16.mxu0 %v225
  %251 = vmatpush1.bf16.msra.mxu0 %v224
  %252 = vmatprep.subr.bf16.mxu0 %v223
  %253 = vmatpush1.bf16.msra.mxu0 %v222
  %254 = vmatprep.subr.bf16.mxu0 %v221
  %255 = vmatpush1.bf16.msra.mxu0 %v220
  %256 = vmatprep.subr.bf16.mxu0 %v219
  %257 = vmatpush1.bf16.msra.mxu0 %v218
  %258 = vmatprep.subr.bf16.mxu0 %v217
  %259 = vmatpush1.bf16.msra.mxu0 %v216
  %260 = vmatprep.subr.bf16.mxu0 %v215
  %261 = vmatpush1.bf16.msra.mxu0 %v214
  %262 = vmatprep.subr.bf16.mxu0 0
  %263 = vmatpush2.bf16.msra.mxu0 0
  %264 = vmatprep.subr.bf16.mxu0 0
  %265 = vmatpush2.bf16.msra.mxu0 0
  %266 = vmatprep.subr.bf16.mxu0 0
  %267 = vmatpush2.bf16.msra.mxu0 0
  %268 = vmatprep.subr.bf16.mxu0 0
  %269 = vmatpush2.bf16.msra.mxu0 0
  %270 = vmatprep.subr.bf16.mxu0 0
  %271 = vmatpush2.bf16.msra.mxu0 0
  %272 = vmatprep.subr.bf16.mxu0 0
  %273 = vmatpush2.bf16.msra.mxu0 0
  %274 = vmatprep.subr.bf16.mxu0 0
  %275 = vmatpush2.bf16.msra.mxu0 0
  %276 = vmatprep.subr.bf16.mxu0 0
  %277 = vmatpush2.bf16.msra.mxu0 0
  %278 = vmatprep.mubr.bf16.mxu0 0
  %279 = vmatmul.mubr.bf16.gmra.mxu0 %v150
  %v280 = vpop.f32.mrf.mxu0
  %v281 = vadd.f32 0.0, %v280
  %v282 = vpop.f32.mrf.mxu0
  %v283 = vadd.f32 0.0, %v282
  %v284 = vpop.f32.mrf.mxu0
  %v285 = vadd.f32 0.0, %v284
  %v286 = vpop.f32.mrf.mxu0
  %v287 = vadd.f32 0.0, %v286
  %288 = vmatprep.mubr.bf16.mxu0 0
  %289 = vmatmul.mubr.bf16.gmra.mxu0 %v151
  %v290 = vpop.f32.mrf.mxu0
  %v291 = vadd.f32 0.0, %v290
  %v292 = vpop.f32.mrf.mxu0
  %v293 = vadd.f32 0.0, %v292
  %v294 = vpop.f32.mrf.mxu0
  %v295 = vadd.f32 0.0, %v294
  %v296 = vpop.f32.mrf.mxu0
  %v297 = vadd.f32 0.0, %v296
  %298 = vmatprep.mubr.bf16.mxu0 0
  %299 = vmatmul.mubr.bf16.gmra.mxu0 %v152
  %v300 = vpop.f32.mrf.mxu0
  %v301 = vadd.f32 0.0, %v300
  %v302 = vpop.f32.mrf.mxu0
  %v303 = vadd.f32 0.0, %v302
  %v304 = vpop.f32.mrf.mxu0
  %v305 = vadd.f32 0.0, %v304
  %v306 = vpop.f32.mrf.mxu0
  %v307 = vadd.f32 0.0, %v306
  %308 = vmatprep.mubr.bf16.mxu0 0
  %309 = vmatmul.mubr.bf16.gmra.mxu0 %v153
  %v310 = vpop.f32.mrf.mxu0
  %v311 = vadd.f32 0.0, %v310
  %v312 = vpop.f32.mrf.mxu0
  %v313 = vadd.f32 0.0, %v312
  %v314 = vpop.f32.mrf.mxu0
  %v315 = vadd.f32 0.0, %v314
  %v316 = vpop.f32.mrf.mxu0
  %v317 = vadd.f32 0.0, %v316
  %318 = vmatprep.mubr.bf16.mxu0 0
  %319 = vmatmul.mubr.bf16.gmra.mxu0 %v154
  %v320 = vpop.f32.mrf.mxu0
  %v321 = vadd.f32 0.0, %v320
  %v322 = vpop.f32.mrf.mxu0
  %v323 = vadd.f32 0.0, %v322
  %v324 = vpop.f32.mrf.mxu0
  %v325 = vadd.f32 0.0, %v324
  %v326 = vpop.f32.mrf.mxu0
  %v327 = vadd.f32 0.0, %v326
  %328 = vmatprep.mubr.bf16.mxu0 0
  %329 = vmatmul.mubr.bf16.gmra.mxu0 %v155
  %v330 = vpop.f32.mrf.mxu0
  %v331 = vadd.f32 0.0, %v330
  %v332 = vpop.f32.mrf.mxu0
  %v333 = vadd.f32 0.0, %v332
  %v334 = vpop.f32.mrf.mxu0
  %v335 = vadd.f32 0.0, %v334
  %v336 = vpop.f32.mrf.mxu0
  %v337 = vadd.f32 0.0, %v336
  %338 = vmatprep.mubr.bf16.mxu0 0
  %339 = vmatmul.mubr.bf16.gmra.mxu0 %v156
  %v340 = vpop.f32.mrf.mxu0
  %v341 = vadd.f32 0.0, %v340
  %v342 = vpop.f32.mrf.mxu0
  %v343 = vadd.f32 0.0, %v342
  %v344 = vpop.f32.mrf.mxu0
  %v345 = vadd.f32 0.0, %v344
  %v346 = vpop.f32.mrf.mxu0
  %v347 = vadd.f32 0.0, %v346
  %348 = vmatprep.mubr.bf16.mxu0 0
  %349 = vmatmul.mubr.bf16.gmra.mxu0 %v157
  %v350 = vpop.f32.mrf.mxu0
  %v351 = vadd.f32 0.0, %v350
  %v352 = vpop.f32.mrf.mxu0
  %v353 = vadd.f32 0.0, %v352
  %v354 = vpop.f32.mrf.mxu0
  %v355 = vadd.f32 0.0, %v354
  %v356 = vpop.f32.mrf.mxu0
  %v357 = vadd.f32 0.0, %v356
  %358 = vdwg.mxu0
  %v359 = vadd.f32 %v54, %v281
  %v360 = vadd.f32 %v55, %v283
  %v361 = vadd.f32 %v56, %v285
  %v362 = vadd.f32 %v57, %v287
  %v363 = vadd.f32 %v58, %v291
  %v364 = vadd.f32 %v59, %v293
  %v365 = vadd.f32 %v60, %v295
  %v366 = vadd.f32 %v61, %v297
  %v367 = vadd.f32 %v62, %v301
  %v368 = vadd.f32 %v63, %v303
  %v369 = vadd.f32 %v64, %v305
  %v370 = vadd.f32 %v65, %v307
  %v371 = vadd.f32 %v66, %v311
  %v372 = vadd.f32 %v67, %v313
  %v373 = vadd.f32 %v68, %v315
  %v374 = vadd.f32 %v69, %v317
  %v375 = vadd.f32 %v70, %v321
  %v376 = vadd.f32 %v71, %v323
  %v377 = vadd.f32 %v72, %v325
  %v378 = vadd.f32 %v73, %v327
  %v379 = vadd.f32 %v74, %v331
  %v380 = vadd.f32 %v75, %v333
  %v381 = vadd.f32 %v76, %v335
  %v382 = vadd.f32 %v77, %v337
  %v383 = vadd.f32 %v78, %v341
  %v384 = vadd.f32 %v79, %v343
  %v385 = vadd.f32 %v80, %v345
  %v386 = vadd.f32 %v81, %v347
  %v387 = vadd.f32 %v82, %v351
  %v388 = vadd.f32 %v83, %v353
  %v389 = vadd.f32 %v84, %v355
  %v390 = vadd.f32 %v85, %v357
  %391 = vst [vmem:[#allocation2] sm:$0xff] %v359
  %392 = vst [vmem:[#allocation2 + $0x8] sm:$0xff] %v360
  %393 = vst [vmem:[#allocation2 + $0x10] sm:$0xff] %v361
  %394 = vst [vmem:[#allocation2 + $0x18] sm:$0xff] %v362
  %395 = vst [vmem:[#allocation2 + $0x20] sm:$0xff] %v363
  %396 = vst [vmem:[#allocation2 + $0x28] sm:$0xff] %v364
  %397 = vst [vmem:[#allocation2 + $0x30] sm:$0xff] %v365
  %398 = vst [vmem:[#allocation2 + $0x38] sm:$0xff] %v366
  %399 = vst [vmem:[#allocation2 + $0x40] sm:$0xff] %v367
  %400 = vst [vmem:[#allocation2 + $0x48] sm:$0xff] %v368
  %401 = vst [vmem:[#allocation2 + $0x50] sm:$0xff] %v369
  %402 = vst [vmem:[#allocation2 + $0x58] sm:$0xff] %v370
  %403 = vst [vmem:[#allocation2 + $0x60] sm:$0xff] %v371
  %404 = vst [vmem:[#allocation2 + $0x68] sm:$0xff] %v372
  %405 = vst [vmem:[#allocation2 + $0x70] sm:$0xff] %v373
  %406 = vst [vmem:[#allocation2 + $0x78] sm:$0xff] %v374
  %407 = vst [vmem:[#allocation2 + $0x80] sm:$0xff] %v375
  %408 = vst [vmem:[#allocation2 + $0x88] sm:$0xff] %v376
  %409 = vst [vmem:[#allocation2 + $0x90] sm:$0xff] %v377
  %410 = vst [vmem:[#allocation2 + $0x98] sm:$0xff] %v378
  %411 = vst [vmem:[#allocation2 + $0xa0] sm:$0xff] %v379
  %412 = vst [vmem:[#allocation2 + $0xa8] sm:$0xff] %v380
  %413 = vst [vmem:[#allocation2 + $0xb0] sm:$0xff] %v381
  %414 = vst [vmem:[#allocation2 + $0xb8] sm:$0xff] %v382
  %415 = vst [vmem:[#allocation2 + $0xc0] sm:$0xff] %v383
  %416 = vst [vmem:[#allocation2 + $0xc8] sm:$0xff] %v384
  %417 = vst [vmem:[#allocation2 + $0xd0] sm:$0xff] %v385
  %418 = vst [vmem:[#allocation2 + $0xd8] sm:$0xff] %v386
  %419 = vst [vmem:[#allocation2 + $0xe0] sm:$0xff] %v387
  %420 = vst [vmem:[#allocation2 + $0xe8] sm:$0xff] %v388
  %421 = vst [vmem:[#allocation2 + $0xf0] sm:$0xff] %v389
  %422 = vst [vmem:[#allocation2 + $0xf8] sm:$0xff] %v390
  // Predicated region
  $region22: #{a_call__.29} parent=0 // pred_check
    %p423 = pneg %p18
  $region23: #{a_call__.29} parent=0 // pred_check_branch
    %425 = sbr.rel (%p423) target = $region25
  $region24: #{a_call__.29} parent=0 // pred_region
    %v426 = vld [vmem:[#allocation2] sm:$0xff]
    %v427 = vld [vmem:[#allocation2 + $0x8] sm:$0xff]
    %v428 = vld [vmem:[#allocation2 + $0x10] sm:$0xff]
    %v429 = vld [vmem:[#allocation2 + $0x18] sm:$0xff]
    %v430 = vld [vmem:[#allocation2 + $0x20] sm:$0xff]
    %v431 = vld [vmem:[#allocation2 + $0x28] sm:$0xff]
    %v432 = vld [vmem:[#allocation2 + $0x30] sm:$0xff]
    %v433 = vld [vmem:[#allocation2 + $0x38] sm:$0xff]
    %v434 = vld [vmem:[#allocation2 + $0x40] sm:$0xff]
    %v435 = vld [vmem:[#allocation2 + $0x48] sm:$0xff]
    %v436 = vld [vmem:[#allocation2 + $0x50] sm:$0xff]
    %v437 = vld [vmem:[#allocation2 + $0x58] sm:$0xff]
    %v438 = vld [vmem:[#allocation2 + $0x60] sm:$0xff]
    %v439 = vld [vmem:[#allocation2 + $0x68] sm:$0xff]
    %v440 = vld [vmem:[#allocation2 + $0x70] sm:$0xff]
    %v441 = vld [vmem:[#allocation2 + $0x78] sm:$0xff]
    %v442 = vld [vmem:[#allocation2 + $0x80] sm:$0xff]
    %v443 = vld [vmem:[#allocation2 + $0x88] sm:$0xff]
    %v444 = vld [vmem:[#allocation2 + $0x90] sm:$0xff]
    %v445 = vld [vmem:[#allocation2 + $0x98] sm:$0xff]
    %v446 = vld [vmem:[#allocation2 + $0xa0] sm:$0xff]
    %v447 = vld [vmem:[#allocation2 + $0xa8] sm:$0xff]
    %v448 = vld [vmem:[#allocation2 + $0xb0] sm:$0xff]
    %v449 = vld [vmem:[#allocation2 + $0xb8] sm:$0xff]
    %v450 = vld [vmem:[#allocation2 + $0xc0] sm:$0xff]
    %v451 = vld [vmem:[#allocation2 + $0xc8] sm:$0xff]
    %v452 = vld [vmem:[#allocation2 + $0xd0] sm:$0xff]
    %v453 = vld [vmem:[#allocation2 + $0xd8] sm:$0xff]
    %v454 = vld [vmem:[#allocation2 + $0xe0] sm:$0xff]
    %v455 = vld [vmem:[#allocation2 + $0xe8] sm:$0xff]
    %v456 = vld [vmem:[#allocation2 + $0xf0] sm:$0xff]
    %v457 = vld [vmem:[#allocation2 + $0xf8] sm:$0xff]
    %v458 = vld [vmem:[%s2] sm:$0x3]
    %v460 = vlaneseq
    %v461 = vshrl.u32 %v460, 7
    %v462 = vsub.s32 0, %v461
    %v463 = vrot.slane %v458, %v462
    %v464 = vlaneseq
    %v465 = vshrl.u32 %v464, 7
    %v466 = vsub.s32 1, %v465
    %v467 = vrot.slane %v458, %v466
    %v470 = vadd.f32 %v426, %v463
    %v471 = vadd.f32 %v427, %v467
    %v472 = vadd.f32 %v428, %v463
    %v473 = vadd.f32 %v429, %v467
    %v474 = vadd.f32 %v430, %v463
    %v475 = vadd.f32 %v431, %v467
    %v476 = vadd.f32 %v432, %v463
    %v477 = vadd.f32 %v433, %v467
    %v478 = vadd.f32 %v434, %v463
    %v479 = vadd.f32 %v435, %v467
    %v480 = vadd.f32 %v436, %v463
    %v481 = vadd.f32 %v437, %v467
    %v482 = vadd.f32 %v438, %v463
    %v483 = vadd.f32 %v439, %v467
    %v484 = vadd.f32 %v440, %v463
    %v485 = vadd.f32 %v441, %v467
    %v486 = vadd.f32 %v442, %v463
    %v487 = vadd.f32 %v443, %v467
    %v488 = vadd.f32 %v444, %v463
    %v489 = vadd.f32 %v445, %v467
    %v490 = vadd.f32 %v446, %v463
    %v491 = vadd.f32 %v447, %v467
    %v492 = vadd.f32 %v448, %v463
    %v493 = vadd.f32 %v449, %v467
    %v494 = vadd.f32 %v450, %v463
    %v495 = vadd.f32 %v451, %v467
    %v496 = vadd.f32 %v452, %v463
    %v497 = vadd.f32 %v453, %v467
    %v498 = vadd.f32 %v454, %v463
    %v499 = vadd.f32 %v455, %v467
    %v500 = vadd.f32 %v456, %v463
    %v501 = vadd.f32 %v457, %v467
    %v502 = vld [vmem:[%s3] sm:$0xff]
    %v503 = vld [vmem:[%s3 + $0x8] sm:$0xff]
    %v504 = vld [vmem:[%s3 + $0x10] sm:$0xff]
    %v505 = vld [vmem:[%s3 + $0x18] sm:$0xff]
    %v506 = vld [vmem:[%s3 + $0x20] sm:$0xff]
    %v507 = vld [vmem:[%s3 + $0x28] sm:$0xff]
    %v508 = vld [vmem:[%s3 + $0x30] sm:$0xff]
    %v509 = vld [vmem:[%s3 + $0x38] sm:$0xff]
    %v510 = vld [vmem:[%s3 + $0x40] sm:$0xff]
    %v511 = vld [vmem:[%s3 + $0x48] sm:$0xff]
    %v512 = vld [vmem:[%s3 + $0x50] sm:$0xff]
    %v513 = vld [vmem:[%s3 + $0x58] sm:$0xff]
    %v514 = vld [vmem:[%s3 + $0x60] sm:$0xff]
    %v515 = vld [vmem:[%s3 + $0x68] sm:$0xff]
    %v516 = vld [vmem:[%s3 + $0x70] sm:$0xff]
    %v517 = vld [vmem:[%s3 + $0x78] sm:$0xff]
    %v518 = vunpack.c.l.bf16 %v502
    %v519 = vunpack.c.h.bf16 %v502
    %v520 = vunpack.c.l.bf16 %v503
    %v521 = vunpack.c.h.bf16 %v503
    %v522 = vunpack.c.l.bf16 %v504
    %v523 = vunpack.c.h.bf16 %v504
    %v524 = vunpack.c.l.bf16 %v505
    %v525 = vunpack.c.h.bf16 %v505
    %v526 = vunpack.c.l.bf16 %v506
    %v527 = vunpack.c.h.bf16 %v506
    %v528 = vunpack.c.l.bf16 %v507
    %v529 = vunpack.c.h.bf16 %v507
    %v530 = vunpack.c.l.bf16 %v508
    %v531 = vunpack.c.h.bf16 %v508
    %v532 = vunpack.c.l.bf16 %v509
    %v533 = vunpack.c.h.bf16 %v509
    %v534 = vunpack.c.l.bf16 %v510
    %v535 = vunpack.c.h.bf16 %v510
    %v536 = vunpack.c.l.bf16 %v511
    %v537 = vunpack.c.h.bf16 %v511
    %v538 = vunpack.c.l.bf16 %v512
    %v539 = vunpack.c.h.bf16 %v512
    %v540 = vunpack.c.l.bf16 %v513
    %v541 = vunpack.c.h.bf16 %v513
    %v542 = vunpack.c.l.bf16 %v514
    %v543 = vunpack.c.h.bf16 %v514
    %v544 = vunpack.c.l.bf16 %v515
    %v545 = vunpack.c.h.bf16 %v515
    %v546 = vunpack.c.l.bf16 %v516
    %v547 = vunpack.c.h.bf16 %v516
    %v548 = vunpack.c.l.bf16 %v517
    %v549 = vunpack.c.h.bf16 %v517
    %v550 = vadd.f32 %v470, %v518
    %v551 = vadd.f32 %v471, %v519
    %v552 = vadd.f32 %v472, %v520
    %v553 = vadd.f32 %v473, %v521
    %v554 = vadd.f32 %v474, %v522
    %v555 = vadd.f32 %v475, %v523
    %v556 = vadd.f32 %v476, %v524
    %v557 = vadd.f32 %v477, %v525
    %v558 = vadd.f32 %v478, %v526
    %v559 = vadd.f32 %v479, %v527
    %v560 = vadd.f32 %v480, %v528
    %v561 = vadd.f32 %v481, %v529
    %v562 = vadd.f32 %v482, %v530
    %v563 = vadd.f32 %v483, %v531
    %v564 = vadd.f32 %v484, %v532
    %v565 = vadd.f32 %v485, %v533
    %v566 = vadd.f32 %v486, %v534
    %v567 = vadd.f32 %v487, %v535
    %v568 = vadd.f32 %v488, %v536
    %v569 = vadd.f32 %v489, %v537
    %v570 = vadd.f32 %v490, %v538
    %v571 = vadd.f32 %v491, %v539
    %v572 = vadd.f32 %v492, %v540
    %v573 = vadd.f32 %v493, %v541
    %v574 = vadd.f32 %v494, %v542
    %v575 = vadd.f32 %v495, %v543
    %v576 = vadd.f32 %v496, %v544
    %v577 = vadd.f32 %v497, %v545
    %v578 = vadd.f32 %v498, %v546
    %v579 = vadd.f32 %v499, %v547
    %v580 = vadd.f32 %v500, %v548
    %v581 = vadd.f32 %v501, %v549
    %v582 = vmax.f32 %v550, 0.0
    %v583 = vmax.f32 %v551, 0.0
    %v584 = vmax.f32 %v552, 0.0
    %v585 = vmax.f32 %v553, 0.0
    %v586 = vmax.f32 %v554, 0.0
    %v587 = vmax.f32 %v555, 0.0
    %v588 = vmax.f32 %v556, 0.0
    %v589 = vmax.f32 %v557, 0.0
    %v590 = vmax.f32 %v558, 0.0
    %v591 = vmax.f32 %v559, 0.0
    %v592 = vmax.f32 %v560, 0.0
    %v593 = vmax.f32 %v561, 0.0
    %v594 = vmax.f32 %v562, 0.0
    %v595 = vmax.f32 %v563, 0.0
    %v596 = vmax.f32 %v564, 0.0
    %v597 = vmax.f32 %v565, 0.0
    %v598 = vmax.f32 %v566, 0.0
    %v599 = vmax.f32 %v567, 0.0
    %v600 = vmax.f32 %v568, 0.0
    %v601 = vmax.f32 %v569, 0.0
    %v602 = vmax.f32 %v570, 0.0
    %v603 = vmax.f32 %v571, 0.0
    %v604 = vmax.f32 %v572, 0.0
    %v605 = vmax.f32 %v573, 0.0
    %v606 = vmax.f32 %v574, 0.0
    %v607 = vmax.f32 %v575, 0.0
    %v608 = vmax.f32 %v576, 0.0
    %v609 = vmax.f32 %v577, 0.0
    %v610 = vmax.f32 %v578, 0.0
    %v611 = vmax.f32 %v579, 0.0
    %v612 = vmax.f32 %v580, 0.0
    %v613 = vmax.f32 %v581, 0.0
    %v614 = vpack.c.bf16 %v584, %v582
    %v615 = vpack.c.bf16 %v585, %v583
    %v616 = vpack.c.bf16 %v588, %v586
    %v617 = vpack.c.bf16 %v589, %v587
    %v618 = vpack.c.bf16 %v592, %v590
    %v619 = vpack.c.bf16 %v593, %v591
    %v620 = vpack.c.bf16 %v596, %v594
    %v621 = vpack.c.bf16 %v597, %v595
    %v622 = vpack.c.bf16 %v600, %v598
    %v623 = vpack.c.bf16 %v601, %v599
    %v624 = vpack.c.bf16 %v604, %v602
    %v625 = vpack.c.bf16 %v605, %v603
    %v626 = vpack.c.bf16 %v608, %v606
    %v627 = vpack.c.bf16 %v609, %v607
    %v628 = vpack.c.bf16 %v612, %v610
    %v629 = vpack.c.bf16 %v613, %v611
    %v646 = vunpack.c.l.b16 %v614
    %v647 = vunpack.c.l.b16 %v615
    %v648 = vunpack.c.h.b16 %v614
    %v649 = vunpack.c.h.b16 %v615
    %v650 = vunpack.c.l.b16 %v616
    %v651 = vunpack.c.l.b16 %v617
    %v652 = vunpack.c.h.b16 %v616
    %v653 = vunpack.c.h.b16 %v617
    %v654 = vunpack.c.l.b16 %v618
    %v655 = vunpack.c.l.b16 %v619
    %v656 = vunpack.c.h.b16 %v618
    %v657 = vunpack.c.h.b16 %v619
    %v658 = vunpack.c.l.b16 %v620
    %v659 = vunpack.c.l.b16 %v621
    %v660 = vunpack.c.h.b16 %v620
    %v661 = vunpack.c.h.b16 %v621
    %v662 = vunpack.c.l.b16 %v622
    %v663 = vunpack.c.l.b16 %v623
    %v664 = vunpack.c.h.b16 %v622
    %v665 = vunpack.c.h.b16 %v623
    %v666 = vunpack.c.l.b16 %v624
    %v667 = vunpack.c.l.b16 %v625
    %v668 = vunpack.c.h.b16 %v624
    %v669 = vunpack.c.h.b16 %v625
    %v670 = vunpack.c.l.b16 %v626
    %v671 = vunpack.c.l.b16 %v627
    %v672 = vunpack.c.h.b16 %v626
    %v673 = vunpack.c.h.b16 %v627
    %v674 = vunpack.c.l.b16 %v628
    %v675 = vunpack.c.l.b16 %v629
    %v676 = vunpack.c.h.b16 %v628
    %v677 = vunpack.c.h.b16 %v629
    %v678 = vpack.c.b16 %v647, %v646
    %v679 = vpack.c.b16 %v649, %v648
    %v680 = vpack.c.b16 %v651, %v650
    %v681 = vpack.c.b16 %v653, %v652
    %v682 = vpack.c.b16 %v655, %v654
    %v683 = vpack.c.b16 %v657, %v656
    %v684 = vpack.c.b16 %v659, %v658
    %v685 = vpack.c.b16 %v661, %v660
    %v686 = vpack.c.b16 %v663, %v662
    %v687 = vpack.c.b16 %v665, %v664
    %v688 = vpack.c.b16 %v667, %v666
    %v689 = vpack.c.b16 %v669, %v668
    %v690 = vpack.c.b16 %v671, %v670
    %v691 = vpack.c.b16 %v673, %v672
    %v692 = vpack.c.b16 %v675, %v674
    %v693 = vpack.c.b16 %v677, %v676
    %710 = vst [vmem:[%s4] sm:$0xff] %v678
    %711 = vst [vmem:[%s4 + $0x8] sm:$0xff] %v679
    %712 = vst [vmem:[%s4 + $0x10] sm:$0xff] %v680
    %713 = vst [vmem:[%s4 + $0x18] sm:$0xff] %v681
    %714 = vst [vmem:[%s4 + $0x20] sm:$0xff] %v682
    %715 = vst [vmem:[%s4 + $0x28] sm:$0xff] %v683
    %716 = vst [vmem:[%s4 + $0x30] sm:$0xff] %v684
    %717 = vst [vmem:[%s4 + $0x38] sm:$0xff] %v685
    %718 = vst [vmem:[%s4 + $0x40] sm:$0xff] %v686
    %719 = vst [vmem:[%s4 + $0x48] sm:$0xff] %v687
    %720 = vst [vmem:[%s4 + $0x50] sm:$0xff] %v688
    %721 = vst [vmem:[%s4 + $0x58] sm:$0xff] %v689
    %722 = vst [vmem:[%s4 + $0x60] sm:$0xff] %v690
    %723 = vst [vmem:[%s4 + $0x68] sm:$0xff] %v691
    %724 = vst [vmem:[%s4 + $0x70] sm:$0xff] %v692
    %725 = vst [vmem:[%s4 + $0x78] sm:$0xff] %v693
  $region25: #{a_call__.29} parent=0 // pred_fallthru
    _
  // Predicated region
  $region26: #{a_call__.29} parent=0 // pred_check
    _
  $region27: #{a_call__.29} parent=0 // pred_check_branch
    %727 = sbr.rel (0) target = $region29
  $region28: #{a_call__.29} parent=0 // pred_region
    _
  $region29: #{a_call__.29} parent=0 // pred_fallthru
    _
  // Predicated region
  $region30: #{a_call__.29} parent=0 // pred_check
    _
  $region31: #{a_call__.29} parent=0 // pred_check_branch
    %729 = sbr.rel (0) target = $region33
  $region32: #{a_call__.29} parent=0 // pred_region
    _
  $region33: #{a_call__.29} parent=0 // pred_fallthru
    _

// kernel: a_call__.27
$region0: #{a_call__.27}
  #allocation0 [shape = 'u32[]', space=smem, size = 0x4, offset = 0x4, fixed_abs, tag = 'smem constant byte address 0x4 - core index']
  #allocation1 [shape = 'u32[144,128]{1,0:T(1,128)}', space=vmem, size = 0x12000, scoped, tag = 'internal scratch']
  #allocation2 [shape = 'f32[128,128]{1,0:T(8,128)}', space=vmem, size = 0x10000, scoped, tag = 'scratch operand']
  %s0 = inlined_call_operand.vmem [shape: bf16[128,640], index: 0, kind: input, shape index: {}]
  %s1 = inlined_call_operand.vmem [shape: bf16[640,128], index: 1, kind: input, shape index: {}]
  %s2 = inlined_call_operand.vmem [shape: f32[1,128], index: 2, kind: input, shape index: {}]
  %s3 = inlined_call_operand.vmem [shape: bf16[128,128], index: 3, kind: output, shape index: {}]
  %s4 = sld [smem:[#allocation0]]
  $region30: #{a_call__.27} parent=0
    _
  %s6 = ssub.s32 1, %s4
  %s7 = scalar_select 0, %s6, %s4
  // Predicated region
  $region2: #{a_call__.27} parent=0 // pred_check
    _
  $region3: #{a_call__.27} parent=0 // pred_check_branch
    %9 = sbr.rel (0) target = $region5
  $region4: #{a_call__.27} parent=0 // pred_region
    _
  $region5: #{a_call__.27} parent=0 // pred_fallthru
    _
  // Predicated region
  $region6: #{a_call__.27} parent=0 // pred_check
    _
  $region7: #{a_call__.27} parent=0 // pred_check_branch
    %11 = sbr.rel (0) target = $region9
  $region8: #{a_call__.27} parent=0 // pred_region
    _
  $region9: #{a_call__.27} parent=0 // pred_fallthru
    _
  // Predicated region
  $region10: #{a_call__.27} parent=0 // pred_check
    _
  $region11: #{a_call__.27} parent=0 // pred_check_branch
    %13 = sbr.rel (0) target = $region13
  $region12: #{a_call__.27} parent=0 // pred_region
    _
  $region13: #{a_call__.27} parent=0 // pred_fallthru
    _
  %p15 = scmp.eq.s32.totalorder 0, 0
  // Predicated region
  $region14: #{a_call__.27} parent=0 // pred_check
    %p16 = pneg %p15
  $region15: #{a_call__.27} parent=0 // pred_check_branch
    %18 = sbr.rel (%p16) target = $region17
  $region16: #{a_call__.27} parent=0 // pred_region
    %19 = vst [vmem:[#allocation2] sm:$0xff] 0.0
    %20 = vst [vmem:[#allocation2 + $0x8] sm:$0xff] 0.0
    %21 = vst [vmem:[#allocation2 + $0x10] sm:$0xff] 0.0
    %22 = vst [vmem:[#allocation2 + $0x18] sm:$0xff] 0.0
    %23 = vst [vmem:[#allocation2 + $0x20] sm:$0xff] 0.0
    %24 = vst [vmem:[#allocation2 + $0x28] sm:$0xff] 0.0
    %25 = vst [vmem:[#allocation2 + $0x30] sm:$0xff] 0.0
    %26 = vst [vmem:[#allocation2 + $0x38] sm:$0xff] 0.0
    %27 = vst [vmem:[#allocation2 + $0x40] sm:$0xff] 0.0
    %28 = vst [vmem:[#allocation2 + $0x48] sm:$0xff] 0.0
    %29 = vst [vmem:[#allocation2 + $0x50] sm:$0xff] 0.0
    %30 = vst [vmem:[#allocation2 + $0x58] sm:$0xff] 0.0
    %31 = vst [vmem:[#allocation2 + $0x60] sm:$0xff] 0.0
    %32 = vst [vmem:[#allocation2 + $0x68] sm:$0xff] 0.0
    %33 = vst [vmem:[#allocation2 + $0x70] sm:$0xff] 0.0
    %34 = vst [vmem:[#allocation2 + $0x78] sm:$0xff] 0.0
  $region17: #{a_call__.27} parent=0 // pred_fallthru
    _
  %v35 = vld [vmem:[#allocation2] sm:$0xff]
  %v36 = vld [vmem:[#allocation2 + $0x8] sm:$0xff]
  %v37 = vld [vmem:[#allocation2 + $0x10] sm:$0xff]
  %v38 = vld [vmem:[#allocation2 + $0x18] sm:$0xff]
  %v39 = vld [vmem:[#allocation2 + $0x20] sm:$0xff]
  %v40 = vld [vmem:[#allocation2 + $0x28] sm:$0xff]
  %v41 = vld [vmem:[#allocation2 + $0x30] sm:$0xff]
  %v42 = vld [vmem:[#allocation2 + $0x38] sm:$0xff]
  %v43 = vld [vmem:[#allocation2 + $0x40] sm:$0xff]
  %v44 = vld [vmem:[#allocation2 + $0x48] sm:$0xff]
  %v45 = vld [vmem:[#allocation2 + $0x50] sm:$0xff]
  %v46 = vld [vmem:[#allocation2 + $0x58] sm:$0xff]
  %v47 = vld [vmem:[#allocation2 + $0x60] sm:$0xff]
  %v48 = vld [vmem:[#allocation2 + $0x68] sm:$0xff]
  %v49 = vld [vmem:[#allocation2 + $0x70] sm:$0xff]
  %v50 = vld [vmem:[#allocation2 + $0x78] sm:$0xff]
  %v51 = vld [vmem:[%s0] sm:$0xff]
  %v52 = vld [vmem:[%s0 + $0x8] sm:$0xff]
  %v53 = vld [vmem:[%s0 + $0x10] sm:$0xf]
  %v54 = vld [vmem:[%s0 + $0x14] sm:$0xff]
  %v55 = vld [vmem:[%s0 + $0x1c] sm:$0xff]
  %v56 = vld [vmem:[%s0 + $0x24] sm:$0xf]
  %v57 = vld [vmem:[%s0 + $0x28] sm:$0xff]
  %v58 = vld [vmem:[%s0 + $0x30] sm:$0xff]
  %v59 = vld [vmem:[%s0 + $0x38] sm:$0xf]
  %v60 = vld [vmem:[%s0 + $0x3c] sm:$0xff]
  %v61 = vld [vmem:[%s0 + $0x44] sm:$0xff]
  %v62 = vld [vmem:[%s0 + $0x4c] sm:$0xf]
  %v63 = vld [vmem:[%s0 + $0x50] sm:$0xff]
  %v64 = vld [vmem:[%s0 + $0x58] sm:$0xff]
  %v65 = vld [vmem:[%s0 + $0x60] sm:$0xf]
  %v66 = vld [vmem:[%s0 + $0x64] sm:$0xff]
  %v67 = vld [vmem:[%s0 + $0x6c] sm:$0xff]
  %v68 = vld [vmem:[%s0 + $0x74] sm:$0xf]
  %v69 = vld [vmem:[%s0 + $0x78] sm:$0xff]
  %v70 = vld [vmem:[%s0 + $0x80] sm:$0xff]
  %v71 = vld [vmem:[%s0 + $0x88] sm:$0xf]
  %v72 = vld [vmem:[%s0 + $0x8c] sm:$0xff]
  %v73 = vld [vmem:[%s0 + $0x94] sm:$0xff]
  %v74 = vld [vmem:[%s0 + $0x9c] sm:$0xf]
  %v75 = vld [vmem:[%s0 + $0xa0] sm:$0xff]
  %v76 = vld [vmem:[%s0 + $0xa8] sm:$0xff]
  %v77 = vld [vmem:[%s0 + $0xb0] sm:$0xf]
  %v78 = vld [vmem:[%s0 + $0xb4] sm:$0xff]
  %v79 = vld [vmem:[%s0 + $0xbc] sm:$0xff]
  %v80 = vld [vmem:[%s0 + $0xc4] sm:$0xf]
  %v81 = vld [vmem:[%s0 + $0xc8] sm:$0xff]
  %v82 = vld [vmem:[%s0 + $0xd0] sm:$0xff]
  %v83 = vld [vmem:[%s0 + $0xd8] sm:$0xf]
  %v84 = vld [vmem:[%s0 + $0xdc] sm:$0xff]
  %v85 = vld [vmem:[%s0 + $0xe4] sm:$0xff]
  %v86 = vld [vmem:[%s0 + $0xec] sm:$0xf]
  %v87 = vld [vmem:[%s0 + $0xf0] sm:$0xff]
  %v88 = vld [vmem:[%s0 + $0xf8] sm:$0xff]
  %v89 = vld [vmem:[%s0 + $0x100] sm:$0xf]
  %v90 = vld [vmem:[%s0 + $0x104] sm:$0xff]
  %v91 = vld [vmem:[%s0 + $0x10c] sm:$0xff]
  %v92 = vld [vmem:[%s0 + $0x114] sm:$0xf]
  %v93 = vld [vmem:[%s0 + $0x118] sm:$0xff]
  %v94 = vld [vmem:[%s0 + $0x120] sm:$0xff]
  %v95 = vld [vmem:[%s0 + $0x128] sm:$0xf]
  %v96 = vld [vmem:[%s0 + $0x12c] sm:$0xff]
  %v97 = vld [vmem:[%s0 + $0x134] sm:$0xff]
  %v98 = vld [vmem:[%s0 + $0x13c] sm:$0xf]
  %v99 = vld [vmem:[%s1] sm:$0xf]
  %v100 = vld [vmem:[%s1 + $0x4] sm:$0xf]
  %v101 = vld [vmem:[%s1 + $0x8] sm:$0xf]
  %v102 = vld [vmem:[%s1 + $0xc] sm:$0xf]
  %v103 = vld [vmem:[%s1 + $0x10] sm:$0xf]
  %v104 = vld [vmem:[%s1 + $0x14] sm:$0xf]
  %v105 = vld [vmem:[%s1 + $0x18] sm:$0xf]
  %v106 = vld [vmem:[%s1 + $0x1c] sm:$0xf]
  %v107 = vld [vmem:[%s1 + $0x20] sm:$0xf]
  %v108 = vld [vmem:[%s1 + $0x24] sm:$0xf]
  %v109 = vld [vmem:[%s1 + $0x28] sm:$0xf]
  %v110 = vld [vmem:[%s1 + $0x2c] sm:$0xf]
  %v111 = vld [vmem:[%s1 + $0x30] sm:$0xf]
  %v112 = vld [vmem:[%s1 + $0x34] sm:$0xf]
  %v113 = vld [vmem:[%s1 + $0x38] sm:$0xf]
  %v114 = vld [vmem:[%s1 + $0x3c] sm:$0xf]
  %v115 = vld [vmem:[%s1 + $0x40] sm:$0xf]
  %v116 = vld [vmem:[%s1 + $0x44] sm:$0xf]
  %v117 = vld [vmem:[%s1 + $0x48] sm:$0xf]
  %v118 = vld [vmem:[%s1 + $0x4c] sm:$0xf]
  %v119 = vld [vmem:[%s1 + $0x50] sm:$0xf]
  %v120 = vld [vmem:[%s1 + $0x54] sm:$0xf]
  %v121 = vld [vmem:[%s1 + $0x58] sm:$0xf]
  %v122 = vld [vmem:[%s1 + $0x5c] sm:$0xf]
  %v123 = vld [vmem:[%s1 + $0x60] sm:$0xf]
  %v124 = vld [vmem:[%s1 + $0x64] sm:$0xf]
  %v125 = vld [vmem:[%s1 + $0x68] sm:$0xf]
  %v126 = vld [vmem:[%s1 + $0x6c] sm:$0xf]
  %v127 = vld [vmem:[%s1 + $0x70] sm:$0xf]
  %v128 = vld [vmem:[%s1 + $0x74] sm:$0xf]
  %v129 = vld [vmem:[%s1 + $0x78] sm:$0xf]
  %v130 = vld [vmem:[%s1 + $0x7c] sm:$0xf]
  %v131 = vld [vmem:[%s1 + $0x80] sm:$0xf]
  %v132 = vld [vmem:[%s1 + $0x84] sm:$0xf]
  %v133 = vld [vmem:[%s1 + $0x88] sm:$0xf]
  %v134 = vld [vmem:[%s1 + $0x8c] sm:$0xf]
  %v135 = vld [vmem:[%s1 + $0x90] sm:$0xf]
  %v136 = vld [vmem:[%s1 + $0x94] sm:$0xf]
  %v137 = vld [vmem:[%s1 + $0x98] sm:$0xf]
  %v138 = vld [vmem:[%s1 + $0x9c] sm:$0xf]
  %v139 = vld [vmem:[%s1 + $0xa0] sm:$0xf]
  %v140 = vld [vmem:[%s1 + $0xa4] sm:$0xf]
  %v141 = vld [vmem:[%s1 + $0xa8] sm:$0xf]
  %v142 = vld [vmem:[%s1 + $0xac] sm:$0xf]
  %v143 = vld [vmem:[%s1 + $0xb0] sm:$0xf]
  %v144 = vld [vmem:[%s1 + $0xb4] sm:$0xf]
  %v145 = vld [vmem:[%s1 + $0xb8] sm:$0xf]
  %v146 = vld [vmem:[%s1 + $0xbc] sm:$0xf]
  %v147 = vld [vmem:[%s1 + $0xc0] sm:$0xf]
  %v148 = vld [vmem:[%s1 + $0xc4] sm:$0xf]
  %v149 = vld [vmem:[%s1 + $0xc8] sm:$0xf]
  %v150 = vld [vmem:[%s1 + $0xcc] sm:$0xf]
  %v151 = vld [vmem:[%s1 + $0xd0] sm:$0xf]
  %v152 = vld [vmem:[%s1 + $0xd4] sm:$0xf]
  %v153 = vld [vmem:[%s1 + $0xd8] sm:$0xf]
  %v154 = vld [vmem:[%s1 + $0xdc] sm:$0xf]
  %v155 = vld [vmem:[%s1 + $0xe0] sm:$0xf]
  %v156 = vld [vmem:[%s1 + $0xe4] sm:$0xf]
  %v157 = vld [vmem:[%s1 + $0xe8] sm:$0xf]
  %v158 = vld [vmem:[%s1 + $0xec] sm:$0xf]
  %v159 = vld [vmem:[%s1 + $0xf0] sm:$0xf]
  %v160 = vld [vmem:[%s1 + $0xf4] sm:$0xf]
  %v161 = vld [vmem:[%s1 + $0xf8] sm:$0xf]
  %v162 = vld [vmem:[%s1 + $0xfc] sm:$0xf]
  %v163 = vld [vmem:[%s1 + $0x100] sm:$0xf]
  %v164 = vld [vmem:[%s1 + $0x104] sm:$0xf]
  %v165 = vld [vmem:[%s1 + $0x108] sm:$0xf]
  %v166 = vld [vmem:[%s1 + $0x10c] sm:$0xf]
  %v167 = vld [vmem:[%s1 + $0x110] sm:$0xf]
  %v168 = vld [vmem:[%s1 + $0x114] sm:$0xf]
  %v169 = vld [vmem:[%s1 + $0x118] sm:$0xf]
  %v170 = vld [vmem:[%s1 + $0x11c] sm:$0xf]
  %v171 = vld [vmem:[%s1 + $0x120] sm:$0xf]
  %v172 = vld [vmem:[%s1 + $0x124] sm:$0xf]
  %v173 = vld [vmem:[%s1 + $0x128] sm:$0xf]
  %v174 = vld [vmem:[%s1 + $0x12c] sm:$0xf]
  %v175 = vld [vmem:[%s1 + $0x130] sm:$0xf]
  %v176 = vld [vmem:[%s1 + $0x134] sm:$0xf]
  %v177 = vld [vmem:[%s1 + $0x138] sm:$0xf]
  %v178 = vld [vmem:[%s1 + $0x13c] sm:$0xf]
  %v227 = vunpack.c.l.b16 %v51
  %v228 = vunpack.c.h.b16 %v51
  %v229 = vunpack.c.l.b16 %v52
  %v230 = vunpack.c.h.b16 %v52
  %v231 = vunpack.c.l.b16 %v53
  %v232 = vunpack.c.l.b16 %v54
  %v233 = vunpack.c.h.b16 %v54
  %v234 = vunpack.c.l.b16 %v55
  %v235 = vunpack.c.h.b16 %v55
  %v236 = vunpack.c.l.b16 %v56
  %v237 = vunpack.c.l.b16 %v57
  %v238 = vunpack.c.h.b16 %v57
  %v239 = vunpack.c.l.b16 %v58
  %v240 = vunpack.c.h.b16 %v58
  %v241 = vunpack.c.l.b16 %v59
  %v242 = vunpack.c.l.b16 %v60
  %v243 = vunpack.c.h.b16 %v60
  %v244 = vunpack.c.l.b16 %v61
  %v245 = vunpack.c.h.b16 %v61
  %v246 = vunpack.c.l.b16 %v62
  %v247 = vunpack.c.l.b16 %v63
  %v248 = vunpack.c.h.b16 %v63
  %v249 = vunpack.c.l.b16 %v64
  %v250 = vunpack.c.h.b16 %v64
  %v251 = vunpack.c.l.b16 %v65
  %v252 = vunpack.c.l.b16 %v66
  %v253 = vunpack.c.h.b16 %v66
  %v254 = vunpack.c.l.b16 %v67
  %v255 = vunpack.c.h.b16 %v67
  %v256 = vunpack.c.l.b16 %v68
  %v257 = vunpack.c.l.b16 %v69
  %v258 = vunpack.c.h.b16 %v69
  %v259 = vunpack.c.l.b16 %v70
  %v260 = vunpack.c.h.b16 %v70
  %v261 = vunpack.c.l.b16 %v71
  %v262 = vunpack.c.l.b16 %v72
  %v263 = vunpack.c.h.b16 %v72
  %v264 = vunpack.c.l.b16 %v73
  %v265 = vunpack.c.h.b16 %v73
  %v266 = vunpack.c.l.b16 %v74
  %v267 = vunpack.c.l.b16 %v75
  %v268 = vunpack.c.h.b16 %v75
  %v269 = vunpack.c.l.b16 %v76
  %v270 = vunpack.c.h.b16 %v76
  %v271 = vunpack.c.l.b16 %v77
  %v272 = vunpack.c.l.b16 %v78
  %v273 = vunpack.c.h.b16 %v78
  %v274 = vunpack.c.l.b16 %v79
  %v275 = vunpack.c.h.b16 %v79
  %v276 = vunpack.c.l.b16 %v80
  %v277 = vunpack.c.l.b16 %v81
  %v278 = vunpack.c.h.b16 %v81
  %v279 = vunpack.c.l.b16 %v82
  %v280 = vunpack.c.h.b16 %v82
  %v281 = vunpack.c.l.b16 %v83
  %v282 = vunpack.c.l.b16 %v84
  %v283 = vunpack.c.h.b16 %v84
  %v284 = vunpack.c.l.b16 %v85
  %v285 = vunpack.c.h.b16 %v85
  %v286 = vunpack.c.l.b16 %v86
  %v287 = vunpack.c.l.b16 %v87
  %v288 = vunpack.c.h.b16 %v87
  %v289 = vunpack.c.l.b16 %v88
  %v290 = vunpack.c.h.b16 %v88
  %v291 = vunpack.c.l.b16 %v89
  %v292 = vunpack.c.l.b16 %v90
  %v293 = vunpack.c.h.b16 %v90
  %v294 = vunpack.c.l.b16 %v91
  %v295 = vunpack.c.h.b16 %v91
  %v296 = vunpack.c.l.b16 %v92
  %v297 = vunpack.c.l.b16 %v93
  %v298 = vunpack.c.h.b16 %v93
  %v299 = vunpack.c.l.b16 %v94
  %v300 = vunpack.c.h.b16 %v94
  %v301 = vunpack.c.l.b16 %v95
  %v302 = vunpack.c.l.b16 %v96
  %v303 = vunpack.c.h.b16 %v96
  %v304 = vunpack.c.l.b16 %v97
  %v305 = vunpack.c.h.b16 %v97
  %v306 = vunpack.c.l.b16 %v98
  %v307 = vpack.c.b16 %v232, %v227
  %v308 = vpack.c.b16 %v233, %v228
  %v309 = vpack.c.b16 %v234, %v229
  %v310 = vpack.c.b16 %v235, %v230
  %v311 = vpack.c.b16 %v236, %v231
  %v312 = vpack.c.b16 %v242, %v237
  %v313 = vpack.c.b16 %v243, %v238
  %v314 = vpack.c.b16 %v244, %v239
  %v315 = vpack.c.b16 %v245, %v240
  %v316 = vpack.c.b16 %v246, %v241
  %v317 = vpack.c.b16 %v252, %v247
  %v318 = vpack.c.b16 %v253, %v248
  %v319 = vpack.c.b16 %v254, %v249
  %v320 = vpack.c.b16 %v255, %v250
  %v321 = vpack.c.b16 %v256, %v251
  %v322 = vpack.c.b16 %v262, %v257
  %v323 = vpack.c.b16 %v263, %v258
  %v324 = vpack.c.b16 %v264, %v259
  %v325 = vpack.c.b16 %v265, %v260
  %v326 = vpack.c.b16 %v266, %v261
  %v327 = vpack.c.b16 %v272, %v267
  %v328 = vpack.c.b16 %v273, %v268
  %v329 = vpack.c.b16 %v274, %v269
  %v330 = vpack.c.b16 %v275, %v270
  %v331 = vpack.c.b16 %v276, %v271
  %v332 = vpack.c.b16 %v282, %v277
  %v333 = vpack.c.b16 %v283, %v278
  %v334 = vpack.c.b16 %v284, %v279
  %v335 = vpack.c.b16 %v285, %v280
  %v336 = vpack.c.b16 %v286, %v281
  %v337 = vpack.c.b16 %v292, %v287
  %v338 = vpack.c.b16 %v293, %v288
  %v339 = vpack.c.b16 %v294, %v289
  %v340 = vpack.c.b16 %v295, %v290
  %v341 = vpack.c.b16 %v296, %v291
  %v342 = vpack.c.b16 %v302, %v297
  %v343 = vpack.c.b16 %v303, %v298
  %v344 = vpack.c.b16 %v304, %v299
  %v345 = vpack.c.b16 %v305, %v300
  %v346 = vpack.c.b16 %v306, %v301
  %v467 = vunpack.c.l.b16 %v99
  %v468 = vunpack.c.l.b16 %v100
  %v469 = vunpack.c.l.b16 %v101
  %v470 = vunpack.c.l.b16 %v102
  %v471 = vunpack.c.l.b16 %v103
  %v472 = vunpack.c.l.b16 %v104
  %v473 = vunpack.c.l.b16 %v105
  %v474 = vunpack.c.l.b16 %v106
  %v475 = vunpack.c.l.b16 %v107
  %v476 = vunpack.c.l.b16 %v108
  %v477 = vunpack.c.l.b16 %v109
  %v478 = vunpack.c.l.b16 %v110
  %v479 = vunpack.c.l.b16 %v111
  %v480 = vunpack.c.l.b16 %v112
  %v481 = vunpack.c.l.b16 %v113
  %v482 = vunpack.c.l.b16 %v114
  %v483 = vunpack.c.l.b16 %v115
  %v484 = vunpack.c.l.b16 %v116
  %v485 = vunpack.c.l.b16 %v117
  %v486 = vunpack.c.l.b16 %v118
  %v487 = vunpack.c.l.b16 %v119
  %v488 = vunpack.c.l.b16 %v120
  %v489 = vunpack.c.l.b16 %v121
  %v490 = vunpack.c.l.b16 %v122
  %v491 = vunpack.c.l.b16 %v123
  %v492 = vunpack.c.l.b16 %v124
  %v493 = vunpack.c.l.b16 %v125
  %v494 = vunpack.c.l.b16 %v126
  %v495 = vunpack.c.l.b16 %v127
  %v496 = vunpack.c.l.b16 %v128
  %v497 = vunpack.c.l.b16 %v129
  %v498 = vunpack.c.l.b16 %v130
  %v499 = vunpack.c.l.b16 %v131
  %v500 = vunpack.c.l.b16 %v132
  %v501 = vunpack.c.l.b16 %v133
  %v502 = vunpack.c.l.b16 %v134
  %v503 = vunpack.c.l.b16 %v135
  %v504 = vunpack.c.l.b16 %v136
  %v505 = vunpack.c.l.b16 %v137
  %v506 = vunpack.c.l.b16 %v138
  %v507 = vunpack.c.l.b16 %v139
  %v508 = vunpack.c.l.b16 %v140
  %v509 = vunpack.c.l.b16 %v141
  %v510 = vunpack.c.l.b16 %v142
  %v511 = vunpack.c.l.b16 %v143
  %v512 = vunpack.c.l.b16 %v144
  %v513 = vunpack.c.l.b16 %v145
  %v514 = vunpack.c.l.b16 %v146
  %v515 = vunpack.c.l.b16 %v147
  %v516 = vunpack.c.l.b16 %v148
  %v517 = vunpack.c.l.b16 %v149
  %v518 = vunpack.c.l.b16 %v150
  %v519 = vunpack.c.l.b16 %v151
  %v520 = vunpack.c.l.b16 %v152
  %v521 = vunpack.c.l.b16 %v153
  %v522 = vunpack.c.l.b16 %v154
  %v523 = vunpack.c.l.b16 %v155
  %v524 = vunpack.c.l.b16 %v156
  %v525 = vunpack.c.l.b16 %v157
  %v526 = vunpack.c.l.b16 %v158
  %v527 = vunpack.c.l.b16 %v159
  %v528 = vunpack.c.l.b16 %v160
  %v529 = vunpack.c.l.b16 %v161
  %v530 = vunpack.c.l.b16 %v162
  %v531 = vunpack.c.l.b16 %v163
  %v532 = vunpack.c.l.b16 %v164
  %v533 = vunpack.c.l.b16 %v165
  %v534 = vunpack.c.l.b16 %v166
  %v535 = vunpack.c.l.b16 %v167
  %v536 = vunpack.c.l.b16 %v168
  %v537 = vunpack.c.l.b16 %v169
  %v538 = vunpack.c.l.b16 %v170
  %v539 = vunpack.c.l.b16 %v171
  %v540 = vunpack.c.l.b16 %v172
  %v541 = vunpack.c.l.b16 %v173
  %v542 = vunpack.c.l.b16 %v174
  %v543 = vunpack.c.l.b16 %v175
  %v544 = vunpack.c.l.b16 %v176
  %v545 = vunpack.c.l.b16 %v177
  %v546 = vunpack.c.l.b16 %v178
  %v547 = vpack.c.b16 %v468, %v467
  %v548 = vpack.c.b16 %v470, %v469
  %v549 = vpack.c.b16 %v472, %v471
  %v550 = vpack.c.b16 %v474, %v473
  %v551 = vpack.c.b16 %v476, %v475
  %v552 = vpack.c.b16 %v478, %v477
  %v553 = vpack.c.b16 %v480, %v479
  %v554 = vpack.c.b16 %v482, %v481
  %v555 = vpack.c.b16 %v484, %v483
  %v556 = vpack.c.b16 %v486, %v485
  %v557 = vpack.c.b16 %v488, %v487
  %v558 = vpack.c.b16 %v490, %v489
  %v559 = vpack.c.b16 %v492, %v491
  %v560 = vpack.c.b16 %v494, %v493
  %v561 = vpack.c.b16 %v496, %v495
  %v562 = vpack.c.b16 %v498, %v497
  %v563 = vpack.c.b16 %v500, %v499
  %v564 = vpack.c.b16 %v502, %v501
  %v565 = vpack.c.b16 %v504, %v503
  %v566 = vpack.c.b16 %v506, %v505
  %v567 = vpack.c.b16 %v508, %v507
  %v568 = vpack.c.b16 %v510, %v509
  %v569 = vpack.c.b16 %v512, %v511
  %v570 = vpack.c.b16 %v514, %v513
  %v571 = vpack.c.b16 %v516, %v515
  %v572 = vpack.c.b16 %v518, %v517
  %v573 = vpack.c.b16 %v520, %v519
  %v574 = vpack.c.b16 %v522, %v521
  %v575 = vpack.c.b16 %v524, %v523
  %v576 = vpack.c.b16 %v526, %v525
  %v577 = vpack.c.b16 %v528, %v527
  %v578 = vpack.c.b16 %v530, %v529
  %v579 = vpack.c.b16 %v532, %v531
  %v580 = vpack.c.b16 %v534, %v533
  %v581 = vpack.c.b16 %v536, %v535
  %v582 = vpack.c.b16 %v538, %v537
  %v583 = vpack.c.b16 %v540, %v539
  %v584 = vpack.c.b16 %v542, %v541
  %v585 = vpack.c.b16 %v544, %v543
  %v586 = vpack.c.b16 %v546, %v545
  %627 = vmatprep.subr.bf16.mxu0 0
  %628 = vmatpush1.bf16.msra.mxu0 %v554
  %629 = vmatprep.subr.bf16.mxu0 0
  %630 = vmatpush1.bf16.msra.mxu0 %v553
  %631 = vmatprep.subr.bf16.mxu0 0
  %632 = vmatpush1.bf16.msra.mxu0 %v552
  %633 = vmatprep.subr.bf16.mxu0 0
  %634 = vmatpush1.bf16.msra.mxu0 %v551
  %635 = vmatprep.subr.bf16.mxu0 0
  %636 = vmatpush1.bf16.msra.mxu0 %v550
  %637 = vmatprep.subr.bf16.mxu0 0
  %638 = vmatpush1.bf16.msra.mxu0 %v549
  %639 = vmatprep.subr.bf16.mxu0 0
  %640 = vmatpush1.bf16.msra.mxu0 %v548
  %641 = vmatprep.subr.bf16.mxu0 0
  %642 = vmatpush1.bf16.msra.mxu0 %v547
  %643 = vmatprep.subr.bf16.mxu0 0
  %644 = vmatpush2.bf16.msra.mxu0 %v562
  %645 = vmatprep.subr.bf16.mxu0 0
  %646 = vmatpush2.bf16.msra.mxu0 %v561
  %647 = vmatprep.subr.bf16.mxu0 0
  %648 = vmatpush2.bf16.msra.mxu0 %v560
  %649 = vmatprep.subr.bf16.mxu0 0
  %650 = vmatpush2.bf16.msra.mxu0 %v559
  %651 = vmatprep.subr.bf16.mxu0 0
  %652 = vmatpush2.bf16.msra.mxu0 %v558
  %653 = vmatprep.subr.bf16.mxu0 0
  %654 = vmatpush2.bf16.msra.mxu0 %v557
  %655 = vmatprep.subr.bf16.mxu0 0
  %656 = vmatpush2.bf16.msra.mxu0 %v556
  %657 = vmatprep.subr.bf16.mxu0 0
  %658 = vmatpush2.bf16.msra.mxu0 %v555
  %659 = vmatprep.mubr.bf16.mxu0 %v308
  %660 = vmatmul.mubr.bf16.gmra.mxu0 %v307
  %v661 = vpop.f32.mrf.mxu0
  %v662 = vadd.f32 0.0, %v661
  %v663 = vpop.f32.mrf.mxu0
  %v664 = vpop.f32.mrf.mxu0
  %v665 = vadd.f32 0.0, %v664
  %v666 = vpop.f32.mrf.mxu0
  %667 = vmatprep.mubr.bf16.mxu0 %v313
  %668 = vmatmul.mubr.bf16.gmra.mxu0 %v312
  %v669 = vpop.f32.mrf.mxu0
  %v670 = vadd.f32 0.0, %v669
  %v671 = vpop.f32.mrf.mxu0
  %v672 = vpop.f32.mrf.mxu0
  %v673 = vadd.f32 0.0, %v672
  %v674 = vpop.f32.mrf.mxu0
  %675 = vmatprep.mubr.bf16.mxu0 %v318
  %676 = vmatmul.mubr.bf16.gmra.mxu0 %v317
  %v677 = vpop.f32.mrf.mxu0
  %v678 = vadd.f32 0.0, %v677
  %v679 = vpop.f32.mrf.mxu0
  %v680 = vpop.f32.mrf.mxu0
  %v681 = vadd.f32 0.0, %v680
  %v682 = vpop.f32.mrf.mxu0
  %683 = vmatprep.mubr.bf16.mxu0 %v323
  %684 = vmatmul.mubr.bf16.gmra.mxu0 %v322
  %v685 = vpop.f32.mrf.mxu0
  %v686 = vadd.f32 0.0, %v685
  %v687 = vpop.f32.mrf.mxu0
  %v688 = vpop.f32.mrf.mxu0
  %v689 = vadd.f32 0.0, %v688
  %v690 = vpop.f32.mrf.mxu0
  %691 = vmatprep.mubr.bf16.mxu0 %v328
  %692 = vmatmul.mubr.bf16.gmra.mxu0 %v327
  %v693 = vpop.f32.mrf.mxu0
  %v694 = vadd.f32 0.0, %v693
  %v695 = vpop.f32.mrf.mxu0
  %v696 = vpop.f32.mrf.mxu0
  %v697 = vadd.f32 0.0, %v696
  %v698 = vpop.f32.mrf.mxu0
  %699 = vmatprep.mubr.bf16.mxu0 %v333
  %700 = vmatmul.mubr.bf16.gmra.mxu0 %v332
  %v701 = vpop.f32.mrf.mxu0
  %v702 = vadd.f32 0.0, %v701
  %v703 = vpop.f32.mrf.mxu0
  %v704 = vpop.f32.mrf.mxu0
  %v705 = vadd.f32 0.0, %v704
  %v706 = vpop.f32.mrf.mxu0
  %707 = vmatprep.mubr.bf16.mxu0 %v338
  %708 = vmatmul.mubr.bf16.gmra.mxu0 %v337
  %v709 = vpop.f32.mrf.mxu0
  %v710 = vadd.f32 0.0, %v709
  %v711 = vpop.f32.mrf.mxu0
  %v712 = vpop.f32.mrf.mxu0
  %v713 = vadd.f32 0.0, %v712
  %v714 = vpop.f32.mrf.mxu0
  %715 = vmatprep.mubr.bf16.mxu0 %v343
  %716 = vmatmul.mubr.bf16.gmra.mxu0 %v342
  %v717 = vpop.f32.mrf.mxu0
  %v718 = vadd.f32 0.0, %v717
  %v719 = vpop.f32.mrf.mxu0
  %v720 = vpop.f32.mrf.mxu0
  %v721 = vadd.f32 0.0, %v720
  %v722 = vpop.f32.mrf.mxu0
  %723 = vdwg.mxu0
  %724 = vmatprep.subr.bf16.mxu0 0
  %725 = vmatpush1.bf16.msra.mxu0 %v570
  %726 = vmatprep.subr.bf16.mxu0 0
  %727 = vmatpush1.bf16.msra.mxu0 %v569
  %728 = vmatprep.subr.bf16.mxu0 0
  %729 = vmatpush1.bf16.msra.mxu0 %v568
  %730 = vmatprep.subr.bf16.mxu0 0
  %731 = vmatpush1.bf16.msra.mxu0 %v567
  %732 = vmatprep.subr.bf16.mxu0 0
  %733 = vmatpush1.bf16.msra.mxu0 %v566
  %734 = vmatprep.subr.bf16.mxu0 0
  %735 = vmatpush1.bf16.msra.mxu0 %v565
  %736 = vmatprep.subr.bf16.mxu0 0
  %737 = vmatpush1.bf16.msra.mxu0 %v564
  %738 = vmatprep.subr.bf16.mxu0 0
  %739 = vmatpush1.bf16.msra.mxu0 %v563
  %740 = vmatprep.subr.bf16.mxu0 0
  %741 = vmatpush2.bf16.msra.mxu0 %v578
  %742 = vmatprep.subr.bf16.mxu0 0
  %743 = vmatpush2.bf16.msra.mxu0 %v577
  %744 = vmatprep.subr.bf16.mxu0 0
  %745 = vmatpush2.bf16.msra.mxu0 %v576
  %746 = vmatprep.subr.bf16.mxu0 0
  %747 = vmatpush2.bf16.msra.mxu0 %v575
  %748 = vmatprep.subr.bf16.mxu0 0
  %749 = vmatpush2.bf16.msra.mxu0 %v574
  %750 = vmatprep.subr.bf16.mxu0 0
  %751 = vmatpush2.bf16.msra.mxu0 %v573
  %752 = vmatprep.subr.bf16.mxu0 0
  %753 = vmatpush2.bf16.msra.mxu0 %v572
  %754 = vmatprep.subr.bf16.mxu0 0
  %755 = vmatpush2.bf16.msra.mxu0 %v571
  %756 = vmatprep.mubr.bf16.mxu0 %v310
  %757 = vmatmul.mubr.bf16.gmra.mxu0 %v309
  %v758 = vpop.f32.mrf.mxu0
  %v759 = vadd.f32 %v662, %v758
  %v760 = vpop.f32.mrf.mxu0
  %v761 = vpop.f32.mrf.mxu0
  %v762 = vadd.f32 %v665, %v761
  %v763 = vpop.f32.mrf.mxu0
  %764 = vmatprep.mubr.bf16.mxu0 %v315
  %765 = vmatmul.mubr.bf16.gmra.mxu0 %v314
  %v766 = vpop.f32.mrf.mxu0
  %v767 = vadd.f32 %v670, %v766
  %v768 = vpop.f32.mrf.mxu0
  %v769 = vpop.f32.mrf.mxu0
  %v770 = vadd.f32 %v673, %v769
  %v771 = vpop.f32.mrf.mxu0
  %772 = vmatprep.mubr.bf16.mxu0 %v320
  %773 = vmatmul.mubr.bf16.gmra.mxu0 %v319
  %v774 = vpop.f32.mrf.mxu0
  %v775 = vadd.f32 %v678, %v774
  %v776 = vpop.f32.mrf.mxu0
  %v777 = vpop.f32.mrf.mxu0
  %v778 = vadd.f32 %v681, %v777
  %v779 = vpop.f32.mrf.mxu0
  %780 = vmatprep.mubr.bf16.mxu0 %v325
  %781 = vmatmul.mubr.bf16.gmra.mxu0 %v324
  %v782 = vpop.f32.mrf.mxu0
  %v783 = vadd.f32 %v686, %v782
  %v784 = vpop.f32.mrf.mxu0
  %v785 = vpop.f32.mrf.mxu0
  %v786 = vadd.f32 %v689, %v785
  %v787 = vpop.f32.mrf.mxu0
  %788 = vmatprep.mubr.bf16.mxu0 %v330
  %789 = vmatmul.mubr.bf16.gmra.mxu0 %v329
  %v790 = vpop.f32.mrf.mxu0
  %v791 = vadd.f32 %v694, %v790
  %v792 = vpop.f32.mrf.mxu0
  %v793 = vpop.f32.mrf.mxu0
  %v794 = vadd.f32 %v697, %v793
  %v795 = vpop.f32.mrf.mxu0
  %796 = vmatprep.mubr.bf16.mxu0 %v335
  %797 = vmatmul.mubr.bf16.gmra.mxu0 %v334
  %v798 = vpop.f32.mrf.mxu0
  %v799 = vadd.f32 %v702, %v798
  %v800 = vpop.f32.mrf.mxu0
  %v801 = vpop.f32.mrf.mxu0
  %v802 = vadd.f32 %v705, %v801
  %v803 = vpop.f32.mrf.mxu0
  %804 = vmatprep.mubr.bf16.mxu0 %v340
  %805 = vmatmul.mubr.bf16.gmra.mxu0 %v339
  %v806 = vpop.f32.mrf.mxu0
  %v807 = vadd.f32 %v710, %v806
  %v808 = vpop.f32.mrf.mxu0
  %v809 = vpop.f32.mrf.mxu0
  %v810 = vadd.f32 %v713, %v809
  %v811 = vpop.f32.mrf.mxu0
  %812 = vmatprep.mubr.bf16.mxu0 %v345
  %813 = vmatmul.mubr.bf16.gmra.mxu0 %v344
  %v814 = vpop.f32.mrf.mxu0
  %v815 = vadd.f32 %v718, %v814
  %v816 = vpop.f32.mrf.mxu0
  %v817 = vpop.f32.mrf.mxu0
  %v818 = vadd.f32 %v721, %v817
  %v819 = vpop.f32.mrf.mxu0
  %820 = vdwg.mxu0
  %821 = vmatprep.subr.bf16.mxu0 0
  %822 = vmatpush1.bf16.msra.mxu0 %v586
  %823 = vmatprep.subr.bf16.mxu0 0
  %824 = vmatpush1.bf16.msra.mxu0 %v585
  %825 = vmatprep.subr.bf16.mxu0 0
  %826 = vmatpush1.bf16.msra.mxu0 %v584
  %827 = vmatprep.subr.bf16.mxu0 0
  %828 = vmatpush1.bf16.msra.mxu0 %v583
  %829 = vmatprep.subr.bf16.mxu0 0
  %830 = vmatpush1.bf16.msra.mxu0 %v582
  %831 = vmatprep.subr.bf16.mxu0 0
  %832 = vmatpush1.bf16.msra.mxu0 %v581
  %833 = vmatprep.subr.bf16.mxu0 0
  %834 = vmatpush1.bf16.msra.mxu0 %v580
  %835 = vmatprep.subr.bf16.mxu0 0
  %836 = vmatpush1.bf16.msra.mxu0 %v579
  %837 = vmatprep.subr.bf16.mxu0 0
  %838 = vmatpush2.bf16.msra.mxu0 0
  %839 = vmatprep.subr.bf16.mxu0 0
  %840 = vmatpush2.bf16.msra.mxu0 0
  %841 = vmatprep.subr.bf16.mxu0 0
  %842 = vmatpush2.bf16.msra.mxu0 0
  %843 = vmatprep.subr.bf16.mxu0 0
  %844 = vmatpush2.bf16.msra.mxu0 0
  %845 = vmatprep.subr.bf16.mxu0 0
  %846 = vmatpush2.bf16.msra.mxu0 0
  %847 = vmatprep.subr.bf16.mxu0 0
  %848 = vmatpush2.bf16.msra.mxu0 0
  %849 = vmatprep.subr.bf16.mxu0 0
  %850 = vmatpush2.bf16.msra.mxu0 0
  %851 = vmatprep.subr.bf16.mxu0 0
  %852 = vmatpush2.bf16.msra.mxu0 0
  %853 = vmatprep.mubr.bf16.mxu0 0
  %854 = vmatmul.mubr.bf16.gmra.mxu0 %v311
  %v855 = vpop.f32.mrf.mxu0
  %v856 = vadd.f32 %v759, %v855
  %v857 = vpop.f32.mrf.mxu0
  %v858 = vpop.f32.mrf.mxu0
  %v859 = vadd.f32 %v762, %v858
  %v860 = vpop.f32.mrf.mxu0
  %861 = vmatprep.mubr.bf16.mxu0 0
  %862 = vmatmul.mubr.bf16.gmra.mxu0 %v316
  %v863 = vpop.f32.mrf.mxu0
  %v864 = vadd.f32 %v767, %v863
  %v865 = vpop.f32.mrf.mxu0
  %v866 = vpop.f32.mrf.mxu0
  %v867 = vadd.f32 %v770, %v866
  %v868 = vpop.f32.mrf.mxu0
  %869 = vmatprep.mubr.bf16.mxu0 0
  %870 = vmatmul.mubr.bf16.gmra.mxu0 %v321
  %v871 = vpop.f32.mrf.mxu0
  %v872 = vadd.f32 %v775, %v871
  %v873 = vpop.f32.mrf.mxu0
  %v874 = vpop.f32.mrf.mxu0
  %v875 = vadd.f32 %v778, %v874
  %v876 = vpop.f32.mrf.mxu0
  %877 = vmatprep.mubr.bf16.mxu0 0
  %878 = vmatmul.mubr.bf16.gmra.mxu0 %v326
  %v879 = vpop.f32.mrf.mxu0
  %v880 = vadd.f32 %v783, %v879
  %v881 = vpop.f32.mrf.mxu0
  %v882 = vpop.f32.mrf.mxu0
  %v883 = vadd.f32 %v786, %v882
  %v884 = vpop.f32.mrf.mxu0
  %885 = vmatprep.mubr.bf16.mxu0 0
  %886 = vmatmul.mubr.bf16.gmra.mxu0 %v331
  %v887 = vpop.f32.mrf.mxu0
  %v888 = vadd.f32 %v791, %v887
  %v889 = vpop.f32.mrf.mxu0
  %v890 = vpop.f32.mrf.mxu0
  %v891 = vadd.f32 %v794, %v890
  %v892 = vpop.f32.mrf.mxu0
  %893 = vmatprep.mubr.bf16.mxu0 0
  %894 = vmatmul.mubr.bf16.gmra.mxu0 %v336
  %v895 = vpop.f32.mrf.mxu0
  %v896 = vadd.f32 %v799, %v895
  %v897 = vpop.f32.mrf.mxu0
  %v898 = vpop.f32.mrf.mxu0
  %v899 = vadd.f32 %v802, %v898
  %v900 = vpop.f32.mrf.mxu0
  %901 = vmatprep.mubr.bf16.mxu0 0
  %902 = vmatmul.mubr.bf16.gmra.mxu0 %v341
  %v903 = vpop.f32.mrf.mxu0
  %v904 = vadd.f32 %v807, %v903
  %v905 = vpop.f32.mrf.mxu0
  %v906 = vpop.f32.mrf.mxu0
  %v907 = vadd.f32 %v810, %v906
  %v908 = vpop.f32.mrf.mxu0
  %909 = vmatprep.mubr.bf16.mxu0 0
  %910 = vmatmul.mubr.bf16.gmra.mxu0 %v346
  %v911 = vpop.f32.mrf.mxu0
  %v912 = vadd.f32 %v815, %v911
  %v913 = vpop.f32.mrf.mxu0
  %v914 = vpop.f32.mrf.mxu0
  %v915 = vadd.f32 %v818, %v914
  %v916 = vpop.f32.mrf.mxu0
  %917 = vdwg.mxu0
  %v918 = vadd.f32 %v35, %v856
  %v919 = vadd.f32 %v36, %v859
  %v920 = vadd.f32 %v37, %v864
  %v921 = vadd.f32 %v38, %v867
  %v922 = vadd.f32 %v39, %v872
  %v923 = vadd.f32 %v40, %v875
  %v924 = vadd.f32 %v41, %v880
  %v925 = vadd.f32 %v42, %v883
  %v926 = vadd.f32 %v43, %v888
  %v927 = vadd.f32 %v44, %v891
  %v928 = vadd.f32 %v45, %v896
  %v929 = vadd.f32 %v46, %v899
  %v930 = vadd.f32 %v47, %v904
  %v931 = vadd.f32 %v48, %v907
  %v932 = vadd.f32 %v49, %v912
  %v933 = vadd.f32 %v50, %v915
  %934 = vst [vmem:[#allocation2] sm:$0xff] %v918
  %935 = vst [vmem:[#allocation2 + $0x8] sm:$0xff] %v919
  %936 = vst [vmem:[#allocation2 + $0x10] sm:$0xff] %v920
  %937 = vst [vmem:[#allocation2 + $0x18] sm:$0xff] %v921
  %938 = vst [vmem:[#allocation2 + $0x20] sm:$0xff] %v922
  %939 = vst [vmem:[#allocation2 + $0x28] sm:$0xff] %v923
  %940 = vst [vmem:[#allocation2 + $0x30] sm:$0xff] %v924
  %941 = vst [vmem:[#allocation2 + $0x38] sm:$0xff] %v925
  %942 = vst [vmem:[#allocation2 + $0x40] sm:$0xff] %v926
  %943 = vst [vmem:[#allocation2 + $0x48] sm:$0xff] %v927
  %944 = vst [vmem:[#allocation2 + $0x50] sm:$0xff] %v928
  %945 = vst [vmem:[#allocation2 + $0x58] sm:$0xff] %v929
  %946 = vst [vmem:[#allocation2 + $0x60] sm:$0xff] %v930
  %947 = vst [vmem:[#allocation2 + $0x68] sm:$0xff] %v931
  %948 = vst [vmem:[#allocation2 + $0x70] sm:$0xff] %v932
  %949 = vst [vmem:[#allocation2 + $0x78] sm:$0xff] %v933
  // Predicated region
  $region18: #{a_call__.27} parent=0 // pred_check
    %p950 = pneg %p15
  $region19: #{a_call__.27} parent=0 // pred_check_branch
    %952 = sbr.rel (%p950) target = $region21
  $region20: #{a_call__.27} parent=0 // pred_region
    %v953 = vld [vmem:[#allocation2] sm:$0xff]
    %v954 = vld [vmem:[#allocation2 + $0x8] sm:$0xff]
    %v955 = vld [vmem:[#allocation2 + $0x10] sm:$0xff]
    %v956 = vld [vmem:[#allocation2 + $0x18] sm:$0xff]
    %v957 = vld [vmem:[#allocation2 + $0x20] sm:$0xff]
    %v958 = vld [vmem:[#allocation2 + $0x28] sm:$0xff]
    %v959 = vld [vmem:[#allocation2 + $0x30] sm:$0xff]
    %v960 = vld [vmem:[#allocation2 + $0x38] sm:$0xff]
    %v961 = vld [vmem:[#allocation2 + $0x40] sm:$0xff]
    %v962 = vld [vmem:[#allocation2 + $0x48] sm:$0xff]
    %v963 = vld [vmem:[#allocation2 + $0x50] sm:$0xff]
    %v964 = vld [vmem:[#allocation2 + $0x58] sm:$0xff]
    %v965 = vld [vmem:[#allocation2 + $0x60] sm:$0xff]
    %v966 = vld [vmem:[#allocation2 + $0x68] sm:$0xff]
    %v967 = vld [vmem:[#allocation2 + $0x70] sm:$0xff]
    %v968 = vld [vmem:[#allocation2 + $0x78] sm:$0xff]
    %v969 = vld [vmem:[%s2] sm:$0x1]
    %v971 = vlaneseq
    %v972 = vshrl.u32 %v971, 7
    %v973 = vsub.s32 0, %v972
    %v974 = vrot.slane %v969, %v973
    %v976 = vadd.f32 %v953, %v974
    %v977 = vadd.f32 %v954, %v974
    %v978 = vadd.f32 %v955, %v974
    %v979 = vadd.f32 %v956, %v974
    %v980 = vadd.f32 %v957, %v974
    %v981 = vadd.f32 %v958, %v974
    %v982 = vadd.f32 %v959, %v974
    %v983 = vadd.f32 %v960, %v974
    %v984 = vadd.f32 %v961, %v974
    %v985 = vadd.f32 %v962, %v974
    %v986 = vadd.f32 %v963, %v974
    %v987 = vadd.f32 %v964, %v974
    %v988 = vadd.f32 %v965, %v974
    %v989 = vadd.f32 %v966, %v974
    %v990 = vadd.f32 %v967, %v974
    %v991 = vadd.f32 %v968, %v974
    %v992 = vmax.f32 %v976, 0.0
    %v993 = vmax.f32 %v977, 0.0
    %v994 = vmax.f32 %v978, 0.0
    %v995 = vmax.f32 %v979, 0.0
    %v996 = vmax.f32 %v980, 0.0
    %v997 = vmax.f32 %v981, 0.0
    %v998 = vmax.f32 %v982, 0.0
    %v999 = vmax.f32 %v983, 0.0
    %v1000 = vmax.f32 %v984, 0.0
    %v1001 = vmax.f32 %v985, 0.0
    %v1002 = vmax.f32 %v986, 0.0
    %v1003 = vmax.f32 %v987, 0.0
    %v1004 = vmax.f32 %v988, 0.0
    %v1005 = vmax.f32 %v989, 0.0
    %v1006 = vmax.f32 %v990, 0.0
    %v1007 = vmax.f32 %v991, 0.0
    %v1008 = vpack.c.bf16 %v993, %v992
    %v1009 = vpack.c.bf16 %v995, %v994
    %v1010 = vpack.c.bf16 %v997, %v996
    %v1011 = vpack.c.bf16 %v999, %v998
    %v1012 = vpack.c.bf16 %v1001, %v1000
    %v1013 = vpack.c.bf16 %v1003, %v1002
    %v1014 = vpack.c.bf16 %v1005, %v1004
    %v1015 = vpack.c.bf16 %v1007, %v1006
    %v1024 = vunpack.c.l.b16 %v1008
    %v1025 = vunpack.c.h.b16 %v1008
    %v1026 = vunpack.c.l.b16 %v1009
    %v1027 = vunpack.c.h.b16 %v1009
    %v1028 = vunpack.c.l.b16 %v1010
    %v1029 = vunpack.c.h.b16 %v1010
    %v1030 = vunpack.c.l.b16 %v1011
    %v1031 = vunpack.c.h.b16 %v1011
    %v1032 = vunpack.c.l.b16 %v1012
    %v1033 = vunpack.c.h.b16 %v1012
    %v1034 = vunpack.c.l.b16 %v1013
    %v1035 = vunpack.c.h.b16 %v1013
    %v1036 = vunpack.c.l.b16 %v1014
    %v1037 = vunpack.c.h.b16 %v1014
    %v1038 = vunpack.c.l.b16 %v1015
    %v1039 = vunpack.c.h.b16 %v1015
    %v1040 = vpack.c.b16 %v1024, %v1024
    %v1041 = vpack.c.b16 %v1025, %v1025
    %v1042 = vpack.c.b16 %v1026, %v1026
    %v1043 = vpack.c.b16 %v1027, %v1027
    %v1044 = vpack.c.b16 %v1028, %v1028
    %v1045 = vpack.c.b16 %v1029, %v1029
    %v1046 = vpack.c.b16 %v1030, %v1030
    %v1047 = vpack.c.b16 %v1031, %v1031
    %v1048 = vpack.c.b16 %v1032, %v1032
    %v1049 = vpack.c.b16 %v1033, %v1033
    %v1050 = vpack.c.b16 %v1034, %v1034
    %v1051 = vpack.c.b16 %v1035, %v1035
    %v1052 = vpack.c.b16 %v1036, %v1036
    %v1053 = vpack.c.b16 %v1037, %v1037
    %v1054 = vpack.c.b16 %v1038, %v1038
    %v1055 = vpack.c.b16 %v1039, %v1039
    %1072 = vst [vmem:[%s3] sm:$0xf] %v1040
    %1073 = vst [vmem:[%s3 + $0x4] sm:$0xf] %v1041
    %1074 = vst [vmem:[%s3 + $0x8] sm:$0xf] %v1042
    %1075 = vst [vmem:[%s3 + $0xc] sm:$0xf] %v1043
    %1076 = vst [vmem:[%s3 + $0x10] sm:$0xf] %v1044
    %1077 = vst [vmem:[%s3 + $0x14] sm:$0xf] %v1045
    %1078 = vst [vmem:[%s3 + $0x18] sm:$0xf] %v1046
    %1079 = vst [vmem:[%s3 + $0x1c] sm:$0xf] %v1047
    %1080 = vst [vmem:[%s3 + $0x20] sm:$0xf] %v1048
    %1081 = vst [vmem:[%s3 + $0x24] sm:$0xf] %v1049
    %1082 = vst [vmem:[%s3 + $0x28] sm:$0xf] %v1050
    %1083 = vst [vmem:[%s3 + $0x2c] sm:$0xf] %v1051
    %1084 = vst [vmem:[%s3 + $0x30] sm:$0xf] %v1052
    %1085 = vst [vmem:[%s3 + $0x34] sm:$0xf] %v1053
    %1086 = vst [vmem:[%s3 + $0x38] sm:$0xf] %v1054
    %1087 = vst [vmem:[%s3 + $0x3c] sm:$0xf] %v1055
  $region21: #{a_call__.27} parent=0 // pred_fallthru
    _
  // Predicated region
  $region22: #{a_call__.27} parent=0 // pred_check
    _
  $region23: #{a_call__.27} parent=0 // pred_check_branch
    %1089 = sbr.rel (0) target = $region25
  $region24: #{a_call__.27} parent=0 // pred_region
    _
  $region25: #{a_call__.27} parent=0 // pred_fallthru
    _
  // Predicated region
  $region26: #{a_call__.27} parent=0 // pred_check
    _
  $region27: #{a_call__.27} parent=0 // pred_check_branch
    %1091 = sbr.rel (0) target = $region29
  $region28: #{a_call__.27} parent=0 // pred_region
    _
  $region29: #{a_call__.27} parent=0 // pred_fallthru
    _

// kernel: a_call__.38
$region0: #{a_call__.38}
  #allocation0 [shape = 'u32[]', space=smem, size = 0x4, offset = 0x4, fixed_abs, tag = 'smem constant byte address 0x4 - core index']
  #allocation1 [shape = 'u32[144,128]{1,0:T(1,128)}', space=vmem, size = 0x12000, scoped, tag = 'internal scratch']
  #allocation2 [shape = 'f32[32,256]{1,0:T(8,128)}', space=vmem, size = 0x8000, scoped, tag = 'scratch operand']
  %s0 = inlined_call_operand.vmem [shape: bf16[32,256], index: 0, kind: input, shape index: {}]
  %s1 = inlined_call_operand.vmem [shape: bf16[256,512], index: 1, kind: input, shape index: {}]
  %s2 = inlined_call_operand.vmem [shape: f32[1,512], index: 2, kind: input, shape index: {}]
  %s3 = inlined_call_operand.vmem [shape: bf16[32,512], index: 3, kind: output, shape index: {}]
  %s4 = sld [smem:[#allocation0]]
  $region125: #{a_call__.38} parent=0
    _
  %s6 = ssub.s32 1, %s4
  %s7 = scalar_select 0, %s6, %s4
  $region1: #{a_call__.38} parent=0
    #allocation3 [shape = 'u8[262144]{0}', space=vmem, size = 0x40000, scoped, tag = 'input window, operand 1']
    #allocation4 [shape = 'u8[32768]{0}', space=vmem, size = 0x8000, scoped, tag = 'output window, operand 0']
    loop: start=0, step=1, limit=4
    $region2: #{a_call__.38} parent=1 // loop_pre_header
      _
    $region3: #{a_call__.38} parent=1 // loop_header
      %s9 = sphi 0, %s13
      %p10 = scmp.ge.s32.totalorder %s9, 4
      %s16 = sphi 0, %s35
      %s17 = sphi 0, %s31
      %s18 = sphi 0, %s27
      %s19 = sphi 0, %s16
      %s20 = sphi 0, %s17
      %s21 = sphi 0, %s18
      %s22 = sphi 0, %s19
      %s23 = sphi 0, %s20
      %s24 = sphi 0, %s21
      %s40 = sphi 0, %s42
      %s43 = sphi 0, %s40
      %s44 = sphi 0, %s43
      %s60 = sphi 0, %s44
      %s68 = sphi 0, %s70
      %s71 = sphi 0, %s68
      %s72 = sphi 0, %s71
      %s88 = sphi 0, %s72
      %s94 = sphi 0, %s96
      %s97 = sphi 0, %s94
      %s98 = sphi 0, %s97
      %s114 = sphi 0, %s98
      %s122 = sphi 0, %s124
      %s125 = sphi 0, %s122
      %s126 = sphi 0, %s125
      %s142 = sphi 0, %s126
    $region4: #{a_call__.38} parent=1 // loop_header_branch
      %12 = sbr.rel (%p10) target = $region8
    $region5: #{a_call__.38} parent=1 // loop_body
      %s14 = ssub.s32 %s9, 1
      %s15 = ssub.s32 %s9, 2
      %s25 = sadd.s32 1, %s18
      %p26 = scmp.ge.s32.totalorder %s25, 1
      %s27 = scalar_select %p26, 0, %s25
      %s28 = sadd.s32 1, %s17
      %s29 = scalar_select %p26, %s28, %s17
      %p30 = scmp.ge.s32.totalorder %s29, 2
      %s31 = scalar_select %p30, 0, %s29
      %s32 = sadd.s32 1, %s16
      %s33 = scalar_select %p30, %s32, %s16
      %p34 = scmp.ge.s32.totalorder %s33, 1
      %s35 = scalar_select %p34, 0, %s33
      %s36 = ssub.s32 %s16, %s35
      %s37 = ssub.s32 %s18, %s27
      %s38 = sor.u32 %s36, %s37
      %p39 = scmp.eq.s32.totalorder %s38, 0
      %s41 = sadd.s32 %s40, 1
      %s42 = scalar_select %p39, %s40, %s41
      %p45 = pneg %p39
      %p46 = scmp.eq.s32.totalorder %s9, 1
      %p47 = por %p45, %p46
      %p48 = scmp.ne.s32.totalorder %s40, %s43
      %p49 = scmp.eq.s32.totalorder %s9, 0
      %p50 = por %p48, %p49
      %p51 = scmp.ne.s32.totalorder %s40, %s43
      %p52 = scmp.eq.s32.totalorder %s14, 1
      %p53 = por %p51, %p52
      %p54 = scmp.ne.s32.totalorder %s43, %s44
      %p55 = scmp.eq.s32.totalorder %s14, 0
      %p56 = por %p54, %p55
      %p57 = scmp.ne.s32.totalorder %s43, %s44
      %p58 = scmp.eq.s32.totalorder %s15, 1
      %p59 = por %p57, %p58
      %p61 = scmp.ne.s32.totalorder %s44, %s60
      %p62 = scmp.eq.s32.totalorder %s15, 0
      %p63 = por %p61, %p62
      %s64 = ssub.s32 %s18, %s27
      %s65 = ssub.s32 %s17, %s31
      %s66 = sor.u32 %s64, %s65
      %p67 = scmp.eq.s32.totalorder %s66, 0
      %s69 = sadd.s32 %s68, 1
      %s70 = scalar_select %p67, %s68, %s69
      %p73 = pneg %p67
      %p74 = scmp.eq.s32.totalorder %s9, 1
      %p75 = por %p73, %p74
      %p76 = scmp.ne.s32.totalorder %s68, %s71
      %p77 = scmp.eq.s32.totalorder %s9, 0
      %p78 = por %p76, %p77
      %p79 = scmp.ne.s32.totalorder %s68, %s71
      %p80 = scmp.eq.s32.totalorder %s14, 1
      %p81 = por %p79, %p80
      %p82 = scmp.ne.s32.totalorder %s71, %s72
      %p83 = scmp.eq.s32.totalorder %s14, 0
      %p84 = por %p82, %p83
      %p85 = scmp.ne.s32.totalorder %s71, %s72
      %p86 = scmp.eq.s32.totalorder %s15, 1
      %p87 = por %p85, %p86
      %p89 = scmp.ne.s32.totalorder %s72, %s88
      %p90 = scmp.eq.s32.totalorder %s15, 0
      %p91 = por %p89, %p90
      %s92 = ssub.s32 %s17, %s31
      %p93 = scmp.eq.s32.totalorder %s92, 0
      %s95 = sadd.s32 %s94, 1
      %s96 = scalar_select %p93, %s94, %s95
      %p99 = pneg %p93
      %p100 = scmp.eq.s32.totalorder %s9, 1
      %p101 = por %p99, %p100
      %p102 = scmp.ne.s32.totalorder %s94, %s97
      %p103 = scmp.eq.s32.totalorder %s9, 0
      %p104 = por %p102, %p103
      %p105 = scmp.ne.s32.totalorder %s94, %s97
      %p106 = scmp.eq.s32.totalorder %s14, 1
      %p107 = por %p105, %p106
      %p108 = scmp.ne.s32.totalorder %s97, %s98
      %p109 = scmp.eq.s32.totalorder %s14, 0
      %p110 = por %p108, %p109
      %p111 = scmp.ne.s32.totalorder %s97, %s98
      %p112 = scmp.eq.s32.totalorder %s15, 1
      %p113 = por %p111, %p112
      %p115 = scmp.ne.s32.totalorder %s98, %s114
      %p116 = scmp.eq.s32.totalorder %s15, 0
      %p117 = por %p115, %p116
      %s118 = ssub.s32 %s16, %s35
      %s119 = ssub.s32 %s17, %s31
      %s120 = sor.u32 %s118, %s119
      %p121 = scmp.eq.s32.totalorder %s120, 0
      %s123 = sadd.s32 %s122, 1
      %s124 = scalar_select %p121, %s122, %s123
      %p127 = pneg %p121
      %p128 = scmp.eq.s32.totalorder %s9, 1
      %p129 = por %p127, %p128
      %p130 = scmp.ne.s32.totalorder %s122, %s125
      %p131 = scmp.eq.s32.totalorder %s9, 0
      %p132 = por %p130, %p131
      %p133 = scmp.ne.s32.totalorder %s122, %s125
      %p134 = scmp.eq.s32.totalorder %s14, 1
      %p135 = por %p133, %p134
      %p136 = scmp.ne.s32.totalorder %s125, %s126
      %p137 = scmp.eq.s32.totalorder %s14, 0
      %p138 = por %p136, %p137
      %p139 = scmp.ne.s32.totalorder %s125, %s126
      %p140 = scmp.eq.s32.totalorder %s15, 1
      %p141 = por %p139, %p140
      %p143 = scmp.ne.s32.totalorder %s126, %s142
      %p144 = scmp.eq.s32.totalorder %s15, 0
      %p145 = por %p143, %p144
      %p146 = scmp.le.s32.totalorder 1, %s9
      %p147 = scmp.lt.s32.totalorder %s9, 3
      %p148 = pnand %p146, %p147
      %p149 = pneg %p148
      // Predicated region
      $region9: #{a_call__.38} parent=5 // pred_check
        _
      $region10: #{a_call__.38} parent=5 // pred_check_branch
        %151 = sbr.rel (%p148) target = $region12
      $region11: #{a_call__.38} parent=5 // pred_region
        %s152 = ssub.s32 %s9, 1
        // Predicated region
        $region13: #{a_call__.38} parent=11 // pred_check
          %p153 = pneg %p56
        $region14: #{a_call__.38} parent=11 // pred_check_branch
          %155 = sbr.rel (%p153) target = $region16
        $region15: #{a_call__.38} parent=11 // pred_region
          %s156 = smul.u32 4, %s19
          %s157 = smul.u32 2, %s21
          %p158 = scmp.lt.s32.totalorder %s156, 3
          %s159 = scalar_select %p158, %s156, 3
          %p160 = scmp.lt.s32.totalorder %s157, 1
          %s161 = scalar_select %p160, %s157, 1
          %s162 = smul.addr %s159, 2
          %s163 = sadd.s32 %s161, %s162
          %s164 = smul.addr %s163, 4
          %s165 = scalar_lea.vmem %s0, %s164
          %s166 = smul.u32 4, %s19
          %s167 = smul.u32 2, %s21
        $region16: #{a_call__.38} parent=11 // pred_fallthru
          _
      $region12: #{a_call__.38} parent=5 // pred_fallthru
        _
      %p168 = scmp.lt.s32.totalorder %s9, 2
      // Predicated region
      $region17: #{a_call__.38} parent=5 // pred_check
        %p169 = pneg %p168
      $region18: #{a_call__.38} parent=5 // pred_check_branch
        %171 = sbr.rel (%p169) target = $region20
      $region19: #{a_call__.38} parent=5 // pred_region
        // Predicated region
        $region21: #{a_call__.38} parent=19 // pred_check
          %p172 = pneg %p78
        $region22: #{a_call__.38} parent=19 // pred_check_branch
          %174 = sbr.rel (%p172) target = $region24
        $region23: #{a_call__.38} parent=19 // pred_region
          %s175 = sand.u32 %s68, 1
          %s176 = sand.u32 %s68, 1
          %s177 = smul.addr %s176, 256
          %s178 = scalar_lea.vmem [#allocation3], %s177
          %s179 = smul.u32 32, %s18
          %s180 = smul.u32 2, %s17
          %s181 = smul.addr %s179, 4
          %s182 = sadd.s32 %s180, %s181
          %s183 = smul.addr %s182, 4
          %s184 = scalar_lea.vmem %s1, %s183
          // Predicated region
          $region25: #{a_call__.38} parent=23 // pred_check
            _
          $region26: #{a_call__.38} parent=23 // pred_check_branch
            %186 = sbr.rel (0) target = $region28
          $region27: #{a_call__.38} parent=23 // pred_region
            // Predicated region
            $region29: #{a_call__.38} parent=27 // pred_check
              _
            $region30: #{a_call__.38} parent=27 // pred_check_branch
              %188 = sbr.rel (0) target = $region32
            $region31: #{a_call__.38} parent=27 // pred_region
              // Predicated region
              $region44: #{a_call__.38} parent=31 // pred_check
                _
              $region45: #{a_call__.38} parent=31 // pred_check_branch
                %266 = sbr.rel (0) target = $region47
              $region46: #{a_call__.38} parent=31 // pred_region
                loop: start=0, step=1, limit=1
                $region48: #{a_call__.38} parent=46 // loop_pre_header
                  _
                $region49: #{a_call__.38} parent=46 // loop_header
                  %s268 = sphi 0, %s272
                  %p269 = scmp.ge.s32.totalorder %s268, 1
                  %s273 = sphi %s184, %s184
                  %s274 = sphi %s178, %s178
                $region50: #{a_call__.38} parent=46 // loop_header_branch
                  %271 = sbr.rel (%p269) target = $region54
                $region51: #{a_call__.38} parent=46 // loop_body
                  %v275 = vld [vmem:[%s273] sm:$0xff]
                  %276 = vst [vmem:[%s274] sm:$0xff] %v275
                  %v277 = vld [vmem:[%s273 + $0x10] sm:$0xff]
                  %278 = vst [vmem:[%s274 + $0x8] sm:$0xff] %v277
                  %v279 = vld [vmem:[%s273 + $0x20] sm:$0xff]
                  %280 = vst [vmem:[%s274 + $0x10] sm:$0xff] %v279
                  %v281 = vld [vmem:[%s273 + $0x30] sm:$0xff]
                  %282 = vst [vmem:[%s274 + $0x18] sm:$0xff] %v281
                  %v283 = vld [vmem:[%s273 + $0x40] sm:$0xff]
                  %284 = vst [vmem:[%s274 + $0x20] sm:$0xff] %v283
                  %v285 = vld [vmem:[%s273 + $0x50] sm:$0xff]
                  %286 = vst [vmem:[%s274 + $0x28] sm:$0xff] %v285
                  %v287 = vld [vmem:[%s273 + $0x60] sm:$0xff]
                  %288 = vst [vmem:[%s274 + $0x30] sm:$0xff] %v287
                  %v289 = vld [vmem:[%s273 + $0x70] sm:$0xff]
                  %290 = vst [vmem:[%s274 + $0x38] sm:$0xff] %v289
                  %v291 = vld [vmem:[%s273 + $0x80] sm:$0xff]
                  %292 = vst [vmem:[%s274 + $0x40] sm:$0xff] %v291
                  %v293 = vld [vmem:[%s273 + $0x90] sm:$0xff]
                  %294 = vst [vmem:[%s274 + $0x48] sm:$0xff] %v293
                  %v295 = vld [vmem:[%s273 + $0xa0] sm:$0xff]
                  %296 = vst [vmem:[%s274 + $0x50] sm:$0xff] %v295
                  %v297 = vld [vmem:[%s273 + $0xb0] sm:$0xff]
                  %298 = vst [vmem:[%s274 + $0x58] sm:$0xff] %v297
                  %v299 = vld [vmem:[%s273 + $0xc0] sm:$0xff]
                  %300 = vst [vmem:[%s274 + $0x60] sm:$0xff] %v299
                  %v301 = vld [vmem:[%s273 + $0xd0] sm:$0xff]
                  %302 = vst [vmem:[%s274 + $0x68] sm:$0xff] %v301
                  %v303 = vld [vmem:[%s273 + $0xe0] sm:$0xff]
                  %304 = vst [vmem:[%s274 + $0x70] sm:$0xff] %v303
                  %v305 = vld [vmem:[%s273 + $0xf0] sm:$0xff]
                  %306 = vst [vmem:[%s274 + $0x78] sm:$0xff] %v305
                  %v307 = vld [vmem:[%s273 + $0x100] sm:$0xff]
                  %308 = vst [vmem:[%s274 + $0x80] sm:$0xff] %v307
                  %v309 = vld [vmem:[%s273 + $0x110] sm:$0xff]
                  %310 = vst [vmem:[%s274 + $0x88] sm:$0xff] %v309
                  %v311 = vld [vmem:[%s273 + $0x120] sm:$0xff]
                  %312 = vst [vmem:[%s274 + $0x90] sm:$0xff] %v311
                  %v313 = vld [vmem:[%s273 + $0x130] sm:$0xff]
                  %314 = vst [vmem:[%s274 + $0x98] sm:$0xff] %v313
                  %v315 = vld [vmem:[%s273 + $0x140] sm:$0xff]
                  %316 = vst [vmem:[%s274 + $0xa0] sm:$0xff] %v315
                  %v317 = vld [vmem:[%s273 + $0x150] sm:$0xff]
                  %318 = vst [vmem:[%s274 + $0xa8] sm:$0xff] %v317
                  %v319 = vld [vmem:[%s273 + $0x160] sm:$0xff]
                  %320 = vst [vmem:[%s274 + $0xb0] sm:$0xff] %v319
                  %v321 = vld [vmem:[%s273 + $0x170] sm:$0xff]
                  %322 = vst [vmem:[%s274 + $0xb8] sm:$0xff] %v321
                  %v323 = vld [vmem:[%s273 + $0x180] sm:$0xff]
                  %324 = vst [vmem:[%s274 + $0xc0] sm:$0xff] %v323
                  %v325 = vld [vmem:[%s273 + $0x190] sm:$0xff]
                  %326 = vst [vmem:[%s274 + $0xc8] sm:$0xff] %v325
                  %v327 = vld [vmem:[%s273 + $0x1a0] sm:$0xff]
                  %328 = vst [vmem:[%s274 + $0xd0] sm:$0xff] %v327
                  %v329 = vld [vmem:[%s273 + $0x1b0] sm:$0xff]
                  %330 = vst [vmem:[%s274 + $0xd8] sm:$0xff] %v329
                  %v331 = vld [vmem:[%s273 + $0x1c0] sm:$0xff]
                  %332 = vst [vmem:[%s274 + $0xe0] sm:$0xff] %v331
                  %v333 = vld [vmem:[%s273 + $0x1d0] sm:$0xff]
                  %334 = vst [vmem:[%s274 + $0xe8] sm:$0xff] %v333
                  %v335 = vld [vmem:[%s273 + $0x1e0] sm:$0xff]
                  %336 = vst [vmem:[%s274 + $0xf0] sm:$0xff] %v335
                  %v337 = vld [vmem:[%s273 + $0x1f0] sm:$0xff]
                  %338 = vst [vmem:[%s274 + $0xf8] sm:$0xff] %v337
                $region52: #{a_call__.38} parent=46 // loop_footer
                  %s272 = sadd.s32 1, %s268
                $region53: #{a_call__.38} parent=46 // loop_footer_branch
                  %267 = sbr.rel target = $region49
                $region54: #{a_call__.38} parent=46 // loop_exit
                  _
              $region47: #{a_call__.38} parent=31 // pred_fallthru
                _
              // Predicated region
              $region55: #{a_call__.38} parent=31 // pred_check
                _
              $region56: #{a_call__.38} parent=31 // pred_check_branch
                %340 = sbr.rel target = $region58
              $region57: #{a_call__.38} parent=31 // pred_region
                _
              $region58: #{a_call__.38} parent=31 // pred_fallthru
                _
            $region32: #{a_call__.38} parent=27 // pred_fallthru
              _
            // Predicated region
            $region33: #{a_call__.38} parent=27 // pred_check
              _
            $region34: #{a_call__.38} parent=27 // pred_check_branch
              %190 = sbr.rel target = $region36
            $region35: #{a_call__.38} parent=27 // pred_region
              %s192 = ssub.s32 256, 1
              loop: start=0, step=1, limit=1
              $region37: #{a_call__.38} parent=35 // loop_pre_header
                _
              $region38: #{a_call__.38} parent=35 // loop_header
                %s194 = sphi 0, %s198
                %p195 = scmp.ge.s32.totalorder %s194, 1
                %s199 = sphi %s184, %s184
                %s200 = sphi %s178, %s178
              $region39: #{a_call__.38} parent=35 // loop_header_branch
                %197 = sbr.rel (%p195) target = $region43
              $region40: #{a_call__.38} parent=35 // loop_body
                %v201 = vld [vmem:[%s199] sm:%s192]
                %202 = vst [vmem:[%s200] sm:%s192] %v201
                %v203 = vld [vmem:[%s199 + $0x10] sm:%s192]
                %204 = vst [vmem:[%s200 + $0x8] sm:%s192] %v203
                %v205 = vld [vmem:[%s199 + $0x20] sm:%s192]
                %206 = vst [vmem:[%s200 + $0x10] sm:%s192] %v205
                %v207 = vld [vmem:[%s199 + $0x30] sm:%s192]
                %208 = vst [vmem:[%s200 + $0x18] sm:%s192] %v207
                %v209 = vld [vmem:[%s199 + $0x40] sm:%s192]
                %210 = vst [vmem:[%s200 + $0x20] sm:%s192] %v209
                %v211 = vld [vmem:[%s199 + $0x50] sm:%s192]
                %212 = vst [vmem:[%s200 + $0x28] sm:%s192] %v211
                %v213 = vld [vmem:[%s199 + $0x60] sm:%s192]
                %214 = vst [vmem:[%s200 + $0x30] sm:%s192] %v213
                %v215 = vld [vmem:[%s199 + $0x70] sm:%s192]
                %216 = vst [vmem:[%s200 + $0x38] sm:%s192] %v215
                %v217 = vld [vmem:[%s199 + $0x80] sm:%s192]
                %218 = vst [vmem:[%s200 + $0x40] sm:%s192] %v217
                %v219 = vld [vmem:[%s199 + $0x90] sm:%s192]
                %220 = vst [vmem:[%s200 + $0x48] sm:%s192] %v219
                %v221 = vld [vmem:[%s199 + $0xa0] sm:%s192]
                %222 = vst [vmem:[%s200 + $0x50] sm:%s192] %v221
                %v223 = vld [vmem:[%s199 + $0xb0] sm:%s192]
                %224 = vst [vmem:[%s200 + $0x58] sm:%s192] %v223
                %v225 = vld [vmem:[%s199 + $0xc0] sm:%s192]
                %226 = vst [vmem:[%s200 + $0x60] sm:%s192] %v225
                %v227 = vld [vmem:[%s199 + $0xd0] sm:%s192]
                %228 = vst [vmem:[%s200 + $0x68] sm:%s192] %v227
                %v229 = vld [vmem:[%s199 + $0xe0] sm:%s192]
                %230 = vst [vmem:[%s200 + $0x70] sm:%s192] %v229
                %v231 = vld [vmem:[%s199 + $0xf0] sm:%s192]
                %232 = vst [vmem:[%s200 + $0x78] sm:%s192] %v231
                %v233 = vld [vmem:[%s199 + $0x100] sm:%s192]
                %234 = vst [vmem:[%s200 + $0x80] sm:%s192] %v233
                %v235 = vld [vmem:[%s199 + $0x110] sm:%s192]
                %236 = vst [vmem:[%s200 + $0x88] sm:%s192] %v235
                %v237 = vld [vmem:[%s199 + $0x120] sm:%s192]
                %238 = vst [vmem:[%s200 + $0x90] sm:%s192] %v237
                %v239 = vld [vmem:[%s199 + $0x130] sm:%s192]
                %240 = vst [vmem:[%s200 + $0x98] sm:%s192] %v239
                %v241 = vld [vmem:[%s199 + $0x140] sm:%s192]
                %242 = vst [vmem:[%s200 + $0xa0] sm:%s192] %v241
                %v243 = vld [vmem:[%s199 + $0x150] sm:%s192]
                %244 = vst [vmem:[%s200 + $0xa8] sm:%s192] %v243
                %v245 = vld [vmem:[%s199 + $0x160] sm:%s192]
                %246 = vst [vmem:[%s200 + $0xb0] sm:%s192] %v245
                %v247 = vld [vmem:[%s199 + $0x170] sm:%s192]
                %248 = vst [vmem:[%s200 + $0xb8] sm:%s192] %v247
                %v249 = vld [vmem:[%s199 + $0x180] sm:%s192]
                %250 = vst [vmem:[%s200 + $0xc0] sm:%s192] %v249
                %v251 = vld [vmem:[%s199 + $0x190] sm:%s192]
                %252 = vst [vmem:[%s200 + $0xc8] sm:%s192] %v251
                %v253 = vld [vmem:[%s199 + $0x1a0] sm:%s192]
                %254 = vst [vmem:[%s200 + $0xd0] sm:%s192] %v253
                %v255 = vld [vmem:[%s199 + $0x1b0] sm:%s192]
                %256 = vst [vmem:[%s200 + $0xd8] sm:%s192] %v255
                %v257 = vld [vmem:[%s199 + $0x1c0] sm:%s192]
                %258 = vst [vmem:[%s200 + $0xe0] sm:%s192] %v257
                %v259 = vld [vmem:[%s199 + $0x1d0] sm:%s192]
                %260 = vst [vmem:[%s200 + $0xe8] sm:%s192] %v259
                %v261 = vld [vmem:[%s199 + $0x1e0] sm:%s192]
                %262 = vst [vmem:[%s200 + $0xf0] sm:%s192] %v261
                %v263 = vld [vmem:[%s199 + $0x1f0] sm:%s192]
                %264 = vst [vmem:[%s200 + $0xf8] sm:%s192] %v263
              $region41: #{a_call__.38} parent=35 // loop_footer
                %s198 = sadd.s32 1, %s194
              $region42: #{a_call__.38} parent=35 // loop_footer_branch
                %193 = sbr.rel target = $region38
              $region43: #{a_call__.38} parent=35 // loop_exit
                _
            $region36: #{a_call__.38} parent=27 // pred_fallthru
              _
          $region28: #{a_call__.38} parent=23 // pred_fallthru
            _
          %341 = vnop
        $region24: #{a_call__.38} parent=19 // pred_fallthru
          _
        // Predicated region
        $region59: #{a_call__.38} parent=19 // pred_check
          %p342 = pneg %p104
        $region60: #{a_call__.38} parent=19 // pred_check_branch
          %344 = sbr.rel (%p342) target = $region62
        $region61: #{a_call__.38} parent=19 // pred_region
          %s345 = smul.u32 2, %s17
          %p346 = scmp.lt.s32.totalorder %s345, 3
          %s347 = scalar_select %p346, %s345, 3
          %s348 = scalar_lea.vmem %s2, %s347
          %s349 = smul.u32 2, %s17
        $region62: #{a_call__.38} parent=19 // pred_fallthru
          _
      $region20: #{a_call__.38} parent=5 // pred_fallthru
        _
      %p350 = scmp.le.s32.totalorder 1, %s9
      %p351 = scmp.lt.s32.totalorder %s9, 3
      %p352 = pnand %p350, %p351
      %p353 = pneg %p352
      // Predicated region
      $region63: #{a_call__.38} parent=5 // pred_check
        _
      $region64: #{a_call__.38} parent=5 // pred_check_branch
        %355 = sbr.rel (%p352) target = $region66
      $region65: #{a_call__.38} parent=5 // pred_region
        %s356 = ssub.s32 %s9, 1
        %s357 = sand.u32 %s71, 1
        %s358 = sand.u32 %s71, 1
        %s359 = smul.addr %s358, 256
        %s360 = scalar_lea.vmem [#allocation3], %s359
        // Predicated region
        $region67: #{a_call__.38} parent=65 // pred_check
          %p361 = pneg %p84
        $region68: #{a_call__.38} parent=65 // pred_check_branch
          %363 = sbr.rel (%p361) target = $region70
        $region69: #{a_call__.38} parent=65 // pred_region
          _
        $region70: #{a_call__.38} parent=65 // pred_fallthru
          _
        %s364 = smul.u32 4, %s19
        %s365 = smul.u32 2, %s21
        %p366 = scmp.lt.s32.totalorder %s364, 3
        %s367 = scalar_select %p366, %s364, 3
        %p368 = scmp.lt.s32.totalorder %s365, 1
        %s369 = scalar_select %p368, %s365, 1
        %s370 = smul.addr %s367, 2
        %s371 = sadd.s32 %s369, %s370
        %s372 = smul.addr %s371, 4
        %s373 = scalar_lea.vmem %s0, %s372
        %p374 = pneg %p56
        %p375 = pneg %p53
        %s376 = sand.u32 %s71, 1
        %s377 = sand.u32 %s71, 1
        %s378 = smul.addr %s377, 256
        %s379 = scalar_lea.vmem [#allocation3], %s378
        %p380 = pneg %p84
        %p381 = pneg %p81
        %s382 = smul.u32 2, %s20
        %p383 = scmp.lt.s32.totalorder %s382, 3
        %s384 = scalar_select %p383, %s382, 3
        %s385 = scalar_lea.vmem %s2, %s384
        %p386 = pneg %p110
        %p387 = pneg %p107
        %p388 = pneg %p138
        %p389 = pneg %p135
        %s390 = sand.u32 %s125, 1
        %s391 = sand.u32 %s125, 1
        %s392 = smul.addr %s391, 32
        %s393 = scalar_lea.vmem [#allocation4], %s392
        %s394 = smul.u32 4, %s19
        %s395 = smul.u32 2, %s21
        %p396 = scmp.lt.s32.totalorder %s394, 3
        %s397 = scalar_select %p396, %s394, 3
        %p398 = scmp.lt.s32.totalorder %s395, 1
        %s399 = scalar_select %p398, %s395, 1
        %s400 = smul.addr %s397, 2
        %s401 = sadd.s32 %s399, %s400
        %s402 = smul.addr %s401, 4
        %s403 = scalar_lea.vmem %s0, %s402
        %s404 = smul.u32 4, %s19
        %s405 = smul.u32 2, %s21
        %s406 = smul.u32 32, %s21
        %s407 = smul.u32 2, %s20
        %s408 = smul.u32 2, %s20
        %p409 = scmp.lt.s32.totalorder %s408, 3
        %s410 = scalar_select %p409, %s408, 3
        %s411 = scalar_lea.vmem %s2, %s410
        %s412 = smul.u32 2, %s20
        %s413 = smul.u32 4, %s19
        %s414 = smul.u32 2, %s20
        %p415 = scmp.eq.s32.totalorder %s21, 0
        // Predicated region
        $region71: #{a_call__.38} parent=65 // pred_check
          %p416 = pneg %p415
        $region72: #{a_call__.38} parent=65 // pred_check_branch
          %418 = sbr.rel (%p416) target = $region74
        $region73: #{a_call__.38} parent=65 // pred_region
          %419 = vst [vmem:[#allocation2] sm:$0xff] 0.0
          %420 = vst [vmem:[#allocation2 + $0x8] sm:$0xff] 0.0
          %421 = vst [vmem:[#allocation2 + $0x10] sm:$0xff] 0.0
          %422 = vst [vmem:[#allocation2 + $0x18] sm:$0xff] 0.0
          %423 = vst [vmem:[#allocation2 + $0x20] sm:$0xff] 0.0
          %424 = vst [vmem:[#allocation2 + $0x28] sm:$0xff] 0.0
          %425 = vst [vmem:[#allocation2 + $0x30] sm:$0xff] 0.0
          %426 = vst [vmem:[#allocation2 + $0x38] sm:$0xff] 0.0
        $region74: #{a_call__.38} parent=65 // pred_fallthru
          _
        %v427 = vld [vmem:[#allocation2] sm:$0xff]
        %v428 = vld [vmem:[#allocation2 + $0x8] sm:$0xff]
        %v429 = vld [vmem:[#allocation2 + $0x10] sm:$0xff]
        %v430 = vld [vmem:[#allocation2 + $0x18] sm:$0xff]
        %v431 = vld [vmem:[#allocation2 + $0x20] sm:$0xff]
        %v432 = vld [vmem:[#allocation2 + $0x28] sm:$0xff]
        %v433 = vld [vmem:[#allocation2 + $0x30] sm:$0xff]
        %v434 = vld [vmem:[#allocation2 + $0x38] sm:$0xff]
        %v435 = vld [vmem:[%s403] sm:$0xff]
        %v436 = vld [vmem:[%s403 + $0x8] sm:$0xff]
        %v437 = vld [vmem:[%s403 + $0x10] sm:$0xff]
        %v438 = vld [vmem:[%s403 + $0x18] sm:$0xff]
        %v439 = vld [vmem:[%s360] sm:$0xff]
        %v440 = vld [vmem:[%s360 + $0x8] sm:$0xff]
        %v441 = vld [vmem:[%s360 + $0x10] sm:$0xff]
        %v442 = vld [vmem:[%s360 + $0x18] sm:$0xff]
        %v443 = vld [vmem:[%s360 + $0x20] sm:$0xff]
        %v444 = vld [vmem:[%s360 + $0x28] sm:$0xff]
        %v445 = vld [vmem:[%s360 + $0x30] sm:$0xff]
        %v446 = vld [vmem:[%s360 + $0x38] sm:$0xff]
        %v447 = vld [vmem:[%s360 + $0x40] sm:$0xff]
        %v448 = vld [vmem:[%s360 + $0x48] sm:$0xff]
        %v449 = vld [vmem:[%s360 + $0x50] sm:$0xff]
        %v450 = vld [vmem:[%s360 + $0x58] sm:$0xff]
        %v451 = vld [vmem:[%s360 + $0x60] sm:$0xff]
        %v452 = vld [vmem:[%s360 + $0x68] sm:$0xff]
        %v453 = vld [vmem:[%s360 + $0x70] sm:$0xff]
        %v454 = vld [vmem:[%s360 + $0x78] sm:$0xff]
        %v455 = vld [vmem:[%s360 + $0x80] sm:$0xff]
        %v456 = vld [vmem:[%s360 + $0x88] sm:$0xff]
        %v457 = vld [vmem:[%s360 + $0x90] sm:$0xff]
        %v458 = vld [vmem:[%s360 + $0x98] sm:$0xff]
        %v459 = vld [vmem:[%s360 + $0xa0] sm:$0xff]
        %v460 = vld [vmem:[%s360 + $0xa8] sm:$0xff]
        %v461 = vld [vmem:[%s360 + $0xb0] sm:$0xff]
        %v462 = vld [vmem:[%s360 + $0xb8] sm:$0xff]
        %v463 = vld [vmem:[%s360 + $0xc0] sm:$0xff]
        %v464 = vld [vmem:[%s360 + $0xc8] sm:$0xff]
        %v465 = vld [vmem:[%s360 + $0xd0] sm:$0xff]
        %v466 = vld [vmem:[%s360 + $0xd8] sm:$0xff]
        %v467 = vld [vmem:[%s360 + $0xe0] sm:$0xff]
        %v468 = vld [vmem:[%s360 + $0xe8] sm:$0xff]
        %v469 = vld [vmem:[%s360 + $0xf0] sm:$0xff]
        %v470 = vld [vmem:[%s360 + $0xf8] sm:$0xff]
        %v475 = vunpack.c.l.b16 %v435
        %v476 = vunpack.c.h.b16 %v435
        %v477 = vunpack.c.l.b16 %v436
        %v478 = vunpack.c.h.b16 %v436
        %v479 = vunpack.c.l.b16 %v437
        %v480 = vunpack.c.h.b16 %v437
        %v481 = vunpack.c.l.b16 %v438
        %v482 = vunpack.c.h.b16 %v438
        %v483 = vpack.c.b16 %v477, %v475
        %v484 = vpack.c.b16 %v478, %v476
        %v485 = vpack.c.b16 %v481, %v479
        %v486 = vpack.c.b16 %v482, %v480
        %v523 = vunpack.c.l.b16 %v439
        %v524 = vunpack.c.h.b16 %v439
        %v525 = vunpack.c.l.b16 %v440
        %v526 = vunpack.c.h.b16 %v440
        %v527 = vunpack.c.l.b16 %v441
        %v528 = vunpack.c.h.b16 %v441
        %v529 = vunpack.c.l.b16 %v442
        %v530 = vunpack.c.h.b16 %v442
        %v531 = vunpack.c.l.b16 %v443
        %v532 = vunpack.c.h.b16 %v443
        %v533 = vunpack.c.l.b16 %v444
        %v534 = vunpack.c.h.b16 %v444
        %v535 = vunpack.c.l.b16 %v445
        %v536 = vunpack.c.h.b16 %v445
        %v537 = vunpack.c.l.b16 %v446
        %v538 = vunpack.c.h.b16 %v446
        %v539 = vunpack.c.l.b16 %v447
        %v540 = vunpack.c.h.b16 %v447
        %v541 = vunpack.c.l.b16 %v448
        %v542 = vunpack.c.h.b16 %v448
        %v543 = vunpack.c.l.b16 %v449
        %v544 = vunpack.c.h.b16 %v449
        %v545 = vunpack.c.l.b16 %v450
        %v546 = vunpack.c.h.b16 %v450
        %v547 = vunpack.c.l.b16 %v451
        %v548 = vunpack.c.h.b16 %v451
        %v549 = vunpack.c.l.b16 %v452
        %v550 = vunpack.c.h.b16 %v452
        %v551 = vunpack.c.l.b16 %v453
        %v552 = vunpack.c.h.b16 %v453
        %v553 = vunpack.c.l.b16 %v454
        %v554 = vunpack.c.h.b16 %v454
        %v555 = vunpack.c.l.b16 %v455
        %v556 = vunpack.c.h.b16 %v455
        %v557 = vunpack.c.l.b16 %v456
        %v558 = vunpack.c.h.b16 %v456
        %v559 = vunpack.c.l.b16 %v457
        %v560 = vunpack.c.h.b16 %v457
        %v561 = vunpack.c.l.b16 %v458
        %v562 = vunpack.c.h.b16 %v458
        %v563 = vunpack.c.l.b16 %v459
        %v564 = vunpack.c.h.b16 %v459
        %v565 = vunpack.c.l.b16 %v460
        %v566 = vunpack.c.h.b16 %v460
        %v567 = vunpack.c.l.b16 %v461
        %v568 = vunpack.c.h.b16 %v461
        %v569 = vunpack.c.l.b16 %v462
        %v570 = vunpack.c.h.b16 %v462
        %v571 = vunpack.c.l.b16 %v463
        %v572 = vunpack.c.h.b16 %v463
        %v573 = vunpack.c.l.b16 %v464
        %v574 = vunpack.c.h.b16 %v464
        %v575 = vunpack.c.l.b16 %v465
        %v576 = vunpack.c.h.b16 %v465
        %v577 = vunpack.c.l.b16 %v466
        %v578 = vunpack.c.h.b16 %v466
        %v579 = vunpack.c.l.b16 %v467
        %v580 = vunpack.c.h.b16 %v467
        %v581 = vunpack.c.l.b16 %v468
        %v582 = vunpack.c.h.b16 %v468
        %v583 = vunpack.c.l.b16 %v469
        %v584 = vunpack.c.h.b16 %v469
        %v585 = vunpack.c.l.b16 %v470
        %v586 = vunpack.c.h.b16 %v470
        %v587 = vpack.c.b16 %v525, %v523
        %v588 = vpack.c.b16 %v526, %v524
        %v589 = vpack.c.b16 %v529, %v527
        %v590 = vpack.c.b16 %v530, %v528
        %v591 = vpack.c.b16 %v533, %v531
        %v592 = vpack.c.b16 %v534, %v532
        %v593 = vpack.c.b16 %v537, %v535
        %v594 = vpack.c.b16 %v538, %v536
        %v595 = vpack.c.b16 %v541, %v539
        %v596 = vpack.c.b16 %v542, %v540
        %v597 = vpack.c.b16 %v545, %v543
        %v598 = vpack.c.b16 %v546, %v544
        %v599 = vpack.c.b16 %v549, %v547
        %v600 = vpack.c.b16 %v550, %v548
        %v601 = vpack.c.b16 %v553, %v551
        %v602 = vpack.c.b16 %v554, %v552
        %v603 = vpack.c.b16 %v557, %v555
        %v604 = vpack.c.b16 %v558, %v556
        %v605 = vpack.c.b16 %v561, %v559
        %v606 = vpack.c.b16 %v562, %v560
        %v607 = vpack.c.b16 %v565, %v563
        %v608 = vpack.c.b16 %v566, %v564
        %v609 = vpack.c.b16 %v569, %v567
        %v610 = vpack.c.b16 %v570, %v568
        %v611 = vpack.c.b16 %v573, %v571
        %v612 = vpack.c.b16 %v574, %v572
        %v613 = vpack.c.b16 %v577, %v575
        %v614 = vpack.c.b16 %v578, %v576
        %v615 = vpack.c.b16 %v581, %v579
        %v616 = vpack.c.b16 %v582, %v580
        %v617 = vpack.c.b16 %v585, %v583
        %v618 = vpack.c.b16 %v586, %v584
        %651 = vmatprep.subr.bf16.mxu0 %v602
        %652 = vmatpush1.bf16.msra.mxu0 %v601
        %653 = vmatprep.subr.bf16.mxu0 %v600
        %654 = vmatpush1.bf16.msra.mxu0 %v599
        %655 = vmatprep.subr.bf16.mxu0 %v598
        %656 = vmatpush1.bf16.msra.mxu0 %v597
        %657 = vmatprep.subr.bf16.mxu0 %v596
        %658 = vmatpush1.bf16.msra.mxu0 %v595
        %659 = vmatprep.subr.bf16.mxu0 %v594
        %660 = vmatpush1.bf16.msra.mxu0 %v593
        %661 = vmatprep.subr.bf16.mxu0 %v592
        %662 = vmatpush1.bf16.msra.mxu0 %v591
        %663 = vmatprep.subr.bf16.mxu0 %v590
        %664 = vmatpush1.bf16.msra.mxu0 %v589
        %665 = vmatprep.subr.bf16.mxu0 %v588
        %666 = vmatpush1.bf16.msra.mxu0 %v587
        %667 = vmatprep.subr.bf16.mxu0 %v618
        %668 = vmatpush2.bf16.msra.mxu0 %v617
        %669 = vmatprep.subr.bf16.mxu0 %v616
        %670 = vmatpush2.bf16.msra.mxu0 %v615
        %671 = vmatprep.subr.bf16.mxu0 %v614
        %672 = vmatpush2.bf16.msra.mxu0 %v613
        %673 = vmatprep.subr.bf16.mxu0 %v612
        %674 = vmatpush2.bf16.msra.mxu0 %v611
        %675 = vmatprep.subr.bf16.mxu0 %v610
        %676 = vmatpush2.bf16.msra.mxu0 %v609
        %677 = vmatprep.subr.bf16.mxu0 %v608
        %678 = vmatpush2.bf16.msra.mxu0 %v607
        %679 = vmatprep.subr.bf16.mxu0 %v606
        %680 = vmatpush2.bf16.msra.mxu0 %v605
        %681 = vmatprep.subr.bf16.mxu0 %v604
        %682 = vmatpush2.bf16.msra.mxu0 %v603
        %683 = vmatprep.mubr.bf16.mxu0 %v484
        %684 = vmatmul.mubr.bf16.gmra.mxu0 %v483
        %v685 = vpop.f32.mrf.mxu0
        %v686 = vadd.f32 0.0, %v685
        %v687 = vpop.f32.mrf.mxu0
        %v688 = vadd.f32 0.0, %v687
        %v689 = vpop.f32.mrf.mxu0
        %v690 = vadd.f32 0.0, %v689
        %v691 = vpop.f32.mrf.mxu0
        %v692 = vadd.f32 0.0, %v691
        %693 = vmatprep.mubr.bf16.mxu0 %v486
        %694 = vmatmul.mubr.bf16.gmra.mxu0 %v485
        %v695 = vpop.f32.mrf.mxu0
        %v696 = vadd.f32 0.0, %v695
        %v697 = vpop.f32.mrf.mxu0
        %v698 = vadd.f32 0.0, %v697
        %v699 = vpop.f32.mrf.mxu0
        %v700 = vadd.f32 0.0, %v699
        %v701 = vpop.f32.mrf.mxu0
        %v702 = vadd.f32 0.0, %v701
        %703 = vdwg.mxu0
        %v704 = vadd.f32 %v427, %v686
        %v705 = vadd.f32 %v428, %v688
        %v706 = vadd.f32 %v429, %v690
        %v707 = vadd.f32 %v430, %v692
        %v708 = vadd.f32 %v431, %v696
        %v709 = vadd.f32 %v432, %v698
        %v710 = vadd.f32 %v433, %v700
        %v711 = vadd.f32 %v434, %v702
        %712 = vst [vmem:[#allocation2] sm:$0xff] %v704
        %713 = vst [vmem:[#allocation2 + $0x8] sm:$0xff] %v705
        %714 = vst [vmem:[#allocation2 + $0x10] sm:$0xff] %v706
        %715 = vst [vmem:[#allocation2 + $0x18] sm:$0xff] %v707
        %716 = vst [vmem:[#allocation2 + $0x20] sm:$0xff] %v708
        %717 = vst [vmem:[#allocation2 + $0x28] sm:$0xff] %v709
        %718 = vst [vmem:[#allocation2 + $0x30] sm:$0xff] %v710
        %719 = vst [vmem:[#allocation2 + $0x38] sm:$0xff] %v711
        // Predicated region
        $region75: #{a_call__.38} parent=65 // pred_check
          %p720 = pneg %p415
        $region76: #{a_call__.38} parent=65 // pred_check_branch
          %722 = sbr.rel (%p720) target = $region78
        $region77: #{a_call__.38} parent=65 // pred_region
          %v723 = vld [vmem:[#allocation2] sm:$0xff]
          %v724 = vld [vmem:[#allocation2 + $0x8] sm:$0xff]
          %v725 = vld [vmem:[#allocation2 + $0x10] sm:$0xff]
          %v726 = vld [vmem:[#allocation2 + $0x18] sm:$0xff]
          %v727 = vld [vmem:[#allocation2 + $0x20] sm:$0xff]
          %v728 = vld [vmem:[#allocation2 + $0x28] sm:$0xff]
          %v729 = vld [vmem:[#allocation2 + $0x30] sm:$0xff]
          %v730 = vld [vmem:[#allocation2 + $0x38] sm:$0xff]
          %v731 = vld [vmem:[%s411] sm:$0x3]
          %v733 = vlaneseq
          %v734 = vshrl.u32 %v733, 7
          %v735 = vsub.s32 0, %v734
          %v736 = vrot.slane %v731, %v735
          %v737 = vlaneseq
          %v738 = vshrl.u32 %v737, 7
          %v739 = vsub.s32 1, %v738
          %v740 = vrot.slane %v731, %v739
          %v743 = vadd.f32 %v723, %v736
          %v744 = vadd.f32 %v724, %v740
          %v745 = vadd.f32 %v725, %v736
          %v746 = vadd.f32 %v726, %v740
          %v747 = vadd.f32 %v727, %v736
          %v748 = vadd.f32 %v728, %v740
          %v749 = vadd.f32 %v729, %v736
          %v750 = vadd.f32 %v730, %v740
          %v751 = vpack.c.bf16 %v745, %v743
          %v752 = vpack.c.bf16 %v746, %v744
          %v753 = vpack.c.bf16 %v749, %v747
          %v754 = vpack.c.bf16 %v750, %v748
          %v759 = vunpack.c.l.b16 %v751
          %v760 = vunpack.c.l.b16 %v752
          %v761 = vunpack.c.h.b16 %v751
          %v762 = vunpack.c.h.b16 %v752
          %v763 = vunpack.c.l.b16 %v753
          %v764 = vunpack.c.l.b16 %v754
          %v765 = vunpack.c.h.b16 %v753
          %v766 = vunpack.c.h.b16 %v754
          %v767 = vpack.c.b16 %v760, %v759
          %v768 = vpack.c.b16 %v762, %v761
          %v769 = vpack.c.b16 %v764, %v763
          %v770 = vpack.c.b16 %v766, %v765
          %775 = vst [vmem:[%s393] sm:$0xff] %v767
          %776 = vst [vmem:[%s393 + $0x8] sm:$0xff] %v768
          %777 = vst [vmem:[%s393 + $0x10] sm:$0xff] %v769
          %778 = vst [vmem:[%s393 + $0x18] sm:$0xff] %v770
        $region78: #{a_call__.38} parent=65 // pred_fallthru
          _
        %s779 = sand.u32 %s125, 1
        %s780 = sand.u32 %s125, 1
        %s781 = smul.addr %s780, 32
        %s782 = scalar_lea.vmem [#allocation4], %s781
        // Predicated region
        $region79: #{a_call__.38} parent=65 // pred_check
          %p783 = pneg %p135
        $region80: #{a_call__.38} parent=65 // pred_check_branch
          %785 = sbr.rel (%p783) target = $region82
        $region81: #{a_call__.38} parent=65 // pred_region
          %s786 = smul.u32 4, %s19
          %s787 = smul.u32 2, %s20
          %s788 = smul.addr %s786, 4
          %s789 = sadd.s32 %s787, %s788
          %s790 = smul.addr %s789, 4
          %s791 = scalar_lea.vmem %s3, %s790
          // Predicated region
          $region83: #{a_call__.38} parent=81 // pred_check
            _
          $region84: #{a_call__.38} parent=81 // pred_check_branch
            %793 = sbr.rel (0) target = $region86
          $region85: #{a_call__.38} parent=81 // pred_region
            // Predicated region
            $region87: #{a_call__.38} parent=85 // pred_check
              _
            $region88: #{a_call__.38} parent=85 // pred_check_branch
              %795 = sbr.rel (0) target = $region90
            $region89: #{a_call__.38} parent=85 // pred_region
              // Predicated region
              $region102: #{a_call__.38} parent=89 // pred_check
                _
              $region103: #{a_call__.38} parent=89 // pred_check_branch
                %817 = sbr.rel (0) target = $region105
              $region104: #{a_call__.38} parent=89 // pred_region
                loop: start=0, step=1, limit=1
                $region106: #{a_call__.38} parent=104 // loop_pre_header
                  _
                $region107: #{a_call__.38} parent=104 // loop_header
                  %s819 = sphi 0, %s823
                  %p820 = scmp.ge.s32.totalorder %s819, 1
                  %s824 = sphi %s782, %s782
                  %s825 = sphi %s791, %s791
                $region108: #{a_call__.38} parent=104 // loop_header_branch
                  %822 = sbr.rel (%p820) target = $region112
                $region109: #{a_call__.38} parent=104 // loop_body
                  %v826 = vld [vmem:[%s824] sm:$0xff]
                  %827 = vst [vmem:[%s825] sm:$0xff] %v826
                  %v828 = vld [vmem:[%s824 + $0x8] sm:$0xff]
                  %829 = vst [vmem:[%s825 + $0x10] sm:$0xff] %v828
                  %v830 = vld [vmem:[%s824 + $0x10] sm:$0xff]
                  %831 = vst [vmem:[%s825 + $0x20] sm:$0xff] %v830
                  %v832 = vld [vmem:[%s824 + $0x18] sm:$0xff]
                  %833 = vst [vmem:[%s825 + $0x30] sm:$0xff] %v832
                $region110: #{a_call__.38} parent=104 // loop_footer
                  %s823 = sadd.s32 1, %s819
                $region111: #{a_call__.38} parent=104 // loop_footer_branch
                  %818 = sbr.rel target = $region107
                $region112: #{a_call__.38} parent=104 // loop_exit
                  _
              $region105: #{a_call__.38} parent=89 // pred_fallthru
                _
              // Predicated region
              $region113: #{a_call__.38} parent=89 // pred_check
                _
              $region114: #{a_call__.38} parent=89 // pred_check_branch
                %835 = sbr.rel target = $region116
              $region115: #{a_call__.38} parent=89 // pred_region
                _
              $region116: #{a_call__.38} parent=89 // pred_fallthru
                _
            $region90: #{a_call__.38} parent=85 // pred_fallthru
              _
            // Predicated region
            $region91: #{a_call__.38} parent=85 // pred_check
              _
            $region92: #{a_call__.38} parent=85 // pred_check_branch
              %797 = sbr.rel target = $region94
            $region93: #{a_call__.38} parent=85 // pred_region
              %s799 = ssub.s32 256, 1
              loop: start=0, step=1, limit=1
              $region95: #{a_call__.38} parent=93 // loop_pre_header
                _
              $region96: #{a_call__.38} parent=93 // loop_header
                %s801 = sphi 0, %s805
                %p802 = scmp.ge.s32.totalorder %s801, 1
                %s806 = sphi %s782, %s782
                %s807 = sphi %s791, %s791
              $region97: #{a_call__.38} parent=93 // loop_header_branch
                %804 = sbr.rel (%p802) target = $region101
              $region98: #{a_call__.38} parent=93 // loop_body
                %v808 = vld [vmem:[%s806] sm:%s799]
                %809 = vst [vmem:[%s807] sm:%s799] %v808
                %v810 = vld [vmem:[%s806 + $0x8] sm:%s799]
                %811 = vst [vmem:[%s807 + $0x10] sm:%s799] %v810
                %v812 = vld [vmem:[%s806 + $0x10] sm:%s799]
                %813 = vst [vmem:[%s807 + $0x20] sm:%s799] %v812
                %v814 = vld [vmem:[%s806 + $0x18] sm:%s799]
                %815 = vst [vmem:[%s807 + $0x30] sm:%s799] %v814
              $region99: #{a_call__.38} parent=93 // loop_footer
                %s805 = sadd.s32 1, %s801
              $region100: #{a_call__.38} parent=93 // loop_footer_branch
                %800 = sbr.rel target = $region96
              $region101: #{a_call__.38} parent=93 // loop_exit
                _
            $region94: #{a_call__.38} parent=85 // pred_fallthru
              _
          $region86: #{a_call__.38} parent=81 // pred_fallthru
            _
          %836 = vnop
        $region82: #{a_call__.38} parent=65 // pred_fallthru
          _
      $region66: #{a_call__.38} parent=5 // pred_fallthru
        _
      %p837 = scmp.le.s32.totalorder 2, %s9
      // Predicated region
      $region117: #{a_call__.38} parent=5 // pred_check
        %p838 = pneg %p837
      $region118: #{a_call__.38} parent=5 // pred_check_branch
        %840 = sbr.rel (%p838) target = $region120
      $region119: #{a_call__.38} parent=5 // pred_region
        %s841 = ssub.s32 %s9, 2
        // Predicated region
        $region121: #{a_call__.38} parent=119 // pred_check
          %p842 = pneg %p141
        $region122: #{a_call__.38} parent=119 // pred_check_branch
          %844 = sbr.rel (%p842) target = $region124
        $region123: #{a_call__.38} parent=119 // pred_region
          %s845 = sand.u32 %s126, 1
          %s846 = sand.u32 %s126, 1
          %s847 = smul.addr %s846, 32
          %s848 = scalar_lea.vmem [#allocation4], %s847
        $region124: #{a_call__.38} parent=119 // pred_fallthru
          _
      $region120: #{a_call__.38} parent=5 // pred_fallthru
        _
    $region6: #{a_call__.38} parent=1 // loop_footer
      %s13 = sadd.s32 1, %s9
    $region7: #{a_call__.38} parent=1 // loop_footer_branch
      %8 = sbr.rel target = $region3
    $region8: #{a_call__.38} parent=1 // loop_exit
      _

// kernel: a_call__.37
$region0: #{a_call__.37}
  #allocation0 [shape = 'u32[]', space=smem, size = 0x4, offset = 0x4, fixed_abs, tag = 'smem constant byte address 0x4 - core index']
  #allocation1 [shape = 'u32[144,128]{1,0:T(1,128)}', space=vmem, size = 0x12000, scoped, tag = 'internal scratch']
  #allocation2 [shape = 'f32[32,128]{1,0:T(8,128)}', space=vmem, size = 0x4000, scoped, tag = 'scratch operand']
  %s0 = inlined_call_operand.vmem [shape: bf16[32,1152], index: 0, kind: input, shape index: {}]
  %s1 = inlined_call_operand.vmem [shape: bf16[1152,128], index: 1, kind: input, shape index: {}]
  %s2 = inlined_call_operand.vmem [shape: f32[1,128], index: 2, kind: input, shape index: {}]
  %s3 = inlined_call_operand.vmem [shape: bf16[32,128], index: 3, kind: output, shape index: {}]
  %s4 = sld [smem:[#allocation0]]
  $region79: #{a_call__.37} parent=0
    _
  %s6 = ssub.s32 1, %s4
  %s7 = scalar_select 0, %s6, %s4
  $region1: #{a_call__.37} parent=0
    #allocation3 [shape = 'u8[49152]{0}', space=vmem, size = 0xc000, scoped, tag = 'input window, operand 0']
    loop: start=0, step=1, limit=5
    $region2: #{a_call__.37} parent=1 // loop_pre_header
      _
    $region3: #{a_call__.37} parent=1 // loop_header
      %s9 = sphi 0, %s13
      %p10 = scmp.ge.s32.totalorder %s9, 5
      %s16 = sphi 0, %s35
      %s17 = sphi 0, %s31
      %s18 = sphi 0, %s27
      %s19 = sphi 0, %s16
      %s20 = sphi 0, %s17
      %s21 = sphi 0, %s18
      %s22 = sphi 0, %s19
      %s23 = sphi 0, %s20
      %s24 = sphi 0, %s21
      %s40 = sphi 0, %s42
      %s43 = sphi 0, %s40
      %s44 = sphi 0, %s43
      %s60 = sphi 0, %s44
      %s68 = sphi 0, %s70
      %s71 = sphi 0, %s68
      %s72 = sphi 0, %s71
      %s88 = sphi 0, %s72
      %s94 = sphi 0, %s96
      %s97 = sphi 0, %s94
      %s98 = sphi 0, %s97
      %s114 = sphi 0, %s98
      %s122 = sphi 0, %s124
      %s125 = sphi 0, %s122
      %s126 = sphi 0, %s125
      %s142 = sphi 0, %s126
    $region4: #{a_call__.37} parent=1 // loop_header_branch
      %12 = sbr.rel (%p10) target = $region8
    $region5: #{a_call__.37} parent=1 // loop_body
      %s14 = ssub.s32 %s9, 1
      %s15 = ssub.s32 %s9, 2
      %s25 = sadd.s32 1, %s18
      %p26 = scmp.ge.s32.totalorder %s25, 3
      %s27 = scalar_select %p26, 0, %s25
      %s28 = sadd.s32 1, %s17
      %s29 = scalar_select %p26, %s28, %s17
      %p30 = scmp.ge.s32.totalorder %s29, 1
      %s31 = scalar_select %p30, 0, %s29
      %s32 = sadd.s32 1, %s16
      %s33 = scalar_select %p30, %s32, %s16
      %p34 = scmp.ge.s32.totalorder %s33, 1
      %s35 = scalar_select %p34, 0, %s33
      %s36 = ssub.s32 %s16, %s35
      %s37 = ssub.s32 %s18, %s27
      %s38 = sor.u32 %s36, %s37
      %p39 = scmp.eq.s32.totalorder %s38, 0
      %s41 = sadd.s32 %s40, 1
      %s42 = scalar_select %p39, %s40, %s41
      %p45 = pneg %p39
      %p46 = scmp.eq.s32.totalorder %s9, 2
      %p47 = por %p45, %p46
      %p48 = scmp.ne.s32.totalorder %s40, %s43
      %p49 = scmp.eq.s32.totalorder %s9, 0
      %p50 = por %p48, %p49
      %p51 = scmp.ne.s32.totalorder %s40, %s43
      %p52 = scmp.eq.s32.totalorder %s14, 2
      %p53 = por %p51, %p52
      %p54 = scmp.ne.s32.totalorder %s43, %s44
      %p55 = scmp.eq.s32.totalorder %s14, 0
      %p56 = por %p54, %p55
      %p57 = scmp.ne.s32.totalorder %s43, %s44
      %p58 = scmp.eq.s32.totalorder %s15, 2
      %p59 = por %p57, %p58
      %p61 = scmp.ne.s32.totalorder %s44, %s60
      %p62 = scmp.eq.s32.totalorder %s15, 0
      %p63 = por %p61, %p62
      %s64 = ssub.s32 %s18, %s27
      %s65 = ssub.s32 %s17, %s31
      %s66 = sor.u32 %s64, %s65
      %p67 = scmp.eq.s32.totalorder %s66, 0
      %s69 = sadd.s32 %s68, 1
      %s70 = scalar_select %p67, %s68, %s69
      %p73 = pneg %p67
      %p74 = scmp.eq.s32.totalorder %s9, 2
      %p75 = por %p73, %p74
      %p76 = scmp.ne.s32.totalorder %s68, %s71
      %p77 = scmp.eq.s32.totalorder %s9, 0
      %p78 = por %p76, %p77
      %p79 = scmp.ne.s32.totalorder %s68, %s71
      %p80 = scmp.eq.s32.totalorder %s14, 2
      %p81 = por %p79, %p80
      %p82 = scmp.ne.s32.totalorder %s71, %s72
      %p83 = scmp.eq.s32.totalorder %s14, 0
      %p84 = por %p82, %p83
      %p85 = scmp.ne.s32.totalorder %s71, %s72
      %p86 = scmp.eq.s32.totalorder %s15, 2
      %p87 = por %p85, %p86
      %p89 = scmp.ne.s32.totalorder %s72, %s88
      %p90 = scmp.eq.s32.totalorder %s15, 0
      %p91 = por %p89, %p90
      %s92 = ssub.s32 %s17, %s31
      %p93 = scmp.eq.s32.totalorder %s92, 0
      %s95 = sadd.s32 %s94, 1
      %s96 = scalar_select %p93, %s94, %s95
      %p99 = pneg %p93
      %p100 = scmp.eq.s32.totalorder %s9, 2
      %p101 = por %p99, %p100
      %p102 = scmp.ne.s32.totalorder %s94, %s97
      %p103 = scmp.eq.s32.totalorder %s9, 0
      %p104 = por %p102, %p103
      %p105 = scmp.ne.s32.totalorder %s94, %s97
      %p106 = scmp.eq.s32.totalorder %s14, 2
      %p107 = por %p105, %p106
      %p108 = scmp.ne.s32.totalorder %s97, %s98
      %p109 = scmp.eq.s32.totalorder %s14, 0
      %p110 = por %p108, %p109
      %p111 = scmp.ne.s32.totalorder %s97, %s98
      %p112 = scmp.eq.s32.totalorder %s15, 2
      %p113 = por %p111, %p112
      %p115 = scmp.ne.s32.totalorder %s98, %s114
      %p116 = scmp.eq.s32.totalorder %s15, 0
      %p117 = por %p115, %p116
      %s118 = ssub.s32 %s16, %s35
      %s119 = ssub.s32 %s17, %s31
      %s120 = sor.u32 %s118, %s119
      %p121 = scmp.eq.s32.totalorder %s120, 0
      %s123 = sadd.s32 %s122, 1
      %s124 = scalar_select %p121, %s122, %s123
      %p127 = pneg %p121
      %p128 = scmp.eq.s32.totalorder %s9, 2
      %p129 = por %p127, %p128
      %p130 = scmp.ne.s32.totalorder %s122, %s125
      %p131 = scmp.eq.s32.totalorder %s9, 0
      %p132 = por %p130, %p131
      %p133 = scmp.ne.s32.totalorder %s122, %s125
      %p134 = scmp.eq.s32.totalorder %s14, 2
      %p135 = por %p133, %p134
      %p136 = scmp.ne.s32.totalorder %s125, %s126
      %p137 = scmp.eq.s32.totalorder %s14, 0
      %p138 = por %p136, %p137
      %p139 = scmp.ne.s32.totalorder %s125, %s126
      %p140 = scmp.eq.s32.totalorder %s15, 2
      %p141 = por %p139, %p140
      %p143 = scmp.ne.s32.totalorder %s126, %s142
      %p144 = scmp.eq.s32.totalorder %s15, 0
      %p145 = por %p143, %p144
      %p146 = scmp.le.s32.totalorder 1, %s9
      %p147 = scmp.lt.s32.totalorder %s9, 4
      %p148 = pnand %p146, %p147
      %p149 = pneg %p148
      // Predicated region
      $region9: #{a_call__.37} parent=5 // pred_check
        _
      $region10: #{a_call__.37} parent=5 // pred_check_branch
        %151 = sbr.rel (%p148) target = $region12
      $region11: #{a_call__.37} parent=5 // pred_region
        %s152 = ssub.s32 %s9, 1
        // Predicated region
        $region13: #{a_call__.37} parent=11 // pred_check
          %p153 = pneg %p110
        $region14: #{a_call__.37} parent=11 // pred_check_branch
          %155 = sbr.rel (%p153) target = $region16
        $region15: #{a_call__.37} parent=11 // pred_region
          %p156 = scmp.lt.s32.totalorder %s20, 0
          %s157 = scalar_select %p156, %s20, 0
          %s158 = scalar_lea.vmem %s2, %s157
        $region16: #{a_call__.37} parent=11 // pred_fallthru
          _
      $region12: #{a_call__.37} parent=5 // pred_fallthru
        _
      %p159 = scmp.lt.s32.totalorder %s9, 3
      // Predicated region
      $region17: #{a_call__.37} parent=5 // pred_check
        %p160 = pneg %p159
      $region18: #{a_call__.37} parent=5 // pred_check_branch
        %162 = sbr.rel (%p160) target = $region20
      $region19: #{a_call__.37} parent=5 // pred_region
        // Predicated region
        $region21: #{a_call__.37} parent=19 // pred_check
          %p163 = pneg %p50
        $region22: #{a_call__.37} parent=19 // pred_check_branch
          %165 = sbr.rel (%p163) target = $region24
        $region23: #{a_call__.37} parent=19 // pred_region
          %s166 = sand.u32 %s40, 1
          %s167 = sand.u32 %s40, 1
          %s168 = smul.addr %s167, 48
          %s169 = scalar_lea.vmem [#allocation3], %s168
          %s170 = smul.u32 4, %s16
          %s171 = smul.u32 3, %s18
          %s172 = smul.addr %s170, 9
          %s173 = sadd.s32 %s171, %s172
          %s174 = smul.addr %s173, 4
          %s175 = scalar_lea.vmem %s0, %s174
          // Predicated region
          $region25: #{a_call__.37} parent=23 // pred_check
            _
          $region26: #{a_call__.37} parent=23 // pred_check_branch
            %177 = sbr.rel (0) target = $region28
          $region27: #{a_call__.37} parent=23 // pred_region
            // Predicated region
            $region29: #{a_call__.37} parent=27 // pred_check
              _
            $region30: #{a_call__.37} parent=27 // pred_check_branch
              %179 = sbr.rel (0) target = $region32
            $region31: #{a_call__.37} parent=27 // pred_region
              %s180 = scalar_lea.vmem %s175, 8
              %s181 = scalar_lea.vmem %s169, 8 [#allocation3]
              loop: start=0, step=1, limit=1
              $region33: #{a_call__.37} parent=31 // loop_pre_header
                _
              $region34: #{a_call__.37} parent=31 // loop_header
                %s183 = sphi 0, %s187
                %p184 = scmp.ge.s32.totalorder %s183, 1
                %s188 = sphi %s175, %s175
                %s189 = sphi %s169, %s169
              $region35: #{a_call__.37} parent=31 // loop_header_branch
                %186 = sbr.rel (%p184) target = $region39
              $region36: #{a_call__.37} parent=31 // loop_body
                %v190 = vld [vmem:[%s188] sm:$0xff]
                %191 = vst [vmem:[%s189] sm:$0xff] %v190
                %v192 = vld [vmem:[%s188 + $0x24] sm:$0xff]
                %193 = vst [vmem:[%s189 + $0xc] sm:$0xff] %v192
                %v194 = vld [vmem:[%s188 + $0x48] sm:$0xff]
                %195 = vst [vmem:[%s189 + $0x18] sm:$0xff] %v194
                %v196 = vld [vmem:[%s188 + $0x6c] sm:$0xff]
                %197 = vst [vmem:[%s189 + $0x24] sm:$0xff] %v196
              $region37: #{a_call__.37} parent=31 // loop_footer
                %s187 = sadd.s32 1, %s183
              $region38: #{a_call__.37} parent=31 // loop_footer_branch
                %182 = sbr.rel target = $region34
              $region39: #{a_call__.37} parent=31 // loop_exit
                _
              %s199 = ssub.s32 16, 1
              loop: start=0, step=1, limit=1
              $region40: #{a_call__.37} parent=31 // loop_pre_header
                _
              $region41: #{a_call__.37} parent=31 // loop_header
                %s201 = sphi 0, %s205
                %p202 = scmp.ge.s32.totalorder %s201, 1
                %s206 = sphi %s180, %s180
                %s207 = sphi %s181, %s181
              $region42: #{a_call__.37} parent=31 // loop_header_branch
                %204 = sbr.rel (%p202) target = $region46
              $region43: #{a_call__.37} parent=31 // loop_body
                %v208 = vld [vmem:[%s206] sm:%s199]
                %209 = vst [vmem:[%s207] sm:%s199] %v208
                %v210 = vld [vmem:[%s206 + $0x24] sm:%s199]
                %211 = vst [vmem:[%s207 + $0xc] sm:%s199] %v210
                %v212 = vld [vmem:[%s206 + $0x48] sm:%s199]
                %213 = vst [vmem:[%s207 + $0x18] sm:%s199] %v212
                %v214 = vld [vmem:[%s206 + $0x6c] sm:%s199]
                %215 = vst [vmem:[%s207 + $0x24] sm:%s199] %v214
              $region44: #{a_call__.37} parent=31 // loop_footer
                %s205 = sadd.s32 1, %s201
              $region45: #{a_call__.37} parent=31 // loop_footer_branch
                %200 = sbr.rel target = $region41
              $region46: #{a_call__.37} parent=31 // loop_exit
                _
            $region32: #{a_call__.37} parent=27 // pred_fallthru
              _
          $region28: #{a_call__.37} parent=23 // pred_fallthru
            _
          %216 = vnop
        $region24: #{a_call__.37} parent=19 // pred_fallthru
          _
        // Predicated region
        $region47: #{a_call__.37} parent=19 // pred_check
          %p217 = pneg %p78
        $region48: #{a_call__.37} parent=19 // pred_check_branch
          %219 = sbr.rel (%p217) target = $region50
        $region49: #{a_call__.37} parent=19 // pred_region
          %s220 = smul.u32 48, %s18
          %p221 = scmp.lt.s32.totalorder %s220, 143
          %s222 = scalar_select %p221, %s220, 143
          %p223 = scmp.lt.s32.totalorder %s17, 0
          %s224 = scalar_select %p223, %s17, 0
          %s225 = sadd.s32 %s224, %s222
          %s226 = smul.addr %s225, 4
          %s227 = scalar_lea.vmem %s1, %s226
          %s228 = smul.u32 48, %s18
        $region50: #{a_call__.37} parent=19 // pred_fallthru
          _
      $region20: #{a_call__.37} parent=5 // pred_fallthru
        _
      %p229 = scmp.le.s32.totalorder 1, %s9
      %p230 = scmp.lt.s32.totalorder %s9, 4
      %p231 = pnand %p229, %p230
      %p232 = pneg %p231
      // Predicated region
      $region51: #{a_call__.37} parent=5 // pred_check
        _
      $region52: #{a_call__.37} parent=5 // pred_check_branch
        %234 = sbr.rel (%p231) target = $region54
      $region53: #{a_call__.37} parent=5 // pred_region
        %s235 = ssub.s32 %s9, 1
        %s236 = sand.u32 %s43, 1
        %s237 = sand.u32 %s43, 1
        %s238 = smul.addr %s237, 48
        %s239 = scalar_lea.vmem [#allocation3], %s238
        // Predicated region
        $region55: #{a_call__.37} parent=53 // pred_check
          %p240 = pneg %p56
        $region56: #{a_call__.37} parent=53 // pred_check_branch
          %242 = sbr.rel (%p240) target = $region58
        $region57: #{a_call__.37} parent=53 // pred_region
          _
        $region58: #{a_call__.37} parent=53 // pred_fallthru
          _
        %s243 = sand.u32 %s43, 1
        %s244 = sand.u32 %s43, 1
        %s245 = smul.addr %s244, 48
        %s246 = scalar_lea.vmem [#allocation3], %s245
        %p247 = pneg %p56
        %p248 = pneg %p53
        %s249 = smul.u32 48, %s21
        %p250 = scmp.lt.s32.totalorder %s249, 143
        %s251 = scalar_select %p250, %s249, 143
        %p252 = scmp.lt.s32.totalorder %s20, 0
        %s253 = scalar_select %p252, %s20, 0
        %s254 = sadd.s32 %s253, %s251
        %s255 = smul.addr %s254, 4
        %s256 = scalar_lea.vmem %s1, %s255
        %p257 = pneg %p84
        %p258 = pneg %p81
        %p259 = scmp.lt.s32.totalorder %s20, 0
        %s260 = scalar_select %p259, %s20, 0
        %s261 = scalar_lea.vmem %s2, %s260
        %p262 = pneg %p110
        %p263 = pneg %p107
        %p264 = pneg %p138
        %p265 = pneg %p135
        %s266 = smul.u32 4, %s19
        %p267 = scmp.lt.s32.totalorder %s266, 3
        %s268 = scalar_select %p267, %s266, 3
        %p269 = scmp.lt.s32.totalorder %s20, 0
        %s270 = scalar_select %p269, %s20, 0
        %s271 = sadd.s32 %s270, %s268
        %s272 = smul.addr %s271, 4
        %s273 = scalar_lea.vmem %s3, %s272
        %s274 = smul.u32 4, %s19
        %s275 = smul.u32 3, %s21
        %s276 = smul.u32 48, %s21
        %p277 = scmp.lt.s32.totalorder %s276, 143
        %s278 = scalar_select %p277, %s276, 143
        %p279 = scmp.lt.s32.totalorder %s20, 0
        %s280 = scalar_select %p279, %s20, 0
        %s281 = sadd.s32 %s280, %s278
        %s282 = smul.addr %s281, 4
        %s283 = scalar_lea.vmem %s1, %s282
        %s284 = smul.u32 48, %s21
        %p285 = scmp.lt.s32.totalorder %s20, 0
        %s286 = scalar_select %p285, %s20, 0
        %s287 = scalar_lea.vmem %s2, %s286
        %s288 = smul.u32 4, %s19
        %p289 = scmp.lt.s32.totalorder %s288, 3
        %s290 = scalar_select %p289, %s288, 3
        %p291 = scmp.lt.s32.totalorder %s20, 0
        %s292 = scalar_select %p291, %s20, 0
        %s293 = sadd.s32 %s292, %s290
        %s294 = smul.addr %s293, 4
        %s295 = scalar_lea.vmem %s3, %s294
        %s296 = smul.u32 4, %s19
        %p298 = scmp.eq.s32.totalorder %s21, 0
        // Predicated region
        $region59: #{a_call__.37} parent=53 // pred_check
          %p299 = pneg %p298
        $region60: #{a_call__.37} parent=53 // pred_check_branch
          %301 = sbr.rel (%p299) target = $region62
        $region61: #{a_call__.37} parent=53 // pred_region
          %302 = vst [vmem:[#allocation2] sm:$0xff] 0.0
          %303 = vst [vmem:[#allocation2 + $0x8] sm:$0xff] 0.0
          %304 = vst [vmem:[#allocation2 + $0x10] sm:$0xff] 0.0
          %305 = vst [vmem:[#allocation2 + $0x18] sm:$0xff] 0.0
        $region62: #{a_call__.37} parent=53 // pred_fallthru
          _
        %v306 = vld [vmem:[#allocation2] sm:$0xff]
        %v307 = vld [vmem:[#allocation2 + $0x8] sm:$0xff]
        %v308 = vld [vmem:[#allocation2 + $0x10] sm:$0xff]
        %v309 = vld [vmem:[#allocation2 + $0x18] sm:$0xff]
        %v310 = vld [vmem:[%s239] sm:$0xff]
        %v311 = vld [vmem:[%s239 + $0x8] sm:$0xf]
        %v312 = vld [vmem:[%s239 + $0xc] sm:$0xff]
        %v313 = vld [vmem:[%s239 + $0x14] sm:$0xf]
        %v314 = vld [vmem:[%s239 + $0x18] sm:$0xff]
        %v315 = vld [vmem:[%s239 + $0x20] sm:$0xf]
        %v316 = vld [vmem:[%s239 + $0x24] sm:$0xff]
        %v317 = vld [vmem:[%s239 + $0x2c] sm:$0xf]
        %v318 = vld [vmem:[%s283] sm:$0xf]
        %v319 = vld [vmem:[%s283 + $0x4] sm:$0xf]
        %v320 = vld [vmem:[%s283 + $0x8] sm:$0xf]
        %v321 = vld [vmem:[%s283 + $0xc] sm:$0xf]
        %v322 = vld [vmem:[%s283 + $0x10] sm:$0xf]
        %v323 = vld [vmem:[%s283 + $0x14] sm:$0xf]
        %v324 = vld [vmem:[%s283 + $0x18] sm:$0xf]
        %v325 = vld [vmem:[%s283 + $0x1c] sm:$0xf]
        %v326 = vld [vmem:[%s283 + $0x20] sm:$0xf]
        %v327 = vld [vmem:[%s283 + $0x24] sm:$0xf]
        %v328 = vld [vmem:[%s283 + $0x28] sm:$0xf]
        %v329 = vld [vmem:[%s283 + $0x2c] sm:$0xf]
        %v330 = vld [vmem:[%s283 + $0x30] sm:$0xf]
        %v331 = vld [vmem:[%s283 + $0x34] sm:$0xf]
        %v332 = vld [vmem:[%s283 + $0x38] sm:$0xf]
        %v333 = vld [vmem:[%s283 + $0x3c] sm:$0xf]
        %v334 = vld [vmem:[%s283 + $0x40] sm:$0xf]
        %v335 = vld [vmem:[%s283 + $0x44] sm:$0xf]
        %v336 = vld [vmem:[%s283 + $0x48] sm:$0xf]
        %v337 = vld [vmem:[%s283 + $0x4c] sm:$0xf]
        %v338 = vld [vmem:[%s283 + $0x50] sm:$0xf]
        %v339 = vld [vmem:[%s283 + $0x54] sm:$0xf]
        %v340 = vld [vmem:[%s283 + $0x58] sm:$0xf]
        %v341 = vld [vmem:[%s283 + $0x5c] sm:$0xf]
        %v342 = vld [vmem:[%s283 + $0x60] sm:$0xf]
        %v343 = vld [vmem:[%s283 + $0x64] sm:$0xf]
        %v344 = vld [vmem:[%s283 + $0x68] sm:$0xf]
        %v345 = vld [vmem:[%s283 + $0x6c] sm:$0xf]
        %v346 = vld [vmem:[%s283 + $0x70] sm:$0xf]
        %v347 = vld [vmem:[%s283 + $0x74] sm:$0xf]
        %v348 = vld [vmem:[%s283 + $0x78] sm:$0xf]
        %v349 = vld [vmem:[%s283 + $0x7c] sm:$0xf]
        %v350 = vld [vmem:[%s283 + $0x80] sm:$0xf]
        %v351 = vld [vmem:[%s283 + $0x84] sm:$0xf]
        %v352 = vld [vmem:[%s283 + $0x88] sm:$0xf]
        %v353 = vld [vmem:[%s283 + $0x8c] sm:$0xf]
        %v354 = vld [vmem:[%s283 + $0x90] sm:$0xf]
        %v355 = vld [vmem:[%s283 + $0x94] sm:$0xf]
        %v356 = vld [vmem:[%s283 + $0x98] sm:$0xf]
        %v357 = vld [vmem:[%s283 + $0x9c] sm:$0xf]
        %v358 = vld [vmem:[%s283 + $0xa0] sm:$0xf]
        %v359 = vld [vmem:[%s283 + $0xa4] sm:$0xf]
        %v360 = vld [vmem:[%s283 + $0xa8] sm:$0xf]
        %v361 = vld [vmem:[%s283 + $0xac] sm:$0xf]
        %v362 = vld [vmem:[%s283 + $0xb0] sm:$0xf]
        %v363 = vld [vmem:[%s283 + $0xb4] sm:$0xf]
        %v364 = vld [vmem:[%s283 + $0xb8] sm:$0xf]
        %v365 = vld [vmem:[%s283 + $0xbc] sm:$0xf]
        %v374 = vunpack.c.l.b16 %v310
        %v375 = vunpack.c.h.b16 %v310
        %v376 = vunpack.c.l.b16 %v311
        %v377 = vunpack.c.l.b16 %v312
        %v378 = vunpack.c.h.b16 %v312
        %v379 = vunpack.c.l.b16 %v313
        %v380 = vunpack.c.l.b16 %v314
        %v381 = vunpack.c.h.b16 %v314
        %v382 = vunpack.c.l.b16 %v315
        %v383 = vunpack.c.l.b16 %v316
        %v384 = vunpack.c.h.b16 %v316
        %v385 = vunpack.c.l.b16 %v317
        %v386 = vpack.c.b16 %v377, %v374
        %v387 = vpack.c.b16 %v378, %v375
        %v388 = vpack.c.b16 %v379, %v376
        %v389 = vpack.c.b16 %v383, %v380
        %v390 = vpack.c.b16 %v384, %v381
        %v391 = vpack.c.b16 %v385, %v382
        %v446 = vunpack.c.l.b16 %v318
        %v447 = vunpack.c.l.b16 %v319
        %v448 = vunpack.c.l.b16 %v320
        %v449 = vunpack.c.l.b16 %v321
        %v450 = vunpack.c.l.b16 %v322
        %v451 = vunpack.c.l.b16 %v323
        %v452 = vunpack.c.l.b16 %v324
        %v453 = vunpack.c.l.b16 %v325
        %v454 = vunpack.c.l.b16 %v326
        %v455 = vunpack.c.l.b16 %v327
        %v456 = vunpack.c.l.b16 %v328
        %v457 = vunpack.c.l.b16 %v329
        %v458 = vunpack.c.l.b16 %v330
        %v459 = vunpack.c.l.b16 %v331
        %v460 = vunpack.c.l.b16 %v332
        %v461 = vunpack.c.l.b16 %v333
        %v462 = vunpack.c.l.b16 %v334
        %v463 = vunpack.c.l.b16 %v335
        %v464 = vunpack.c.l.b16 %v336
        %v465 = vunpack.c.l.b16 %v337
        %v466 = vunpack.c.l.b16 %v338
        %v467 = vunpack.c.l.b16 %v339
        %v468 = vunpack.c.l.b16 %v340
        %v469 = vunpack.c.l.b16 %v341
        %v470 = vunpack.c.l.b16 %v342
        %v471 = vunpack.c.l.b16 %v343
        %v472 = vunpack.c.l.b16 %v344
        %v473 = vunpack.c.l.b16 %v345
        %v474 = vunpack.c.l.b16 %v346
        %v475 = vunpack.c.l.b16 %v347
        %v476 = vunpack.c.l.b16 %v348
        %v477 = vunpack.c.l.b16 %v349
        %v478 = vunpack.c.l.b16 %v350
        %v479 = vunpack.c.l.b16 %v351
        %v480 = vunpack.c.l.b16 %v352
        %v481 = vunpack.c.l.b16 %v353
        %v482 = vunpack.c.l.b16 %v354
        %v483 = vunpack.c.l.b16 %v355
        %v484 = vunpack.c.l.b16 %v356
        %v485 = vunpack.c.l.b16 %v357
        %v486 = vunpack.c.l.b16 %v358
        %v487 = vunpack.c.l.b16 %v359
        %v488 = vunpack.c.l.b16 %v360
        %v489 = vunpack.c.l.b16 %v361
        %v490 = vunpack.c.l.b16 %v362
        %v491 = vunpack.c.l.b16 %v363
        %v492 = vunpack.c.l.b16 %v364
        %v493 = vunpack.c.l.b16 %v365
        %v494 = vpack.c.b16 %v447, %v446
        %v495 = vpack.c.b16 %v449, %v448
        %v496 = vpack.c.b16 %v451, %v450
        %v497 = vpack.c.b16 %v453, %v452
        %v498 = vpack.c.b16 %v455, %v454
        %v499 = vpack.c.b16 %v457, %v456
        %v500 = vpack.c.b16 %v459, %v458
        %v501 = vpack.c.b16 %v461, %v460
        %v502 = vpack.c.b16 %v463, %v462
        %v503 = vpack.c.b16 %v465, %v464
        %v504 = vpack.c.b16 %v467, %v466
        %v505 = vpack.c.b16 %v469, %v468
        %v506 = vpack.c.b16 %v471, %v470
        %v507 = vpack.c.b16 %v473, %v472
        %v508 = vpack.c.b16 %v475, %v474
        %v509 = vpack.c.b16 %v477, %v476
        %v510 = vpack.c.b16 %v479, %v478
        %v511 = vpack.c.b16 %v481, %v480
        %v512 = vpack.c.b16 %v483, %v482
        %v513 = vpack.c.b16 %v485, %v484
        %v514 = vpack.c.b16 %v487, %v486
        %v515 = vpack.c.b16 %v489, %v488
        %v516 = vpack.c.b16 %v491, %v490
        %v517 = vpack.c.b16 %v493, %v492
        %542 = vmatprep.subr.bf16.mxu0 0
        %543 = vmatpush1.bf16.msra.mxu0 %v501
        %544 = vmatprep.subr.bf16.mxu0 0
        %545 = vmatpush1.bf16.msra.mxu0 %v500
        %546 = vmatprep.subr.bf16.mxu0 0
        %547 = vmatpush1.bf16.msra.mxu0 %v499
        %548 = vmatprep.subr.bf16.mxu0 0
        %549 = vmatpush1.bf16.msra.mxu0 %v498
        %550 = vmatprep.subr.bf16.mxu0 0
        %551 = vmatpush1.bf16.msra.mxu0 %v497
        %552 = vmatprep.subr.bf16.mxu0 0
        %553 = vmatpush1.bf16.msra.mxu0 %v496
        %554 = vmatprep.subr.bf16.mxu0 0
        %555 = vmatpush1.bf16.msra.mxu0 %v495
        %556 = vmatprep.subr.bf16.mxu0 0
        %557 = vmatpush1.bf16.msra.mxu0 %v494
        %558 = vmatprep.subr.bf16.mxu0 0
        %559 = vmatpush2.bf16.msra.mxu0 %v509
        %560 = vmatprep.subr.bf16.mxu0 0
        %561 = vmatpush2.bf16.msra.mxu0 %v508
        %562 = vmatprep.subr.bf16.mxu0 0
        %563 = vmatpush2.bf16.msra.mxu0 %v507
        %564 = vmatprep.subr.bf16.mxu0 0
        %565 = vmatpush2.bf16.msra.mxu0 %v506
        %566 = vmatprep.subr.bf16.mxu0 0
        %567 = vmatpush2.bf16.msra.mxu0 %v505
        %568 = vmatprep.subr.bf16.mxu0 0
        %569 = vmatpush2.bf16.msra.mxu0 %v504
        %570 = vmatprep.subr.bf16.mxu0 0
        %571 = vmatpush2.bf16.msra.mxu0 %v503
        %572 = vmatprep.subr.bf16.mxu0 0
        %573 = vmatpush2.bf16.msra.mxu0 %v502
        %574 = vmatprep.mubr.bf16.mxu0 %v387
        %575 = vmatmul.mubr.bf16.gmra.mxu0 %v386
        %v576 = vpop.f32.mrf.mxu0
        %v577 = vadd.f32 0.0, %v576
        %v578 = vpop.f32.mrf.mxu0
        %v579 = vpop.f32.mrf.mxu0
        %v580 = vadd.f32 0.0, %v579
        %v581 = vpop.f32.mrf.mxu0
        %582 = vmatprep.mubr.bf16.mxu0 %v390
        %583 = vmatmul.mubr.bf16.gmra.mxu0 %v389
        %v584 = vpop.f32.mrf.mxu0
        %v585 = vadd.f32 0.0, %v584
        %v586 = vpop.f32.mrf.mxu0
        %v587 = vpop.f32.mrf.mxu0
        %v588 = vadd.f32 0.0, %v587
        %v589 = vpop.f32.mrf.mxu0
        %590 = vdwg.mxu0
        %591 = vmatprep.subr.bf16.mxu0 0
        %592 = vmatpush1.bf16.msra.mxu0 %v517
        %593 = vmatprep.subr.bf16.mxu0 0
        %594 = vmatpush1.bf16.msra.mxu0 %v516
        %595 = vmatprep.subr.bf16.mxu0 0
        %596 = vmatpush1.bf16.msra.mxu0 %v515
        %597 = vmatprep.subr.bf16.mxu0 0
        %598 = vmatpush1.bf16.msra.mxu0 %v514
        %599 = vmatprep.subr.bf16.mxu0 0
        %600 = vmatpush1.bf16.msra.mxu0 %v513
        %601 = vmatprep.subr.bf16.mxu0 0
        %602 = vmatpush1.bf16.msra.mxu0 %v512
        %603 = vmatprep.subr.bf16.mxu0 0
        %604 = vmatpush1.bf16.msra.mxu0 %v511
        %605 = vmatprep.subr.bf16.mxu0 0
        %606 = vmatpush1.bf16.msra.mxu0 %v510
        %607 = vmatprep.subr.bf16.mxu0 0
        %608 = vmatpush2.bf16.msra.mxu0 0
        %609 = vmatprep.subr.bf16.mxu0 0
        %610 = vmatpush2.bf16.msra.mxu0 0
        %611 = vmatprep.subr.bf16.mxu0 0
        %612 = vmatpush2.bf16.msra.mxu0 0
        %613 = vmatprep.subr.bf16.mxu0 0
        %614 = vmatpush2.bf16.msra.mxu0 0
        %615 = vmatprep.subr.bf16.mxu0 0
        %616 = vmatpush2.bf16.msra.mxu0 0
        %617 = vmatprep.subr.bf16.mxu0 0
        %618 = vmatpush2.bf16.msra.mxu0 0
        %619 = vmatprep.subr.bf16.mxu0 0
        %620 = vmatpush2.bf16.msra.mxu0 0
        %621 = vmatprep.subr.bf16.mxu0 0
        %622 = vmatpush2.bf16.msra.mxu0 0
        %623 = vmatprep.mubr.bf16.mxu0 0
        %624 = vmatmul.mubr.bf16.gmra.mxu0 %v388
        %v625 = vpop.f32.mrf.mxu0
        %v626 = vadd.f32 %v577, %v625
        %v627 = vpop.f32.mrf.mxu0
        %v628 = vpop.f32.mrf.mxu0
        %v629 = vadd.f32 %v580, %v628
        %v630 = vpop.f32.mrf.mxu0
        %631 = vmatprep.mubr.bf16.mxu0 0
        %632 = vmatmul.mubr.bf16.gmra.mxu0 %v391
        %v633 = vpop.f32.mrf.mxu0
        %v634 = vadd.f32 %v585, %v633
        %v635 = vpop.f32.mrf.mxu0
        %v636 = vpop.f32.mrf.mxu0
        %v637 = vadd.f32 %v588, %v636
        %v638 = vpop.f32.mrf.mxu0
        %639 = vdwg.mxu0
        %v640 = vadd.f32 %v306, %v626
        %v641 = vadd.f32 %v307, %v629
        %v642 = vadd.f32 %v308, %v634
        %v643 = vadd.f32 %v309, %v637
        %644 = vst [vmem:[#allocation2] sm:$0xff] %v640
        %645 = vst [vmem:[#allocation2 + $0x8] sm:$0xff] %v641
        %646 = vst [vmem:[#allocation2 + $0x10] sm:$0xff] %v642
        %647 = vst [vmem:[#allocation2 + $0x18] sm:$0xff] %v643
        %p648 = scmp.eq.s32.totalorder %s21, 2
        // Predicated region
        $region63: #{a_call__.37} parent=53 // pred_check
          %p649 = pneg %p648
        $region64: #{a_call__.37} parent=53 // pred_check_branch
          %651 = sbr.rel (%p649) target = $region66
        $region65: #{a_call__.37} parent=53 // pred_region
          %v652 = vld [vmem:[#allocation2] sm:$0xff]
          %v653 = vld [vmem:[#allocation2 + $0x8] sm:$0xff]
          %v654 = vld [vmem:[#allocation2 + $0x10] sm:$0xff]
          %v655 = vld [vmem:[#allocation2 + $0x18] sm:$0xff]
          %v656 = vld [vmem:[%s287] sm:$0x1]
          %v658 = vlaneseq
          %v659 = vshrl.u32 %v658, 7
          %v660 = vsub.s32 0, %v659
          %v661 = vrot.slane %v656, %v660
          %v663 = vadd.f32 %v652, %v661
          %v664 = vadd.f32 %v653, %v661
          %v665 = vadd.f32 %v654, %v661
          %v666 = vadd.f32 %v655, %v661
          %v667 = vmax.f32 %v663, 0.0
          %v668 = vmax.f32 %v664, 0.0
          %v669 = vmax.f32 %v665, 0.0
          %v670 = vmax.f32 %v666, 0.0
          %v671 = vpack.c.bf16 %v668, %v667
          %v672 = vpack.c.bf16 %v670, %v669
          %v675 = vunpack.c.l.b16 %v671
          %v676 = vunpack.c.h.b16 %v671
          %v677 = vunpack.c.l.b16 %v672
          %v678 = vunpack.c.h.b16 %v672
          %v679 = vpack.c.b16 %v675, %v675
          %v680 = vpack.c.b16 %v676, %v676
          %v681 = vpack.c.b16 %v677, %v677
          %v682 = vpack.c.b16 %v678, %v678
          %687 = vst [vmem:[%s295] sm:$0xf] %v679
          %688 = vst [vmem:[%s295 + $0x4] sm:$0xf] %v680
          %689 = vst [vmem:[%s295 + $0x8] sm:$0xf] %v681
          %690 = vst [vmem:[%s295 + $0xc] sm:$0xf] %v682
        $region66: #{a_call__.37} parent=53 // pred_fallthru
          _
        %s691 = smul.u32 4, %s19
        %p692 = scmp.lt.s32.totalorder %s691, 3
        %s693 = scalar_select %p692, %s691, 3
        %p694 = scmp.lt.s32.totalorder %s20, 0
        %s695 = scalar_select %p694, %s20, 0
        %s696 = sadd.s32 %s695, %s693
        %s697 = smul.addr %s696, 4
        %s698 = scalar_lea.vmem %s3, %s697
        // Predicated region
        $region67: #{a_call__.37} parent=53 // pred_check
          %p699 = pneg %p135
        $region68: #{a_call__.37} parent=53 // pred_check_branch
          %701 = sbr.rel (%p699) target = $region70
        $region69: #{a_call__.37} parent=53 // pred_region
          %s702 = smul.u32 4, %s19
        $region70: #{a_call__.37} parent=53 // pred_fallthru
          _
        // Predicated region
        $region71: #{a_call__.37} parent=53 // pred_check
          %p703 = pneg %p135
        $region72: #{a_call__.37} parent=53 // pred_check_branch
          %705 = sbr.rel (%p703) target = $region74
        $region73: #{a_call__.37} parent=53 // pred_region
          %s706 = smul.u32 4, %s19
          %p707 = scmp.lt.s32.totalorder %s706, 3
          %s708 = scalar_select %p707, %s706, 3
          %p709 = scmp.lt.s32.totalorder %s20, 0
          %s710 = scalar_select %p709, %s20, 0
          %s711 = sadd.s32 %s710, %s708
          %s712 = smul.addr %s711, 4
          %s713 = scalar_lea.vmem %s3, %s712
        $region74: #{a_call__.37} parent=53 // pred_fallthru
          _
      $region54: #{a_call__.37} parent=5 // pred_fallthru
        _
      %p714 = scmp.le.s32.totalorder 2, %s9
      // Predicated region
      $region75: #{a_call__.37} parent=5 // pred_check
        %p715 = pneg %p714
      $region76: #{a_call__.37} parent=5 // pred_check_branch
        %717 = sbr.rel (%p715) target = $region78
      $region77: #{a_call__.37} parent=5 // pred_region
        %s718 = ssub.s32 %s9, 2
      $region78: #{a_call__.37} parent=5 // pred_fallthru
        _
    $region6: #{a_call__.37} parent=1 // loop_footer
      %s13 = sadd.s32 1, %s9
    $region7: #{a_call__.37} parent=1 // loop_footer_branch
      %8 = sbr.rel target = $region3
    $region8: #{a_call__.37} parent=1 // loop_exit
      _

// kernel: a_call__.39
$region0: #{a_call__.39}
  #allocation0 [shape = 'u32[]', space=smem, size = 0x4, offset = 0x4, fixed_abs, tag = 'smem constant byte address 0x4 - core index']
  #allocation1 [shape = 'u32[144,128]{1,0:T(1,128)}', space=vmem, size = 0x12000, scoped, tag = 'internal scratch']
  #allocation2 [shape = 'f32[32,256]{1,0:T(8,128)}', space=vmem, size = 0x8000, scoped, tag = 'scratch operand']
  %s0 = inlined_call_operand.vmem [shape: bf16[32,128], index: 0, kind: input, shape index: {}]
  %s1 = inlined_call_operand.vmem [shape: bf16[128,512], index: 1, kind: input, shape index: {}]
  %s2 = inlined_call_operand.vmem [shape: f32[1,512], index: 2, kind: input, shape index: {}]
  %s3 = inlined_call_operand.vmem [shape: bf16[32,512], index: 3, kind: input, shape index: {}]
  %s4 = inlined_call_operand.vmem [shape: bf16[32,512], index: 4, kind: output, shape index: {}]
  %s5 = sld [smem:[#allocation0]]
  $region167: #{a_call__.39} parent=0
    _
  %s7 = ssub.s32 1, %s5
  %s8 = scalar_select 0, %s7, %s5
  $region1: #{a_call__.39} parent=0
    #allocation3 [shape = 'u8[131072]{0}', space=vmem, size = 0x20000, scoped, tag = 'input window, operand 1']
    #allocation4 [shape = 'u8[32768]{0}', space=vmem, size = 0x8000, scoped, tag = 'input window, operand 3']
    #allocation5 [shape = 'u8[32768]{0}', space=vmem, size = 0x8000, scoped, tag = 'output window, operand 0']
    loop: start=0, step=1, limit=4
    $region2: #{a_call__.39} parent=1 // loop_pre_header
      _
    $region3: #{a_call__.39} parent=1 // loop_header
      %s10 = sphi 0, %s14
      %p11 = scmp.ge.s32.totalorder %s10, 4
      %s17 = sphi 0, %s36
      %s18 = sphi 0, %s32
      %s19 = sphi 0, %s28
      %s20 = sphi 0, %s17
      %s21 = sphi 0, %s18
      %s22 = sphi 0, %s19
      %s23 = sphi 0, %s20
      %s24 = sphi 0, %s21
      %s25 = sphi 0, %s22
      %s41 = sphi 0, %s43
      %s44 = sphi 0, %s41
      %s45 = sphi 0, %s44
      %s61 = sphi 0, %s45
      %s69 = sphi 0, %s71
      %s72 = sphi 0, %s69
      %s73 = sphi 0, %s72
      %s89 = sphi 0, %s73
      %s95 = sphi 0, %s97
      %s98 = sphi 0, %s95
      %s99 = sphi 0, %s98
      %s115 = sphi 0, %s99
      %s123 = sphi 0, %s125
      %s126 = sphi 0, %s123
      %s127 = sphi 0, %s126
      %s143 = sphi 0, %s127
      %s151 = sphi 0, %s153
      %s154 = sphi 0, %s151
      %s155 = sphi 0, %s154
      %s171 = sphi 0, %s155
    $region4: #{a_call__.39} parent=1 // loop_header_branch
      %13 = sbr.rel (%p11) target = $region8
    $region5: #{a_call__.39} parent=1 // loop_body
      %s15 = ssub.s32 %s10, 1
      %s16 = ssub.s32 %s10, 2
      %s26 = sadd.s32 1, %s19
      %p27 = scmp.ge.s32.totalorder %s26, 1
      %s28 = scalar_select %p27, 0, %s26
      %s29 = sadd.s32 1, %s18
      %s30 = scalar_select %p27, %s29, %s18
      %p31 = scmp.ge.s32.totalorder %s30, 2
      %s32 = scalar_select %p31, 0, %s30
      %s33 = sadd.s32 1, %s17
      %s34 = scalar_select %p31, %s33, %s17
      %p35 = scmp.ge.s32.totalorder %s34, 1
      %s36 = scalar_select %p35, 0, %s34
      %s37 = ssub.s32 %s17, %s36
      %s38 = ssub.s32 %s19, %s28
      %s39 = sor.u32 %s37, %s38
      %p40 = scmp.eq.s32.totalorder %s39, 0
      %s42 = sadd.s32 %s41, 1
      %s43 = scalar_select %p40, %s41, %s42
      %p46 = pneg %p40
      %p47 = scmp.eq.s32.totalorder %s10, 1
      %p48 = por %p46, %p47
      %p49 = scmp.ne.s32.totalorder %s41, %s44
      %p50 = scmp.eq.s32.totalorder %s10, 0
      %p51 = por %p49, %p50
      %p52 = scmp.ne.s32.totalorder %s41, %s44
      %p53 = scmp.eq.s32.totalorder %s15, 1
      %p54 = por %p52, %p53
      %p55 = scmp.ne.s32.totalorder %s44, %s45
      %p56 = scmp.eq.s32.totalorder %s15, 0
      %p57 = por %p55, %p56
      %p58 = scmp.ne.s32.totalorder %s44, %s45
      %p59 = scmp.eq.s32.totalorder %s16, 1
      %p60 = por %p58, %p59
      %p62 = scmp.ne.s32.totalorder %s45, %s61
      %p63 = scmp.eq.s32.totalorder %s16, 0
      %p64 = por %p62, %p63
      %s65 = ssub.s32 %s19, %s28
      %s66 = ssub.s32 %s18, %s32
      %s67 = sor.u32 %s65, %s66
      %p68 = scmp.eq.s32.totalorder %s67, 0
      %s70 = sadd.s32 %s69, 1
      %s71 = scalar_select %p68, %s69, %s70
      %p74 = pneg %p68
      %p75 = scmp.eq.s32.totalorder %s10, 1
      %p76 = por %p74, %p75
      %p77 = scmp.ne.s32.totalorder %s69, %s72
      %p78 = scmp.eq.s32.totalorder %s10, 0
      %p79 = por %p77, %p78
      %p80 = scmp.ne.s32.totalorder %s69, %s72
      %p81 = scmp.eq.s32.totalorder %s15, 1
      %p82 = por %p80, %p81
      %p83 = scmp.ne.s32.totalorder %s72, %s73
      %p84 = scmp.eq.s32.totalorder %s15, 0
      %p85 = por %p83, %p84
      %p86 = scmp.ne.s32.totalorder %s72, %s73
      %p87 = scmp.eq.s32.totalorder %s16, 1
      %p88 = por %p86, %p87
      %p90 = scmp.ne.s32.totalorder %s73, %s89
      %p91 = scmp.eq.s32.totalorder %s16, 0
      %p92 = por %p90, %p91
      %s93 = ssub.s32 %s18, %s32
      %p94 = scmp.eq.s32.totalorder %s93, 0
      %s96 = sadd.s32 %s95, 1
      %s97 = scalar_select %p94, %s95, %s96
      %p100 = pneg %p94
      %p101 = scmp.eq.s32.totalorder %s10, 1
      %p102 = por %p100, %p101
      %p103 = scmp.ne.s32.totalorder %s95, %s98
      %p104 = scmp.eq.s32.totalorder %s10, 0
      %p105 = por %p103, %p104
      %p106 = scmp.ne.s32.totalorder %s95, %s98
      %p107 = scmp.eq.s32.totalorder %s15, 1
      %p108 = por %p106, %p107
      %p109 = scmp.ne.s32.totalorder %s98, %s99
      %p110 = scmp.eq.s32.totalorder %s15, 0
      %p111 = por %p109, %p110
      %p112 = scmp.ne.s32.totalorder %s98, %s99
      %p113 = scmp.eq.s32.totalorder %s16, 1
      %p114 = por %p112, %p113
      %p116 = scmp.ne.s32.totalorder %s99, %s115
      %p117 = scmp.eq.s32.totalorder %s16, 0
      %p118 = por %p116, %p117
      %s119 = ssub.s32 %s17, %s36
      %s120 = ssub.s32 %s18, %s32
      %s121 = sor.u32 %s119, %s120
      %p122 = scmp.eq.s32.totalorder %s121, 0
      %s124 = sadd.s32 %s123, 1
      %s125 = scalar_select %p122, %s123, %s124
      %p128 = pneg %p122
      %p129 = scmp.eq.s32.totalorder %s10, 1
      %p130 = por %p128, %p129
      %p131 = scmp.ne.s32.totalorder %s123, %s126
      %p132 = scmp.eq.s32.totalorder %s10, 0
      %p133 = por %p131, %p132
      %p134 = scmp.ne.s32.totalorder %s123, %s126
      %p135 = scmp.eq.s32.totalorder %s15, 1
      %p136 = por %p134, %p135
      %p137 = scmp.ne.s32.totalorder %s126, %s127
      %p138 = scmp.eq.s32.totalorder %s15, 0
      %p139 = por %p137, %p138
      %p140 = scmp.ne.s32.totalorder %s126, %s127
      %p141 = scmp.eq.s32.totalorder %s16, 1
      %p142 = por %p140, %p141
      %p144 = scmp.ne.s32.totalorder %s127, %s143
      %p145 = scmp.eq.s32.totalorder %s16, 0
      %p146 = por %p144, %p145
      %s147 = ssub.s32 %s17, %s36
      %s148 = ssub.s32 %s18, %s32
      %s149 = sor.u32 %s147, %s148
      %p150 = scmp.eq.s32.totalorder %s149, 0
      %s152 = sadd.s32 %s151, 1
      %s153 = scalar_select %p150, %s151, %s152
      %p156 = pneg %p150
      %p157 = scmp.eq.s32.totalorder %s10, 1
      %p158 = por %p156, %p157
      %p159 = scmp.ne.s32.totalorder %s151, %s154
      %p160 = scmp.eq.s32.totalorder %s10, 0
      %p161 = por %p159, %p160
      %p162 = scmp.ne.s32.totalorder %s151, %s154
      %p163 = scmp.eq.s32.totalorder %s15, 1
      %p164 = por %p162, %p163
      %p165 = scmp.ne.s32.totalorder %s154, %s155
      %p166 = scmp.eq.s32.totalorder %s15, 0
      %p167 = por %p165, %p166
      %p168 = scmp.ne.s32.totalorder %s154, %s155
      %p169 = scmp.eq.s32.totalorder %s16, 1
      %p170 = por %p168, %p169
      %p172 = scmp.ne.s32.totalorder %s155, %s171
      %p173 = scmp.eq.s32.totalorder %s16, 0
      %p174 = por %p172, %p173
      %p175 = scmp.le.s32.totalorder 1, %s10
      %p176 = scmp.lt.s32.totalorder %s10, 3
      %p177 = pnand %p175, %p176
      %p178 = pneg %p177
      // Predicated region
      $region9: #{a_call__.39} parent=5 // pred_check
        _
      $region10: #{a_call__.39} parent=5 // pred_check_branch
        %180 = sbr.rel (%p177) target = $region12
      $region11: #{a_call__.39} parent=5 // pred_region
        %s181 = ssub.s32 %s10, 1
        // Predicated region
        $region13: #{a_call__.39} parent=11 // pred_check
          %p182 = pneg %p57
        $region14: #{a_call__.39} parent=11 // pred_check_branch
          %184 = sbr.rel (%p182) target = $region16
        $region15: #{a_call__.39} parent=11 // pred_region
          %s185 = smul.u32 4, %s20
          %p186 = scmp.lt.s32.totalorder %s185, 3
          %s187 = scalar_select %p186, %s185, 3
          %p188 = scmp.lt.s32.totalorder %s22, 0
          %s189 = scalar_select %p188, %s22, 0
          %s190 = sadd.s32 %s189, %s187
          %s191 = smul.addr %s190, 4
          %s192 = scalar_lea.vmem %s0, %s191
          %s193 = smul.u32 4, %s20
        $region16: #{a_call__.39} parent=11 // pred_fallthru
          _
      $region12: #{a_call__.39} parent=5 // pred_fallthru
        _
      %p194 = scmp.lt.s32.totalorder %s10, 2
      // Predicated region
      $region17: #{a_call__.39} parent=5 // pred_check
        %p195 = pneg %p194
      $region18: #{a_call__.39} parent=5 // pred_check_branch
        %197 = sbr.rel (%p195) target = $region20
      $region19: #{a_call__.39} parent=5 // pred_region
        // Predicated region
        $region21: #{a_call__.39} parent=19 // pred_check
          %p198 = pneg %p79
        $region22: #{a_call__.39} parent=19 // pred_check_branch
          %200 = sbr.rel (%p198) target = $region24
        $region23: #{a_call__.39} parent=19 // pred_region
          %s201 = sand.u32 %s69, 1
          %s202 = sand.u32 %s69, 1
          %s203 = smul.addr %s202, 128
          %s204 = scalar_lea.vmem [#allocation3], %s203
          %s205 = smul.u32 16, %s19
          %s206 = smul.u32 2, %s18
          %s207 = smul.addr %s205, 4
          %s208 = sadd.s32 %s206, %s207
          %s209 = smul.addr %s208, 4
          %s210 = scalar_lea.vmem %s1, %s209
          // Predicated region
          $region25: #{a_call__.39} parent=23 // pred_check
            _
          $region26: #{a_call__.39} parent=23 // pred_check_branch
            %212 = sbr.rel (0) target = $region28
          $region27: #{a_call__.39} parent=23 // pred_region
            // Predicated region
            $region29: #{a_call__.39} parent=27 // pred_check
              _
            $region30: #{a_call__.39} parent=27 // pred_check_branch
              %214 = sbr.rel (0) target = $region32
            $region31: #{a_call__.39} parent=27 // pred_region
              // Predicated region
              $region44: #{a_call__.39} parent=31 // pred_check
                _
              $region45: #{a_call__.39} parent=31 // pred_check_branch
                %260 = sbr.rel (0) target = $region47
              $region46: #{a_call__.39} parent=31 // pred_region
                loop: start=0, step=1, limit=1
                $region48: #{a_call__.39} parent=46 // loop_pre_header
                  _
                $region49: #{a_call__.39} parent=46 // loop_header
                  %s262 = sphi 0, %s266
                  %p263 = scmp.ge.s32.totalorder %s262, 1
                  %s267 = sphi %s210, %s210
                  %s268 = sphi %s204, %s204
                $region50: #{a_call__.39} parent=46 // loop_header_branch
                  %265 = sbr.rel (%p263) target = $region54
                $region51: #{a_call__.39} parent=46 // loop_body
                  %v269 = vld [vmem:[%s267] sm:$0xff]
                  %270 = vst [vmem:[%s268] sm:$0xff] %v269
                  %v271 = vld [vmem:[%s267 + $0x10] sm:$0xff]
                  %272 = vst [vmem:[%s268 + $0x8] sm:$0xff] %v271
                  %v273 = vld [vmem:[%s267 + $0x20] sm:$0xff]
                  %274 = vst [vmem:[%s268 + $0x10] sm:$0xff] %v273
                  %v275 = vld [vmem:[%s267 + $0x30] sm:$0xff]
                  %276 = vst [vmem:[%s268 + $0x18] sm:$0xff] %v275
                  %v277 = vld [vmem:[%s267 + $0x40] sm:$0xff]
                  %278 = vst [vmem:[%s268 + $0x20] sm:$0xff] %v277
                  %v279 = vld [vmem:[%s267 + $0x50] sm:$0xff]
                  %280 = vst [vmem:[%s268 + $0x28] sm:$0xff] %v279
                  %v281 = vld [vmem:[%s267 + $0x60] sm:$0xff]
                  %282 = vst [vmem:[%s268 + $0x30] sm:$0xff] %v281
                  %v283 = vld [vmem:[%s267 + $0x70] sm:$0xff]
                  %284 = vst [vmem:[%s268 + $0x38] sm:$0xff] %v283
                  %v285 = vld [vmem:[%s267 + $0x80] sm:$0xff]
                  %286 = vst [vmem:[%s268 + $0x40] sm:$0xff] %v285
                  %v287 = vld [vmem:[%s267 + $0x90] sm:$0xff]
                  %288 = vst [vmem:[%s268 + $0x48] sm:$0xff] %v287
                  %v289 = vld [vmem:[%s267 + $0xa0] sm:$0xff]
                  %290 = vst [vmem:[%s268 + $0x50] sm:$0xff] %v289
                  %v291 = vld [vmem:[%s267 + $0xb0] sm:$0xff]
                  %292 = vst [vmem:[%s268 + $0x58] sm:$0xff] %v291
                  %v293 = vld [vmem:[%s267 + $0xc0] sm:$0xff]
                  %294 = vst [vmem:[%s268 + $0x60] sm:$0xff] %v293
                  %v295 = vld [vmem:[%s267 + $0xd0] sm:$0xff]
                  %296 = vst [vmem:[%s268 + $0x68] sm:$0xff] %v295
                  %v297 = vld [vmem:[%s267 + $0xe0] sm:$0xff]
                  %298 = vst [vmem:[%s268 + $0x70] sm:$0xff] %v297
                  %v299 = vld [vmem:[%s267 + $0xf0] sm:$0xff]
                  %300 = vst [vmem:[%s268 + $0x78] sm:$0xff] %v299
                $region52: #{a_call__.39} parent=46 // loop_footer
                  %s266 = sadd.s32 1, %s262
                $region53: #{a_call__.39} parent=46 // loop_footer_branch
                  %261 = sbr.rel target = $region49
                $region54: #{a_call__.39} parent=46 // loop_exit
                  _
              $region47: #{a_call__.39} parent=31 // pred_fallthru
                _
              // Predicated region
              $region55: #{a_call__.39} parent=31 // pred_check
                _
              $region56: #{a_call__.39} parent=31 // pred_check_branch
                %302 = sbr.rel target = $region58
              $region57: #{a_call__.39} parent=31 // pred_region
                _
              $region58: #{a_call__.39} parent=31 // pred_fallthru
                _
            $region32: #{a_call__.39} parent=27 // pred_fallthru
              _
            // Predicated region
            $region33: #{a_call__.39} parent=27 // pred_check
              _
            $region34: #{a_call__.39} parent=27 // pred_check_branch
              %216 = sbr.rel target = $region36
            $region35: #{a_call__.39} parent=27 // pred_region
              %s218 = ssub.s32 256, 1
              loop: start=0, step=1, limit=1
              $region37: #{a_call__.39} parent=35 // loop_pre_header
                _
              $region38: #{a_call__.39} parent=35 // loop_header
                %s220 = sphi 0, %s224
                %p221 = scmp.ge.s32.totalorder %s220, 1
                %s225 = sphi %s210, %s210
                %s226 = sphi %s204, %s204
              $region39: #{a_call__.39} parent=35 // loop_header_branch
                %223 = sbr.rel (%p221) target = $region43
              $region40: #{a_call__.39} parent=35 // loop_body
                %v227 = vld [vmem:[%s225] sm:%s218]
                %228 = vst [vmem:[%s226] sm:%s218] %v227
                %v229 = vld [vmem:[%s225 + $0x10] sm:%s218]
                %230 = vst [vmem:[%s226 + $0x8] sm:%s218] %v229
                %v231 = vld [vmem:[%s225 + $0x20] sm:%s218]
                %232 = vst [vmem:[%s226 + $0x10] sm:%s218] %v231
                %v233 = vld [vmem:[%s225 + $0x30] sm:%s218]
                %234 = vst [vmem:[%s226 + $0x18] sm:%s218] %v233
                %v235 = vld [vmem:[%s225 + $0x40] sm:%s218]
                %236 = vst [vmem:[%s226 + $0x20] sm:%s218] %v235
                %v237 = vld [vmem:[%s225 + $0x50] sm:%s218]
                %238 = vst [vmem:[%s226 + $0x28] sm:%s218] %v237
                %v239 = vld [vmem:[%s225 + $0x60] sm:%s218]
                %240 = vst [vmem:[%s226 + $0x30] sm:%s218] %v239
                %v241 = vld [vmem:[%s225 + $0x70] sm:%s218]
                %242 = vst [vmem:[%s226 + $0x38] sm:%s218] %v241
                %v243 = vld [vmem:[%s225 + $0x80] sm:%s218]
                %244 = vst [vmem:[%s226 + $0x40] sm:%s218] %v243
                %v245 = vld [vmem:[%s225 + $0x90] sm:%s218]
                %246 = vst [vmem:[%s226 + $0x48] sm:%s218] %v245
                %v247 = vld [vmem:[%s225 + $0xa0] sm:%s218]
                %248 = vst [vmem:[%s226 + $0x50] sm:%s218] %v247
                %v249 = vld [vmem:[%s225 + $0xb0] sm:%s218]
                %250 = vst [vmem:[%s226 + $0x58] sm:%s218] %v249
                %v251 = vld [vmem:[%s225 + $0xc0] sm:%s218]
                %252 = vst [vmem:[%s226 + $0x60] sm:%s218] %v251
                %v253 = vld [vmem:[%s225 + $0xd0] sm:%s218]
                %254 = vst [vmem:[%s226 + $0x68] sm:%s218] %v253
                %v255 = vld [vmem:[%s225 + $0xe0] sm:%s218]
                %256 = vst [vmem:[%s226 + $0x70] sm:%s218] %v255
                %v257 = vld [vmem:[%s225 + $0xf0] sm:%s218]
                %258 = vst [vmem:[%s226 + $0x78] sm:%s218] %v257
              $region41: #{a_call__.39} parent=35 // loop_footer
                %s224 = sadd.s32 1, %s220
              $region42: #{a_call__.39} parent=35 // loop_footer_branch
                %219 = sbr.rel target = $region38
              $region43: #{a_call__.39} parent=35 // loop_exit
                _
            $region36: #{a_call__.39} parent=27 // pred_fallthru
              _
          $region28: #{a_call__.39} parent=23 // pred_fallthru
            _
          %303 = vnop
        $region24: #{a_call__.39} parent=19 // pred_fallthru
          _
        // Predicated region
        $region59: #{a_call__.39} parent=19 // pred_check
          %p304 = pneg %p105
        $region60: #{a_call__.39} parent=19 // pred_check_branch
          %306 = sbr.rel (%p304) target = $region62
        $region61: #{a_call__.39} parent=19 // pred_region
          %s307 = smul.u32 2, %s18
          %p308 = scmp.lt.s32.totalorder %s307, 3
          %s309 = scalar_select %p308, %s307, 3
          %s310 = scalar_lea.vmem %s2, %s309
          %s311 = smul.u32 2, %s18
        $region62: #{a_call__.39} parent=19 // pred_fallthru
          _
        // Predicated region
        $region63: #{a_call__.39} parent=19 // pred_check
          %p312 = pneg %p133
        $region64: #{a_call__.39} parent=19 // pred_check_branch
          %314 = sbr.rel (%p312) target = $region66
        $region65: #{a_call__.39} parent=19 // pred_region
          %s315 = sand.u32 %s123, 1
          %s316 = sand.u32 %s123, 1
          %s317 = smul.addr %s316, 32
          %s318 = scalar_lea.vmem [#allocation4], %s317
          %s319 = smul.u32 4, %s17
          %s320 = smul.u32 2, %s18
          %s321 = smul.addr %s319, 4
          %s322 = sadd.s32 %s320, %s321
          %s323 = smul.addr %s322, 4
          %s324 = scalar_lea.vmem %s3, %s323
          // Predicated region
          $region67: #{a_call__.39} parent=65 // pred_check
            _
          $region68: #{a_call__.39} parent=65 // pred_check_branch
            %326 = sbr.rel (0) target = $region70
          $region69: #{a_call__.39} parent=65 // pred_region
            // Predicated region
            $region71: #{a_call__.39} parent=69 // pred_check
              _
            $region72: #{a_call__.39} parent=69 // pred_check_branch
              %328 = sbr.rel (0) target = $region74
            $region73: #{a_call__.39} parent=69 // pred_region
              // Predicated region
              $region86: #{a_call__.39} parent=73 // pred_check
                _
              $region87: #{a_call__.39} parent=73 // pred_check_branch
                %350 = sbr.rel (0) target = $region89
              $region88: #{a_call__.39} parent=73 // pred_region
                loop: start=0, step=1, limit=1
                $region90: #{a_call__.39} parent=88 // loop_pre_header
                  _
                $region91: #{a_call__.39} parent=88 // loop_header
                  %s352 = sphi 0, %s356
                  %p353 = scmp.ge.s32.totalorder %s352, 1
                  %s357 = sphi %s324, %s324
                  %s358 = sphi %s318, %s318
                $region92: #{a_call__.39} parent=88 // loop_header_branch
                  %355 = sbr.rel (%p353) target = $region96
                $region93: #{a_call__.39} parent=88 // loop_body
                  %v359 = vld [vmem:[%s357] sm:$0xff]
                  %360 = vst [vmem:[%s358] sm:$0xff] %v359
                  %v361 = vld [vmem:[%s357 + $0x10] sm:$0xff]
                  %362 = vst [vmem:[%s358 + $0x8] sm:$0xff] %v361
                  %v363 = vld [vmem:[%s357 + $0x20] sm:$0xff]
                  %364 = vst [vmem:[%s358 + $0x10] sm:$0xff] %v363
                  %v365 = vld [vmem:[%s357 + $0x30] sm:$0xff]
                  %366 = vst [vmem:[%s358 + $0x18] sm:$0xff] %v365
                $region94: #{a_call__.39} parent=88 // loop_footer
                  %s356 = sadd.s32 1, %s352
                $region95: #{a_call__.39} parent=88 // loop_footer_branch
                  %351 = sbr.rel target = $region91
                $region96: #{a_call__.39} parent=88 // loop_exit
                  _
              $region89: #{a_call__.39} parent=73 // pred_fallthru
                _
              // Predicated region
              $region97: #{a_call__.39} parent=73 // pred_check
                _
              $region98: #{a_call__.39} parent=73 // pred_check_branch
                %368 = sbr.rel target = $region100
              $region99: #{a_call__.39} parent=73 // pred_region
                _
              $region100: #{a_call__.39} parent=73 // pred_fallthru
                _
            $region74: #{a_call__.39} parent=69 // pred_fallthru
              _
            // Predicated region
            $region75: #{a_call__.39} parent=69 // pred_check
              _
            $region76: #{a_call__.39} parent=69 // pred_check_branch
              %330 = sbr.rel target = $region78
            $region77: #{a_call__.39} parent=69 // pred_region
              %s332 = ssub.s32 256, 1
              loop: start=0, step=1, limit=1
              $region79: #{a_call__.39} parent=77 // loop_pre_header
                _
              $region80: #{a_call__.39} parent=77 // loop_header
                %s334 = sphi 0, %s338
                %p335 = scmp.ge.s32.totalorder %s334, 1
                %s339 = sphi %s324, %s324
                %s340 = sphi %s318, %s318
              $region81: #{a_call__.39} parent=77 // loop_header_branch
                %337 = sbr.rel (%p335) target = $region85
              $region82: #{a_call__.39} parent=77 // loop_body
                %v341 = vld [vmem:[%s339] sm:%s332]
                %342 = vst [vmem:[%s340] sm:%s332] %v341
                %v343 = vld [vmem:[%s339 + $0x10] sm:%s332]
                %344 = vst [vmem:[%s340 + $0x8] sm:%s332] %v343
                %v345 = vld [vmem:[%s339 + $0x20] sm:%s332]
                %346 = vst [vmem:[%s340 + $0x10] sm:%s332] %v345
                %v347 = vld [vmem:[%s339 + $0x30] sm:%s332]
                %348 = vst [vmem:[%s340 + $0x18] sm:%s332] %v347
              $region83: #{a_call__.39} parent=77 // loop_footer
                %s338 = sadd.s32 1, %s334
              $region84: #{a_call__.39} parent=77 // loop_footer_branch
                %333 = sbr.rel target = $region80
              $region85: #{a_call__.39} parent=77 // loop_exit
                _
            $region78: #{a_call__.39} parent=69 // pred_fallthru
              _
          $region70: #{a_call__.39} parent=65 // pred_fallthru
            _
          %369 = vnop
        $region66: #{a_call__.39} parent=19 // pred_fallthru
          _
      $region20: #{a_call__.39} parent=5 // pred_fallthru
        _
      %p370 = scmp.le.s32.totalorder 1, %s10
      %p371 = scmp.lt.s32.totalorder %s10, 3
      %p372 = pnand %p370, %p371
      %p373 = pneg %p372
      // Predicated region
      $region101: #{a_call__.39} parent=5 // pred_check
        _
      $region102: #{a_call__.39} parent=5 // pred_check_branch
        %375 = sbr.rel (%p372) target = $region104
      $region103: #{a_call__.39} parent=5 // pred_region
        %s376 = ssub.s32 %s10, 1
        %s377 = sand.u32 %s72, 1
        %s378 = sand.u32 %s72, 1
        %s379 = smul.addr %s378, 128
        %s380 = scalar_lea.vmem [#allocation3], %s379
        // Predicated region
        $region105: #{a_call__.39} parent=103 // pred_check
          %p381 = pneg %p85
        $region106: #{a_call__.39} parent=103 // pred_check_branch
          %383 = sbr.rel (%p381) target = $region108
        $region107: #{a_call__.39} parent=103 // pred_region
          _
        $region108: #{a_call__.39} parent=103 // pred_fallthru
          _
        %s384 = sand.u32 %s126, 1
        %s385 = sand.u32 %s126, 1
        %s386 = smul.addr %s385, 32
        %s387 = scalar_lea.vmem [#allocation4], %s386
        // Predicated region
        $region109: #{a_call__.39} parent=103 // pred_check
          %p388 = pneg %p139
        $region110: #{a_call__.39} parent=103 // pred_check_branch
          %390 = sbr.rel (%p388) target = $region112
        $region111: #{a_call__.39} parent=103 // pred_region
          _
        $region112: #{a_call__.39} parent=103 // pred_fallthru
          _
        %s391 = smul.u32 4, %s20
        %p392 = scmp.lt.s32.totalorder %s391, 3
        %s393 = scalar_select %p392, %s391, 3
        %p394 = scmp.lt.s32.totalorder %s22, 0
        %s395 = scalar_select %p394, %s22, 0
        %s396 = sadd.s32 %s395, %s393
        %s397 = smul.addr %s396, 4
        %s398 = scalar_lea.vmem %s0, %s397
        %p399 = pneg %p57
        %p400 = pneg %p54
        %s401 = sand.u32 %s72, 1
        %s402 = sand.u32 %s72, 1
        %s403 = smul.addr %s402, 128
        %s404 = scalar_lea.vmem [#allocation3], %s403
        %p405 = pneg %p85
        %p406 = pneg %p82
        %s407 = smul.u32 2, %s21
        %p408 = scmp.lt.s32.totalorder %s407, 3
        %s409 = scalar_select %p408, %s407, 3
        %s410 = scalar_lea.vmem %s2, %s409
        %p411 = pneg %p111
        %p412 = pneg %p108
        %s413 = sand.u32 %s126, 1
        %s414 = sand.u32 %s126, 1
        %s415 = smul.addr %s414, 32
        %s416 = scalar_lea.vmem [#allocation4], %s415
        %p417 = pneg %p139
        %p418 = pneg %p136
        %p419 = pneg %p167
        %p420 = pneg %p164
        %s421 = sand.u32 %s154, 1
        %s422 = sand.u32 %s154, 1
        %s423 = smul.addr %s422, 32
        %s424 = scalar_lea.vmem [#allocation5], %s423
        %s425 = smul.u32 4, %s20
        %p426 = scmp.lt.s32.totalorder %s425, 3
        %s427 = scalar_select %p426, %s425, 3
        %p428 = scmp.lt.s32.totalorder %s22, 0
        %s429 = scalar_select %p428, %s22, 0
        %s430 = sadd.s32 %s429, %s427
        %s431 = smul.addr %s430, 4
        %s432 = scalar_lea.vmem %s0, %s431
        %s433 = smul.u32 4, %s20
        %s434 = smul.u32 16, %s22
        %s435 = smul.u32 2, %s21
        %s436 = smul.u32 2, %s21
        %p437 = scmp.lt.s32.totalorder %s436, 3
        %s438 = scalar_select %p437, %s436, 3
        %s439 = scalar_lea.vmem %s2, %s438
        %s440 = smul.u32 2, %s21
        %s441 = smul.u32 4, %s20
        %s442 = smul.u32 2, %s21
        %s443 = smul.u32 4, %s20
        %s444 = smul.u32 2, %s21
        %p446 = scmp.eq.s32.totalorder %s22, 0
        // Predicated region
        $region113: #{a_call__.39} parent=103 // pred_check
          %p447 = pneg %p446
        $region114: #{a_call__.39} parent=103 // pred_check_branch
          %449 = sbr.rel (%p447) target = $region116
        $region115: #{a_call__.39} parent=103 // pred_region
          %450 = vst [vmem:[#allocation2] sm:$0xff] 0.0
          %451 = vst [vmem:[#allocation2 + $0x8] sm:$0xff] 0.0
          %452 = vst [vmem:[#allocation2 + $0x10] sm:$0xff] 0.0
          %453 = vst [vmem:[#allocation2 + $0x18] sm:$0xff] 0.0
          %454 = vst [vmem:[#allocation2 + $0x20] sm:$0xff] 0.0
          %455 = vst [vmem:[#allocation2 + $0x28] sm:$0xff] 0.0
          %456 = vst [vmem:[#allocation2 + $0x30] sm:$0xff] 0.0
          %457 = vst [vmem:[#allocation2 + $0x38] sm:$0xff] 0.0
        $region116: #{a_call__.39} parent=103 // pred_fallthru
          _
        %v458 = vld [vmem:[#allocation2] sm:$0xff]
        %v459 = vld [vmem:[#allocation2 + $0x8] sm:$0xff]
        %v460 = vld [vmem:[#allocation2 + $0x10] sm:$0xff]
        %v461 = vld [vmem:[#allocation2 + $0x18] sm:$0xff]
        %v462 = vld [vmem:[#allocation2 + $0x20] sm:$0xff]
        %v463 = vld [vmem:[#allocation2 + $0x28] sm:$0xff]
        %v464 = vld [vmem:[#allocation2 + $0x30] sm:$0xff]
        %v465 = vld [vmem:[#allocation2 + $0x38] sm:$0xff]
        %v466 = vld [vmem:[%s432] sm:$0xf]
        %v467 = vld [vmem:[%s432 + $0x4] sm:$0xf]
        %v468 = vld [vmem:[%s432 + $0x8] sm:$0xf]
        %v469 = vld [vmem:[%s432 + $0xc] sm:$0xf]
        %v470 = vld [vmem:[%s380] sm:$0xff]
        %v471 = vld [vmem:[%s380 + $0x8] sm:$0xff]
        %v472 = vld [vmem:[%s380 + $0x10] sm:$0xff]
        %v473 = vld [vmem:[%s380 + $0x18] sm:$0xff]
        %v474 = vld [vmem:[%s380 + $0x20] sm:$0xff]
        %v475 = vld [vmem:[%s380 + $0x28] sm:$0xff]
        %v476 = vld [vmem:[%s380 + $0x30] sm:$0xff]
        %v477 = vld [vmem:[%s380 + $0x38] sm:$0xff]
        %v478 = vld [vmem:[%s380 + $0x40] sm:$0xff]
        %v479 = vld [vmem:[%s380 + $0x48] sm:$0xff]
        %v480 = vld [vmem:[%s380 + $0x50] sm:$0xff]
        %v481 = vld [vmem:[%s380 + $0x58] sm:$0xff]
        %v482 = vld [vmem:[%s380 + $0x60] sm:$0xff]
        %v483 = vld [vmem:[%s380 + $0x68] sm:$0xff]
        %v484 = vld [vmem:[%s380 + $0x70] sm:$0xff]
        %v485 = vld [vmem:[%s380 + $0x78] sm:$0xff]
        %v490 = vunpack.c.l.b16 %v466
        %v491 = vunpack.c.l.b16 %v467
        %v492 = vunpack.c.l.b16 %v468
        %v493 = vunpack.c.l.b16 %v469
        %v494 = vpack.c.b16 %v491, %v490
        %v495 = vpack.c.b16 %v493, %v492
        %v514 = vunpack.c.l.b16 %v470
        %v515 = vunpack.c.h.b16 %v470
        %v516 = vunpack.c.l.b16 %v471
        %v517 = vunpack.c.h.b16 %v471
        %v518 = vunpack.c.l.b16 %v472
        %v519 = vunpack.c.h.b16 %v472
        %v520 = vunpack.c.l.b16 %v473
        %v521 = vunpack.c.h.b16 %v473
        %v522 = vunpack.c.l.b16 %v474
        %v523 = vunpack.c.h.b16 %v474
        %v524 = vunpack.c.l.b16 %v475
        %v525 = vunpack.c.h.b16 %v475
        %v526 = vunpack.c.l.b16 %v476
        %v527 = vunpack.c.h.b16 %v476
        %v528 = vunpack.c.l.b16 %v477
        %v529 = vunpack.c.h.b16 %v477
        %v530 = vunpack.c.l.b16 %v478
        %v531 = vunpack.c.h.b16 %v478
        %v532 = vunpack.c.l.b16 %v479
        %v533 = vunpack.c.h.b16 %v479
        %v534 = vunpack.c.l.b16 %v480
        %v535 = vunpack.c.h.b16 %v480
        %v536 = vunpack.c.l.b16 %v481
        %v537 = vunpack.c.h.b16 %v481
        %v538 = vunpack.c.l.b16 %v482
        %v539 = vunpack.c.h.b16 %v482
        %v540 = vunpack.c.l.b16 %v483
        %v541 = vunpack.c.h.b16 %v483
        %v542 = vunpack.c.l.b16 %v484
        %v543 = vunpack.c.h.b16 %v484
        %v544 = vunpack.c.l.b16 %v485
        %v545 = vunpack.c.h.b16 %v485
        %v546 = vpack.c.b16 %v516, %v514
        %v547 = vpack.c.b16 %v517, %v515
        %v548 = vpack.c.b16 %v520, %v518
        %v549 = vpack.c.b16 %v521, %v519
        %v550 = vpack.c.b16 %v524, %v522
        %v551 = vpack.c.b16 %v525, %v523
        %v552 = vpack.c.b16 %v528, %v526
        %v553 = vpack.c.b16 %v529, %v527
        %v554 = vpack.c.b16 %v532, %v530
        %v555 = vpack.c.b16 %v533, %v531
        %v556 = vpack.c.b16 %v536, %v534
        %v557 = vpack.c.b16 %v537, %v535
        %v558 = vpack.c.b16 %v540, %v538
        %v559 = vpack.c.b16 %v541, %v539
        %v560 = vpack.c.b16 %v544, %v542
        %v561 = vpack.c.b16 %v545, %v543
        %578 = vmatprep.subr.bf16.mxu0 %v561
        %579 = vmatpush1.bf16.msra.mxu0 %v560
        %580 = vmatprep.subr.bf16.mxu0 %v559
        %581 = vmatpush1.bf16.msra.mxu0 %v558
        %582 = vmatprep.subr.bf16.mxu0 %v557
        %583 = vmatpush1.bf16.msra.mxu0 %v556
        %584 = vmatprep.subr.bf16.mxu0 %v555
        %585 = vmatpush1.bf16.msra.mxu0 %v554
        %586 = vmatprep.subr.bf16.mxu0 %v553
        %587 = vmatpush1.bf16.msra.mxu0 %v552
        %588 = vmatprep.subr.bf16.mxu0 %v551
        %589 = vmatpush1.bf16.msra.mxu0 %v550
        %590 = vmatprep.subr.bf16.mxu0 %v549
        %591 = vmatpush1.bf16.msra.mxu0 %v548
        %592 = vmatprep.subr.bf16.mxu0 %v547
        %593 = vmatpush1.bf16.msra.mxu0 %v546
        %594 = vmatprep.subr.bf16.mxu0 0
        %595 = vmatpush2.bf16.msra.mxu0 0
        %596 = vmatprep.subr.bf16.mxu0 0
        %597 = vmatpush2.bf16.msra.mxu0 0
        %598 = vmatprep.subr.bf16.mxu0 0
        %599 = vmatpush2.bf16.msra.mxu0 0
        %600 = vmatprep.subr.bf16.mxu0 0
        %601 = vmatpush2.bf16.msra.mxu0 0
        %602 = vmatprep.subr.bf16.mxu0 0
        %603 = vmatpush2.bf16.msra.mxu0 0
        %604 = vmatprep.subr.bf16.mxu0 0
        %605 = vmatpush2.bf16.msra.mxu0 0
        %606 = vmatprep.subr.bf16.mxu0 0
        %607 = vmatpush2.bf16.msra.mxu0 0
        %608 = vmatprep.subr.bf16.mxu0 0
        %609 = vmatpush2.bf16.msra.mxu0 0
        %610 = vmatprep.mubr.bf16.mxu0 0
        %611 = vmatmul.mubr.bf16.gmra.mxu0 %v494
        %v612 = vpop.f32.mrf.mxu0
        %v613 = vadd.f32 0.0, %v612
        %v614 = vpop.f32.mrf.mxu0
        %v615 = vadd.f32 0.0, %v614
        %v616 = vpop.f32.mrf.mxu0
        %v617 = vadd.f32 0.0, %v616
        %v618 = vpop.f32.mrf.mxu0
        %v619 = vadd.f32 0.0, %v618
        %620 = vmatprep.mubr.bf16.mxu0 0
        %621 = vmatmul.mubr.bf16.gmra.mxu0 %v495
        %v622 = vpop.f32.mrf.mxu0
        %v623 = vadd.f32 0.0, %v622
        %v624 = vpop.f32.mrf.mxu0
        %v625 = vadd.f32 0.0, %v624
        %v626 = vpop.f32.mrf.mxu0
        %v627 = vadd.f32 0.0, %v626
        %v628 = vpop.f32.mrf.mxu0
        %v629 = vadd.f32 0.0, %v628
        %630 = vdwg.mxu0
        %v631 = vadd.f32 %v458, %v613
        %v632 = vadd.f32 %v459, %v615
        %v633 = vadd.f32 %v460, %v617
        %v634 = vadd.f32 %v461, %v619
        %v635 = vadd.f32 %v462, %v623
        %v636 = vadd.f32 %v463, %v625
        %v637 = vadd.f32 %v464, %v627
        %v638 = vadd.f32 %v465, %v629
        %639 = vst [vmem:[#allocation2] sm:$0xff] %v631
        %640 = vst [vmem:[#allocation2 + $0x8] sm:$0xff] %v632
        %641 = vst [vmem:[#allocation2 + $0x10] sm:$0xff] %v633
        %642 = vst [vmem:[#allocation2 + $0x18] sm:$0xff] %v634
        %643 = vst [vmem:[#allocation2 + $0x20] sm:$0xff] %v635
        %644 = vst [vmem:[#allocation2 + $0x28] sm:$0xff] %v636
        %645 = vst [vmem:[#allocation2 + $0x30] sm:$0xff] %v637
        %646 = vst [vmem:[#allocation2 + $0x38] sm:$0xff] %v638
        // Predicated region
        $region117: #{a_call__.39} parent=103 // pred_check
          %p647 = pneg %p446
        $region118: #{a_call__.39} parent=103 // pred_check_branch
          %649 = sbr.rel (%p647) target = $region120
        $region119: #{a_call__.39} parent=103 // pred_region
          %v650 = vld [vmem:[#allocation2] sm:$0xff]
          %v651 = vld [vmem:[#allocation2 + $0x8] sm:$0xff]
          %v652 = vld [vmem:[#allocation2 + $0x10] sm:$0xff]
          %v653 = vld [vmem:[#allocation2 + $0x18] sm:$0xff]
          %v654 = vld [vmem:[#allocation2 + $0x20] sm:$0xff]
          %v655 = vld [vmem:[#allocation2 + $0x28] sm:$0xff]
          %v656 = vld [vmem:[#allocation2 + $0x30] sm:$0xff]
          %v657 = vld [vmem:[#allocation2 + $0x38] sm:$0xff]
          %v658 = vld [vmem:[%s439] sm:$0x3]
          %v660 = vlaneseq
          %v661 = vshrl.u32 %v660, 7
          %v662 = vsub.s32 0, %v661
          %v663 = vrot.slane %v658, %v662
          %v664 = vlaneseq
          %v665 = vshrl.u32 %v664, 7
          %v666 = vsub.s32 1, %v665
          %v667 = vrot.slane %v658, %v666
          %v670 = vadd.f32 %v650, %v663
          %v671 = vadd.f32 %v651, %v667
          %v672 = vadd.f32 %v652, %v663
          %v673 = vadd.f32 %v653, %v667
          %v674 = vadd.f32 %v654, %v663
          %v675 = vadd.f32 %v655, %v667
          %v676 = vadd.f32 %v656, %v663
          %v677 = vadd.f32 %v657, %v667
          %v678 = vld [vmem:[%s387] sm:$0xff]
          %v679 = vld [vmem:[%s387 + $0x8] sm:$0xff]
          %v680 = vld [vmem:[%s387 + $0x10] sm:$0xff]
          %v681 = vld [vmem:[%s387 + $0x18] sm:$0xff]
          %v682 = vunpack.c.l.bf16 %v678
          %v683 = vunpack.c.h.bf16 %v678
          %v684 = vunpack.c.l.bf16 %v679
          %v685 = vunpack.c.h.bf16 %v679
          %v686 = vunpack.c.l.bf16 %v680
          %v687 = vunpack.c.h.bf16 %v680
          %v688 = vunpack.c.l.bf16 %v681
          %v689 = vunpack.c.h.bf16 %v681
          %v690 = vadd.f32 %v670, %v682
          %v691 = vadd.f32 %v671, %v683
          %v692 = vadd.f32 %v672, %v684
          %v693 = vadd.f32 %v673, %v685
          %v694 = vadd.f32 %v674, %v686
          %v695 = vadd.f32 %v675, %v687
          %v696 = vadd.f32 %v676, %v688
          %v697 = vadd.f32 %v677, %v689
          %v698 = vmax.f32 %v690, 0.0
          %v699 = vmax.f32 %v691, 0.0
          %v700 = vmax.f32 %v692, 0.0
          %v701 = vmax.f32 %v693, 0.0
          %v702 = vmax.f32 %v694, 0.0
          %v703 = vmax.f32 %v695, 0.0
          %v704 = vmax.f32 %v696, 0.0
          %v705 = vmax.f32 %v697, 0.0
          %v706 = vpack.c.bf16 %v700, %v698
          %v707 = vpack.c.bf16 %v701, %v699
          %v708 = vpack.c.bf16 %v704, %v702
          %v709 = vpack.c.bf16 %v705, %v703
          %v714 = vunpack.c.l.b16 %v706
          %v715 = vunpack.c.l.b16 %v707
          %v716 = vunpack.c.h.b16 %v706
          %v717 = vunpack.c.h.b16 %v707
          %v718 = vunpack.c.l.b16 %v708
          %v719 = vunpack.c.l.b16 %v709
          %v720 = vunpack.c.h.b16 %v708
          %v721 = vunpack.c.h.b16 %v709
          %v722 = vpack.c.b16 %v715, %v714
          %v723 = vpack.c.b16 %v717, %v716
          %v724 = vpack.c.b16 %v719, %v718
          %v725 = vpack.c.b16 %v721, %v720
          %730 = vst [vmem:[%s424] sm:$0xff] %v722
          %731 = vst [vmem:[%s424 + $0x8] sm:$0xff] %v723
          %732 = vst [vmem:[%s424 + $0x10] sm:$0xff] %v724
          %733 = vst [vmem:[%s424 + $0x18] sm:$0xff] %v725
        $region120: #{a_call__.39} parent=103 // pred_fallthru
          _
        %s734 = sand.u32 %s154, 1
        %s735 = sand.u32 %s154, 1
        %s736 = smul.addr %s735, 32
        %s737 = scalar_lea.vmem [#allocation5], %s736
        // Predicated region
        $region121: #{a_call__.39} parent=103 // pred_check
          %p738 = pneg %p164
        $region122: #{a_call__.39} parent=103 // pred_check_branch
          %740 = sbr.rel (%p738) target = $region124
        $region123: #{a_call__.39} parent=103 // pred_region
          %s741 = smul.u32 4, %s20
          %s742 = smul.u32 2, %s21
          %s743 = smul.addr %s741, 4
          %s744 = sadd.s32 %s742, %s743
          %s745 = smul.addr %s744, 4
          %s746 = scalar_lea.vmem %s4, %s745
          // Predicated region
          $region125: #{a_call__.39} parent=123 // pred_check
            _
          $region126: #{a_call__.39} parent=123 // pred_check_branch
            %748 = sbr.rel (0) target = $region128
          $region127: #{a_call__.39} parent=123 // pred_region
            // Predicated region
            $region129: #{a_call__.39} parent=127 // pred_check
              _
            $region130: #{a_call__.39} parent=127 // pred_check_branch
              %750 = sbr.rel (0) target = $region132
            $region131: #{a_call__.39} parent=127 // pred_region
              // Predicated region
              $region144: #{a_call__.39} parent=131 // pred_check
                _
              $region145: #{a_call__.39} parent=131 // pred_check_branch
                %772 = sbr.rel (0) target = $region147
              $region146: #{a_call__.39} parent=131 // pred_region
                loop: start=0, step=1, limit=1
                $region148: #{a_call__.39} parent=146 // loop_pre_header
                  _
                $region149: #{a_call__.39} parent=146 // loop_header
                  %s774 = sphi 0, %s778
                  %p775 = scmp.ge.s32.totalorder %s774, 1
                  %s779 = sphi %s737, %s737
                  %s780 = sphi %s746, %s746
                $region150: #{a_call__.39} parent=146 // loop_header_branch
                  %777 = sbr.rel (%p775) target = $region154
                $region151: #{a_call__.39} parent=146 // loop_body
                  %v781 = vld [vmem:[%s779] sm:$0xff]
                  %782 = vst [vmem:[%s780] sm:$0xff] %v781
                  %v783 = vld [vmem:[%s779 + $0x8] sm:$0xff]
                  %784 = vst [vmem:[%s780 + $0x10] sm:$0xff] %v783
                  %v785 = vld [vmem:[%s779 + $0x10] sm:$0xff]
                  %786 = vst [vmem:[%s780 + $0x20] sm:$0xff] %v785
                  %v787 = vld [vmem:[%s779 + $0x18] sm:$0xff]
                  %788 = vst [vmem:[%s780 + $0x30] sm:$0xff] %v787
                $region152: #{a_call__.39} parent=146 // loop_footer
                  %s778 = sadd.s32 1, %s774
                $region153: #{a_call__.39} parent=146 // loop_footer_branch
                  %773 = sbr.rel target = $region149
                $region154: #{a_call__.39} parent=146 // loop_exit
                  _
              $region147: #{a_call__.39} parent=131 // pred_fallthru
                _
              // Predicated region
              $region155: #{a_call__.39} parent=131 // pred_check
                _
              $region156: #{a_call__.39} parent=131 // pred_check_branch
                %790 = sbr.rel target = $region158
              $region157: #{a_call__.39} parent=131 // pred_region
                _
              $region158: #{a_call__.39} parent=131 // pred_fallthru
                _
            $region132: #{a_call__.39} parent=127 // pred_fallthru
              _
            // Predicated region
            $region133: #{a_call__.39} parent=127 // pred_check
              _
            $region134: #{a_call__.39} parent=127 // pred_check_branch
              %752 = sbr.rel target = $region136
            $region135: #{a_call__.39} parent=127 // pred_region
              %s754 = ssub.s32 256, 1
              loop: start=0, step=1, limit=1
              $region137: #{a_call__.39} parent=135 // loop_pre_header
                _
              $region138: #{a_call__.39} parent=135 // loop_header
                %s756 = sphi 0, %s760
                %p757 = scmp.ge.s32.totalorder %s756, 1
                %s761 = sphi %s737, %s737
                %s762 = sphi %s746, %s746
              $region139: #{a_call__.39} parent=135 // loop_header_branch
                %759 = sbr.rel (%p757) target = $region143
              $region140: #{a_call__.39} parent=135 // loop_body
                %v763 = vld [vmem:[%s761] sm:%s754]
                %764 = vst [vmem:[%s762] sm:%s754] %v763
                %v765 = vld [vmem:[%s761 + $0x8] sm:%s754]
                %766 = vst [vmem:[%s762 + $0x10] sm:%s754] %v765
                %v767 = vld [vmem:[%s761 + $0x10] sm:%s754]
                %768 = vst [vmem:[%s762 + $0x20] sm:%s754] %v767
                %v769 = vld [vmem:[%s761 + $0x18] sm:%s754]
                %770 = vst [vmem:[%s762 + $0x30] sm:%s754] %v769
              $region141: #{a_call__.39} parent=135 // loop_footer
                %s760 = sadd.s32 1, %s756
              $region142: #{a_call__.39} parent=135 // loop_footer_branch
                %755 = sbr.rel target = $region138
              $region143: #{a_call__.39} parent=135 // loop_exit
                _
            $region136: #{a_call__.39} parent=127 // pred_fallthru
              _
          $region128: #{a_call__.39} parent=123 // pred_fallthru
            _
          %791 = vnop
        $region124: #{a_call__.39} parent=103 // pred_fallthru
          _
      $region104: #{a_call__.39} parent=5 // pred_fallthru
        _
      %p792 = scmp.le.s32.totalorder 2, %s10
      // Predicated region
      $region159: #{a_call__.39} parent=5 // pred_check
        %p793 = pneg %p792
      $region160: #{a_call__.39} parent=5 // pred_check_branch
        %795 = sbr.rel (%p793) target = $region162
      $region161: #{a_call__.39} parent=5 // pred_region
        %s796 = ssub.s32 %s10, 2
        // Predicated region
        $region163: #{a_call__.39} parent=161 // pred_check
          %p797 = pneg %p170
        $region164: #{a_call__.39} parent=161 // pred_check_branch
          %799 = sbr.rel (%p797) target = $region166
        $region165: #{a_call__.39} parent=161 // pred_region
          %s800 = sand.u32 %s155, 1
          %s801 = sand.u32 %s155, 1
          %s802 = smul.addr %s801, 32
          %s803 = scalar_lea.vmem [#allocation5], %s802
        $region166: #{a_call__.39} parent=161 // pred_fallthru
          _
      $region162: #{a_call__.39} parent=5 // pred_fallthru
        _
    $region6: #{a_call__.39} parent=1 // loop_footer
      %s14 = sadd.s32 1, %s10
    $region7: #{a_call__.39} parent=1 // loop_footer_branch
      %9 = sbr.rel target = $region3
    $region8: #{a_call__.39} parent=1 // loop_exit
      _

// kernel: a_call__.40
$region0: #{a_call__.40}
  #allocation0 [shape = 'u32[]', space=smem, size = 0x4, offset = 0x4, fixed_abs, tag = 'smem constant byte address 0x4 - core index']
  #allocation1 [shape = 'u32[144,128]{1,0:T(1,128)}', space=vmem, size = 0x12000, scoped, tag = 'internal scratch']
  #allocation2 [shape = 'f32[32,128]{1,0:T(8,128)}', space=vmem, size = 0x4000, scoped, tag = 'scratch operand']
  %s0 = inlined_call_operand.vmem [shape: bf16[32,512], index: 0, kind: input, shape index: {}]
  %s1 = inlined_call_operand.vmem [shape: bf16[512,128], index: 1, kind: input, shape index: {}]
  %s2 = inlined_call_operand.vmem [shape: f32[1,128], index: 2, kind: input, shape index: {}]
  %s3 = inlined_call_operand.vmem [shape: bf16[32,128], index: 3, kind: output, shape index: {}]
  %s4 = sld [smem:[#allocation0]]
  $region30: #{a_call__.40} parent=0
    _
  %s6 = ssub.s32 1, %s4
  %s7 = scalar_select 0, %s6, %s4
  // Predicated region
  $region2: #{a_call__.40} parent=0 // pred_check
    _
  $region3: #{a_call__.40} parent=0 // pred_check_branch
    %9 = sbr.rel (0) target = $region5
  $region4: #{a_call__.40} parent=0 // pred_region
    _
  $region5: #{a_call__.40} parent=0 // pred_fallthru
    _
  // Predicated region
  $region6: #{a_call__.40} parent=0 // pred_check
    _
  $region7: #{a_call__.40} parent=0 // pred_check_branch
    %11 = sbr.rel (0) target = $region9
  $region8: #{a_call__.40} parent=0 // pred_region
    _
  $region9: #{a_call__.40} parent=0 // pred_fallthru
    _
  // Predicated region
  $region10: #{a_call__.40} parent=0 // pred_check
    _
  $region11: #{a_call__.40} parent=0 // pred_check_branch
    %13 = sbr.rel (0) target = $region13
  $region12: #{a_call__.40} parent=0 // pred_region
    _
  $region13: #{a_call__.40} parent=0 // pred_fallthru
    _
  %p15 = scmp.eq.s32.totalorder 0, 0
  // Predicated region
  $region14: #{a_call__.40} parent=0 // pred_check
    %p16 = pneg %p15
  $region15: #{a_call__.40} parent=0 // pred_check_branch
    %18 = sbr.rel (%p16) target = $region17
  $region16: #{a_call__.40} parent=0 // pred_region
    %19 = vst [vmem:[#allocation2] sm:$0xff] 0.0
    %20 = vst [vmem:[#allocation2 + $0x8] sm:$0xff] 0.0
    %21 = vst [vmem:[#allocation2 + $0x10] sm:$0xff] 0.0
    %22 = vst [vmem:[#allocation2 + $0x18] sm:$0xff] 0.0
  $region17: #{a_call__.40} parent=0 // pred_fallthru
    _
  %v23 = vld [vmem:[#allocation2] sm:$0xff]
  %v24 = vld [vmem:[#allocation2 + $0x8] sm:$0xff]
  %v25 = vld [vmem:[#allocation2 + $0x10] sm:$0xff]
  %v26 = vld [vmem:[#allocation2 + $0x18] sm:$0xff]
  %v27 = vld [vmem:[%s0] sm:$0xff]
  %v28 = vld [vmem:[%s0 + $0x8] sm:$0xff]
  %v29 = vld [vmem:[%s0 + $0x10] sm:$0xff]
  %v30 = vld [vmem:[%s0 + $0x18] sm:$0xff]
  %v31 = vld [vmem:[%s0 + $0x20] sm:$0xff]
  %v32 = vld [vmem:[%s0 + $0x28] sm:$0xff]
  %v33 = vld [vmem:[%s0 + $0x30] sm:$0xff]
  %v34 = vld [vmem:[%s0 + $0x38] sm:$0xff]
  %v35 = vld [vmem:[%s1] sm:$0xf]
  %v36 = vld [vmem:[%s1 + $0x4] sm:$0xf]
  %v37 = vld [vmem:[%s1 + $0x8] sm:$0xf]
  %v38 = vld [vmem:[%s1 + $0xc] sm:$0xf]
  %v39 = vld [vmem:[%s1 + $0x10] sm:$0xf]
  %v40 = vld [vmem:[%s1 + $0x14] sm:$0xf]
  %v41 = vld [vmem:[%s1 + $0x18] sm:$0xf]
  %v42 = vld [vmem:[%s1 + $0x1c] sm:$0xf]
  %v43 = vld [vmem:[%s1 + $0x20] sm:$0xf]
  %v44 = vld [vmem:[%s1 + $0x24] sm:$0xf]
  %v45 = vld [vmem:[%s1 + $0x28] sm:$0xf]
  %v46 = vld [vmem:[%s1 + $0x2c] sm:$0xf]
  %v47 = vld [vmem:[%s1 + $0x30] sm:$0xf]
  %v48 = vld [vmem:[%s1 + $0x34] sm:$0xf]
  %v49 = vld [vmem:[%s1 + $0x38] sm:$0xf]
  %v50 = vld [vmem:[%s1 + $0x3c] sm:$0xf]
  %v51 = vld [vmem:[%s1 + $0x40] sm:$0xf]
  %v52 = vld [vmem:[%s1 + $0x44] sm:$0xf]
  %v53 = vld [vmem:[%s1 + $0x48] sm:$0xf]
  %v54 = vld [vmem:[%s1 + $0x4c] sm:$0xf]
  %v55 = vld [vmem:[%s1 + $0x50] sm:$0xf]
  %v56 = vld [vmem:[%s1 + $0x54] sm:$0xf]
  %v57 = vld [vmem:[%s1 + $0x58] sm:$0xf]
  %v58 = vld [vmem:[%s1 + $0x5c] sm:$0xf]
  %v59 = vld [vmem:[%s1 + $0x60] sm:$0xf]
  %v60 = vld [vmem:[%s1 + $0x64] sm:$0xf]
  %v61 = vld [vmem:[%s1 + $0x68] sm:$0xf]
  %v62 = vld [vmem:[%s1 + $0x6c] sm:$0xf]
  %v63 = vld [vmem:[%s1 + $0x70] sm:$0xf]
  %v64 = vld [vmem:[%s1 + $0x74] sm:$0xf]
  %v65 = vld [vmem:[%s1 + $0x78] sm:$0xf]
  %v66 = vld [vmem:[%s1 + $0x7c] sm:$0xf]
  %v67 = vld [vmem:[%s1 + $0x80] sm:$0xf]
  %v68 = vld [vmem:[%s1 + $0x84] sm:$0xf]
  %v69 = vld [vmem:[%s1 + $0x88] sm:$0xf]
  %v70 = vld [vmem:[%s1 + $0x8c] sm:$0xf]
  %v71 = vld [vmem:[%s1 + $0x90] sm:$0xf]
  %v72 = vld [vmem:[%s1 + $0x94] sm:$0xf]
  %v73 = vld [vmem:[%s1 + $0x98] sm:$0xf]
  %v74 = vld [vmem:[%s1 + $0x9c] sm:$0xf]
  %v75 = vld [vmem:[%s1 + $0xa0] sm:$0xf]
  %v76 = vld [vmem:[%s1 + $0xa4] sm:$0xf]
  %v77 = vld [vmem:[%s1 + $0xa8] sm:$0xf]
  %v78 = vld [vmem:[%s1 + $0xac] sm:$0xf]
  %v79 = vld [vmem:[%s1 + $0xb0] sm:$0xf]
  %v80 = vld [vmem:[%s1 + $0xb4] sm:$0xf]
  %v81 = vld [vmem:[%s1 + $0xb8] sm:$0xf]
  %v82 = vld [vmem:[%s1 + $0xbc] sm:$0xf]
  %v83 = vld [vmem:[%s1 + $0xc0] sm:$0xf]
  %v84 = vld [vmem:[%s1 + $0xc4] sm:$0xf]
  %v85 = vld [vmem:[%s1 + $0xc8] sm:$0xf]
  %v86 = vld [vmem:[%s1 + $0xcc] sm:$0xf]
  %v87 = vld [vmem:[%s1 + $0xd0] sm:$0xf]
  %v88 = vld [vmem:[%s1 + $0xd4] sm:$0xf]
  %v89 = vld [vmem:[%s1 + $0xd8] sm:$0xf]
  %v90 = vld [vmem:[%s1 + $0xdc] sm:$0xf]
  %v91 = vld [vmem:[%s1 + $0xe0] sm:$0xf]
  %v92 = vld [vmem:[%s1 + $0xe4] sm:$0xf]
  %v93 = vld [vmem:[%s1 + $0xe8] sm:$0xf]
  %v94 = vld [vmem:[%s1 + $0xec] sm:$0xf]
  %v95 = vld [vmem:[%s1 + $0xf0] sm:$0xf]
  %v96 = vld [vmem:[%s1 + $0xf4] sm:$0xf]
  %v97 = vld [vmem:[%s1 + $0xf8] sm:$0xf]
  %v98 = vld [vmem:[%s1 + $0xfc] sm:$0xf]
  %v107 = vunpack.c.l.b16 %v27
  %v108 = vunpack.c.h.b16 %v27
  %v109 = vunpack.c.l.b16 %v28
  %v110 = vunpack.c.h.b16 %v28
  %v111 = vunpack.c.l.b16 %v29
  %v112 = vunpack.c.h.b16 %v29
  %v113 = vunpack.c.l.b16 %v30
  %v114 = vunpack.c.h.b16 %v30
  %v115 = vunpack.c.l.b16 %v31
  %v116 = vunpack.c.h.b16 %v31
  %v117 = vunpack.c.l.b16 %v32
  %v118 = vunpack.c.h.b16 %v32
  %v119 = vunpack.c.l.b16 %v33
  %v120 = vunpack.c.h.b16 %v33
  %v121 = vunpack.c.l.b16 %v34
  %v122 = vunpack.c.h.b16 %v34
  %v123 = vpack.c.b16 %v111, %v107
  %v124 = vpack.c.b16 %v112, %v108
  %v125 = vpack.c.b16 %v113, %v109
  %v126 = vpack.c.b16 %v114, %v110
  %v127 = vpack.c.b16 %v119, %v115
  %v128 = vpack.c.b16 %v120, %v116
  %v129 = vpack.c.b16 %v121, %v117
  %v130 = vpack.c.b16 %v122, %v118
  %v203 = vunpack.c.l.b16 %v35
  %v204 = vunpack.c.l.b16 %v36
  %v205 = vunpack.c.l.b16 %v37
  %v206 = vunpack.c.l.b16 %v38
  %v207 = vunpack.c.l.b16 %v39
  %v208 = vunpack.c.l.b16 %v40
  %v209 = vunpack.c.l.b16 %v41
  %v210 = vunpack.c.l.b16 %v42
  %v211 = vunpack.c.l.b16 %v43
  %v212 = vunpack.c.l.b16 %v44
  %v213 = vunpack.c.l.b16 %v45
  %v214 = vunpack.c.l.b16 %v46
  %v215 = vunpack.c.l.b16 %v47
  %v216 = vunpack.c.l.b16 %v48
  %v217 = vunpack.c.l.b16 %v49
  %v218 = vunpack.c.l.b16 %v50
  %v219 = vunpack.c.l.b16 %v51
  %v220 = vunpack.c.l.b16 %v52
  %v221 = vunpack.c.l.b16 %v53
  %v222 = vunpack.c.l.b16 %v54
  %v223 = vunpack.c.l.b16 %v55
  %v224 = vunpack.c.l.b16 %v56
  %v225 = vunpack.c.l.b16 %v57
  %v226 = vunpack.c.l.b16 %v58
  %v227 = vunpack.c.l.b16 %v59
  %v228 = vunpack.c.l.b16 %v60
  %v229 = vunpack.c.l.b16 %v61
  %v230 = vunpack.c.l.b16 %v62
  %v231 = vunpack.c.l.b16 %v63
  %v232 = vunpack.c.l.b16 %v64
  %v233 = vunpack.c.l.b16 %v65
  %v234 = vunpack.c.l.b16 %v66
  %v235 = vunpack.c.l.b16 %v67
  %v236 = vunpack.c.l.b16 %v68
  %v237 = vunpack.c.l.b16 %v69
  %v238 = vunpack.c.l.b16 %v70
  %v239 = vunpack.c.l.b16 %v71
  %v240 = vunpack.c.l.b16 %v72
  %v241 = vunpack.c.l.b16 %v73
  %v242 = vunpack.c.l.b16 %v74
  %v243 = vunpack.c.l.b16 %v75
  %v244 = vunpack.c.l.b16 %v76
  %v245 = vunpack.c.l.b16 %v77
  %v246 = vunpack.c.l.b16 %v78
  %v247 = vunpack.c.l.b16 %v79
  %v248 = vunpack.c.l.b16 %v80
  %v249 = vunpack.c.l.b16 %v81
  %v250 = vunpack.c.l.b16 %v82
  %v251 = vunpack.c.l.b16 %v83
  %v252 = vunpack.c.l.b16 %v84
  %v253 = vunpack.c.l.b16 %v85
  %v254 = vunpack.c.l.b16 %v86
  %v255 = vunpack.c.l.b16 %v87
  %v256 = vunpack.c.l.b16 %v88
  %v257 = vunpack.c.l.b16 %v89
  %v258 = vunpack.c.l.b16 %v90
  %v259 = vunpack.c.l.b16 %v91
  %v260 = vunpack.c.l.b16 %v92
  %v261 = vunpack.c.l.b16 %v93
  %v262 = vunpack.c.l.b16 %v94
  %v263 = vunpack.c.l.b16 %v95
  %v264 = vunpack.c.l.b16 %v96
  %v265 = vunpack.c.l.b16 %v97
  %v266 = vunpack.c.l.b16 %v98
  %v267 = vpack.c.b16 %v204, %v203
  %v268 = vpack.c.b16 %v206, %v205
  %v269 = vpack.c.b16 %v208, %v207
  %v270 = vpack.c.b16 %v210, %v209
  %v271 = vpack.c.b16 %v212, %v211
  %v272 = vpack.c.b16 %v214, %v213
  %v273 = vpack.c.b16 %v216, %v215
  %v274 = vpack.c.b16 %v218, %v217
  %v275 = vpack.c.b16 %v220, %v219
  %v276 = vpack.c.b16 %v222, %v221
  %v277 = vpack.c.b16 %v224, %v223
  %v278 = vpack.c.b16 %v226, %v225
  %v279 = vpack.c.b16 %v228, %v227
  %v280 = vpack.c.b16 %v230, %v229
  %v281 = vpack.c.b16 %v232, %v231
  %v282 = vpack.c.b16 %v234, %v233
  %v283 = vpack.c.b16 %v236, %v235
  %v284 = vpack.c.b16 %v238, %v237
  %v285 = vpack.c.b16 %v240, %v239
  %v286 = vpack.c.b16 %v242, %v241
  %v287 = vpack.c.b16 %v244, %v243
  %v288 = vpack.c.b16 %v246, %v245
  %v289 = vpack.c.b16 %v248, %v247
  %v290 = vpack.c.b16 %v250, %v249
  %v291 = vpack.c.b16 %v252, %v251
  %v292 = vpack.c.b16 %v254, %v253
  %v293 = vpack.c.b16 %v256, %v255
  %v294 = vpack.c.b16 %v258, %v257
  %v295 = vpack.c.b16 %v260, %v259
  %v296 = vpack.c.b16 %v262, %v261
  %v297 = vpack.c.b16 %v264, %v263
  %v298 = vpack.c.b16 %v266, %v265
  %331 = vmatprep.subr.bf16.mxu0 0
  %332 = vmatpush1.bf16.msra.mxu0 %v274
  %333 = vmatprep.subr.bf16.mxu0 0
  %334 = vmatpush1.bf16.msra.mxu0 %v273
  %335 = vmatprep.subr.bf16.mxu0 0
  %336 = vmatpush1.bf16.msra.mxu0 %v272
  %337 = vmatprep.subr.bf16.mxu0 0
  %338 = vmatpush1.bf16.msra.mxu0 %v271
  %339 = vmatprep.subr.bf16.mxu0 0
  %340 = vmatpush1.bf16.msra.mxu0 %v270
  %341 = vmatprep.subr.bf16.mxu0 0
  %342 = vmatpush1.bf16.msra.mxu0 %v269
  %343 = vmatprep.subr.bf16.mxu0 0
  %344 = vmatpush1.bf16.msra.mxu0 %v268
  %345 = vmatprep.subr.bf16.mxu0 0
  %346 = vmatpush1.bf16.msra.mxu0 %v267
  %347 = vmatprep.subr.bf16.mxu0 0
  %348 = vmatpush2.bf16.msra.mxu0 %v282
  %349 = vmatprep.subr.bf16.mxu0 0
  %350 = vmatpush2.bf16.msra.mxu0 %v281
  %351 = vmatprep.subr.bf16.mxu0 0
  %352 = vmatpush2.bf16.msra.mxu0 %v280
  %353 = vmatprep.subr.bf16.mxu0 0
  %354 = vmatpush2.bf16.msra.mxu0 %v279
  %355 = vmatprep.subr.bf16.mxu0 0
  %356 = vmatpush2.bf16.msra.mxu0 %v278
  %357 = vmatprep.subr.bf16.mxu0 0
  %358 = vmatpush2.bf16.msra.mxu0 %v277
  %359 = vmatprep.subr.bf16.mxu0 0
  %360 = vmatpush2.bf16.msra.mxu0 %v276
  %361 = vmatprep.subr.bf16.mxu0 0
  %362 = vmatpush2.bf16.msra.mxu0 %v275
  %363 = vmatprep.mubr.bf16.mxu0 %v124
  %364 = vmatmul.mubr.bf16.gmra.mxu0 %v123
  %v365 = vpop.f32.mrf.mxu0
  %v366 = vadd.f32 0.0, %v365
  %v367 = vpop.f32.mrf.mxu0
  %v368 = vpop.f32.mrf.mxu0
  %v369 = vadd.f32 0.0, %v368
  %v370 = vpop.f32.mrf.mxu0
  %371 = vmatprep.mubr.bf16.mxu0 %v128
  %372 = vmatmul.mubr.bf16.gmra.mxu0 %v127
  %v373 = vpop.f32.mrf.mxu0
  %v374 = vadd.f32 0.0, %v373
  %v375 = vpop.f32.mrf.mxu0
  %v376 = vpop.f32.mrf.mxu0
  %v377 = vadd.f32 0.0, %v376
  %v378 = vpop.f32.mrf.mxu0
  %379 = vdwg.mxu0
  %380 = vmatprep.subr.bf16.mxu0 0
  %381 = vmatpush1.bf16.msra.mxu0 %v290
  %382 = vmatprep.subr.bf16.mxu0 0
  %383 = vmatpush1.bf16.msra.mxu0 %v289
  %384 = vmatprep.subr.bf16.mxu0 0
  %385 = vmatpush1.bf16.msra.mxu0 %v288
  %386 = vmatprep.subr.bf16.mxu0 0
  %387 = vmatpush1.bf16.msra.mxu0 %v287
  %388 = vmatprep.subr.bf16.mxu0 0
  %389 = vmatpush1.bf16.msra.mxu0 %v286
  %390 = vmatprep.subr.bf16.mxu0 0
  %391 = vmatpush1.bf16.msra.mxu0 %v285
  %392 = vmatprep.subr.bf16.mxu0 0
  %393 = vmatpush1.bf16.msra.mxu0 %v284
  %394 = vmatprep.subr.bf16.mxu0 0
  %395 = vmatpush1.bf16.msra.mxu0 %v283
  %396 = vmatprep.subr.bf16.mxu0 0
  %397 = vmatpush2.bf16.msra.mxu0 %v298
  %398 = vmatprep.subr.bf16.mxu0 0
  %399 = vmatpush2.bf16.msra.mxu0 %v297
  %400 = vmatprep.subr.bf16.mxu0 0
  %401 = vmatpush2.bf16.msra.mxu0 %v296
  %402 = vmatprep.subr.bf16.mxu0 0
  %403 = vmatpush2.bf16.msra.mxu0 %v295
  %404 = vmatprep.subr.bf16.mxu0 0
  %405 = vmatpush2.bf16.msra.mxu0 %v294
  %406 = vmatprep.subr.bf16.mxu0 0
  %407 = vmatpush2.bf16.msra.mxu0 %v293
  %408 = vmatprep.subr.bf16.mxu0 0
  %409 = vmatpush2.bf16.msra.mxu0 %v292
  %410 = vmatprep.subr.bf16.mxu0 0
  %411 = vmatpush2.bf16.msra.mxu0 %v291
  %412 = vmatprep.mubr.bf16.mxu0 %v126
  %413 = vmatmul.mubr.bf16.gmra.mxu0 %v125
  %v414 = vpop.f32.mrf.mxu0
  %v415 = vadd.f32 %v366, %v414
  %v416 = vpop.f32.mrf.mxu0
  %v417 = vpop.f32.mrf.mxu0
  %v418 = vadd.f32 %v369, %v417
  %v419 = vpop.f32.mrf.mxu0
  %420 = vmatprep.mubr.bf16.mxu0 %v130
  %421 = vmatmul.mubr.bf16.gmra.mxu0 %v129
  %v422 = vpop.f32.mrf.mxu0
  %v423 = vadd.f32 %v374, %v422
  %v424 = vpop.f32.mrf.mxu0
  %v425 = vpop.f32.mrf.mxu0
  %v426 = vadd.f32 %v377, %v425
  %v427 = vpop.f32.mrf.mxu0
  %428 = vdwg.mxu0
  %v429 = vadd.f32 %v23, %v415
  %v430 = vadd.f32 %v24, %v418
  %v431 = vadd.f32 %v25, %v423
  %v432 = vadd.f32 %v26, %v426
  %433 = vst [vmem:[#allocation2] sm:$0xff] %v429
  %434 = vst [vmem:[#allocation2 + $0x8] sm:$0xff] %v430
  %435 = vst [vmem:[#allocation2 + $0x10] sm:$0xff] %v431
  %436 = vst [vmem:[#allocation2 + $0x18] sm:$0xff] %v432
  // Predicated region
  $region18: #{a_call__.40} parent=0 // pred_check
    %p437 = pneg %p15
  $region19: #{a_call__.40} parent=0 // pred_check_branch
    %439 = sbr.rel (%p437) target = $region21
  $region20: #{a_call__.40} parent=0 // pred_region
    %v440 = vld [vmem:[#allocation2] sm:$0xff]
    %v441 = vld [vmem:[#allocation2 + $0x8] sm:$0xff]
    %v442 = vld [vmem:[#allocation2 + $0x10] sm:$0xff]
    %v443 = vld [vmem:[#allocation2 + $0x18] sm:$0xff]
    %v444 = vld [vmem:[%s2] sm:$0x1]
    %v446 = vlaneseq
    %v447 = vshrl.u32 %v446, 7
    %v448 = vsub.s32 0, %v447
    %v449 = vrot.slane %v444, %v448
    %v451 = vadd.f32 %v440, %v449
    %v452 = vadd.f32 %v441, %v449
    %v453 = vadd.f32 %v442, %v449
    %v454 = vadd.f32 %v443, %v449
    %v455 = vmax.f32 %v451, 0.0
    %v456 = vmax.f32 %v452, 0.0
    %v457 = vmax.f32 %v453, 0.0
    %v458 = vmax.f32 %v454, 0.0
    %v459 = vpack.c.bf16 %v456, %v455
    %v460 = vpack.c.bf16 %v458, %v457
    %v463 = vunpack.c.l.b16 %v459
    %v464 = vunpack.c.h.b16 %v459
    %v465 = vunpack.c.l.b16 %v460
    %v466 = vunpack.c.h.b16 %v460
    %v467 = vpack.c.b16 %v463, %v463
    %v468 = vpack.c.b16 %v464, %v464
    %v469 = vpack.c.b16 %v465, %v465
    %v470 = vpack.c.b16 %v466, %v466
    %475 = vst [vmem:[%s3] sm:$0xf] %v467
    %476 = vst [vmem:[%s3 + $0x4] sm:$0xf] %v468
    %477 = vst [vmem:[%s3 + $0x8] sm:$0xf] %v469
    %478 = vst [vmem:[%s3 + $0xc] sm:$0xf] %v470
  $region21: #{a_call__.40} parent=0 // pred_fallthru
    _
  // Predicated region
  $region22: #{a_call__.40} parent=0 // pred_check
    _
  $region23: #{a_call__.40} parent=0 // pred_check_branch
    %480 = sbr.rel (0) target = $region25
  $region24: #{a_call__.40} parent=0 // pred_region
    _
  $region25: #{a_call__.40} parent=0 // pred_fallthru
    _
  // Predicated region
  $region26: #{a_call__.40} parent=0 // pred_check
    _
  $region27: #{a_call__.40} parent=0 // pred_check_branch
    %482 = sbr.rel (0) target = $region29
  $region28: #{a_call__.40} parent=0 // pred_region
    _
  $region29: #{a_call__.40} parent=0 // pred_fallthru
    _

// kernel: a_call__.49
$region0: #{a_call__.49}
  #allocation0 [shape = 'u32[]', space=smem, size = 0x4, offset = 0x4, fixed_abs, tag = 'smem constant byte address 0x4 - core index']
  #allocation1 [shape = 'u32[144,128]{1,0:T(1,128)}', space=vmem, size = 0x12000, scoped, tag = 'internal scratch']
  #allocation2 [shape = 'f32[8,128]{1,0:T(8,128)}', space=vmem, size = 0x1000, scoped, tag = 'scratch operand']
  %s0 = inlined_call_operand.vmem [shape: bf16[8,512], index: 0, kind: input, shape index: {}]
  %s1 = inlined_call_operand.vmem [shape: bf16[512,128], index: 1, kind: input, shape index: {}]
  %s2 = inlined_call_operand.vmem [shape: f32[1,128], index: 2, kind: input, shape index: {}]
  %s3 = inlined_call_operand.vmem [shape: f32[8,128], index: 3, kind: output, shape index: {}]
  %s4 = sld [smem:[#allocation0]]
  $region30: #{a_call__.49} parent=0
    _
  %s6 = ssub.s32 1, %s4
  %s7 = scalar_select 0, %s6, %s4
  // Predicated region
  $region2: #{a_call__.49} parent=0 // pred_check
    _
  $region3: #{a_call__.49} parent=0 // pred_check_branch
    %9 = sbr.rel (0) target = $region5
  $region4: #{a_call__.49} parent=0 // pred_region
    _
  $region5: #{a_call__.49} parent=0 // pred_fallthru
    _
  // Predicated region
  $region6: #{a_call__.49} parent=0 // pred_check
    _
  $region7: #{a_call__.49} parent=0 // pred_check_branch
    %11 = sbr.rel (0) target = $region9
  $region8: #{a_call__.49} parent=0 // pred_region
    _
  $region9: #{a_call__.49} parent=0 // pred_fallthru
    _
  // Predicated region
  $region10: #{a_call__.49} parent=0 // pred_check
    _
  $region11: #{a_call__.49} parent=0 // pred_check_branch
    %13 = sbr.rel (0) target = $region13
  $region12: #{a_call__.49} parent=0 // pred_region
    _
  $region13: #{a_call__.49} parent=0 // pred_fallthru
    _
  %p15 = scmp.eq.s32.totalorder 0, 0
  // Predicated region
  $region14: #{a_call__.49} parent=0 // pred_check
    %p16 = pneg %p15
  $region15: #{a_call__.49} parent=0 // pred_check_branch
    %18 = sbr.rel (%p16) target = $region17
  $region16: #{a_call__.49} parent=0 // pred_region
    %19 = vst [vmem:[#allocation2] sm:$0xff] 0.0
  $region17: #{a_call__.49} parent=0 // pred_fallthru
    _
  %v20 = vld [vmem:[#allocation2] sm:$0xff]
  %v21 = vld [vmem:[%s0] sm:$0xff]
  %v22 = vld [vmem:[%s0 + $0x8] sm:$0xff]
  %v23 = vld [vmem:[%s1] sm:$0xf]
  %v24 = vld [vmem:[%s1 + $0x4] sm:$0xf]
  %v25 = vld [vmem:[%s1 + $0x8] sm:$0xf]
  %v26 = vld [vmem:[%s1 + $0xc] sm:$0xf]
  %v27 = vld [vmem:[%s1 + $0x10] sm:$0xf]
  %v28 = vld [vmem:[%s1 + $0x14] sm:$0xf]
  %v29 = vld [vmem:[%s1 + $0x18] sm:$0xf]
  %v30 = vld [vmem:[%s1 + $0x1c] sm:$0xf]
  %v31 = vld [vmem:[%s1 + $0x20] sm:$0xf]
  %v32 = vld [vmem:[%s1 + $0x24] sm:$0xf]
  %v33 = vld [vmem:[%s1 + $0x28] sm:$0xf]
  %v34 = vld [vmem:[%s1 + $0x2c] sm:$0xf]
  %v35 = vld [vmem:[%s1 + $0x30] sm:$0xf]
  %v36 = vld [vmem:[%s1 + $0x34] sm:$0xf]
  %v37 = vld [vmem:[%s1 + $0x38] sm:$0xf]
  %v38 = vld [vmem:[%s1 + $0x3c] sm:$0xf]
  %v39 = vld [vmem:[%s1 + $0x40] sm:$0xf]
  %v40 = vld [vmem:[%s1 + $0x44] sm:$0xf]
  %v41 = vld [vmem:[%s1 + $0x48] sm:$0xf]
  %v42 = vld [vmem:[%s1 + $0x4c] sm:$0xf]
  %v43 = vld [vmem:[%s1 + $0x50] sm:$0xf]
  %v44 = vld [vmem:[%s1 + $0x54] sm:$0xf]
  %v45 = vld [vmem:[%s1 + $0x58] sm:$0xf]
  %v46 = vld [vmem:[%s1 + $0x5c] sm:$0xf]
  %v47 = vld [vmem:[%s1 + $0x60] sm:$0xf]
  %v48 = vld [vmem:[%s1 + $0x64] sm:$0xf]
  %v49 = vld [vmem:[%s1 + $0x68] sm:$0xf]
  %v50 = vld [vmem:[%s1 + $0x6c] sm:$0xf]
  %v51 = vld [vmem:[%s1 + $0x70] sm:$0xf]
  %v52 = vld [vmem:[%s1 + $0x74] sm:$0xf]
  %v53 = vld [vmem:[%s1 + $0x78] sm:$0xf]
  %v54 = vld [vmem:[%s1 + $0x7c] sm:$0xf]
  %v55 = vld [vmem:[%s1 + $0x80] sm:$0xf]
  %v56 = vld [vmem:[%s1 + $0x84] sm:$0xf]
  %v57 = vld [vmem:[%s1 + $0x88] sm:$0xf]
  %v58 = vld [vmem:[%s1 + $0x8c] sm:$0xf]
  %v59 = vld [vmem:[%s1 + $0x90] sm:$0xf]
  %v60 = vld [vmem:[%s1 + $0x94] sm:$0xf]
  %v61 = vld [vmem:[%s1 + $0x98] sm:$0xf]
  %v62 = vld [vmem:[%s1 + $0x9c] sm:$0xf]
  %v63 = vld [vmem:[%s1 + $0xa0] sm:$0xf]
  %v64 = vld [vmem:[%s1 + $0xa4] sm:$0xf]
  %v65 = vld [vmem:[%s1 + $0xa8] sm:$0xf]
  %v66 = vld [vmem:[%s1 + $0xac] sm:$0xf]
  %v67 = vld [vmem:[%s1 + $0xb0] sm:$0xf]
  %v68 = vld [vmem:[%s1 + $0xb4] sm:$0xf]
  %v69 = vld [vmem:[%s1 + $0xb8] sm:$0xf]
  %v70 = vld [vmem:[%s1 + $0xbc] sm:$0xf]
  %v71 = vld [vmem:[%s1 + $0xc0] sm:$0xf]
  %v72 = vld [vmem:[%s1 + $0xc4] sm:$0xf]
  %v73 = vld [vmem:[%s1 + $0xc8] sm:$0xf]
  %v74 = vld [vmem:[%s1 + $0xcc] sm:$0xf]
  %v75 = vld [vmem:[%s1 + $0xd0] sm:$0xf]
  %v76 = vld [vmem:[%s1 + $0xd4] sm:$0xf]
  %v77 = vld [vmem:[%s1 + $0xd8] sm:$0xf]
  %v78 = vld [vmem:[%s1 + $0xdc] sm:$0xf]
  %v79 = vld [vmem:[%s1 + $0xe0] sm:$0xf]
  %v80 = vld [vmem:[%s1 + $0xe4] sm:$0xf]
  %v81 = vld [vmem:[%s1 + $0xe8] sm:$0xf]
  %v82 = vld [vmem:[%s1 + $0xec] sm:$0xf]
  %v83 = vld [vmem:[%s1 + $0xf0] sm:$0xf]
  %v84 = vld [vmem:[%s1 + $0xf4] sm:$0xf]
  %v85 = vld [vmem:[%s1 + $0xf8] sm:$0xf]
  %v86 = vld [vmem:[%s1 + $0xfc] sm:$0xf]
  %v89 = vunpack.c.l.b16 %v21
  %v90 = vunpack.c.h.b16 %v21
  %v91 = vunpack.c.l.b16 %v22
  %v92 = vunpack.c.h.b16 %v22
  %v93 = vpack.c.b16 %v89, %v89
  %v94 = vpack.c.b16 %v90, %v90
  %v95 = vpack.c.b16 %v91, %v91
  %v96 = vpack.c.b16 %v92, %v92
  %v165 = vunpack.c.l.b16 %v23
  %v166 = vunpack.c.l.b16 %v24
  %v167 = vunpack.c.l.b16 %v25
  %v168 = vunpack.c.l.b16 %v26
  %v169 = vunpack.c.l.b16 %v27
  %v170 = vunpack.c.l.b16 %v28
  %v171 = vunpack.c.l.b16 %v29
  %v172 = vunpack.c.l.b16 %v30
  %v173 = vunpack.c.l.b16 %v31
  %v174 = vunpack.c.l.b16 %v32
  %v175 = vunpack.c.l.b16 %v33
  %v176 = vunpack.c.l.b16 %v34
  %v177 = vunpack.c.l.b16 %v35
  %v178 = vunpack.c.l.b16 %v36
  %v179 = vunpack.c.l.b16 %v37
  %v180 = vunpack.c.l.b16 %v38
  %v181 = vunpack.c.l.b16 %v39
  %v182 = vunpack.c.l.b16 %v40
  %v183 = vunpack.c.l.b16 %v41
  %v184 = vunpack.c.l.b16 %v42
  %v185 = vunpack.c.l.b16 %v43
  %v186 = vunpack.c.l.b16 %v44
  %v187 = vunpack.c.l.b16 %v45
  %v188 = vunpack.c.l.b16 %v46
  %v189 = vunpack.c.l.b16 %v47
  %v190 = vunpack.c.l.b16 %v48
  %v191 = vunpack.c.l.b16 %v49
  %v192 = vunpack.c.l.b16 %v50
  %v193 = vunpack.c.l.b16 %v51
  %v194 = vunpack.c.l.b16 %v52
  %v195 = vunpack.c.l.b16 %v53
  %v196 = vunpack.c.l.b16 %v54
  %v197 = vunpack.c.l.b16 %v55
  %v198 = vunpack.c.l.b16 %v56
  %v199 = vunpack.c.l.b16 %v57
  %v200 = vunpack.c.l.b16 %v58
  %v201 = vunpack.c.l.b16 %v59
  %v202 = vunpack.c.l.b16 %v60
  %v203 = vunpack.c.l.b16 %v61
  %v204 = vunpack.c.l.b16 %v62
  %v205 = vunpack.c.l.b16 %v63
  %v206 = vunpack.c.l.b16 %v64
  %v207 = vunpack.c.l.b16 %v65
  %v208 = vunpack.c.l.b16 %v66
  %v209 = vunpack.c.l.b16 %v67
  %v210 = vunpack.c.l.b16 %v68
  %v211 = vunpack.c.l.b16 %v69
  %v212 = vunpack.c.l.b16 %v70
  %v213 = vunpack.c.l.b16 %v71
  %v214 = vunpack.c.l.b16 %v72
  %v215 = vunpack.c.l.b16 %v73
  %v216 = vunpack.c.l.b16 %v74
  %v217 = vunpack.c.l.b16 %v75
  %v218 = vunpack.c.l.b16 %v76
  %v219 = vunpack.c.l.b16 %v77
  %v220 = vunpack.c.l.b16 %v78
  %v221 = vunpack.c.l.b16 %v79
  %v222 = vunpack.c.l.b16 %v80
  %v223 = vunpack.c.l.b16 %v81
  %v224 = vunpack.c.l.b16 %v82
  %v225 = vunpack.c.l.b16 %v83
  %v226 = vunpack.c.l.b16 %v84
  %v227 = vunpack.c.l.b16 %v85
  %v228 = vunpack.c.l.b16 %v86
  %v229 = vpack.c.b16 %v166, %v165
  %v230 = vpack.c.b16 %v168, %v167
  %v231 = vpack.c.b16 %v170, %v169
  %v232 = vpack.c.b16 %v172, %v171
  %v233 = vpack.c.b16 %v174, %v173
  %v234 = vpack.c.b16 %v176, %v175
  %v235 = vpack.c.b16 %v178, %v177
  %v236 = vpack.c.b16 %v180, %v179
  %v237 = vpack.c.b16 %v182, %v181
  %v238 = vpack.c.b16 %v184, %v183
  %v239 = vpack.c.b16 %v186, %v185
  %v240 = vpack.c.b16 %v188, %v187
  %v241 = vpack.c.b16 %v190, %v189
  %v242 = vpack.c.b16 %v192, %v191
  %v243 = vpack.c.b16 %v194, %v193
  %v244 = vpack.c.b16 %v196, %v195
  %v245 = vpack.c.b16 %v198, %v197
  %v246 = vpack.c.b16 %v200, %v199
  %v247 = vpack.c.b16 %v202, %v201
  %v248 = vpack.c.b16 %v204, %v203
  %v249 = vpack.c.b16 %v206, %v205
  %v250 = vpack.c.b16 %v208, %v207
  %v251 = vpack.c.b16 %v210, %v209
  %v252 = vpack.c.b16 %v212, %v211
  %v253 = vpack.c.b16 %v214, %v213
  %v254 = vpack.c.b16 %v216, %v215
  %v255 = vpack.c.b16 %v218, %v217
  %v256 = vpack.c.b16 %v220, %v219
  %v257 = vpack.c.b16 %v222, %v221
  %v258 = vpack.c.b16 %v224, %v223
  %v259 = vpack.c.b16 %v226, %v225
  %v260 = vpack.c.b16 %v228, %v227
  %293 = vmatprep.subr.bf16.mxu0 0
  %294 = vmatpush1.bf16.msra.mxu0 %v236
  %295 = vmatprep.subr.bf16.mxu0 0
  %296 = vmatpush1.bf16.msra.mxu0 %v235
  %297 = vmatprep.subr.bf16.mxu0 0
  %298 = vmatpush1.bf16.msra.mxu0 %v234
  %299 = vmatprep.subr.bf16.mxu0 0
  %300 = vmatpush1.bf16.msra.mxu0 %v233
  %301 = vmatprep.subr.bf16.mxu0 0
  %302 = vmatpush1.bf16.msra.mxu0 %v232
  %303 = vmatprep.subr.bf16.mxu0 0
  %304 = vmatpush1.bf16.msra.mxu0 %v231
  %305 = vmatprep.subr.bf16.mxu0 0
  %306 = vmatpush1.bf16.msra.mxu0 %v230
  %307 = vmatprep.subr.bf16.mxu0 0
  %308 = vmatpush1.bf16.msra.mxu0 %v229
  %309 = vmatprep.subr.bf16.mxu0 0
  %310 = vmatpush2.bf16.msra.mxu0 %v244
  %311 = vmatprep.subr.bf16.mxu0 0
  %312 = vmatpush2.bf16.msra.mxu0 %v243
  %313 = vmatprep.subr.bf16.mxu0 0
  %314 = vmatpush2.bf16.msra.mxu0 %v242
  %315 = vmatprep.subr.bf16.mxu0 0
  %316 = vmatpush2.bf16.msra.mxu0 %v241
  %317 = vmatprep.subr.bf16.mxu0 0
  %318 = vmatpush2.bf16.msra.mxu0 %v240
  %319 = vmatprep.subr.bf16.mxu0 0
  %320 = vmatpush2.bf16.msra.mxu0 %v239
  %321 = vmatprep.subr.bf16.mxu0 0
  %322 = vmatpush2.bf16.msra.mxu0 %v238
  %323 = vmatprep.subr.bf16.mxu0 0
  %324 = vmatpush2.bf16.msra.mxu0 %v237
  %325 = vmatprep.mubr.bf16.mxu0 %v94
  %326 = vmatmul.mubr.bf16.gmra.mxu0 %v93
  %v327 = vpop.f32.mrf.mxu0
  %v328 = vadd.f32 0.0, %v327
  %v329 = vpop.f32.mrf.mxu0
  %v330 = vpop.f32.mrf.mxu0
  %v331 = vpop.f32.mrf.mxu0
  %332 = vdwg.mxu0
  %333 = vmatprep.subr.bf16.mxu0 0
  %334 = vmatpush1.bf16.msra.mxu0 %v252
  %335 = vmatprep.subr.bf16.mxu0 0
  %336 = vmatpush1.bf16.msra.mxu0 %v251
  %337 = vmatprep.subr.bf16.mxu0 0
  %338 = vmatpush1.bf16.msra.mxu0 %v250
  %339 = vmatprep.subr.bf16.mxu0 0
  %340 = vmatpush1.bf16.msra.mxu0 %v249
  %341 = vmatprep.subr.bf16.mxu0 0
  %342 = vmatpush1.bf16.msra.mxu0 %v248
  %343 = vmatprep.subr.bf16.mxu0 0
  %344 = vmatpush1.bf16.msra.mxu0 %v247
  %345 = vmatprep.subr.bf16.mxu0 0
  %346 = vmatpush1.bf16.msra.mxu0 %v246
  %347 = vmatprep.subr.bf16.mxu0 0
  %348 = vmatpush1.bf16.msra.mxu0 %v245
  %349 = vmatprep.subr.bf16.mxu0 0
  %350 = vmatpush2.bf16.msra.mxu0 %v260
  %351 = vmatprep.subr.bf16.mxu0 0
  %352 = vmatpush2.bf16.msra.mxu0 %v259
  %353 = vmatprep.subr.bf16.mxu0 0
  %354 = vmatpush2.bf16.msra.mxu0 %v258
  %355 = vmatprep.subr.bf16.mxu0 0
  %356 = vmatpush2.bf16.msra.mxu0 %v257
  %357 = vmatprep.subr.bf16.mxu0 0
  %358 = vmatpush2.bf16.msra.mxu0 %v256
  %359 = vmatprep.subr.bf16.mxu0 0
  %360 = vmatpush2.bf16.msra.mxu0 %v255
  %361 = vmatprep.subr.bf16.mxu0 0
  %362 = vmatpush2.bf16.msra.mxu0 %v254
  %363 = vmatprep.subr.bf16.mxu0 0
  %364 = vmatpush2.bf16.msra.mxu0 %v253
  %365 = vmatprep.mubr.bf16.mxu0 %v96
  %366 = vmatmul.mubr.bf16.gmra.mxu0 %v95
  %v367 = vpop.f32.mrf.mxu0
  %v368 = vadd.f32 %v328, %v367
  %v369 = vpop.f32.mrf.mxu0
  %v370 = vpop.f32.mrf.mxu0
  %v371 = vpop.f32.mrf.mxu0
  %372 = vdwg.mxu0
  %v373 = vadd.f32 %v20, %v368
  %374 = vst [vmem:[#allocation2] sm:$0xff] %v373
  // Predicated region
  $region18: #{a_call__.49} parent=0 // pred_check
    %p375 = pneg %p15
  $region19: #{a_call__.49} parent=0 // pred_check_branch
    %377 = sbr.rel (%p375) target = $region21
  $region20: #{a_call__.49} parent=0 // pred_region
    %v378 = vld [vmem:[#allocation2] sm:$0xff]
    %v379 = vld [vmem:[%s2] sm:$0x1]
    %v381 = vlaneseq
    %v382 = vshrl.u32 %v381, 7
    %v383 = vsub.s32 0, %v382
    %v384 = vrot.slane %v379, %v383
    %v386 = vadd.f32 %v378, %v384
    %v387 = vxor.u32 %v386, 2147483648
    %v388 = vmul.f32 %v387, 1.442695
    %v389 = vpow.pop %v388
    %v390 = vadd.f32 %v389, 1.0
    %v391 = vrcp.pop %v390
    %v392 = vmul.f32 1.0, %v391
    %393 = vst [vmem:[%s3] sm:$0xff] %v392
  $region21: #{a_call__.49} parent=0 // pred_fallthru
    _
  // Predicated region
  $region22: #{a_call__.49} parent=0 // pred_check
    _
  $region23: #{a_call__.49} parent=0 // pred_check_branch
    %395 = sbr.rel (0) target = $region25
  $region24: #{a_call__.49} parent=0 // pred_region
    _
  $region25: #{a_call__.49} parent=0 // pred_fallthru
    _
  // Predicated region
  $region26: #{a_call__.49} parent=0 // pred_check
    _
  $region27: #{a_call__.49} parent=0 // pred_check_branch
    %397 = sbr.rel (0) target = $region29
  $region28: #{a_call__.49} parent=0 // pred_region
    _
  $region29: #{a_call__.49} parent=0 // pred_fallthru
    _

</llo_original>
